<compile_context>
chip_gen: v5e
topology: v5e:2x2
jax: 0.10.0
libtpu: 0.0.40
codegen_flags: <defaults>
</compile_context>

<pallas_src>
import functools
import math

import jax
import jax.numpy as jnp
import numpy as np
from jax.experimental import pallas as pl
from jax.experimental.pallas import tpu as pltpu

# bf16 MXU inputs, f32 accumulation (native MXU rate on v5e/v6e/v7x).
MATMUL_DTYPE = jnp.bfloat16
LN_EPS = 1e-5


# ----------------------------------------------------------------------------
# Fused whole-model kernel (grid = (N tiles, layers))
# ----------------------------------------------------------------------------
def _fused_forward_kernel(
        x_ref, pos_ref, bd_ref,
        in_w_ref, in_b_ref,
        qkv_w_ref, qkv_b_ref,        # per-layer block: (E, 3E) / (1, 3E)
        op_w_ref, op_b_ref,          # per-layer block: (E, E)  / (1, E)
        ln1_g_ref, ln1_b_ref, ln2_g_ref, ln2_b_ref,   # per-layer block: (1, E)
        ff1_w_ref, ff1_b_ref,        # per-layer block: (E, F)  / (1, F)
        ff2_w_ref, ff2_b_ref,        # per-layer block: (F, E)  / (1, E)
        out_w_ref, out_b_ref,        # (E, OUT_PAD) / (1, OUT_PAD)
        o_ref,                       # (L, TN, OUT_PAD)
        h_ref, ctx_ref,              # VMEM scratch (L*TN, E) each
        *, num_heads, eps):
    L, TN, D = x_ref.shape
    E = in_w_ref.shape[1]
    OUT_PAD = out_w_ref.shape[1]
    hd = E // num_heads
    scale = 1.0 / math.sqrt(hd)
    M = L * TN
    layer = pl.program_id(1)
    last_layer = pl.num_programs(1) - 1

    def mm(a, w):
        # bf16 MXU inputs, f32 accumulation. Weights arrive pre-cast to bf16.
        return jnp.dot(a.astype(MATMUL_DTYPE), w.astype(MATMUL_DTYPE),
                       preferred_element_type=jnp.float32)

    def layernorm(z, g, b):
        mu = jnp.mean(z, axis=-1, keepdims=True)
        zc = z - mu
        var = jnp.mean(zc * zc, axis=-1, keepdims=True)
        return zc * jax.lax.rsqrt(var + eps) * g + b

    # ---- layer 0: input projection + positional encoding -> h scratch ---------
    @pl.when(layer == 0)
    def _():
        x2 = x_ref[...].reshape(M, D)
        h0 = mm(x2, in_w_ref[...]) + in_b_ref[...]
        h0 = (h0.reshape(L, TN, E) + pos_ref[...][None, :, :]).reshape(M, E)
        h_ref[...] = h0

    h = h_ref[...]
    bd = bd_ref[...]                                     # block-diag head ones (E, E)

    # ---- self attention: fused QKV projection (one MXU pass) ------------------
    qkv = mm(h, qkv_w_ref[...]) + qkv_b_ref[...]          # (M, 3E)
    q = qkv[:, :E]
    k = qkv[:, E:2 * E]
    v = qkv[:, 2 * E:]

    # Per-head scores via one matmul against the block-diagonal ones matrix: the
    # per-head score is replicated across that head's hd lanes, so softmax/context
    # stay fully lane-dense.  Context rows are written straight into VMEM scratch.
    for l in range(L):                                    # L = attention seq (= B), tiny
        q_l = q[l * TN:(l + 1) * TN, :] * scale           # (TN, E)
        s_list = [mm(q_l * k[m * TN:(m + 1) * TN, :], bd) for m in range(L)]
        s_max = s_list[0]
        for m in range(1, L):
            s_max = jnp.maximum(s_max, s_list[m])
        p0 = jnp.exp(s_list[0] - s_max)
        num = p0 * v[0:TN, :]
        den = p0
        for m in range(1, L):
            p_m = jnp.exp(s_list[m] - s_max)
            num = num + p_m * v[m * TN:(m + 1) * TN, :]
            den = den + p_m
        ctx_ref[pl.ds(l * TN, TN), :] = num * pl.reciprocal(den, approx=True)

    sa = mm(ctx_ref[...], op_w_ref[...]) + op_b_ref[...]
    h1 = layernorm(h + sa, ln1_g_ref[...], ln1_b_ref[...])

    # ---- feed-forward ----------------------------------------------------------
    ff = jnp.maximum(mm(h1, ff1_w_ref[...]) + ff1_b_ref[...], 0.0)
    ff = mm(ff, ff2_w_ref[...]) + ff2_b_ref[...]
    h_new = layernorm(h1 + ff, ln2_g_ref[...], ln2_b_ref[...])
    h_ref[...] = h_new

    # ---- last layer: output head, lane-dense padded store ----------------------
    @pl.when(layer == last_layer)
    def _():
        out = mm(h_new, out_w_ref[...]) + out_b_ref[...]   # (M, OUT_PAD)
        o_ref[...] = out.reshape(L, TN, OUT_PAD)


# ----------------------------------------------------------------------------
# Wrapper: one pallas_call for the whole forward
# ----------------------------------------------------------------------------
def _pick_batch_tile(n):
    # Prefer a tile that yields >= 2 grid steps (so v7x can use both TensorCores);
    # otherwise the largest multiple of 8 dividing n; otherwise the whole axis.
    for t in (128, 64, 32, 16, 8):
        if n % t == 0 and n // t >= 2:
            return t
    for t in (128, 64, 32, 16, 8):
        if n % t == 0:
            return t
    return n


def _maybe_single_buffered(shape, index_map, single_buffer):
    # Constant-index blocks do not need double-buffering; halve their VMEM cost.
    if single_buffer and hasattr(pl, "Buffered"):
        try:
            return pl.BlockSpec(shape, index_map, pipeline_mode=pl.Buffered(1))
        except TypeError:
            pass
    return pl.BlockSpec(shape, index_map)


def transformer_model1_forward(x, params, num_heads, *, single_buffer_consts=True):
    B, S, D = x.shape
    H = params["in_w_t"].shape[1]
    OUT = params["out_w_t"].shape[1]
    FF = params["ff1_w_t"].shape[2]
    num_layers = params["qkv_w_t"].shape[0]
    assert H % num_heads == 0
    assert S <= params["pos"].shape[1], "sequence length exceeds positional encoding table"
    hd = H // num_heads

    L, N = B, S                      # batch_first=False: attention runs over axis 0
    TN = _pick_batch_tile(N)
    grid = (N // TN, num_layers)     # layer axis innermost ("arbitrary"), N axis "parallel"

    OUT_PAD = max(128, ((OUT + 127) // 128) * 128)   # lane-dense output store

    pos = params["pos"][0, :S, :]                                    # (N, H)
    seg = np.arange(H) // hd
    bd = jnp.asarray(seg[:, None] == seg[None, :], MATMUL_DTYPE)     # (H, H)

    wcast = lambda t: t.astype(MATMUL_DTYPE)          # weights live in HBM as bf16
    out_w_p = jnp.pad(params["out_w_t"], ((0, 0), (0, OUT_PAD - OUT)))
    out_b_p = jnp.pad(params["out_b"], ((0, 0), (0, OUT_PAD - OUT)))

    def const2d(shape):               # full 2-D array, same block for every grid step
        return _maybe_single_buffered(shape, lambda i, l: (0, 0), single_buffer_consts)

    def per_layer(shape2d):           # stream one layer's slice per layer grid step
        return pl.BlockSpec((None,) + shape2d, lambda i, l: (l, 0, 0))

    in_specs = [
        pl.BlockSpec((L, TN, D), lambda i, l: (0, i, 0)),     # x   (tile over N)
        pl.BlockSpec((TN, H), lambda i, l: (i, 0)),           # pos (tile over N)
        const2d((H, H)),                                      # block-diag head matrix
        const2d((D, H)), const2d((1, H)),                     # input projection
        per_layer((H, 3 * H)), per_layer((1, 3 * H)),         # fused qkv projection
        per_layer((H, H)), per_layer((1, H)),                 # attn out projection
        per_layer((1, H)), per_layer((1, H)),                 # ln1 gamma/beta
        per_layer((1, H)), per_layer((1, H)),                 # ln2 gamma/beta
        per_layer((H, FF)), per_layer((1, FF)),               # ffn lin1
        per_layer((FF, H)), per_layer((1, H)),                # ffn lin2
        const2d((H, OUT_PAD)), const2d((1, OUT_PAD)),         # output head (padded)
    ]
    out_spec = pl.BlockSpec((L, TN, OUT_PAD), lambda i, l: (0, i, 0))

    # Explicit VMEM budget: 2 buffered layers of weights + constants + tiles + scratch.
    bpe_w = 2 if MATMUL_DTYPE == jnp.bfloat16 else 4
    per_layer_bytes = (H * 3 * H + H * H + H * FF + FF * H) * bpe_w \
        + (3 * H + H + 4 * H + FF + H) * 4
    const_bytes = (H * H + D * H + H * OUT_PAD) * bpe_w + (H + OUT_PAD) * 4
    tile_bytes = (L * TN * D + TN * H + L * TN * OUT_PAD) * 4
    scratch_bytes = 2 * (L * TN * H) * 4
    vmem_needed = (2 * per_layer_bytes
                   + const_bytes * (1 if single_buffer_consts else 2)
                   + 2 * tile_bytes + scratch_bytes)
    vmem_limit = int(min(48 * 1024 * 1024,
                         max(32 * 1024 * 1024, 2 * vmem_needed + (4 << 20))))

    # Advisory cost estimate so XLA schedules the fused custom call sensibly.
    M = B * S
    flops = (2 * M * D * H + 2 * M * H * OUT_PAD
             + num_layers * (2 * M * H * 3 * H        # fused q/k/v projection
                             + 2 * L * L * N * H * H  # head-segmented score matmuls
                             + 2 * M * H * H          # attn out projection
                             + 4 * M * H * FF))       # feed-forward
    transcendentals = num_layers * (L * L * N * H + L * N * H + 2 * M)
    param_bytes = 4 * sum(int(np.prod(p.shape)) for p in jax.tree_util.tree_leaves(params))
    bytes_accessed = 4 * (x.size + M * OUT_PAD + N * H + H * H) + param_bytes

    fused = pl.pallas_call(
        functools.partial(_fused_forward_kernel, num_heads=num_heads, eps=LN_EPS),
        grid=grid,
        in_specs=in_specs,
        out_specs=out_spec,
        out_shape=jax.ShapeDtypeStruct((B, S, OUT_PAD), jnp.float32),
        scratch_shapes=[pltpu.VMEM((L * TN, H), jnp.float32),   # h carried across layers
                        pltpu.VMEM((L * TN, H), jnp.float32)],  # attention context
        compiler_params=pltpu.CompilerParams(
            dimension_semantics=("parallel", "arbitrary"),
            vmem_limit_bytes=vmem_limit),
        cost_estimate=pl.CostEstimate(flops=int(flops),
                                      transcendentals=int(transcendentals),
                                      bytes_accessed=int(bytes_accessed)),
    )
    out_padded = fused(
        x, pos, bd,
        wcast(params["in_w_t"]), params["in_b"],
        wcast(params["qkv_w_t"]), params["qkv_b"],
        wcast(params["op_w_t"]), params["op_b"],
        params["ln1_g"], params["ln1_b"],
        params["ln2_g"], params["ln2_b"],
        wcast(params["ff1_w_t"]), params["ff1_b"],
        wcast(params["ff2_w_t"]), params["ff2_b"],
        wcast(out_w_p), out_b_p)
    return out_padded[..., :OUT]


# ----------------------------------------------------------------------------
# Deterministic parameter init (same shapes as the PyTorch module)
# ----------------------------------------------------------------------------
def init_params(key, input_dim, hidden_dim, num_heads, num_layers, output_dim,
                dim_feedforward=2048):
    keys = jax.random.split(key, 3 + num_layers)
    H = hidden_dim

    def lin_init(k, fan_in, fan_out):
        k1, k2 = jax.random.split(k)
        bound = 1.0 / math.sqrt(fan_in)
        w = jax.random.uniform(k1, (fan_out, fan_in), jnp.float32, -bound, bound)
        b = jax.random.uniform(k2, (1, fan_out), jnp.float32, -bound, bound)
        return w.T, b                      # stored transposed (K, N): y = x @ w_t + b

    params = {}
    params["in_w_t"], params["in_b"] = lin_init(keys[0], input_dim, H)
    params["out_w_t"], params["out_b"] = lin_init(keys[1], H, output_dim)
    # positional_encoding = nn.Parameter(torch.zeros(1, input_dim, hidden_dim));
    # small random values so the positional-add path is exercised by validation.
    params["pos"] = 0.02 * jax.random.normal(keys[2], (1, input_dim, H), jnp.float32)

    qkv_w, qkv_b = [], []
    op_w, op_b, ff1_w, ff1_b, ff2_w, ff2_b = [], [], [], [], [], []
    ln1_g, ln1_b, ln2_g, ln2_b = [], [], [], []
    for l in range(num_layers):
        lk = jax.random.split(keys[3 + l], 4)
        w, b = lin_init(lk[0], H, 3 * H)   # fused in_proj (q|k|v)
        qkv_w.append(w); qkv_b.append(b)
        w, b = lin_init(lk[1], H, H); op_w.append(w); op_b.append(b)
        w, b = lin_init(lk[2], H, dim_feedforward); ff1_w.append(w); ff1_b.append(b)
        w, b = lin_init(lk[3], dim_feedforward, H); ff2_w.append(w); ff2_b.append(b)
        ln1_g.append(jnp.ones((1, H), jnp.float32)); ln1_b.append(jnp.zeros((1, H), jnp.float32))
        ln2_g.append(jnp.ones((1, H), jnp.float32)); ln2_b.append(jnp.zeros((1, H), jnp.float32))

    params["qkv_w_t"] = jnp.stack(qkv_w)   # (num_layers, H, 3H)
    params["qkv_b"] = jnp.stack(qkv_b)     # (num_layers, 1, 3H)
    params["op_w_t"] = jnp.stack(op_w)
    params["op_b"] = jnp.stack(op_b)
    params["ff1_w_t"] = jnp.stack(ff1_w)
    params["ff1_b"] = jnp.stack(ff1_b)
    params["ff2_w_t"] = jnp.stack(ff2_w)
    params["ff2_b"] = jnp.stack(ff2_b)
    params["ln1_g"] = jnp.stack(ln1_g)
    params["ln1_b"] = jnp.stack(ln1_b)
    params["ln2_g"] = jnp.stack(ln2_g)
    params["ln2_b"] = jnp.stack(ln2_b)
    return params


# ----------------------------------------------------------------------------
# Pure-JAX f32 reference (mirrors PyTorch eval-mode math) for validation
# ----------------------------------------------------------------------------
def reference_forward(x, params, num_heads):
    hp = jax.lax.Precision.HIGHEST
    mm = lambda a, b: jnp.matmul(a, b, precision=hp)
    B, S, D = x.shape
    h = mm(x, params["in_w_t"]) + params["in_b"] + params["pos"][:, :S, :]
    num_layers = params["qkv_w_t"].shape[0]

    def ln(z, g, b):
        m = jnp.mean(z, -1, keepdims=True)
        v = jnp.mean((z - m) ** 2, -1, keepdims=True)
        return (z - m) / jnp.sqrt(v + 1e-5) * g + b

    for li in range(num_layers):
        L, N, E = h.shape
        hd = E // num_heads
        x2 = h.reshape(L * N, E)
        qkv = mm(x2, params["qkv_w_t"][li]) + params["qkv_b"][li]
        q, k, v = qkv[:, :E], qkv[:, E:2 * E], qkv[:, 2 * E:]
        sh = lambda t: jnp.transpose(t.reshape(L, N * num_heads, hd), (1, 0, 2))
        q, k, v = sh(q), sh(k), sh(v)
        s = jnp.einsum("blh,bmh->blm", q / jnp.sqrt(hd * 1.0), k, precision=hp)
        a = jax.nn.softmax(s, axis=-1)
        o = jnp.einsum("blm,bmh->blh", a, v, precision=hp)
        o = jnp.transpose(o, (1, 0, 2)).reshape(L * N, E)
        sa = mm(o, params["op_w_t"][li]) + params["op_b"][li]
        h1 = ln(x2 + sa, params["ln1_g"][li], params["ln1_b"][li])
        ff = jnp.maximum(mm(h1, params["ff1_w_t"][li]) + params["ff1_b"][li], 0.0)
        ff = mm(ff, params["ff2_w_t"][li]) + params["ff2_b"][li]
        h = ln(h1 + ff, params["ln2_g"][li], params["ln2_b"][li]).reshape(L, N, E)
    out = mm(h.reshape(B * S, -1), params["out_w_t"]) + params["out_b"]
    return out.reshape(B, S, -1)


# ----------------------------------------------------------------------------
if __name__ == "__main__":
    B, S, D = 2, 8, 16            # batch, seq, input_dim
    H, NH, NL, OUT = 32, 4, 2, 2  # hidden_dim, num_heads, num_layers, output_dim

    key = jax.random.PRNGKey(0)
    kx, kp = jax.random.split(key)
    x = jax.random.normal(kx, (B, S, D), jnp.float32)
    params = init_params(kp, D, H, NH, NL, OUT)

    try:
        out = jax.block_until_ready(transformer_model1_forward(x, params, NH))
    except Exception:
        # Fallback: if single-buffered (Buffered(1)) constant blocks are not supported
        # by this Pallas build, retry with default double-buffering.
        out = jax.block_until_ready(
            transformer_model1_forward(x, params, NH, single_buffer_consts=False))

    ref = reference_forward(x, params, NH)
    assert out.shape == (B, S, OUT), out.shape
    # bf16 MXU inputs (f32 accumulation) vs an f32 "highest" reference -> wider tolerance.
    np.testing.assert_allclose(np.asarray(out), np.asarray(ref), rtol=5e-2, atol=5e-2)
    print("KERNEL_OK")
</pallas_src>

<mosaic_0001>
module attributes {stable_mosaic.version = 11 : i64} {
  func.func @_fused_forward_kernel(%arg0: i32, %arg1: i32, %arg2: memref<2x8x16xf32, #tpu.memory_space<vmem>>, %arg3: memref<8x32xf32, #tpu.memory_space<vmem>>, %arg4: memref<32x32xbf16, #tpu.memory_space<vmem>>, %arg5: memref<16x32xbf16, #tpu.memory_space<vmem>>, %arg6: memref<1x32xf32, #tpu.memory_space<vmem>>, %arg7: memref<1x32x96xbf16, #tpu.memory_space<vmem>>, %arg8: memref<1x1x96xf32, #tpu.memory_space<vmem>>, %arg9: memref<1x32x32xbf16, #tpu.memory_space<vmem>>, %arg10: memref<1x1x32xf32, #tpu.memory_space<vmem>>, %arg11: memref<1x1x32xf32, #tpu.memory_space<vmem>>, %arg12: memref<1x1x32xf32, #tpu.memory_space<vmem>>, %arg13: memref<1x1x32xf32, #tpu.memory_space<vmem>>, %arg14: memref<1x1x32xf32, #tpu.memory_space<vmem>>, %arg15: memref<1x32x2048xbf16, #tpu.memory_space<vmem>>, %arg16: memref<1x1x2048xf32, #tpu.memory_space<vmem>>, %arg17: memref<1x2048x32xbf16, #tpu.memory_space<vmem>>, %arg18: memref<1x1x32xf32, #tpu.memory_space<vmem>>, %arg19: memref<32x128xbf16, #tpu.memory_space<vmem>>, %arg20: memref<1x128xf32, #tpu.memory_space<vmem>>, %arg21: memref<2x8x128xf32, #tpu.memory_space<vmem>>, %arg22: memref<16x32xf32, #tpu.memory_space<vmem>>, %arg23: memref<16x32xf32, #tpu.memory_space<vmem>>) attributes {dimension_semantics = [#tpu.dimension_semantics<parallel>, #tpu.dimension_semantics<arbitrary>], iteration_bounds = array<i64: 1, 2>, scalar_prefetch = 0 : i64, scratch_operands = 2 : i64, tpu.core_type = #tpu.core_type<tc>, window_params = [{transform_indices = @transform_0, window_bounds = array<i64: 2, 8, 16>}, {transform_indices = @transform_1, window_bounds = array<i64: 8, 32>}, {pipeline_mode = #tpu.pipeline_mode<synchronous>, transform_indices = @transform_2, window_bounds = array<i64: 32, 32>}, {pipeline_mode = #tpu.pipeline_mode<synchronous>, transform_indices = @transform_3, window_bounds = array<i64: 16, 32>}, {pipeline_mode = #tpu.pipeline_mode<synchronous>, transform_indices = @transform_4, window_bounds = array<i64: 1, 32>}, {transform_indices = @transform_5, window_bounds = array<i64: 1, 32, 96>}, {transform_indices = @transform_6, window_bounds = array<i64: 1, 1, 96>}, {transform_indices = @transform_7, window_bounds = array<i64: 1, 32, 32>}, {transform_indices = @transform_8, window_bounds = array<i64: 1, 1, 32>}, {transform_indices = @transform_9, window_bounds = array<i64: 1, 1, 32>}, {transform_indices = @transform_10, window_bounds = array<i64: 1, 1, 32>}, {transform_indices = @transform_11, window_bounds = array<i64: 1, 1, 32>}, {transform_indices = @transform_12, window_bounds = array<i64: 1, 1, 32>}, {transform_indices = @transform_13, window_bounds = array<i64: 1, 32, 2048>}, {transform_indices = @transform_14, window_bounds = array<i64: 1, 1, 2048>}, {transform_indices = @transform_15, window_bounds = array<i64: 1, 2048, 32>}, {transform_indices = @transform_16, window_bounds = array<i64: 1, 1, 32>}, {pipeline_mode = #tpu.pipeline_mode<synchronous>, transform_indices = @transform_17, window_bounds = array<i64: 32, 128>}, {pipeline_mode = #tpu.pipeline_mode<synchronous>, transform_indices = @transform_18, window_bounds = array<i64: 1, 128>}, {transform_indices = @transform_19, window_bounds = array<i64: 2, 8, 128>}]} {
    %c0_i32 = arith.constant 0 : i32
    %0 = arith.cmpi eq, %arg1, %c0_i32 : i32
    %1 = arith.extui %0 : i1 to i32
    %c0_i32_0 = arith.constant 0 : i32
    %2 = arith.cmpi ne, %1, %c0_i32_0 : i32
    scf.if %2 {
      %c0_68 = arith.constant 0 : index
      %c0_69 = arith.constant 0 : index
      %c0_70 = arith.constant 0 : index
      %147 = vector.load %arg2[%c0_68, %c0_69, %c0_70] : memref<2x8x16xf32, #tpu.memory_space<vmem>>, vector<2x8x16xf32>
      %148 = vector.shape_cast %147 : vector<2x8x16xf32> to vector<16x16xf32>
      %c0_71 = arith.constant 0 : index
      %c0_72 = arith.constant 0 : index
      %149 = vector.load %arg5[%c0_71, %c0_72] : memref<16x32xbf16, #tpu.memory_space<vmem>>, vector<16x32xbf16>
      %150 = arith.truncf %148 : vector<16x16xf32> to vector<16x16xbf16>
      %cst_73 = arith.constant dense<0.000000e+00> : vector<16x32xf32>
      %151 = tpu.matmul %150, %149, %cst_73 {dimension_numbers = #tpu.dot_dimension_numbers<[1], [0], [0], [1], [0, 0, 1, 1], [], []>} : vector<16x16xbf16>, vector<16x32xbf16>, vector<16x32xf32> -> vector<16x32xf32>
      %c0_74 = arith.constant 0 : index
      %c0_75 = arith.constant 0 : index
      %152 = vector.load %arg6[%c0_74, %c0_75] : memref<1x32xf32, #tpu.memory_space<vmem>>, vector<1x32xf32>
      %153 = vector.broadcast %152 : vector<1x32xf32> to vector<16x32xf32>
      %154 = arith.addf %151, %153 : vector<16x32xf32>
      %155 = vector.shape_cast %154 : vector<16x32xf32> to vector<2x8x32xf32>
      %c0_76 = arith.constant 0 : index
      %c0_77 = arith.constant 0 : index
      %156 = vector.load %arg3[%c0_76, %c0_77] : memref<8x32xf32, #tpu.memory_space<vmem>>, vector<8x32xf32>
      %157 = vector.shape_cast %156 : vector<8x32xf32> to vector<1x8x32xf32>
      %158 = vector.broadcast %157 : vector<1x8x32xf32> to vector<2x8x32xf32>
      %159 = arith.addf %155, %158 : vector<2x8x32xf32>
      %160 = vector.shape_cast %159 : vector<2x8x32xf32> to vector<16x32xf32>
      %c0_78 = arith.constant 0 : index
      %c0_79 = arith.constant 0 : index
      %161 = vector.load %arg22[%c0_78, %c0_79] : memref<16x32xf32, #tpu.memory_space<vmem>>, vector<16x32xf32>
      tpu.vector_store %arg22[%c0_78, %c0_79], %160 {strides = array<i32>} : memref<16x32xf32, #tpu.memory_space<vmem>>, vector<16x32xf32>,
    } else {
    }
    %c0 = arith.constant 0 : index
    %c0_1 = arith.constant 0 : index
    %3 = vector.load %arg22[%c0, %c0_1] : memref<16x32xf32, #tpu.memory_space<vmem>>, vector<16x32xf32>
    %c0_2 = arith.constant 0 : index
    %c0_3 = arith.constant 0 : index
    %4 = vector.load %arg4[%c0_2, %c0_3] : memref<32x32xbf16, #tpu.memory_space<vmem>>, vector<32x32xbf16>
    %c0_4 = arith.constant 0 : index
    %c0_5 = arith.constant 0 : index
    %c0_6 = arith.constant 0 : index
    %5 = vector.load %arg7[%c0_4, %c0_5, %c0_6] : memref<1x32x96xbf16, #tpu.memory_space<vmem>>, vector<1x32x96xbf16>
    %6 = vector.shape_cast %5 : vector<1x32x96xbf16> to vector<32x96xbf16>
    %7 = arith.truncf %3 : vector<16x32xf32> to vector<16x32xbf16>
    %cst = arith.constant dense<0.000000e+00> : vector<16x96xf32>
    %8 = tpu.matmul %7, %6, %cst {dimension_numbers = #tpu.dot_dimension_numbers<[1], [0], [0], [1], [0, 0, 1, 1], [], []>} : vector<16x32xbf16>, vector<32x96xbf16>, vector<16x96xf32> -> vector<16x96xf32>
    %c0_7 = arith.constant 0 : index
    %c0_8 = arith.constant 0 : index
    %c0_9 = arith.constant 0 : index
    %9 = vector.load %arg8[%c0_7, %c0_8, %c0_9] : memref<1x1x96xf32, #tpu.memory_space<vmem>>, vector<1x1x96xf32>
    %10 = vector.shape_cast %9 : vector<1x1x96xf32> to vector<1x96xf32>
    %11 = vector.broadcast %10 : vector<1x96xf32> to vector<16x96xf32>
    %12 = arith.addf %8, %11 : vector<16x96xf32>
    %13 = vector.extract_strided_slice %12 {offsets = [0, 0], sizes = [16, 32], strides = [1, 1]} : vector<16x96xf32> to vector<16x32xf32>
    %14 = vector.extract_strided_slice %12 {offsets = [0, 32], sizes = [16, 32], strides = [1, 1]} : vector<16x96xf32> to vector<16x32xf32>
    %15 = vector.extract_strided_slice %12 {offsets = [0, 64], sizes = [16, 32], strides = [1, 1]} : vector<16x96xf32> to vector<16x32xf32>
    %16 = vector.extract_strided_slice %13 {offsets = [0, 0], sizes = [8, 32], strides = [1, 1]} : vector<16x32xf32> to vector<8x32xf32>
    %cst_10 = arith.constant 0.353553385 : f32
    %17 = vector.broadcast %cst_10 : f32 to vector<8x32xf32>
    %18 = arith.mulf %16, %17 : vector<8x32xf32>
    %19 = vector.extract_strided_slice %14 {offsets = [0, 0], sizes = [8, 32], strides = [1, 1]} : vector<16x32xf32> to vector<8x32xf32>
    %20 = arith.mulf %18, %19 : vector<8x32xf32>
    %21 = arith.truncf %20 : vector<8x32xf32> to vector<8x32xbf16>
    %cst_11 = arith.constant dense<0.000000e+00> : vector<8x32xf32>
    %22 = tpu.matmul %21, %4, %cst_11 {dimension_numbers = #tpu.dot_dimension_numbers<[1], [0], [0], [1], [0, 0, 1, 1], [], []>} : vector<8x32xbf16>, vector<32x32xbf16>, vector<8x32xf32> -> vector<8x32xf32>
    %23 = vector.extract_strided_slice %14 {offsets = [8, 0], sizes = [8, 32], strides = [1, 1]} : vector<16x32xf32> to vector<8x32xf32>
    %24 = arith.mulf %18, %23 : vector<8x32xf32>
    %25 = arith.truncf %24 : vector<8x32xf32> to vector<8x32xbf16>
    %cst_12 = arith.constant dense<0.000000e+00> : vector<8x32xf32>
    %26 = tpu.matmul %25, %4, %cst_12 {dimension_numbers = #tpu.dot_dimension_numbers<[1], [0], [0], [1], [0, 0, 1, 1], [], []>} : vector<8x32xbf16>, vector<32x32xbf16>, vector<8x32xf32> -> vector<8x32xf32>
    %27 = arith.maximumf %22, %26 : vector<8x32xf32>
    %28 = arith.subf %22, %27 : vector<8x32xf32>
    %29 = math.exp %28 : vector<8x32xf32>
    %30 = vector.extract_strided_slice %15 {offsets = [0, 0], sizes = [8, 32], strides = [1, 1]} : vector<16x32xf32> to vector<8x32xf32>
    %31 = arith.mulf %29, %30 : vector<8x32xf32>
    %32 = arith.subf %26, %27 : vector<8x32xf32>
    %33 = math.exp %32 : vector<8x32xf32>
    %34 = vector.extract_strided_slice %15 {offsets = [8, 0], sizes = [8, 32], strides = [1, 1]} : vector<16x32xf32> to vector<8x32xf32>
    %35 = arith.mulf %33, %34 : vector<8x32xf32>
    %36 = arith.addf %31, %35 : vector<8x32xf32>
    %37 = arith.addf %29, %33 : vector<8x32xf32>
    %38 = tpu.reciprocal %37 {approx = true} : vector<8x32xf32> -> vector<8x32xf32>
    %39 = arith.mulf %36, %38 : vector<8x32xf32>
    %c0_13 = arith.constant 0 : index
    %c0_14 = arith.constant 0 : index
    %40 = vector.load %arg23[%c0_13, %c0_14] : memref<16x32xf32, #tpu.memory_space<vmem>>, vector<8x32xf32>
    tpu.vector_store %arg23[%c0_13, %c0_14], %39 {strides = array<i32>} : memref<16x32xf32, #tpu.memory_space<vmem>>, vector<8x32xf32>,
    %41 = vector.extract_strided_slice %13 {offsets = [8, 0], sizes = [8, 32], strides = [1, 1]} : vector<16x32xf32> to vector<8x32xf32>
    %cst_15 = arith.constant 0.353553385 : f32
    %42 = vector.broadcast %cst_15 : f32 to vector<8x32xf32>
    %43 = arith.mulf %41, %42 : vector<8x32xf32>
    %44 = vector.extract_strided_slice %14 {offsets = [0, 0], sizes = [8, 32], strides = [1, 1]} : vector<16x32xf32> to vector<8x32xf32>
    %45 = arith.mulf %43, %44 : vector<8x32xf32>
    %46 = arith.truncf %45 : vector<8x32xf32> to vector<8x32xbf16>
    %cst_16 = arith.constant dense<0.000000e+00> : vector<8x32xf32>
    %47 = tpu.matmul %46, %4, %cst_16 {dimension_numbers = #tpu.dot_dimension_numbers<[1], [0], [0], [1], [0, 0, 1, 1], [], []>} : vector<8x32xbf16>, vector<32x32xbf16>, vector<8x32xf32> -> vector<8x32xf32>
    %48 = vector.extract_strided_slice %14 {offsets = [8, 0], sizes = [8, 32], strides = [1, 1]} : vector<16x32xf32> to vector<8x32xf32>
    %49 = arith.mulf %43, %48 : vector<8x32xf32>
    %50 = arith.truncf %49 : vector<8x32xf32> to vector<8x32xbf16>
    %cst_17 = arith.constant dense<0.000000e+00> : vector<8x32xf32>
    %51 = tpu.matmul %50, %4, %cst_17 {dimension_numbers = #tpu.dot_dimension_numbers<[1], [0], [0], [1], [0, 0, 1, 1], [], []>} : vector<8x32xbf16>, vector<32x32xbf16>, vector<8x32xf32> -> vector<8x32xf32>
    %52 = arith.maximumf %47, %51 : vector<8x32xf32>
    %53 = arith.subf %47, %52 : vector<8x32xf32>
    %54 = math.exp %53 : vector<8x32xf32>
    %55 = vector.extract_strided_slice %15 {offsets = [0, 0], sizes = [8, 32], strides = [1, 1]} : vector<16x32xf32> to vector<8x32xf32>
    %56 = arith.mulf %54, %55 : vector<8x32xf32>
    %57 = arith.subf %51, %52 : vector<8x32xf32>
    %58 = math.exp %57 : vector<8x32xf32>
    %59 = vector.extract_strided_slice %15 {offsets = [8, 0], sizes = [8, 32], strides = [1, 1]} : vector<16x32xf32> to vector<8x32xf32>
    %60 = arith.mulf %58, %59 : vector<8x32xf32>
    %61 = arith.addf %56, %60 : vector<8x32xf32>
    %62 = arith.addf %54, %58 : vector<8x32xf32>
    %63 = tpu.reciprocal %62 {approx = true} : vector<8x32xf32> -> vector<8x32xf32>
    %64 = arith.mulf %61, %63 : vector<8x32xf32>
    %c8 = arith.constant 8 : index
    %c0_18 = arith.constant 0 : index
    %65 = vector.load %arg23[%c8, %c0_18] : memref<16x32xf32, #tpu.memory_space<vmem>>, vector<8x32xf32>
    tpu.vector_store %arg23[%c8, %c0_18], %64 {strides = array<i32>} : memref<16x32xf32, #tpu.memory_space<vmem>>, vector<8x32xf32>,
    %c0_19 = arith.constant 0 : index
    %c0_20 = arith.constant 0 : index
    %66 = vector.load %arg23[%c0_19, %c0_20] : memref<16x32xf32, #tpu.memory_space<vmem>>, vector<16x32xf32>
    %c0_21 = arith.constant 0 : index
    %c0_22 = arith.constant 0 : index
    %c0_23 = arith.constant 0 : index
    %67 = vector.load %arg9[%c0_21, %c0_22, %c0_23] : memref<1x32x32xbf16, #tpu.memory_space<vmem>>, vector<1x32x32xbf16>
    %68 = vector.shape_cast %67 : vector<1x32x32xbf16> to vector<32x32xbf16>
    %69 = arith.truncf %66 : vector<16x32xf32> to vector<16x32xbf16>
    %cst_24 = arith.constant dense<0.000000e+00> : vector<16x32xf32>
    %70 = tpu.matmul %69, %68, %cst_24 {dimension_numbers = #tpu.dot_dimension_numbers<[1], [0], [0], [1], [0, 0, 1, 1], [], []>} : vector<16x32xbf16>, vector<32x32xbf16>, vector<16x32xf32> -> vector<16x32xf32>
    %c0_25 = arith.constant 0 : index
    %c0_26 = arith.constant 0 : index
    %c0_27 = arith.constant 0 : index
    %71 = vector.load %arg10[%c0_25, %c0_26, %c0_27] : memref<1x1x32xf32, #tpu.memory_space<vmem>>, vector<1x1x32xf32>
    %72 = vector.shape_cast %71 : vector<1x1x32xf32> to vector<1x32xf32>
    %73 = vector.broadcast %72 : vector<1x32xf32> to vector<16x32xf32>
    %74 = arith.addf %70, %73 : vector<16x32xf32>
    %75 = arith.addf %3, %74 : vector<16x32xf32>
    %c0_28 = arith.constant 0 : index
    %c0_29 = arith.constant 0 : index
    %c0_30 = arith.constant 0 : index
    %76 = vector.load %arg11[%c0_28, %c0_29, %c0_30] : memref<1x1x32xf32, #tpu.memory_space<vmem>>, vector<1x1x32xf32>
    %77 = vector.shape_cast %76 : vector<1x1x32xf32> to vector<1x32xf32>
    %c0_31 = arith.constant 0 : index
    %c0_32 = arith.constant 0 : index
    %c0_33 = arith.constant 0 : index
    %78 = vector.load %arg12[%c0_31, %c0_32, %c0_33] : memref<1x1x32xf32, #tpu.memory_space<vmem>>, vector<1x1x32xf32>
    %79 = vector.shape_cast %78 : vector<1x1x32xf32> to vector<1x32xf32>
    %cst_34 = arith.constant dense<0.000000e+00> : vector<16xf32>
    %80 = vector.multi_reduction <add>, %75, %cst_34 [1] : vector<16x32xf32> to vector<16xf32>
    %81 = vector.shape_cast %80 : vector<16xf32> to vector<16x1xf32>
    %cst_35 = arith.constant 3.200000e+01 : f32
    %82 = vector.broadcast %cst_35 : f32 to vector<16x1xf32>
    %83 = arith.divf %81, %82 : vector<16x1xf32>
    %84 = vector.broadcast %83 : vector<16x1xf32> to vector<16x32xf32>
    %85 = arith.subf %75, %84 : vector<16x32xf32>
    %86 = arith.mulf %85, %85 : vector<16x32xf32>
    %cst_36 = arith.constant dense<0.000000e+00> : vector<16xf32>
    %87 = vector.multi_reduction <add>, %86, %cst_36 [1] : vector<16x32xf32> to vector<16xf32>
    %88 = vector.shape_cast %87 : vector<16xf32> to vector<16x1xf32>
    %cst_37 = arith.constant 3.200000e+01 : f32
    %89 = vector.broadcast %cst_37 : f32 to vector<16x1xf32>
    %90 = arith.divf %88, %89 : vector<16x1xf32>
    %cst_38 = arith.constant 9.99999974E-6 : f32
    %91 = vector.broadcast %cst_38 : f32 to vector<16x1xf32>
    %92 = arith.addf %90, %91 : vector<16x1xf32>
    %93 = math.rsqrt %92 : vector<16x1xf32>
    %94 = vector.broadcast %93 : vector<16x1xf32> to vector<16x32xf32>
    %95 = arith.mulf %85, %94 : vector<16x32xf32>
    %96 = vector.broadcast %77 : vector<1x32xf32> to vector<16x32xf32>
    %97 = arith.mulf %95, %96 : vector<16x32xf32>
    %98 = vector.broadcast %79 : vector<1x32xf32> to vector<16x32xf32>
    %99 = arith.addf %97, %98 : vector<16x32xf32>
    %c0_39 = arith.constant 0 : index
    %c0_40 = arith.constant 0 : index
    %c0_41 = arith.constant 0 : index
    %100 = vector.load %arg15[%c0_39, %c0_40, %c0_41] : memref<1x32x2048xbf16, #tpu.memory_space<vmem>>, vector<1x32x2048xbf16>
    %101 = vector.shape_cast %100 : vector<1x32x2048xbf16> to vector<32x2048xbf16>
    %102 = arith.truncf %99 : vector<16x32xf32> to vector<16x32xbf16>
    %cst_42 = arith.constant dense<0.000000e+00> : vector<16x2048xf32>
    %103 = tpu.matmul %102, %101, %cst_42 {dimension_numbers = #tpu.dot_dimension_numbers<[1], [0], [0], [1], [0, 0, 1, 1], [], []>} : vector<16x32xbf16>, vector<32x2048xbf16>, vector<16x2048xf32> -> vector<16x2048xf32>
    %c0_43 = arith.constant 0 : index
    %c0_44 = arith.constant 0 : index
    %c0_45 = arith.constant 0 : index
    %104 = vector.load %arg16[%c0_43, %c0_44, %c0_45] : memref<1x1x2048xf32, #tpu.memory_space<vmem>>, vector<1x1x2048xf32>
    %105 = vector.shape_cast %104 : vector<1x1x2048xf32> to vector<1x2048xf32>
    %106 = vector.broadcast %105 : vector<1x2048xf32> to vector<16x2048xf32>
    %107 = arith.addf %103, %106 : vector<16x2048xf32>
    %cst_46 = arith.constant 0.000000e+00 : f32
    %108 = vector.broadcast %cst_46 : f32 to vector<16x2048xf32>
    %109 = arith.maximumf %107, %108 : vector<16x2048xf32>
    %c0_47 = arith.constant 0 : index
    %c0_48 = arith.constant 0 : index
    %c0_49 = arith.constant 0 : index
    %110 = vector.load %arg17[%c0_47, %c0_48, %c0_49] : memref<1x2048x32xbf16, #tpu.memory_space<vmem>>, vector<1x2048x32xbf16>
    %111 = vector.shape_cast %110 : vector<1x2048x32xbf16> to vector<2048x32xbf16>
    %112 = arith.truncf %109 : vector<16x2048xf32> to vector<16x2048xbf16>
    %cst_50 = arith.constant dense<0.000000e+00> : vector<16x32xf32>
    %113 = tpu.matmul %112, %111, %cst_50 {dimension_numbers = #tpu.dot_dimension_numbers<[1], [0], [0], [1], [0, 0, 1, 1], [], []>} : vector<16x2048xbf16>, vector<2048x32xbf16>, vector<16x32xf32> -> vector<16x32xf32>
    %c0_51 = arith.constant 0 : index
    %c0_52 = arith.constant 0 : index
    %c0_53 = arith.constant 0 : index
    %114 = vector.load %arg18[%c0_51, %c0_52, %c0_53] : memref<1x1x32xf32, #tpu.memory_space<vmem>>, vector<1x1x32xf32>
    %115 = vector.shape_cast %114 : vector<1x1x32xf32> to vector<1x32xf32>
    %116 = vector.broadcast %115 : vector<1x32xf32> to vector<16x32xf32>
    %117 = arith.addf %113, %116 : vector<16x32xf32>
    %118 = arith.addf %99, %117 : vector<16x32xf32>
    %c0_54 = arith.constant 0 : index
    %c0_55 = arith.constant 0 : index
    %c0_56 = arith.constant 0 : index
    %119 = vector.load %arg13[%c0_54, %c0_55, %c0_56] : memref<1x1x32xf32, #tpu.memory_space<vmem>>, vector<1x1x32xf32>
    %120 = vector.shape_cast %119 : vector<1x1x32xf32> to vector<1x32xf32>
    %c0_57 = arith.constant 0 : index
    %c0_58 = arith.constant 0 : index
    %c0_59 = arith.constant 0 : index
    %121 = vector.load %arg14[%c0_57, %c0_58, %c0_59] : memref<1x1x32xf32, #tpu.memory_space<vmem>>, vector<1x1x32xf32>
    %122 = vector.shape_cast %121 : vector<1x1x32xf32> to vector<1x32xf32>
    %cst_60 = arith.constant dense<0.000000e+00> : vector<16xf32>
    %123 = vector.multi_reduction <add>, %118, %cst_60 [1] : vector<16x32xf32> to vector<16xf32>
    %124 = vector.shape_cast %123 : vector<16xf32> to vector<16x1xf32>
    %cst_61 = arith.constant 3.200000e+01 : f32
    %125 = vector.broadcast %cst_61 : f32 to vector<16x1xf32>
    %126 = arith.divf %124, %125 : vector<16x1xf32>
    %127 = vector.broadcast %126 : vector<16x1xf32> to vector<16x32xf32>
    %128 = arith.subf %118, %127 : vector<16x32xf32>
    %129 = arith.mulf %128, %128 : vector<16x32xf32>
    %cst_62 = arith.constant dense<0.000000e+00> : vector<16xf32>
    %130 = vector.multi_reduction <add>, %129, %cst_62 [1] : vector<16x32xf32> to vector<16xf32>
    %131 = vector.shape_cast %130 : vector<16xf32> to vector<16x1xf32>
    %cst_63 = arith.constant 3.200000e+01 : f32
    %132 = vector.broadcast %cst_63 : f32 to vector<16x1xf32>
    %133 = arith.divf %131, %132 : vector<16x1xf32>
    %cst_64 = arith.constant 9.99999974E-6 : f32
    %134 = vector.broadcast %cst_64 : f32 to vector<16x1xf32>
    %135 = arith.addf %133, %134 : vector<16x1xf32>
    %136 = math.rsqrt %135 : vector<16x1xf32>
    %137 = vector.broadcast %136 : vector<16x1xf32> to vector<16x32xf32>
    %138 = arith.mulf %128, %137 : vector<16x32xf32>
    %139 = vector.broadcast %120 : vector<1x32xf32> to vector<16x32xf32>
    %140 = arith.mulf %138, %139 : vector<16x32xf32>
    %141 = vector.broadcast %122 : vector<1x32xf32> to vector<16x32xf32>
    %142 = arith.addf %140, %141 : vector<16x32xf32>
    %c0_65 = arith.constant 0 : index
    %c0_66 = arith.constant 0 : index
    %143 = vector.load %arg22[%c0_65, %c0_66] : memref<16x32xf32, #tpu.memory_space<vmem>>, vector<16x32xf32>
    tpu.vector_store %arg22[%c0_65, %c0_66], %142 {strides = array<i32>} : memref<16x32xf32, #tpu.memory_space<vmem>>, vector<16x32xf32>,
    %c1_i32 = arith.constant 1 : i32
    %144 = arith.cmpi eq, %arg1, %c1_i32 : i32
    %145 = arith.extui %144 : i1 to i32
    %c0_i32_67 = arith.constant 0 : i32
    %146 = arith.cmpi ne, %145, %c0_i32_67 : i32
    scf.if %146 {
      %c0_68 = arith.constant 0 : index
      %c0_69 = arith.constant 0 : index
      %147 = vector.load %arg19[%c0_68, %c0_69] : memref<32x128xbf16, #tpu.memory_space<vmem>>, vector<32x128xbf16>
      %148 = arith.truncf %142 : vector<16x32xf32> to vector<16x32xbf16>
      %cst_70 = arith.constant dense<0.000000e+00> : vector<16x128xf32>
      %149 = tpu.matmul %148, %147, %cst_70 {dimension_numbers = #tpu.dot_dimension_numbers<[1], [0], [0], [1], [0, 0, 1, 1], [], []>} : vector<16x32xbf16>, vector<32x128xbf16>, vector<16x128xf32> -> vector<16x128xf32>
      %c0_71 = arith.constant 0 : index
      %c0_72 = arith.constant 0 : index
      %150 = vector.load %arg20[%c0_71, %c0_72] : memref<1x128xf32, #tpu.memory_space<vmem>>, vector<1x128xf32>
      %151 = vector.broadcast %150 : vector<1x128xf32> to vector<16x128xf32>
      %152 = arith.addf %149, %151 : vector<16x128xf32>
      %153 = vector.shape_cast %152 : vector<16x128xf32> to vector<2x8x128xf32>
      %c0_73 = arith.constant 0 : index
      %c0_74 = arith.constant 0 : index
      %c0_75 = arith.constant 0 : index
      %154 = vector.load %arg21[%c0_73, %c0_74, %c0_75] : memref<2x8x128xf32, #tpu.memory_space<vmem>>, vector<2x8x128xf32>
      tpu.vector_store %arg21[%c0_73, %c0_74, %c0_75], %153 {strides = array<i32>} : memref<2x8x128xf32, #tpu.memory_space<vmem>>, vector<2x8x128xf32>,
    } else {
    }
    return
  }
  func.func @transform_0(%arg0: i32, %arg1: i32) -> (i32, i32, i32) {
    %c0_i32 = arith.constant 0 : i32
    %c0_i32_0 = arith.constant 0 : i32
    %c0_i32_1 = arith.constant 0 : i32
    return %c0_i32, %arg0, %c0_i32_0 : i32, i32, i32
  }
  func.func @transform_1(%arg0: i32, %arg1: i32) -> (i32, i32) {
    %c0_i32 = arith.constant 0 : i32
    %c0_i32_0 = arith.constant 0 : i32
    return %arg0, %c0_i32 : i32, i32
  }
  func.func @transform_2(%arg0: i32, %arg1: i32) -> (i32, i32) {
    %c0_i32 = arith.constant 0 : i32
    %c0_i32_0 = arith.constant 0 : i32
    %c0_i32_1 = arith.constant 0 : i32
    return %c0_i32, %c0_i32_0 : i32, i32
  }
  func.func @transform_3(%arg0: i32, %arg1: i32) -> (i32, i32) {
    %c0_i32 = arith.constant 0 : i32
    %c0_i32_0 = arith.constant 0 : i32
    %c0_i32_1 = arith.constant 0 : i32
    return %c0_i32, %c0_i32_0 : i32, i32
  }
  func.func @transform_4(%arg0: i32, %arg1: i32) -> (i32, i32) {
    %c0_i32 = arith.constant 0 : i32
    %c0_i32_0 = arith.constant 0 : i32
    %c0_i32_1 = arith.constant 0 : i32
    return %c0_i32, %c0_i32_0 : i32, i32
  }
  func.func @transform_5(%arg0: i32, %arg1: i32) -> (i32, i32, i32) {
    %c0_i32 = arith.constant 0 : i32
    %c0_i32_0 = arith.constant 0 : i32
    %c0_i32_1 = arith.constant 0 : i32
    return %arg1, %c0_i32, %c0_i32_0 : i32, i32, i32
  }
  func.func @transform_6(%arg0: i32, %arg1: i32) -> (i32, i32, i32) {
    %c0_i32 = arith.constant 0 : i32
    %c0_i32_0 = arith.constant 0 : i32
    %c0_i32_1 = arith.constant 0 : i32
    return %arg1, %c0_i32, %c0_i32_0 : i32, i32, i32
  }
  func.func @transform_7(%arg0: i32, %arg1: i32) -> (i32, i32, i32) {
    %c0_i32 = arith.constant 0 : i32
    %c0_i32_0 = arith.constant 0 : i32
    %c0_i32_1 = arith.constant 0 : i32
    return %arg1, %c0_i32, %c0_i32_0 : i32, i32, i32
  }
  func.func @transform_8(%arg0: i32, %arg1: i32) -> (i32, i32, i32) {
    %c0_i32 = arith.constant 0 : i32
    %c0_i32_0 = arith.constant 0 : i32
    %c0_i32_1 = arith.constant 0 : i32
    return %arg1, %c0_i32, %c0_i32_0 : i32, i32, i32
  }
  func.func @transform_9(%arg0: i32, %arg1: i32) -> (i32, i32, i32) {
    %c0_i32 = arith.constant 0 : i32
    %c0_i32_0 = arith.constant 0 : i32
    %c0_i32_1 = arith.constant 0 : i32
    return %arg1, %c0_i32, %c0_i32_0 : i32, i32, i32
  }
  func.func @transform_10(%arg0: i32, %arg1: i32) -> (i32, i32, i32) {
    %c0_i32 = arith.constant 0 : i32
    %c0_i32_0 = arith.constant 0 : i32
    %c0_i32_1 = arith.constant 0 : i32
    return %arg1, %c0_i32, %c0_i32_0 : i32, i32, i32
  }
  func.func @transform_11(%arg0: i32, %arg1: i32) -> (i32, i32, i32) {
    %c0_i32 = arith.constant 0 : i32
    %c0_i32_0 = arith.constant 0 : i32
    %c0_i32_1 = arith.constant 0 : i32
    return %arg1, %c0_i32, %c0_i32_0 : i32, i32, i32
  }
  func.func @transform_12(%arg0: i32, %arg1: i32) -> (i32, i32, i32) {
    %c0_i32 = arith.constant 0 : i32
    %c0_i32_0 = arith.constant 0 : i32
    %c0_i32_1 = arith.constant 0 : i32
    return %arg1, %c0_i32, %c0_i32_0 : i32, i32, i32
  }
  func.func @transform_13(%arg0: i32, %arg1: i32) -> (i32, i32, i32) {
    %c0_i32 = arith.constant 0 : i32
    %c0_i32_0 = arith.constant 0 : i32
    %c0_i32_1 = arith.constant 0 : i32
    return %arg1, %c0_i32, %c0_i32_0 : i32, i32, i32
  }
  func.func @transform_14(%arg0: i32, %arg1: i32) -> (i32, i32, i32) {
    %c0_i32 = arith.constant 0 : i32
    %c0_i32_0 = arith.constant 0 : i32
    %c0_i32_1 = arith.constant 0 : i32
    return %arg1, %c0_i32, %c0_i32_0 : i32, i32, i32
  }
  func.func @transform_15(%arg0: i32, %arg1: i32) -> (i32, i32, i32) {
    %c0_i32 = arith.constant 0 : i32
    %c0_i32_0 = arith.constant 0 : i32
    %c0_i32_1 = arith.constant 0 : i32
    return %arg1, %c0_i32, %c0_i32_0 : i32, i32, i32
  }
  func.func @transform_16(%arg0: i32, %arg1: i32) -> (i32, i32, i32) {
    %c0_i32 = arith.constant 0 : i32
    %c0_i32_0 = arith.constant 0 : i32
    %c0_i32_1 = arith.constant 0 : i32
    return %arg1, %c0_i32, %c0_i32_0 : i32, i32, i32
  }
  func.func @transform_17(%arg0: i32, %arg1: i32) -> (i32, i32) {
    %c0_i32 = arith.constant 0 : i32
    %c0_i32_0 = arith.constant 0 : i32
    %c0_i32_1 = arith.constant 0 : i32
    return %c0_i32, %c0_i32_0 : i32, i32
  }
  func.func @transform_18(%arg0: i32, %arg1: i32) -> (i32, i32) {
    %c0_i32 = arith.constant 0 : i32
    %c0_i32_0 = arith.constant 0 : i32
    %c0_i32_1 = arith.constant 0 : i32
    return %c0_i32, %c0_i32_0 : i32, i32
  }
  func.func @transform_19(%arg0: i32, %arg1: i32) -> (i32, i32, i32) {
    %c0_i32 = arith.constant 0 : i32
    %c0_i32_0 = arith.constant 0 : i32
    %c0_i32_1 = arith.constant 0 : i32
    return %c0_i32, %arg0, %c0_i32_0 : i32, i32, i32
  }
}

module attributes {stable_mosaic.version = 11 : i64} {
  func.func @_fused_forward_kernel(%arg0: i32, %arg1: i32, %arg2: memref<2x8x16xf32, #tpu.memory_space<vmem>>, %arg3: memref<8x32xf32, #tpu.memory_space<vmem>>, %arg4: memref<32x32xbf16, #tpu.memory_space<vmem>>, %arg5: memref<16x32xbf16, #tpu.memory_space<vmem>>, %arg6: memref<1x32xf32, #tpu.memory_space<vmem>>, %arg7: memref<1x32x96xbf16, #tpu.memory_space<vmem>>, %arg8: memref<1x1x96xf32, #tpu.memory_space<vmem>>, %arg9: memref<1x32x32xbf16, #tpu.memory_space<vmem>>, %arg10: memref<1x1x32xf32, #tpu.memory_space<vmem>>, %arg11: memref<1x1x32xf32, #tpu.memory_space<vmem>>, %arg12: memref<1x1x32xf32, #tpu.memory_space<vmem>>, %arg13: memref<1x1x32xf32, #tpu.memory_space<vmem>>, %arg14: memref<1x1x32xf32, #tpu.memory_space<vmem>>, %arg15: memref<1x32x2048xbf16, #tpu.memory_space<vmem>>, %arg16: memref<1x1x2048xf32, #tpu.memory_space<vmem>>, %arg17: memref<1x2048x32xbf16, #tpu.memory_space<vmem>>, %arg18: memref<1x1x32xf32, #tpu.memory_space<vmem>>, %arg19: memref<32x128xbf16, #tpu.memory_space<vmem>>, %arg20: memref<1x128xf32, #tpu.memory_space<vmem>>, %arg21: memref<2x8x128xf32, #tpu.memory_space<vmem>>, %arg22: memref<16x32xf32, #tpu.memory_space<vmem>>, %arg23: memref<16x32xf32, #tpu.memory_space<vmem>>) attributes {dimension_semantics = [#tpu.dimension_semantics<parallel>, #tpu.dimension_semantics<arbitrary>], iteration_bounds = array<i64: 1, 2>, scalar_prefetch = 0 : i64, scratch_operands = 2 : i64, tpu.core_type = #tpu.core_type<tc>, window_params = [{transform_indices = @transform_0, window_bounds = array<i64: 2, 8, 16>}, {transform_indices = @transform_1, window_bounds = array<i64: 8, 32>}, {pipeline_mode = #tpu.pipeline_mode<synchronous>, transform_indices = @transform_2, window_bounds = array<i64: 32, 32>}, {pipeline_mode = #tpu.pipeline_mode<synchronous>, transform_indices = @transform_3, window_bounds = array<i64: 16, 32>}, {pipeline_mode = #tpu.pipeline_mode<synchronous>, transform_indices = @transform_4, window_bounds = array<i64: 1, 32>}, {transform_indices = @transform_5, window_bounds = array<i64: 1, 32, 96>}, {transform_indices = @transform_6, window_bounds = array<i64: 1, 1, 96>}, {transform_indices = @transform_7, window_bounds = array<i64: 1, 32, 32>}, {transform_indices = @transform_8, window_bounds = array<i64: 1, 1, 32>}, {transform_indices = @transform_9, window_bounds = array<i64: 1, 1, 32>}, {transform_indices = @transform_10, window_bounds = array<i64: 1, 1, 32>}, {transform_indices = @transform_11, window_bounds = array<i64: 1, 1, 32>}, {transform_indices = @transform_12, window_bounds = array<i64: 1, 1, 32>}, {transform_indices = @transform_13, window_bounds = array<i64: 1, 32, 2048>}, {transform_indices = @transform_14, window_bounds = array<i64: 1, 1, 2048>}, {transform_indices = @transform_15, window_bounds = array<i64: 1, 2048, 32>}, {transform_indices = @transform_16, window_bounds = array<i64: 1, 1, 32>}, {pipeline_mode = #tpu.pipeline_mode<synchronous>, transform_indices = @transform_17, window_bounds = array<i64: 32, 128>}, {pipeline_mode = #tpu.pipeline_mode<synchronous>, transform_indices = @transform_18, window_bounds = array<i64: 1, 128>}, {transform_indices = @transform_19, window_bounds = array<i64: 2, 8, 128>}]} {
    %c0_i32 = arith.constant 0 : i32
    %0 = arith.cmpi eq, %arg1, %c0_i32 : i32
    %1 = arith.extui %0 : i1 to i32
    %c0_i32_0 = arith.constant 0 : i32
    %2 = arith.cmpi ne, %1, %c0_i32_0 : i32
    scf.if %2 {
      %c0_68 = arith.constant 0 : index
      %c0_69 = arith.constant 0 : index
      %c0_70 = arith.constant 0 : index
      %147 = vector.load %arg2[%c0_68, %c0_69, %c0_70] : memref<2x8x16xf32, #tpu.memory_space<vmem>>, vector<2x8x16xf32>
      %148 = vector.shape_cast %147 : vector<2x8x16xf32> to vector<16x16xf32>
      %c0_71 = arith.constant 0 : index
      %c0_72 = arith.constant 0 : index
      %149 = vector.load %arg5[%c0_71, %c0_72] : memref<16x32xbf16, #tpu.memory_space<vmem>>, vector<16x32xbf16>
      %150 = arith.truncf %148 : vector<16x16xf32> to vector<16x16xbf16>
      %cst_73 = arith.constant dense<0.000000e+00> : vector<16x32xf32>
      %151 = tpu.matmul %150, %149, %cst_73 {dimension_numbers = #tpu.dot_dimension_numbers<[1], [0], [0], [1], [0, 0, 1, 1], [], []>} : vector<16x16xbf16>, vector<16x32xbf16>, vector<16x32xf32> -> vector<16x32xf32>
      %c0_74 = arith.constant 0 : index
      %c0_75 = arith.constant 0 : index
      %152 = vector.load %arg6[%c0_74, %c0_75] : memref<1x32xf32, #tpu.memory_space<vmem>>, vector<1x32xf32>
      %153 = vector.broadcast %152 : vector<1x32xf32> to vector<16x32xf32>
      %154 = arith.addf %151, %153 : vector<16x32xf32>
      %155 = vector.shape_cast %154 : vector<16x32xf32> to vector<2x8x32xf32>
      %c0_76 = arith.constant 0 : index
      %c0_77 = arith.constant 0 : index
      %156 = vector.load %arg3[%c0_76, %c0_77] : memref<8x32xf32, #tpu.memory_space<vmem>>, vector<8x32xf32>
      %157 = vector.shape_cast %156 : vector<8x32xf32> to vector<1x8x32xf32>
      %158 = vector.broadcast %157 : vector<1x8x32xf32> to vector<2x8x32xf32>
      %159 = arith.addf %155, %158 : vector<2x8x32xf32>
      %160 = vector.shape_cast %159 : vector<2x8x32xf32> to vector<16x32xf32>
      %c0_78 = arith.constant 0 : index
      %c0_79 = arith.constant 0 : index
      %161 = vector.load %arg22[%c0_78, %c0_79] : memref<16x32xf32, #tpu.memory_space<vmem>>, vector<16x32xf32>
      tpu.vector_store %arg22[%c0_78, %c0_79], %160 {strides = array<i32>} : memref<16x32xf32, #tpu.memory_space<vmem>>, vector<16x32xf32>,
    } else {
    }
    %c0 = arith.constant 0 : index
    %c0_1 = arith.constant 0 : index
    %3 = vector.load %arg22[%c0, %c0_1] : memref<16x32xf32, #tpu.memory_space<vmem>>, vector<16x32xf32>
    %c0_2 = arith.constant 0 : index
    %c0_3 = arith.constant 0 : index
    %4 = vector.load %arg4[%c0_2, %c0_3] : memref<32x32xbf16, #tpu.memory_space<vmem>>, vector<32x32xbf16>
    %c0_4 = arith.constant 0 : index
    %c0_5 = arith.constant 0 : index
    %c0_6 = arith.constant 0 : index
    %5 = vector.load %arg7[%c0_4, %c0_5, %c0_6] : memref<1x32x96xbf16, #tpu.memory_space<vmem>>, vector<1x32x96xbf16>
    %6 = vector.shape_cast %5 : vector<1x32x96xbf16> to vector<32x96xbf16>
    %7 = arith.truncf %3 : vector<16x32xf32> to vector<16x32xbf16>
    %cst = arith.constant dense<0.000000e+00> : vector<16x96xf32>
    %8 = tpu.matmul %7, %6, %cst {dimension_numbers = #tpu.dot_dimension_numbers<[1], [0], [0], [1], [0, 0, 1, 1], [], []>} : vector<16x32xbf16>, vector<32x96xbf16>, vector<16x96xf32> -> vector<16x96xf32>
    %c0_7 = arith.constant 0 : index
    %c0_8 = arith.constant 0 : index
    %c0_9 = arith.constant 0 : index
    %9 = vector.load %arg8[%c0_7, %c0_8, %c0_9] : memref<1x1x96xf32, #tpu.memory_space<vmem>>, vector<1x1x96xf32>
    %10 = vector.shape_cast %9 : vector<1x1x96xf32> to vector<1x96xf32>
    %11 = vector.broadcast %10 : vector<1x96xf32> to vector<16x96xf32>
    %12 = arith.addf %8, %11 : vector<16x96xf32>
    %13 = vector.extract_strided_slice %12 {offsets = [0, 0], sizes = [16, 32], strides = [1, 1]} : vector<16x96xf32> to vector<16x32xf32>
    %14 = vector.extract_strided_slice %12 {offsets = [0, 32], sizes = [16, 32], strides = [1, 1]} : vector<16x96xf32> to vector<16x32xf32>
    %15 = vector.extract_strided_slice %12 {offsets = [0, 64], sizes = [16, 32], strides = [1, 1]} : vector<16x96xf32> to vector<16x32xf32>
    %16 = vector.extract_strided_slice %13 {offsets = [0, 0], sizes = [8, 32], strides = [1, 1]} : vector<16x32xf32> to vector<8x32xf32>
    %cst_10 = arith.constant 0.353553385 : f32
    %17 = vector.broadcast %cst_10 : f32 to vector<8x32xf32>
    %18 = arith.mulf %16, %17 : vector<8x32xf32>
    %19 = vector.extract_strided_slice %14 {offsets = [0, 0], sizes = [8, 32], strides = [1, 1]} : vector<16x32xf32> to vector<8x32xf32>
    %20 = arith.mulf %18, %19 : vector<8x32xf32>
    %21 = arith.truncf %20 : vector<8x32xf32> to vector<8x32xbf16>
    %cst_11 = arith.constant dense<0.000000e+00> : vector<8x32xf32>
    %22 = tpu.matmul %21, %4, %cst_11 {dimension_numbers = #tpu.dot_dimension_numbers<[1], [0], [0], [1], [0, 0, 1, 1], [], []>} : vector<8x32xbf16>, vector<32x32xbf16>, vector<8x32xf32> -> vector<8x32xf32>
    %23 = vector.extract_strided_slice %14 {offsets = [8, 0], sizes = [8, 32], strides = [1, 1]} : vector<16x32xf32> to vector<8x32xf32>
    %24 = arith.mulf %18, %23 : vector<8x32xf32>
    %25 = arith.truncf %24 : vector<8x32xf32> to vector<8x32xbf16>
    %cst_12 = arith.constant dense<0.000000e+00> : vector<8x32xf32>
    %26 = tpu.matmul %25, %4, %cst_12 {dimension_numbers = #tpu.dot_dimension_numbers<[1], [0], [0], [1], [0, 0, 1, 1], [], []>} : vector<8x32xbf16>, vector<32x32xbf16>, vector<8x32xf32> -> vector<8x32xf32>
    %27 = arith.maximumf %22, %26 : vector<8x32xf32>
    %28 = arith.subf %22, %27 : vector<8x32xf32>
    %29 = math.exp %28 : vector<8x32xf32>
    %30 = vector.extract_strided_slice %15 {offsets = [0, 0], sizes = [8, 32], strides = [1, 1]} : vector<16x32xf32> to vector<8x32xf32>
    %31 = arith.mulf %29, %30 : vector<8x32xf32>
    %32 = arith.subf %26, %27 : vector<8x32xf32>
    %33 = math.exp %32 : vector<8x32xf32>
    %34 = vector.extract_strided_slice %15 {offsets = [8, 0], sizes = [8, 32], strides = [1, 1]} : vector<16x32xf32> to vector<8x32xf32>
    %35 = arith.mulf %33, %34 : vector<8x32xf32>
    %36 = arith.addf %31, %35 : vector<8x32xf32>
    %37 = arith.addf %29, %33 : vector<8x32xf32>
    %38 = tpu.reciprocal %37 {approx = true} : vector<8x32xf32> -> vector<8x32xf32>
    %39 = arith.mulf %36, %38 : vector<8x32xf32>
    %c0_13 = arith.constant 0 : index
    %c0_14 = arith.constant 0 : index
    %40 = vector.load %arg23[%c0_13, %c0_14] : memref<16x32xf32, #tpu.memory_space<vmem>>, vector<8x32xf32>
    tpu.vector_store %arg23[%c0_13, %c0_14], %39 {strides = array<i32>} : memref<16x32xf32, #tpu.memory_space<vmem>>, vector<8x32xf32>,
    %41 = vector.extract_strided_slice %13 {offsets = [8, 0], sizes = [8, 32], strides = [1, 1]} : vector<16x32xf32> to vector<8x32xf32>
    %cst_15 = arith.constant 0.353553385 : f32
    %42 = vector.broadcast %cst_15 : f32 to vector<8x32xf32>
    %43 = arith.mulf %41, %42 : vector<8x32xf32>
    %44 = vector.extract_strided_slice %14 {offsets = [0, 0], sizes = [8, 32], strides = [1, 1]} : vector<16x32xf32> to vector<8x32xf32>
    %45 = arith.mulf %43, %44 : vector<8x32xf32>
    %46 = arith.truncf %45 : vector<8x32xf32> to vector<8x32xbf16>
    %cst_16 = arith.constant dense<0.000000e+00> : vector<8x32xf32>
    %47 = tpu.matmul %46, %4, %cst_16 {dimension_numbers = #tpu.dot_dimension_numbers<[1], [0], [0], [1], [0, 0, 1, 1], [], []>} : vector<8x32xbf16>, vector<32x32xbf16>, vector<8x32xf32> -> vector<8x32xf32>
    %48 = vector.extract_strided_slice %14 {offsets = [8, 0], sizes = [8, 32], strides = [1, 1]} : vector<16x32xf32> to vector<8x32xf32>
    %49 = arith.mulf %43, %48 : vector<8x32xf32>
    %50 = arith.truncf %49 : vector<8x32xf32> to vector<8x32xbf16>
    %cst_17 = arith.constant dense<0.000000e+00> : vector<8x32xf32>
    %51 = tpu.matmul %50, %4, %cst_17 {dimension_numbers = #tpu.dot_dimension_numbers<[1], [0], [0], [1], [0, 0, 1, 1], [], []>} : vector<8x32xbf16>, vector<32x32xbf16>, vector<8x32xf32> -> vector<8x32xf32>
    %52 = arith.maximumf %47, %51 : vector<8x32xf32>
    %53 = arith.subf %47, %52 : vector<8x32xf32>
    %54 = math.exp %53 : vector<8x32xf32>
    %55 = vector.extract_strided_slice %15 {offsets = [0, 0], sizes = [8, 32], strides = [1, 1]} : vector<16x32xf32> to vector<8x32xf32>
    %56 = arith.mulf %54, %55 : vector<8x32xf32>
    %57 = arith.subf %51, %52 : vector<8x32xf32>
    %58 = math.exp %57 : vector<8x32xf32>
    %59 = vector.extract_strided_slice %15 {offsets = [8, 0], sizes = [8, 32], strides = [1, 1]} : vector<16x32xf32> to vector<8x32xf32>
    %60 = arith.mulf %58, %59 : vector<8x32xf32>
    %61 = arith.addf %56, %60 : vector<8x32xf32>
    %62 = arith.addf %54, %58 : vector<8x32xf32>
    %63 = tpu.reciprocal %62 {approx = true} : vector<8x32xf32> -> vector<8x32xf32>
    %64 = arith.mulf %61, %63 : vector<8x32xf32>
    %c8 = arith.constant 8 : index
    %c0_18 = arith.constant 0 : index
    %65 = vector.load %arg23[%c8, %c0_18] : memref<16x32xf32, #tpu.memory_space<vmem>>, vector<8x32xf32>
    tpu.vector_store %arg23[%c8, %c0_18], %64 {strides = array<i32>} : memref<16x32xf32, #tpu.memory_space<vmem>>, vector<8x32xf32>,
    %c0_19 = arith.constant 0 : index
    %c0_20 = arith.constant 0 : index
    %66 = vector.load %arg23[%c0_19, %c0_20] : memref<16x32xf32, #tpu.memory_space<vmem>>, vector<16x32xf32>
    %c0_21 = arith.constant 0 : index
    %c0_22 = arith.constant 0 : index
    %c0_23 = arith.constant 0 : index
    %67 = vector.load %arg9[%c0_21, %c0_22, %c0_23] : memref<1x32x32xbf16, #tpu.memory_space<vmem>>, vector<1x32x32xbf16>
    %68 = vector.shape_cast %67 : vector<1x32x32xbf16> to vector<32x32xbf16>
    %69 = arith.truncf %66 : vector<16x32xf32> to vector<16x32xbf16>
    %cst_24 = arith.constant dense<0.000000e+00> : vector<16x32xf32>
    %70 = tpu.matmul %69, %68, %cst_24 {dimension_numbers = #tpu.dot_dimension_numbers<[1], [0], [0], [1], [0, 0, 1, 1], [], []>} : vector<16x32xbf16>, vector<32x32xbf16>, vector<16x32xf32> -> vector<16x32xf32>
    %c0_25 = arith.constant 0 : index
    %c0_26 = arith.constant 0 : index
    %c0_27 = arith.constant 0 : index
    %71 = vector.load %arg10[%c0_25, %c0_26, %c0_27] : memref<1x1x32xf32, #tpu.memory_space<vmem>>, vector<1x1x32xf32>
    %72 = vector.shape_cast %71 : vector<1x1x32xf32> to vector<1x32xf32>
    %73 = vector.broadcast %72 : vector<1x32xf32> to vector<16x32xf32>
    %74 = arith.addf %70, %73 : vector<16x32xf32>
    %75 = arith.addf %3, %74 : vector<16x32xf32>
    %c0_28 = arith.constant 0 : index
    %c0_29 = arith.constant 0 : index
    %c0_30 = arith.constant 0 : index
    %76 = vector.load %arg11[%c0_28, %c0_29, %c0_30] : memref<1x1x32xf32, #tpu.memory_space<vmem>>, vector<1x1x32xf32>
    %77 = vector.shape_cast %76 : vector<1x1x32xf32> to vector<1x32xf32>
    %c0_31 = arith.constant 0 : index
    %c0_32 = arith.constant 0 : index
    %c0_33 = arith.constant 0 : index
    %78 = vector.load %arg12[%c0_31, %c0_32, %c0_33] : memref<1x1x32xf32, #tpu.memory_space<vmem>>, vector<1x1x32xf32>
    %79 = vector.shape_cast %78 : vector<1x1x32xf32> to vector<1x32xf32>
    %cst_34 = arith.constant dense<0.000000e+00> : vector<16xf32>
    %80 = vector.multi_reduction <add>, %75, %cst_34 [1] : vector<16x32xf32> to vector<16xf32>
    %81 = vector.shape_cast %80 : vector<16xf32> to vector<16x1xf32>
    %cst_35 = arith.constant 3.200000e+01 : f32
    %82 = vector.broadcast %cst_35 : f32 to vector<16x1xf32>
    %83 = arith.divf %81, %82 : vector<16x1xf32>
    %84 = vector.broadcast %83 : vector<16x1xf32> to vector<16x32xf32>
    %85 = arith.subf %75, %84 : vector<16x32xf32>
    %86 = arith.mulf %85, %85 : vector<16x32xf32>
    %cst_36 = arith.constant dense<0.000000e+00> : vector<16xf32>
    %87 = vector.multi_reduction <add>, %86, %cst_36 [1] : vector<16x32xf32> to vector<16xf32>
    %88 = vector.shape_cast %87 : vector<16xf32> to vector<16x1xf32>
    %cst_37 = arith.constant 3.200000e+01 : f32
    %89 = vector.broadcast %cst_37 : f32 to vector<16x1xf32>
    %90 = arith.divf %88, %89 : vector<16x1xf32>
    %cst_38 = arith.constant 9.99999974E-6 : f32
    %91 = vector.broadcast %cst_38 : f32 to vector<16x1xf32>
    %92 = arith.addf %90, %91 : vector<16x1xf32>
    %93 = math.rsqrt %92 : vector<16x1xf32>
    %94 = vector.broadcast %93 : vector<16x1xf32> to vector<16x32xf32>
    %95 = arith.mulf %85, %94 : vector<16x32xf32>
    %96 = vector.broadcast %77 : vector<1x32xf32> to vector<16x32xf32>
    %97 = arith.mulf %95, %96 : vector<16x32xf32>
    %98 = vector.broadcast %79 : vector<1x32xf32> to vector<16x32xf32>
    %99 = arith.addf %97, %98 : vector<16x32xf32>
    %c0_39 = arith.constant 0 : index
    %c0_40 = arith.constant 0 : index
    %c0_41 = arith.constant 0 : index
    %100 = vector.load %arg15[%c0_39, %c0_40, %c0_41] : memref<1x32x2048xbf16, #tpu.memory_space<vmem>>, vector<1x32x2048xbf16>
    %101 = vector.shape_cast %100 : vector<1x32x2048xbf16> to vector<32x2048xbf16>
    %102 = arith.truncf %99 : vector<16x32xf32> to vector<16x32xbf16>
    %cst_42 = arith.constant dense<0.000000e+00> : vector<16x2048xf32>
    %103 = tpu.matmul %102, %101, %cst_42 {dimension_numbers = #tpu.dot_dimension_numbers<[1], [0], [0], [1], [0, 0, 1, 1], [], []>} : vector<16x32xbf16>, vector<32x2048xbf16>, vector<16x2048xf32> -> vector<16x2048xf32>
    %c0_43 = arith.constant 0 : index
    %c0_44 = arith.constant 0 : index
    %c0_45 = arith.constant 0 : index
    %104 = vector.load %arg16[%c0_43, %c0_44, %c0_45] : memref<1x1x2048xf32, #tpu.memory_space<vmem>>, vector<1x1x2048xf32>
    %105 = vector.shape_cast %104 : vector<1x1x2048xf32> to vector<1x2048xf32>
    %106 = vector.broadcast %105 : vector<1x2048xf32> to vector<16x2048xf32>
    %107 = arith.addf %103, %106 : vector<16x2048xf32>
    %cst_46 = arith.constant 0.000000e+00 : f32
    %108 = vector.broadcast %cst_46 : f32 to vector<16x2048xf32>
    %109 = arith.maximumf %107, %108 : vector<16x2048xf32>
    %c0_47 = arith.constant 0 : index
    %c0_48 = arith.constant 0 : index
    %c0_49 = arith.constant 0 : index
    %110 = vector.load %arg17[%c0_47, %c0_48, %c0_49] : memref<1x2048x32xbf16, #tpu.memory_space<vmem>>, vector<1x2048x32xbf16>
    %111 = vector.shape_cast %110 : vector<1x2048x32xbf16> to vector<2048x32xbf16>
    %112 = arith.truncf %109 : vector<16x2048xf32> to vector<16x2048xbf16>
    %cst_50 = arith.constant dense<0.000000e+00> : vector<16x32xf32>
    %113 = tpu.matmul %112, %111, %cst_50 {dimension_numbers = #tpu.dot_dimension_numbers<[1], [0], [0], [1], [0, 0, 1, 1], [], []>} : vector<16x2048xbf16>, vector<2048x32xbf16>, vector<16x32xf32> -> vector<16x32xf32>
    %c0_51 = arith.constant 0 : index
    %c0_52 = arith.constant 0 : index
    %c0_53 = arith.constant 0 : index
    %114 = vector.load %arg18[%c0_51, %c0_52, %c0_53] : memref<1x1x32xf32, #tpu.memory_space<vmem>>, vector<1x1x32xf32>
    %115 = vector.shape_cast %114 : vector<1x1x32xf32> to vector<1x32xf32>
    %116 = vector.broadcast %115 : vector<1x32xf32> to vector<16x32xf32>
    %117 = arith.addf %113, %116 : vector<16x32xf32>
    %118 = arith.addf %99, %117 : vector<16x32xf32>
    %c0_54 = arith.constant 0 : index
    %c0_55 = arith.constant 0 : index
    %c0_56 = arith.constant 0 : index
    %119 = vector.load %arg13[%c0_54, %c0_55, %c0_56] : memref<1x1x32xf32, #tpu.memory_space<vmem>>, vector<1x1x32xf32>
    %120 = vector.shape_cast %119 : vector<1x1x32xf32> to vector<1x32xf32>
    %c0_57 = arith.constant 0 : index
    %c0_58 = arith.constant 0 : index
    %c0_59 = arith.constant 0 : index
    %121 = vector.load %arg14[%c0_57, %c0_58, %c0_59] : memref<1x1x32xf32, #tpu.memory_space<vmem>>, vector<1x1x32xf32>
    %122 = vector.shape_cast %121 : vector<1x1x32xf32> to vector<1x32xf32>
    %cst_60 = arith.constant dense<0.000000e+00> : vector<16xf32>
    %123 = vector.multi_reduction <add>, %118, %cst_60 [1] : vector<16x32xf32> to vector<16xf32>
    %124 = vector.shape_cast %123 : vector<16xf32> to vector<16x1xf32>
    %cst_61 = arith.constant 3.200000e+01 : f32
    %125 = vector.broadcast %cst_61 : f32 to vector<16x1xf32>
    %126 = arith.divf %124, %125 : vector<16x1xf32>
    %127 = vector.broadcast %126 : vector<16x1xf32> to vector<16x32xf32>
    %128 = arith.subf %118, %127 : vector<16x32xf32>
    %129 = arith.mulf %128, %128 : vector<16x32xf32>
    %cst_62 = arith.constant dense<0.000000e+00> : vector<16xf32>
    %130 = vector.multi_reduction <add>, %129, %cst_62 [1] : vector<16x32xf32> to vector<16xf32>
    %131 = vector.shape_cast %130 : vector<16xf32> to vector<16x1xf32>
    %cst_63 = arith.constant 3.200000e+01 : f32
    %132 = vector.broadcast %cst_63 : f32 to vector<16x1xf32>
    %133 = arith.divf %131, %132 : vector<16x1xf32>
    %cst_64 = arith.constant 9.99999974E-6 : f32
    %134 = vector.broadcast %cst_64 : f32 to vector<16x1xf32>
    %135 = arith.addf %133, %134 : vector<16x1xf32>
    %136 = math.rsqrt %135 : vector<16x1xf32>
    %137 = vector.broadcast %136 : vector<16x1xf32> to vector<16x32xf32>
    %138 = arith.mulf %128, %137 : vector<16x32xf32>
    %139 = vector.broadcast %120 : vector<1x32xf32> to vector<16x32xf32>
    %140 = arith.mulf %138, %139 : vector<16x32xf32>
    %141 = vector.broadcast %122 : vector<1x32xf32> to vector<16x32xf32>
    %142 = arith.addf %140, %141 : vector<16x32xf32>
    %c0_65 = arith.constant 0 : index
    %c0_66 = arith.constant 0 : index
    %143 = vector.load %arg22[%c0_65, %c0_66] : memref<16x32xf32, #tpu.memory_space<vmem>>, vector<16x32xf32>
    tpu.vector_store %arg22[%c0_65, %c0_66], %142 {strides = array<i32>} : memref<16x32xf32, #tpu.memory_space<vmem>>, vector<16x32xf32>,
    %c1_i32 = arith.constant 1 : i32
    %144 = arith.cmpi eq, %arg1, %c1_i32 : i32
    %145 = arith.extui %144 : i1 to i32
    %c0_i32_67 = arith.constant 0 : i32
    %146 = arith.cmpi ne, %145, %c0_i32_67 : i32
    scf.if %146 {
      %c0_68 = arith.constant 0 : index
      %c0_69 = arith.constant 0 : index
      %147 = vector.load %arg19[%c0_68, %c0_69] : memref<32x128xbf16, #tpu.memory_space<vmem>>, vector<32x128xbf16>
      %148 = arith.truncf %142 : vector<16x32xf32> to vector<16x32xbf16>
      %cst_70 = arith.constant dense<0.000000e+00> : vector<16x128xf32>
      %149 = tpu.matmul %148, %147, %cst_70 {dimension_numbers = #tpu.dot_dimension_numbers<[1], [0], [0], [1], [0, 0, 1, 1], [], []>} : vector<16x32xbf16>, vector<32x128xbf16>, vector<16x128xf32> -> vector<16x128xf32>
      %c0_71 = arith.constant 0 : index
      %c0_72 = arith.constant 0 : index
      %150 = vector.load %arg20[%c0_71, %c0_72] : memref<1x128xf32, #tpu.memory_space<vmem>>, vector<1x128xf32>
      %151 = vector.broadcast %150 : vector<1x128xf32> to vector<16x128xf32>
      %152 = arith.addf %149, %151 : vector<16x128xf32>
      %153 = vector.shape_cast %152 : vector<16x128xf32> to vector<2x8x128xf32>
      %c0_73 = arith.constant 0 : index
      %c0_74 = arith.constant 0 : index
      %c0_75 = arith.constant 0 : index
      %154 = vector.load %arg21[%c0_73, %c0_74, %c0_75] : memref<2x8x128xf32, #tpu.memory_space<vmem>>, vector<2x8x128xf32>
      tpu.vector_store %arg21[%c0_73, %c0_74, %c0_75], %153 {strides = array<i32>} : memref<2x8x128xf32, #tpu.memory_space<vmem>>, vector<2x8x128xf32>,
    } else {
    }
    return
  }
  func.func @transform_0(%arg0: i32, %arg1: i32) -> (i32, i32, i32) {
    %c0_i32 = arith.constant 0 : i32
    %c0_i32_0 = arith.constant 0 : i32
    %c0_i32_1 = arith.constant 0 : i32
    return %c0_i32, %arg0, %c0_i32_0 : i32, i32, i32
  }
  func.func @transform_1(%arg0: i32, %arg1: i32) -> (i32, i32) {
    %c0_i32 = arith.constant 0 : i32
    %c0_i32_0 = arith.constant 0 : i32
    return %arg0, %c0_i32 : i32, i32
  }
  func.func @transform_2(%arg0: i32, %arg1: i32) -> (i32, i32) {
    %c0_i32 = arith.constant 0 : i32
    %c0_i32_0 = arith.constant 0 : i32
    %c0_i32_1 = arith.constant 0 : i32
    return %c0_i32, %c0_i32_0 : i32, i32
  }
  func.func @transform_3(%arg0: i32, %arg1: i32) -> (i32, i32) {
    %c0_i32 = arith.constant 0 : i32
    %c0_i32_0 = arith.constant 0 : i32
    %c0_i32_1 = arith.constant 0 : i32
    return %c0_i32, %c0_i32_0 : i32, i32
  }
  func.func @transform_4(%arg0: i32, %arg1: i32) -> (i32, i32) {
    %c0_i32 = arith.constant 0 : i32
    %c0_i32_0 = arith.constant 0 : i32
    %c0_i32_1 = arith.constant 0 : i32
    return %c0_i32, %c0_i32_0 : i32, i32
  }
  func.func @transform_5(%arg0: i32, %arg1: i32) -> (i32, i32, i32) {
    %c0_i32 = arith.constant 0 : i32
    %c0_i32_0 = arith.constant 0 : i32
    %c0_i32_1 = arith.constant 0 : i32
    return %arg1, %c0_i32, %c0_i32_0 : i32, i32, i32
  }
  func.func @transform_6(%arg0: i32, %arg1: i32) -> (i32, i32, i32) {
    %c0_i32 = arith.constant 0 : i32
    %c0_i32_0 = arith.constant 0 : i32
    %c0_i32_1 = arith.constant 0 : i32
    return %arg1, %c0_i32, %c0_i32_0 : i32, i32, i32
  }
  func.func @transform_7(%arg0: i32, %arg1: i32) -> (i32, i32, i32) {
    %c0_i32 = arith.constant 0 : i32
    %c0_i32_0 = arith.constant 0 : i32
    %c0_i32_1 = arith.constant 0 : i32
    return %arg1, %c0_i32, %c0_i32_0 : i32, i32, i32
  }
  func.func @transform_8(%arg0: i32, %arg1: i32) -> (i32, i32, i32) {
    %c0_i32 = arith.constant 0 : i32
    %c0_i32_0 = arith.constant 0 : i32
    %c0_i32_1 = arith.constant 0 : i32
    return %arg1, %c0_i32, %c0_i32_0 : i32, i32, i32
  }
  func.func @transform_9(%arg0: i32, %arg1: i32) -> (i32, i32, i32) {
    %c0_i32 = arith.constant 0 : i32
    %c0_i32_0 = arith.constant 0 : i32
    %c0_i32_1 = arith.constant 0 : i32
    return %arg1, %c0_i32, %c0_i32_0 : i32, i32, i32
  }
  func.func @transform_10(%arg0: i32, %arg1: i32) -> (i32, i32, i32) {
    %c0_i32 = arith.constant 0 : i32
    %c0_i32_0 = arith.constant 0 : i32
    %c0_i32_1 = arith.constant 0 : i32
    return %arg1, %c0_i32, %c0_i32_0 : i32, i32, i32
  }
  func.func @transform_11(%arg0: i32, %arg1: i32) -> (i32, i32, i32) {
    %c0_i32 = arith.constant 0 : i32
    %c0_i32_0 = arith.constant 0 : i32
    %c0_i32_1 = arith.constant 0 : i32
    return %arg1, %c0_i32, %c0_i32_0 : i32, i32, i32
  }
  func.func @transform_12(%arg0: i32, %arg1: i32) -> (i32, i32, i32) {
    %c0_i32 = arith.constant 0 : i32
    %c0_i32_0 = arith.constant 0 : i32
    %c0_i32_1 = arith.constant 0 : i32
    return %arg1, %c0_i32, %c0_i32_0 : i32, i32, i32
  }
  func.func @transform_13(%arg0: i32, %arg1: i32) -> (i32, i32, i32) {
    %c0_i32 = arith.constant 0 : i32
    %c0_i32_0 = arith.constant 0 : i32
    %c0_i32_1 = arith.constant 0 : i32
    return %arg1, %c0_i32, %c0_i32_0 : i32, i32, i32
  }
  func.func @transform_14(%arg0: i32, %arg1: i32) -> (i32, i32, i32) {
    %c0_i32 = arith.constant 0 : i32
    %c0_i32_0 = arith.constant 0 : i32
    %c0_i32_1 = arith.constant 0 : i32
    return %arg1, %c0_i32, %c0_i32_0 : i32, i32, i32
  }
  func.func @transform_15(%arg0: i32, %arg1: i32) -> (i32, i32, i32) {
    %c0_i32 = arith.constant 0 : i32
    %c0_i32_0 = arith.constant 0 : i32
    %c0_i32_1 = arith.constant 0 : i32
    return %arg1, %c0_i32, %c0_i32_0 : i32, i32, i32
  }
  func.func @transform_16(%arg0: i32, %arg1: i32) -> (i32, i32, i32) {
    %c0_i32 = arith.constant 0 : i32
    %c0_i32_0 = arith.constant 0 : i32
    %c0_i32_1 = arith.constant 0 : i32
    return %arg1, %c0_i32, %c0_i32_0 : i32, i32, i32
  }
  func.func @transform_17(%arg0: i32, %arg1: i32) -> (i32, i32) {
    %c0_i32 = arith.constant 0 : i32
    %c0_i32_0 = arith.constant 0 : i32
    %c0_i32_1 = arith.constant 0 : i32
    return %c0_i32, %c0_i32_0 : i32, i32
  }
  func.func @transform_18(%arg0: i32, %arg1: i32) -> (i32, i32) {
    %c0_i32 = arith.constant 0 : i32
    %c0_i32_0 = arith.constant 0 : i32
    %c0_i32_1 = arith.constant 0 : i32
    return %c0_i32, %c0_i32_0 : i32, i32
  }
  func.func @transform_19(%arg0: i32, %arg1: i32) -> (i32, i32, i32) {
    %c0_i32 = arith.constant 0 : i32
    %c0_i32_0 = arith.constant 0 : i32
    %c0_i32_1 = arith.constant 0 : i32
    return %c0_i32, %arg0, %c0_i32_0 : i32, i32, i32
  }
}

</mosaic_0001>

<llo_original>
// kernel: tpu_custom_call.1
$region0: #{tpu_custom_call.1}
  #allocation0 [shape = 'u32[]', space=smem, size = 0x4, offset = 0x4, fixed_abs, tag = 'smem constant byte address 0x4 - core index']
  #allocation1 [shape = 'u32[72,128]{1,0:T(1,128)}', space=vmem, size = 0x9000, scoped, tag = 'internal scratch']
  #allocation2 [shape = 'f32[16,32]{1,0:T(8,128)}', space=vmem, size = 0x2000, scoped, tag = 'scratch operand']
  #allocation3 [shape = 'f32[16,32]{1,0:T(8,128)}', space=vmem, size = 0x2000, scoped, tag = 'scratch operand']
  %s0 = inlined_call_operand.vmem [shape: f32[2,8,16], index: 0, kind: input, shape index: {}]
  %s1 = inlined_call_operand.vmem [shape: f32[8,32], index: 1, kind: input, shape index: {}]
  %s2 = inlined_call_operand.vmem [shape: bf16[32,32], index: 2, kind: input, shape index: {}]
  %s3 = inlined_call_operand.vmem [shape: bf16[16,32], index: 3, kind: input, shape index: {}]
  %s4 = inlined_call_operand.vmem [shape: f32[1,32], index: 4, kind: input, shape index: {}]
  %s5 = inlined_call_operand.vmem [shape: bf16[2,32,96], index: 5, kind: input, shape index: {}]
  %s6 = inlined_call_operand.vmem [shape: f32[2,1,96], index: 6, kind: input, shape index: {}]
  %s7 = inlined_call_operand.vmem [shape: bf16[2,32,32], index: 7, kind: input, shape index: {}]
  %s8 = inlined_call_operand.vmem [shape: f32[2,1,32], index: 8, kind: input, shape index: {}]
  %s9 = inlined_call_operand.vmem [shape: f32[2,1,32], index: 9, kind: input, shape index: {}]
  %s10 = inlined_call_operand.vmem [shape: f32[2,1,32], index: 10, kind: input, shape index: {}]
  %s11 = inlined_call_operand.vmem [shape: f32[2,1,32], index: 11, kind: input, shape index: {}]
  %s12 = inlined_call_operand.vmem [shape: f32[2,1,32], index: 12, kind: input, shape index: {}]
  %s13 = inlined_call_operand.vmem [shape: bf16[2,32,2048], index: 13, kind: input, shape index: {}]
  %s14 = inlined_call_operand.vmem [shape: f32[2,1,2048], index: 14, kind: input, shape index: {}]
  %s15 = inlined_call_operand.vmem [shape: bf16[2,2048,32], index: 15, kind: input, shape index: {}]
  %s16 = inlined_call_operand.vmem [shape: f32[2,1,32], index: 16, kind: input, shape index: {}]
  %s17 = inlined_call_operand.vmem [shape: bf16[32,128], index: 17, kind: input, shape index: {}]
  %s18 = inlined_call_operand.vmem [shape: f32[1,128], index: 18, kind: input, shape index: {}]
  %s19 = inlined_call_operand.hbm [shape: f32[2,8,128], index: 19, kind: output, shape index: {}]
  %s20 = sld [smem:[#allocation0]]
  $region117: #{tpu_custom_call.1} parent=0
    _
  %s22 = ssub.s32 1, %s20
  %s23 = scalar_select 0, %s22, %s20
  $region1: #{tpu_custom_call.1} parent=0
    #allocation4 [shape = 'u8[8192]{0}', space=vmem, size = 0x2000, scoped, tag = 'output window, operand 0, single buffered']
    #allocation5 [shape = 's32[2]{0}', space=sflag, size = 0x8, scoped, tag = 'scoped memory for tpu_custom_call.1']
    %24 = vsyncpa [#allocation5], 0
    loop: start=0, step=1, limit=4
    $region2: #{tpu_custom_call.1} parent=1 // loop_pre_header
      _
    $region3: #{tpu_custom_call.1} parent=1 // loop_header
      %s26 = sphi 0, %s30
      %p27 = scmp.ge.s32.totalorder %s26, 4
      %s33 = sphi 0, %s45
      %s34 = sphi 0, %s41
      %s35 = sphi 0, %s33
      %s36 = sphi 0, %s34
      %s37 = sphi 0, %s35
      %s38 = sphi 0, %s36
      %s48 = sphi 0, %s50
      %s51 = sphi 0, %s48
      %s52 = sphi 0, %s51
      %s68 = sphi 0, %s52
      %s74 = sphi 0, %s76
      %s77 = sphi 0, %s74
      %s78 = sphi 0, %s77
      %s94 = sphi 0, %s78
      %s98 = sphi 0, %s98
      %s100 = sphi 0, %s98
      %s101 = sphi 0, %s100
      %s115 = sphi 0, %s101
      %s119 = sphi 0, %s119
      %s121 = sphi 0, %s119
      %s122 = sphi 0, %s121
      %s136 = sphi 0, %s122
      %s140 = sphi 0, %s140
      %s142 = sphi 0, %s140
      %s143 = sphi 0, %s142
      %s157 = sphi 0, %s143
      %s163 = sphi 0, %s165
      %s166 = sphi 0, %s163
      %s167 = sphi 0, %s166
      %s183 = sphi 0, %s167
      %s189 = sphi 0, %s191
      %s192 = sphi 0, %s189
      %s193 = sphi 0, %s192
      %s209 = sphi 0, %s193
      %s215 = sphi 0, %s217
      %s218 = sphi 0, %s215
      %s219 = sphi 0, %s218
      %s235 = sphi 0, %s219
      %s241 = sphi 0, %s243
      %s244 = sphi 0, %s241
      %s245 = sphi 0, %s244
      %s261 = sphi 0, %s245
      %s267 = sphi 0, %s269
      %s270 = sphi 0, %s267
      %s271 = sphi 0, %s270
      %s287 = sphi 0, %s271
      %s293 = sphi 0, %s295
      %s296 = sphi 0, %s293
      %s297 = sphi 0, %s296
      %s313 = sphi 0, %s297
      %s319 = sphi 0, %s321
      %s322 = sphi 0, %s319
      %s323 = sphi 0, %s322
      %s339 = sphi 0, %s323
      %s345 = sphi 0, %s347
      %s348 = sphi 0, %s345
      %s349 = sphi 0, %s348
      %s365 = sphi 0, %s349
      %s371 = sphi 0, %s373
      %s374 = sphi 0, %s371
      %s375 = sphi 0, %s374
      %s391 = sphi 0, %s375
      %s397 = sphi 0, %s399
      %s400 = sphi 0, %s397
      %s401 = sphi 0, %s400
      %s417 = sphi 0, %s401
      %s423 = sphi 0, %s425
      %s426 = sphi 0, %s423
      %s427 = sphi 0, %s426
      %s443 = sphi 0, %s427
      %s449 = sphi 0, %s451
      %s452 = sphi 0, %s449
      %s453 = sphi 0, %s452
      %s469 = sphi 0, %s453
      %s473 = sphi 0, %s473
      %s475 = sphi 0, %s473
      %s476 = sphi 0, %s475
      %s490 = sphi 0, %s476
      %s494 = sphi 0, %s494
      %s496 = sphi 0, %s494
      %s497 = sphi 0, %s496
      %s511 = sphi 0, %s497
      %s517 = sphi 0, %s519
      %s520 = sphi 0, %s517
      %s521 = sphi 0, %s520
      %s537 = sphi 0, %s521
    $region4: #{tpu_custom_call.1} parent=1 // loop_header_branch
      %29 = sbr.rel (%p27) target = $region8
    $region5: #{tpu_custom_call.1} parent=1 // loop_body
      %s31 = ssub.s32 %s26, 1
      %s32 = ssub.s32 %s26, 2
      %s39 = sadd.s32 1, %s34
      %p40 = scmp.ge.s32.totalorder %s39, 2
      %s41 = scalar_select %p40, 0, %s39
      %s42 = sadd.s32 1, %s33
      %s43 = scalar_select %p40, %s42, %s33
      %p44 = scmp.ge.s32.totalorder %s43, 1
      %s45 = scalar_select %p44, 0, %s43
      %s46 = ssub.s32 %s33, %s45
      %p47 = scmp.eq.s32.totalorder %s46, 0
      %s49 = sadd.s32 %s48, 1
      %s50 = scalar_select %p47, %s48, %s49
      %p53 = pneg %p47
      %p54 = scmp.eq.s32.totalorder %s26, 1
      %p55 = por %p53, %p54
      %p56 = scmp.ne.s32.totalorder %s48, %s51
      %p57 = scmp.eq.s32.totalorder %s26, 0
      %p58 = por %p56, %p57
      %p59 = scmp.ne.s32.totalorder %s48, %s51
      %p60 = scmp.eq.s32.totalorder %s31, 1
      %p61 = por %p59, %p60
      %p62 = scmp.ne.s32.totalorder %s51, %s52
      %p63 = scmp.eq.s32.totalorder %s31, 0
      %p64 = por %p62, %p63
      %p65 = scmp.ne.s32.totalorder %s51, %s52
      %p66 = scmp.eq.s32.totalorder %s32, 1
      %p67 = por %p65, %p66
      %p69 = scmp.ne.s32.totalorder %s52, %s68
      %p70 = scmp.eq.s32.totalorder %s32, 0
      %p71 = por %p69, %p70
      %s72 = ssub.s32 %s33, %s45
      %p73 = scmp.eq.s32.totalorder %s72, 0
      %s75 = sadd.s32 %s74, 1
      %s76 = scalar_select %p73, %s74, %s75
      %p79 = pneg %p73
      %p80 = scmp.eq.s32.totalorder %s26, 1
      %p81 = por %p79, %p80
      %p82 = scmp.ne.s32.totalorder %s74, %s77
      %p83 = scmp.eq.s32.totalorder %s26, 0
      %p84 = por %p82, %p83
      %p85 = scmp.ne.s32.totalorder %s74, %s77
      %p86 = scmp.eq.s32.totalorder %s31, 1
      %p87 = por %p85, %p86
      %p88 = scmp.ne.s32.totalorder %s77, %s78
      %p89 = scmp.eq.s32.totalorder %s31, 0
      %p90 = por %p88, %p89
      %p91 = scmp.ne.s32.totalorder %s77, %s78
      %p92 = scmp.eq.s32.totalorder %s32, 1
      %p93 = por %p91, %p92
      %p95 = scmp.ne.s32.totalorder %s78, %s94
      %p96 = scmp.eq.s32.totalorder %s32, 0
      %p97 = por %p95, %p96
      %s99 = sadd.s32 %s98, 1
      %p102 = scmp.eq.s32.totalorder %s26, 1
      %p103 = scmp.ne.s32.totalorder %s98, %s100
      %p104 = scmp.eq.s32.totalorder %s26, 0
      %p105 = por %p103, %p104
      %p106 = scmp.ne.s32.totalorder %s98, %s100
      %p107 = scmp.eq.s32.totalorder %s31, 1
      %p108 = por %p106, %p107
      %p109 = scmp.ne.s32.totalorder %s100, %s101
      %p110 = scmp.eq.s32.totalorder %s31, 0
      %p111 = por %p109, %p110
      %p112 = scmp.ne.s32.totalorder %s100, %s101
      %p113 = scmp.eq.s32.totalorder %s32, 1
      %p114 = por %p112, %p113
      %p116 = scmp.ne.s32.totalorder %s101, %s115
      %p117 = scmp.eq.s32.totalorder %s32, 0
      %p118 = por %p116, %p117
      %s120 = sadd.s32 %s119, 1
      %p123 = scmp.eq.s32.totalorder %s26, 1
      %p124 = scmp.ne.s32.totalorder %s119, %s121
      %p125 = scmp.eq.s32.totalorder %s26, 0
      %p126 = por %p124, %p125
      %p127 = scmp.ne.s32.totalorder %s119, %s121
      %p128 = scmp.eq.s32.totalorder %s31, 1
      %p129 = por %p127, %p128
      %p130 = scmp.ne.s32.totalorder %s121, %s122
      %p131 = scmp.eq.s32.totalorder %s31, 0
      %p132 = por %p130, %p131
      %p133 = scmp.ne.s32.totalorder %s121, %s122
      %p134 = scmp.eq.s32.totalorder %s32, 1
      %p135 = por %p133, %p134
      %p137 = scmp.ne.s32.totalorder %s122, %s136
      %p138 = scmp.eq.s32.totalorder %s32, 0
      %p139 = por %p137, %p138
      %s141 = sadd.s32 %s140, 1
      %p144 = scmp.eq.s32.totalorder %s26, 1
      %p145 = scmp.ne.s32.totalorder %s140, %s142
      %p146 = scmp.eq.s32.totalorder %s26, 0
      %p147 = por %p145, %p146
      %p148 = scmp.ne.s32.totalorder %s140, %s142
      %p149 = scmp.eq.s32.totalorder %s31, 1
      %p150 = por %p148, %p149
      %p151 = scmp.ne.s32.totalorder %s142, %s143
      %p152 = scmp.eq.s32.totalorder %s31, 0
      %p153 = por %p151, %p152
      %p154 = scmp.ne.s32.totalorder %s142, %s143
      %p155 = scmp.eq.s32.totalorder %s32, 1
      %p156 = por %p154, %p155
      %p158 = scmp.ne.s32.totalorder %s143, %s157
      %p159 = scmp.eq.s32.totalorder %s32, 0
      %p160 = por %p158, %p159
      %s161 = ssub.s32 %s34, %s41
      %p162 = scmp.eq.s32.totalorder %s161, 0
      %s164 = sadd.s32 %s163, 1
      %s165 = scalar_select %p162, %s163, %s164
      %p168 = pneg %p162
      %p169 = scmp.eq.s32.totalorder %s26, 1
      %p170 = por %p168, %p169
      %p171 = scmp.ne.s32.totalorder %s163, %s166
      %p172 = scmp.eq.s32.totalorder %s26, 0
      %p173 = por %p171, %p172
      %p174 = scmp.ne.s32.totalorder %s163, %s166
      %p175 = scmp.eq.s32.totalorder %s31, 1
      %p176 = por %p174, %p175
      %p177 = scmp.ne.s32.totalorder %s166, %s167
      %p178 = scmp.eq.s32.totalorder %s31, 0
      %p179 = por %p177, %p178
      %p180 = scmp.ne.s32.totalorder %s166, %s167
      %p181 = scmp.eq.s32.totalorder %s32, 1
      %p182 = por %p180, %p181
      %p184 = scmp.ne.s32.totalorder %s167, %s183
      %p185 = scmp.eq.s32.totalorder %s32, 0
      %p186 = por %p184, %p185
      %s187 = ssub.s32 %s34, %s41
      %p188 = scmp.eq.s32.totalorder %s187, 0
      %s190 = sadd.s32 %s189, 1
      %s191 = scalar_select %p188, %s189, %s190
      %p194 = pneg %p188
      %p195 = scmp.eq.s32.totalorder %s26, 1
      %p196 = por %p194, %p195
      %p197 = scmp.ne.s32.totalorder %s189, %s192
      %p198 = scmp.eq.s32.totalorder %s26, 0
      %p199 = por %p197, %p198
      %p200 = scmp.ne.s32.totalorder %s189, %s192
      %p201 = scmp.eq.s32.totalorder %s31, 1
      %p202 = por %p200, %p201
      %p203 = scmp.ne.s32.totalorder %s192, %s193
      %p204 = scmp.eq.s32.totalorder %s31, 0
      %p205 = por %p203, %p204
      %p206 = scmp.ne.s32.totalorder %s192, %s193
      %p207 = scmp.eq.s32.totalorder %s32, 1
      %p208 = por %p206, %p207
      %p210 = scmp.ne.s32.totalorder %s193, %s209
      %p211 = scmp.eq.s32.totalorder %s32, 0
      %p212 = por %p210, %p211
      %s213 = ssub.s32 %s34, %s41
      %p214 = scmp.eq.s32.totalorder %s213, 0
      %s216 = sadd.s32 %s215, 1
      %s217 = scalar_select %p214, %s215, %s216
      %p220 = pneg %p214
      %p221 = scmp.eq.s32.totalorder %s26, 1
      %p222 = por %p220, %p221
      %p223 = scmp.ne.s32.totalorder %s215, %s218
      %p224 = scmp.eq.s32.totalorder %s26, 0
      %p225 = por %p223, %p224
      %p226 = scmp.ne.s32.totalorder %s215, %s218
      %p227 = scmp.eq.s32.totalorder %s31, 1
      %p228 = por %p226, %p227
      %p229 = scmp.ne.s32.totalorder %s218, %s219
      %p230 = scmp.eq.s32.totalorder %s31, 0
      %p231 = por %p229, %p230
      %p232 = scmp.ne.s32.totalorder %s218, %s219
      %p233 = scmp.eq.s32.totalorder %s32, 1
      %p234 = por %p232, %p233
      %p236 = scmp.ne.s32.totalorder %s219, %s235
      %p237 = scmp.eq.s32.totalorder %s32, 0
      %p238 = por %p236, %p237
      %s239 = ssub.s32 %s34, %s41
      %p240 = scmp.eq.s32.totalorder %s239, 0
      %s242 = sadd.s32 %s241, 1
      %s243 = scalar_select %p240, %s241, %s242
      %p246 = pneg %p240
      %p247 = scmp.eq.s32.totalorder %s26, 1
      %p248 = por %p246, %p247
      %p249 = scmp.ne.s32.totalorder %s241, %s244
      %p250 = scmp.eq.s32.totalorder %s26, 0
      %p251 = por %p249, %p250
      %p252 = scmp.ne.s32.totalorder %s241, %s244
      %p253 = scmp.eq.s32.totalorder %s31, 1
      %p254 = por %p252, %p253
      %p255 = scmp.ne.s32.totalorder %s244, %s245
      %p256 = scmp.eq.s32.totalorder %s31, 0
      %p257 = por %p255, %p256
      %p258 = scmp.ne.s32.totalorder %s244, %s245
      %p259 = scmp.eq.s32.totalorder %s32, 1
      %p260 = por %p258, %p259
      %p262 = scmp.ne.s32.totalorder %s245, %s261
      %p263 = scmp.eq.s32.totalorder %s32, 0
      %p264 = por %p262, %p263
      %s265 = ssub.s32 %s34, %s41
      %p266 = scmp.eq.s32.totalorder %s265, 0
      %s268 = sadd.s32 %s267, 1
      %s269 = scalar_select %p266, %s267, %s268
      %p272 = pneg %p266
      %p273 = scmp.eq.s32.totalorder %s26, 1
      %p274 = por %p272, %p273
      %p275 = scmp.ne.s32.totalorder %s267, %s270
      %p276 = scmp.eq.s32.totalorder %s26, 0
      %p277 = por %p275, %p276
      %p278 = scmp.ne.s32.totalorder %s267, %s270
      %p279 = scmp.eq.s32.totalorder %s31, 1
      %p280 = por %p278, %p279
      %p281 = scmp.ne.s32.totalorder %s270, %s271
      %p282 = scmp.eq.s32.totalorder %s31, 0
      %p283 = por %p281, %p282
      %p284 = scmp.ne.s32.totalorder %s270, %s271
      %p285 = scmp.eq.s32.totalorder %s32, 1
      %p286 = por %p284, %p285
      %p288 = scmp.ne.s32.totalorder %s271, %s287
      %p289 = scmp.eq.s32.totalorder %s32, 0
      %p290 = por %p288, %p289
      %s291 = ssub.s32 %s34, %s41
      %p292 = scmp.eq.s32.totalorder %s291, 0
      %s294 = sadd.s32 %s293, 1
      %s295 = scalar_select %p292, %s293, %s294
      %p298 = pneg %p292
      %p299 = scmp.eq.s32.totalorder %s26, 1
      %p300 = por %p298, %p299
      %p301 = scmp.ne.s32.totalorder %s293, %s296
      %p302 = scmp.eq.s32.totalorder %s26, 0
      %p303 = por %p301, %p302
      %p304 = scmp.ne.s32.totalorder %s293, %s296
      %p305 = scmp.eq.s32.totalorder %s31, 1
      %p306 = por %p304, %p305
      %p307 = scmp.ne.s32.totalorder %s296, %s297
      %p308 = scmp.eq.s32.totalorder %s31, 0
      %p309 = por %p307, %p308
      %p310 = scmp.ne.s32.totalorder %s296, %s297
      %p311 = scmp.eq.s32.totalorder %s32, 1
      %p312 = por %p310, %p311
      %p314 = scmp.ne.s32.totalorder %s297, %s313
      %p315 = scmp.eq.s32.totalorder %s32, 0
      %p316 = por %p314, %p315
      %s317 = ssub.s32 %s34, %s41
      %p318 = scmp.eq.s32.totalorder %s317, 0
      %s320 = sadd.s32 %s319, 1
      %s321 = scalar_select %p318, %s319, %s320
      %p324 = pneg %p318
      %p325 = scmp.eq.s32.totalorder %s26, 1
      %p326 = por %p324, %p325
      %p327 = scmp.ne.s32.totalorder %s319, %s322
      %p328 = scmp.eq.s32.totalorder %s26, 0
      %p329 = por %p327, %p328
      %p330 = scmp.ne.s32.totalorder %s319, %s322
      %p331 = scmp.eq.s32.totalorder %s31, 1
      %p332 = por %p330, %p331
      %p333 = scmp.ne.s32.totalorder %s322, %s323
      %p334 = scmp.eq.s32.totalorder %s31, 0
      %p335 = por %p333, %p334
      %p336 = scmp.ne.s32.totalorder %s322, %s323
      %p337 = scmp.eq.s32.totalorder %s32, 1
      %p338 = por %p336, %p337
      %p340 = scmp.ne.s32.totalorder %s323, %s339
      %p341 = scmp.eq.s32.totalorder %s32, 0
      %p342 = por %p340, %p341
      %s343 = ssub.s32 %s34, %s41
      %p344 = scmp.eq.s32.totalorder %s343, 0
      %s346 = sadd.s32 %s345, 1
      %s347 = scalar_select %p344, %s345, %s346
      %p350 = pneg %p344
      %p351 = scmp.eq.s32.totalorder %s26, 1
      %p352 = por %p350, %p351
      %p353 = scmp.ne.s32.totalorder %s345, %s348
      %p354 = scmp.eq.s32.totalorder %s26, 0
      %p355 = por %p353, %p354
      %p356 = scmp.ne.s32.totalorder %s345, %s348
      %p357 = scmp.eq.s32.totalorder %s31, 1
      %p358 = por %p356, %p357
      %p359 = scmp.ne.s32.totalorder %s348, %s349
      %p360 = scmp.eq.s32.totalorder %s31, 0
      %p361 = por %p359, %p360
      %p362 = scmp.ne.s32.totalorder %s348, %s349
      %p363 = scmp.eq.s32.totalorder %s32, 1
      %p364 = por %p362, %p363
      %p366 = scmp.ne.s32.totalorder %s349, %s365
      %p367 = scmp.eq.s32.totalorder %s32, 0
      %p368 = por %p366, %p367
      %s369 = ssub.s32 %s34, %s41
      %p370 = scmp.eq.s32.totalorder %s369, 0
      %s372 = sadd.s32 %s371, 1
      %s373 = scalar_select %p370, %s371, %s372
      %p376 = pneg %p370
      %p377 = scmp.eq.s32.totalorder %s26, 1
      %p378 = por %p376, %p377
      %p379 = scmp.ne.s32.totalorder %s371, %s374
      %p380 = scmp.eq.s32.totalorder %s26, 0
      %p381 = por %p379, %p380
      %p382 = scmp.ne.s32.totalorder %s371, %s374
      %p383 = scmp.eq.s32.totalorder %s31, 1
      %p384 = por %p382, %p383
      %p385 = scmp.ne.s32.totalorder %s374, %s375
      %p386 = scmp.eq.s32.totalorder %s31, 0
      %p387 = por %p385, %p386
      %p388 = scmp.ne.s32.totalorder %s374, %s375
      %p389 = scmp.eq.s32.totalorder %s32, 1
      %p390 = por %p388, %p389
      %p392 = scmp.ne.s32.totalorder %s375, %s391
      %p393 = scmp.eq.s32.totalorder %s32, 0
      %p394 = por %p392, %p393
      %s395 = ssub.s32 %s34, %s41
      %p396 = scmp.eq.s32.totalorder %s395, 0
      %s398 = sadd.s32 %s397, 1
      %s399 = scalar_select %p396, %s397, %s398
      %p402 = pneg %p396
      %p403 = scmp.eq.s32.totalorder %s26, 1
      %p404 = por %p402, %p403
      %p405 = scmp.ne.s32.totalorder %s397, %s400
      %p406 = scmp.eq.s32.totalorder %s26, 0
      %p407 = por %p405, %p406
      %p408 = scmp.ne.s32.totalorder %s397, %s400
      %p409 = scmp.eq.s32.totalorder %s31, 1
      %p410 = por %p408, %p409
      %p411 = scmp.ne.s32.totalorder %s400, %s401
      %p412 = scmp.eq.s32.totalorder %s31, 0
      %p413 = por %p411, %p412
      %p414 = scmp.ne.s32.totalorder %s400, %s401
      %p415 = scmp.eq.s32.totalorder %s32, 1
      %p416 = por %p414, %p415
      %p418 = scmp.ne.s32.totalorder %s401, %s417
      %p419 = scmp.eq.s32.totalorder %s32, 0
      %p420 = por %p418, %p419
      %s421 = ssub.s32 %s34, %s41
      %p422 = scmp.eq.s32.totalorder %s421, 0
      %s424 = sadd.s32 %s423, 1
      %s425 = scalar_select %p422, %s423, %s424
      %p428 = pneg %p422
      %p429 = scmp.eq.s32.totalorder %s26, 1
      %p430 = por %p428, %p429
      %p431 = scmp.ne.s32.totalorder %s423, %s426
      %p432 = scmp.eq.s32.totalorder %s26, 0
      %p433 = por %p431, %p432
      %p434 = scmp.ne.s32.totalorder %s423, %s426
      %p435 = scmp.eq.s32.totalorder %s31, 1
      %p436 = por %p434, %p435
      %p437 = scmp.ne.s32.totalorder %s426, %s427
      %p438 = scmp.eq.s32.totalorder %s31, 0
      %p439 = por %p437, %p438
      %p440 = scmp.ne.s32.totalorder %s426, %s427
      %p441 = scmp.eq.s32.totalorder %s32, 1
      %p442 = por %p440, %p441
      %p444 = scmp.ne.s32.totalorder %s427, %s443
      %p445 = scmp.eq.s32.totalorder %s32, 0
      %p446 = por %p444, %p445
      %s447 = ssub.s32 %s34, %s41
      %p448 = scmp.eq.s32.totalorder %s447, 0
      %s450 = sadd.s32 %s449, 1
      %s451 = scalar_select %p448, %s449, %s450
      %p454 = pneg %p448
      %p455 = scmp.eq.s32.totalorder %s26, 1
      %p456 = por %p454, %p455
      %p457 = scmp.ne.s32.totalorder %s449, %s452
      %p458 = scmp.eq.s32.totalorder %s26, 0
      %p459 = por %p457, %p458
      %p460 = scmp.ne.s32.totalorder %s449, %s452
      %p461 = scmp.eq.s32.totalorder %s31, 1
      %p462 = por %p460, %p461
      %p463 = scmp.ne.s32.totalorder %s452, %s453
      %p464 = scmp.eq.s32.totalorder %s31, 0
      %p465 = por %p463, %p464
      %p466 = scmp.ne.s32.totalorder %s452, %s453
      %p467 = scmp.eq.s32.totalorder %s32, 1
      %p468 = por %p466, %p467
      %p470 = scmp.ne.s32.totalorder %s453, %s469
      %p471 = scmp.eq.s32.totalorder %s32, 0
      %p472 = por %p470, %p471
      %s474 = sadd.s32 %s473, 1
      %p477 = scmp.eq.s32.totalorder %s26, 1
      %p478 = scmp.ne.s32.totalorder %s473, %s475
      %p479 = scmp.eq.s32.totalorder %s26, 0
      %p480 = por %p478, %p479
      %p481 = scmp.ne.s32.totalorder %s473, %s475
      %p482 = scmp.eq.s32.totalorder %s31, 1
      %p483 = por %p481, %p482
      %p484 = scmp.ne.s32.totalorder %s475, %s476
      %p485 = scmp.eq.s32.totalorder %s31, 0
      %p486 = por %p484, %p485
      %p487 = scmp.ne.s32.totalorder %s475, %s476
      %p488 = scmp.eq.s32.totalorder %s32, 1
      %p489 = por %p487, %p488
      %p491 = scmp.ne.s32.totalorder %s476, %s490
      %p492 = scmp.eq.s32.totalorder %s32, 0
      %p493 = por %p491, %p492
      %s495 = sadd.s32 %s494, 1
      %p498 = scmp.eq.s32.totalorder %s26, 1
      %p499 = scmp.ne.s32.totalorder %s494, %s496
      %p500 = scmp.eq.s32.totalorder %s26, 0
      %p501 = por %p499, %p500
      %p502 = scmp.ne.s32.totalorder %s494, %s496
      %p503 = scmp.eq.s32.totalorder %s31, 1
      %p504 = por %p502, %p503
      %p505 = scmp.ne.s32.totalorder %s496, %s497
      %p506 = scmp.eq.s32.totalorder %s31, 0
      %p507 = por %p505, %p506
      %p508 = scmp.ne.s32.totalorder %s496, %s497
      %p509 = scmp.eq.s32.totalorder %s32, 1
      %p510 = por %p508, %p509
      %p512 = scmp.ne.s32.totalorder %s497, %s511
      %p513 = scmp.eq.s32.totalorder %s32, 0
      %p514 = por %p512, %p513
      %s515 = ssub.s32 %s33, %s45
      %p516 = scmp.eq.s32.totalorder %s515, 0
      %s518 = sadd.s32 %s517, 1
      %s519 = scalar_select %p516, %s517, %s518
      %p522 = pneg %p516
      %p523 = scmp.eq.s32.totalorder %s26, 1
      %p524 = por %p522, %p523
      %p525 = scmp.ne.s32.totalorder %s517, %s520
      %p526 = scmp.eq.s32.totalorder %s26, 0
      %p527 = por %p525, %p526
      %p528 = scmp.ne.s32.totalorder %s517, %s520
      %p529 = scmp.eq.s32.totalorder %s31, 1
      %p530 = por %p528, %p529
      %p531 = scmp.ne.s32.totalorder %s520, %s521
      %p532 = scmp.eq.s32.totalorder %s31, 0
      %p533 = por %p531, %p532
      %p534 = scmp.ne.s32.totalorder %s520, %s521
      %p535 = scmp.eq.s32.totalorder %s32, 1
      %p536 = por %p534, %p535
      %p538 = scmp.ne.s32.totalorder %s521, %s537
      %p539 = scmp.eq.s32.totalorder %s32, 0
      %p540 = por %p538, %p539
      %p541 = scmp.le.s32.totalorder 1, %s26
      %p542 = scmp.lt.s32.totalorder %s26, 3
      %p543 = pnand %p541, %p542
      %p544 = pneg %p543
      // Predicated region
      $region9: #{tpu_custom_call.1} parent=5 // pred_check
        _
      $region10: #{tpu_custom_call.1} parent=5 // pred_check_branch
        %546 = sbr.rel (%p543) target = $region12
      $region11: #{tpu_custom_call.1} parent=5 // pred_region
        %s547 = ssub.s32 %s26, 1
        // Predicated region
        $region13: #{tpu_custom_call.1} parent=11 // pred_check
          %p548 = pneg %p64
        $region14: #{tpu_custom_call.1} parent=11 // pred_check_branch
          %550 = sbr.rel (%p548) target = $region16
        $region15: #{tpu_custom_call.1} parent=11 // pred_region
          %p551 = scmp.lt.s32.totalorder %s35, 0
          %s552 = scalar_select %p551, %s35, 0
          %s553 = smul.addr %s552, 8
          %s554 = scalar_lea.vmem %s0, %s553
        $region16: #{tpu_custom_call.1} parent=11 // pred_fallthru
          _
        // Predicated region
        $region17: #{tpu_custom_call.1} parent=11 // pred_check
          %p555 = pneg %p90
        $region18: #{tpu_custom_call.1} parent=11 // pred_check_branch
          %557 = sbr.rel (%p555) target = $region20
        $region19: #{tpu_custom_call.1} parent=11 // pred_region
          %p558 = scmp.lt.s32.totalorder %s35, 0
          %s559 = scalar_select %p558, %s35, 0
          %s560 = smul.addr %s559, 8
          %s561 = scalar_lea.vmem %s1, %s560
        $region20: #{tpu_custom_call.1} parent=11 // pred_fallthru
          _
        // Predicated region
        $region21: #{tpu_custom_call.1} parent=11 // pred_check
          %p562 = pneg %p111
        $region22: #{tpu_custom_call.1} parent=11 // pred_check_branch
          %564 = sbr.rel (%p562) target = $region24
        $region23: #{tpu_custom_call.1} parent=11 // pred_region
          _
        $region24: #{tpu_custom_call.1} parent=11 // pred_fallthru
          _
        // Predicated region
        $region25: #{tpu_custom_call.1} parent=11 // pred_check
          %p565 = pneg %p132
        $region26: #{tpu_custom_call.1} parent=11 // pred_check_branch
          %567 = sbr.rel (%p565) target = $region28
        $region27: #{tpu_custom_call.1} parent=11 // pred_region
          _
        $region28: #{tpu_custom_call.1} parent=11 // pred_fallthru
          _
        // Predicated region
        $region29: #{tpu_custom_call.1} parent=11 // pred_check
          %p568 = pneg %p153
        $region30: #{tpu_custom_call.1} parent=11 // pred_check_branch
          %570 = sbr.rel (%p568) target = $region32
        $region31: #{tpu_custom_call.1} parent=11 // pred_region
          _
        $region32: #{tpu_custom_call.1} parent=11 // pred_fallthru
          _
        // Predicated region
        $region33: #{tpu_custom_call.1} parent=11 // pred_check
          %p571 = pneg %p486
        $region34: #{tpu_custom_call.1} parent=11 // pred_check_branch
          %573 = sbr.rel (%p571) target = $region36
        $region35: #{tpu_custom_call.1} parent=11 // pred_region
          _
        $region36: #{tpu_custom_call.1} parent=11 // pred_fallthru
          _
        // Predicated region
        $region37: #{tpu_custom_call.1} parent=11 // pred_check
          %p574 = pneg %p507
        $region38: #{tpu_custom_call.1} parent=11 // pred_check_branch
          %576 = sbr.rel (%p574) target = $region40
        $region39: #{tpu_custom_call.1} parent=11 // pred_region
          _
        $region40: #{tpu_custom_call.1} parent=11 // pred_fallthru
          _
      $region12: #{tpu_custom_call.1} parent=5 // pred_fallthru
        _
      %p577 = scmp.lt.s32.totalorder %s26, 2
      // Predicated region
      $region41: #{tpu_custom_call.1} parent=5 // pred_check
        %p578 = pneg %p577
      $region42: #{tpu_custom_call.1} parent=5 // pred_check_branch
        %580 = sbr.rel (%p578) target = $region44
      $region43: #{tpu_custom_call.1} parent=5 // pred_region
        // Predicated region
        $region45: #{tpu_custom_call.1} parent=43 // pred_check
          %p581 = pneg %p173
        $region46: #{tpu_custom_call.1} parent=43 // pred_check_branch
          %583 = sbr.rel (%p581) target = $region48
        $region47: #{tpu_custom_call.1} parent=43 // pred_region
          %p584 = scmp.lt.s32.totalorder %s34, 1
          %s585 = scalar_select %p584, %s34, 1
          %s586 = smul.addr %s585, 4
          %s587 = smul.addr %s586, 4
          %s588 = scalar_lea.vmem %s5, %s587
        $region48: #{tpu_custom_call.1} parent=43 // pred_fallthru
          _
        // Predicated region
        $region49: #{tpu_custom_call.1} parent=43 // pred_check
          %p589 = pneg %p199
        $region50: #{tpu_custom_call.1} parent=43 // pred_check_branch
          %591 = sbr.rel (%p589) target = $region52
        $region51: #{tpu_custom_call.1} parent=43 // pred_region
          %p592 = scmp.lt.s32.totalorder %s34, 1
          %s593 = scalar_select %p592, %s34, 1
          %s594 = scalar_lea.vmem %s6, %s593
        $region52: #{tpu_custom_call.1} parent=43 // pred_fallthru
          _
        // Predicated region
        $region53: #{tpu_custom_call.1} parent=43 // pred_check
          %p595 = pneg %p225
        $region54: #{tpu_custom_call.1} parent=43 // pred_check_branch
          %597 = sbr.rel (%p595) target = $region56
        $region55: #{tpu_custom_call.1} parent=43 // pred_region
          %p598 = scmp.lt.s32.totalorder %s34, 1
          %s599 = scalar_select %p598, %s34, 1
          %s600 = smul.addr %s599, 4
          %s601 = smul.addr %s600, 4
          %s602 = scalar_lea.vmem %s7, %s601
        $region56: #{tpu_custom_call.1} parent=43 // pred_fallthru
          _
        // Predicated region
        $region57: #{tpu_custom_call.1} parent=43 // pred_check
          %p603 = pneg %p251
        $region58: #{tpu_custom_call.1} parent=43 // pred_check_branch
          %605 = sbr.rel (%p603) target = $region60
        $region59: #{tpu_custom_call.1} parent=43 // pred_region
          %p606 = scmp.lt.s32.totalorder %s34, 1
          %s607 = scalar_select %p606, %s34, 1
          %s608 = scalar_lea.vmem %s8, %s607
        $region60: #{tpu_custom_call.1} parent=43 // pred_fallthru
          _
        // Predicated region
        $region61: #{tpu_custom_call.1} parent=43 // pred_check
          %p609 = pneg %p277
        $region62: #{tpu_custom_call.1} parent=43 // pred_check_branch
          %611 = sbr.rel (%p609) target = $region64
        $region63: #{tpu_custom_call.1} parent=43 // pred_region
          %p612 = scmp.lt.s32.totalorder %s34, 1
          %s613 = scalar_select %p612, %s34, 1
          %s614 = scalar_lea.vmem %s9, %s613
        $region64: #{tpu_custom_call.1} parent=43 // pred_fallthru
          _
        // Predicated region
        $region65: #{tpu_custom_call.1} parent=43 // pred_check
          %p615 = pneg %p303
        $region66: #{tpu_custom_call.1} parent=43 // pred_check_branch
          %617 = sbr.rel (%p615) target = $region68
        $region67: #{tpu_custom_call.1} parent=43 // pred_region
          %p618 = scmp.lt.s32.totalorder %s34, 1
          %s619 = scalar_select %p618, %s34, 1
          %s620 = scalar_lea.vmem %s10, %s619
        $region68: #{tpu_custom_call.1} parent=43 // pred_fallthru
          _
        // Predicated region
        $region69: #{tpu_custom_call.1} parent=43 // pred_check
          %p621 = pneg %p329
        $region70: #{tpu_custom_call.1} parent=43 // pred_check_branch
          %623 = sbr.rel (%p621) target = $region72
        $region71: #{tpu_custom_call.1} parent=43 // pred_region
          %p624 = scmp.lt.s32.totalorder %s34, 1
          %s625 = scalar_select %p624, %s34, 1
          %s626 = scalar_lea.vmem %s11, %s625
        $region72: #{tpu_custom_call.1} parent=43 // pred_fallthru
          _
        // Predicated region
        $region73: #{tpu_custom_call.1} parent=43 // pred_check
          %p627 = pneg %p355
        $region74: #{tpu_custom_call.1} parent=43 // pred_check_branch
          %629 = sbr.rel (%p627) target = $region76
        $region75: #{tpu_custom_call.1} parent=43 // pred_region
          %p630 = scmp.lt.s32.totalorder %s34, 1
          %s631 = scalar_select %p630, %s34, 1
          %s632 = scalar_lea.vmem %s12, %s631
        $region76: #{tpu_custom_call.1} parent=43 // pred_fallthru
          _
        // Predicated region
        $region77: #{tpu_custom_call.1} parent=43 // pred_check
          %p633 = pneg %p381
        $region78: #{tpu_custom_call.1} parent=43 // pred_check_branch
          %635 = sbr.rel (%p633) target = $region80
        $region79: #{tpu_custom_call.1} parent=43 // pred_region
          %p636 = scmp.lt.s32.totalorder %s34, 1
          %s637 = scalar_select %p636, %s34, 1
          %s638 = smul.addr %s637, 64
          %s639 = smul.addr %s638, 4
          %s640 = scalar_lea.vmem %s13, %s639
        $region80: #{tpu_custom_call.1} parent=43 // pred_fallthru
          _
        // Predicated region
        $region81: #{tpu_custom_call.1} parent=43 // pred_check
          %p641 = pneg %p407
        $region82: #{tpu_custom_call.1} parent=43 // pred_check_branch
          %643 = sbr.rel (%p641) target = $region84
        $region83: #{tpu_custom_call.1} parent=43 // pred_region
          %p644 = scmp.lt.s32.totalorder %s34, 1
          %s645 = scalar_select %p644, %s34, 1
          %s646 = smul.addr %s645, 16
          %s647 = scalar_lea.vmem %s14, %s646
        $region84: #{tpu_custom_call.1} parent=43 // pred_fallthru
          _
        // Predicated region
        $region85: #{tpu_custom_call.1} parent=43 // pred_check
          %p648 = pneg %p433
        $region86: #{tpu_custom_call.1} parent=43 // pred_check_branch
          %650 = sbr.rel (%p648) target = $region88
        $region87: #{tpu_custom_call.1} parent=43 // pred_region
          %p651 = scmp.lt.s32.totalorder %s34, 1
          %s652 = scalar_select %p651, %s34, 1
          %s653 = smul.addr %s652, 256
          %s654 = smul.addr %s653, 4
          %s655 = scalar_lea.vmem %s15, %s654
        $region88: #{tpu_custom_call.1} parent=43 // pred_fallthru
          _
        // Predicated region
        $region89: #{tpu_custom_call.1} parent=43 // pred_check
          %p656 = pneg %p459
        $region90: #{tpu_custom_call.1} parent=43 // pred_check_branch
          %658 = sbr.rel (%p656) target = $region92
        $region91: #{tpu_custom_call.1} parent=43 // pred_region
          %p659 = scmp.lt.s32.totalorder %s34, 1
          %s660 = scalar_select %p659, %s34, 1
          %s661 = scalar_lea.vmem %s16, %s660
        $region92: #{tpu_custom_call.1} parent=43 // pred_fallthru
          _
      $region44: #{tpu_custom_call.1} parent=5 // pred_fallthru
        _
      %p662 = scmp.le.s32.totalorder 1, %s26
      %p663 = scmp.lt.s32.totalorder %s26, 3
      %p664 = pnand %p662, %p663
      %p665 = pneg %p664
      // Predicated region
      $region93: #{tpu_custom_call.1} parent=5 // pred_check
        _
      $region94: #{tpu_custom_call.1} parent=5 // pred_check_branch
        %667 = sbr.rel (%p664) target = $region96
      $region95: #{tpu_custom_call.1} parent=5 // pred_region
        %s668 = ssub.s32 %s26, 1
        %p669 = scmp.lt.s32.totalorder %s35, 0
        %s670 = scalar_select %p669, %s35, 0
        %s671 = smul.addr %s670, 8
        %s672 = scalar_lea.vmem %s0, %s671
        %p673 = pneg %p64
        %p674 = pneg %p61
        %p675 = scmp.lt.s32.totalorder %s35, 0
        %s676 = scalar_select %p675, %s35, 0
        %s677 = smul.addr %s676, 8
        %s678 = scalar_lea.vmem %s1, %s677
        %p679 = pneg %p90
        %p680 = pneg %p87
        %p681 = pneg %p111
        %p682 = pneg %p108
        %p683 = pneg %p132
        %p684 = pneg %p129
        %p685 = pneg %p153
        %p686 = pneg %p150
        %p687 = scmp.lt.s32.totalorder %s36, 1
        %s688 = scalar_select %p687, %s36, 1
        %s689 = smul.addr %s688, 4
        %s690 = smul.addr %s689, 4
        %s691 = scalar_lea.vmem %s5, %s690
        %p692 = pneg %p179
        %p693 = pneg %p176
        %p694 = scmp.lt.s32.totalorder %s36, 1
        %s695 = scalar_select %p694, %s36, 1
        %s696 = scalar_lea.vmem %s6, %s695
        %p697 = pneg %p205
        %p698 = pneg %p202
        %p699 = scmp.lt.s32.totalorder %s36, 1
        %s700 = scalar_select %p699, %s36, 1
        %s701 = smul.addr %s700, 4
        %s702 = smul.addr %s701, 4
        %s703 = scalar_lea.vmem %s7, %s702
        %p704 = pneg %p231
        %p705 = pneg %p228
        %p706 = scmp.lt.s32.totalorder %s36, 1
        %s707 = scalar_select %p706, %s36, 1
        %s708 = scalar_lea.vmem %s8, %s707
        %p709 = pneg %p257
        %p710 = pneg %p254
        %p711 = scmp.lt.s32.totalorder %s36, 1
        %s712 = scalar_select %p711, %s36, 1
        %s713 = scalar_lea.vmem %s9, %s712
        %p714 = pneg %p283
        %p715 = pneg %p280
        %p716 = scmp.lt.s32.totalorder %s36, 1
        %s717 = scalar_select %p716, %s36, 1
        %s718 = scalar_lea.vmem %s10, %s717
        %p719 = pneg %p309
        %p720 = pneg %p306
        %p721 = scmp.lt.s32.totalorder %s36, 1
        %s722 = scalar_select %p721, %s36, 1
        %s723 = scalar_lea.vmem %s11, %s722
        %p724 = pneg %p335
        %p725 = pneg %p332
        %p726 = scmp.lt.s32.totalorder %s36, 1
        %s727 = scalar_select %p726, %s36, 1
        %s728 = scalar_lea.vmem %s12, %s727
        %p729 = pneg %p361
        %p730 = pneg %p358
        %p731 = scmp.lt.s32.totalorder %s36, 1
        %s732 = scalar_select %p731, %s36, 1
        %s733 = smul.addr %s732, 64
        %s734 = smul.addr %s733, 4
        %s735 = scalar_lea.vmem %s13, %s734
        %p736 = pneg %p387
        %p737 = pneg %p384
        %p738 = scmp.lt.s32.totalorder %s36, 1
        %s739 = scalar_select %p738, %s36, 1
        %s740 = smul.addr %s739, 16
        %s741 = scalar_lea.vmem %s14, %s740
        %p742 = pneg %p413
        %p743 = pneg %p410
        %p744 = scmp.lt.s32.totalorder %s36, 1
        %s745 = scalar_select %p744, %s36, 1
        %s746 = smul.addr %s745, 256
        %s747 = smul.addr %s746, 4
        %s748 = scalar_lea.vmem %s15, %s747
        %p749 = pneg %p439
        %p750 = pneg %p436
        %p751 = scmp.lt.s32.totalorder %s36, 1
        %s752 = scalar_select %p751, %s36, 1
        %s753 = scalar_lea.vmem %s16, %s752
        %p754 = pneg %p465
        %p755 = pneg %p462
        %p756 = pneg %p486
        %p757 = pneg %p483
        %p758 = pneg %p507
        %p759 = pneg %p504
        %p760 = pneg %p533
        %p761 = pneg %p530
        %p762 = scmp.lt.s32.totalorder %s35, 0
        %s763 = scalar_select %p762, %s35, 0
        %s764 = smul.addr %s763, 8
        %s765 = scalar_lea.vmem %s0, %s764
        %p766 = scmp.lt.s32.totalorder %s35, 0
        %s767 = scalar_select %p766, %s35, 0
        %s768 = smul.addr %s767, 8
        %s769 = scalar_lea.vmem %s1, %s768
        %p770 = scmp.lt.s32.totalorder %s36, 1
        %s771 = scalar_select %p770, %s36, 1
        %s772 = smul.addr %s771, 4
        %s773 = smul.addr %s772, 4
        %s774 = scalar_lea.vmem %s5, %s773
        %p775 = scmp.lt.s32.totalorder %s36, 1
        %s776 = scalar_select %p775, %s36, 1
        %s777 = scalar_lea.vmem %s6, %s776
        %p778 = scmp.lt.s32.totalorder %s36, 1
        %s779 = scalar_select %p778, %s36, 1
        %s780 = smul.addr %s779, 4
        %s781 = smul.addr %s780, 4
        %s782 = scalar_lea.vmem %s7, %s781
        %p783 = scmp.lt.s32.totalorder %s36, 1
        %s784 = scalar_select %p783, %s36, 1
        %s785 = scalar_lea.vmem %s8, %s784
        %p786 = scmp.lt.s32.totalorder %s36, 1
        %s787 = scalar_select %p786, %s36, 1
        %s788 = scalar_lea.vmem %s9, %s787
        %p789 = scmp.lt.s32.totalorder %s36, 1
        %s790 = scalar_select %p789, %s36, 1
        %s791 = scalar_lea.vmem %s10, %s790
        %p792 = scmp.lt.s32.totalorder %s36, 1
        %s793 = scalar_select %p792, %s36, 1
        %s794 = scalar_lea.vmem %s11, %s793
        %p795 = scmp.lt.s32.totalorder %s36, 1
        %s796 = scalar_select %p795, %s36, 1
        %s797 = scalar_lea.vmem %s12, %s796
        %p798 = scmp.lt.s32.totalorder %s36, 1
        %s799 = scalar_select %p798, %s36, 1
        %s800 = smul.addr %s799, 64
        %s801 = smul.addr %s800, 4
        %s802 = scalar_lea.vmem %s13, %s801
        %p803 = scmp.lt.s32.totalorder %s36, 1
        %s804 = scalar_select %p803, %s36, 1
        %s805 = smul.addr %s804, 16
        %s806 = scalar_lea.vmem %s14, %s805
        %p807 = scmp.lt.s32.totalorder %s36, 1
        %s808 = scalar_select %p807, %s36, 1
        %s809 = smul.addr %s808, 256
        %s810 = smul.addr %s809, 4
        %s811 = scalar_lea.vmem %s15, %s810
        %p812 = scmp.lt.s32.totalorder %s36, 1
        %s813 = scalar_select %p812, %s36, 1
        %s814 = scalar_lea.vmem %s16, %s813
        %p816 = scmp.eq.s32.totalorder %s36, 0
        // Predicated region
        $region97: #{tpu_custom_call.1} parent=95 // pred_check
          %p817 = pneg %p816
        $region98: #{tpu_custom_call.1} parent=95 // pred_check_branch
          %819 = sbr.rel (%p817) target = $region100
        $region99: #{tpu_custom_call.1} parent=95 // pred_region
          %v820 = vld [vmem:[%s765] sm:$0xff]
          %v821 = vld [vmem:[%s765 + $0x8] sm:$0xff]
          %v822 = vld [vmem:[%s3] sm:$0xf]
          %v823 = vld [vmem:[%s3 + $0x4] sm:$0xf]
          %v824 = vpack.c.bf16 %v821, %v820
          %v825 = vld [vmem:[%s4] sm:$0x1]
          %v827 = vperm.slane %v825, 0
          %v831 = vunpack.c.l.b16 %v822
          %v832 = vunpack.c.l.b16 %v823
          %v833 = vpack.c.b16 %v832, %v831
          %vm835 = vcmask 130048
          %v837 = vsel %vm835, %v824, 0
          %839 = vmatpush.bf16.msra.mxu0 0
          %840 = vmatpush.bf16.msra.mxu0 0
          %841 = vmatpush.bf16.msra.mxu0 0
          %842 = vmatpush.bf16.msra.mxu0 0
          %843 = vmatpush.bf16.msra.mxu0 0
          %844 = vmatpush.bf16.msra.mxu0 0
          %845 = vmatpush.bf16.msra.mxu0 0
          %846 = vmatpush.bf16.msra.mxu0 %v833
          %847 = vmatmul.bf16.gmra.mxu0 %v837
          %v848 = vpop.f32.mrf.mxu0
          %v849 = vadd.f32 %v827, %v848
          %v850 = vpop.f32.mrf.mxu0
          %v851 = vadd.f32 %v827, %v850
          %852 = vdwg.mxu0
          %v853 = vld [vmem:[%s769] sm:$0xff]
          %v854 = vadd.f32 %v849, %v853
          %v855 = vadd.f32 %v851, %v853
          %vm856 = vcmask 261120
          %857 = vst.msk [vmem:[#allocation2] sm:$0xff] %vm856, %v854
          %858 = vst.msk [vmem:[#allocation2 + $0x8] sm:$0xff] %vm856, %v855
        $region100: #{tpu_custom_call.1} parent=95 // pred_fallthru
          _
        %v859 = vld [vmem:[#allocation2] sm:$0xff]
        %v860 = vld [vmem:[#allocation2 + $0x8] sm:$0xff]
        %v861 = vld [vmem:[%s2] sm:$0xf]
        %v862 = vld [vmem:[%s2 + $0x4] sm:$0xf]
        %v863 = vld [vmem:[%s2 + $0x8] sm:$0xf]
        %v864 = vld [vmem:[%s2 + $0xc] sm:$0xf]
        %v865 = vld [vmem:[%s774] sm:$0xf]
        %v866 = vld [vmem:[%s774 + $0x4] sm:$0xf]
        %v867 = vld [vmem:[%s774 + $0x8] sm:$0xf]
        %v868 = vld [vmem:[%s774 + $0xc] sm:$0xf]
        %v869 = vpack.c.bf16 %v860, %v859
        %v870 = vld [vmem:[%s777] sm:$0x1]
        %v872 = vperm.slane %v870, 0
        %v878 = vunpack.c.l.b16 %v865
        %v879 = vunpack.c.l.b16 %v866
        %v880 = vunpack.c.l.b16 %v867
        %v881 = vunpack.c.l.b16 %v868
        %v882 = vpack.c.b16 %v879, %v878
        %v883 = vpack.c.b16 %v881, %v880
        %vm886 = vcmask 261120
        %v888 = vsel %vm886, %v869, 0
        %890 = vmatpush.bf16.msra.mxu0 0
        %891 = vmatpush.bf16.msra.mxu0 0
        %892 = vmatpush.bf16.msra.mxu0 0
        %893 = vmatpush.bf16.msra.mxu0 0
        %894 = vmatpush.bf16.msra.mxu0 0
        %895 = vmatpush.bf16.msra.mxu0 0
        %896 = vmatpush.bf16.msra.mxu0 %v883
        %897 = vmatpush.bf16.msra.mxu0 %v882
        %898 = vmatmul.bf16.gmra.mxu0 %v888
        %v899 = vpop.f32.mrf.mxu0
        %v900 = vadd.f32 %v872, %v899
        %v901 = vpop.f32.mrf.mxu0
        %v902 = vadd.f32 %v872, %v901
        %903 = vdwg.mxu0
        %v904 = vmul.f32 %v900, 0.35355338
        %906 = vrot.lane.b32.xlu0 %v900, 96
        %v907 = vpop.permute.xlu0 %906
        %v909 = vmul.f32 %v904, %v907
        %v910 = vpack.c.bf16 %v909, %v909
        %v915 = vunpack.c.l.b16 %v861
        %v916 = vunpack.c.l.b16 %v862
        %v917 = vunpack.c.l.b16 %v863
        %v918 = vunpack.c.l.b16 %v864
        %v919 = vpack.c.b16 %v916, %v915
        %v920 = vpack.c.b16 %v918, %v917
        %v924 = vsel %vm886, %v910, 0
        %926 = vmatpush.bf16.msra.mxu0 0
        %927 = vmatpush.bf16.msra.mxu0 0
        %928 = vmatpush.bf16.msra.mxu0 0
        %929 = vmatpush.bf16.msra.mxu0 0
        %930 = vmatpush.bf16.msra.mxu0 0
        %931 = vmatpush.bf16.msra.mxu0 0
        %932 = vmatpush.bf16.msra.mxu0 %v920
        %933 = vmatpush.bf16.msra.mxu0 %v919
        %934 = vmatmul.bf16.gmra.mxu0 %v924
        %v935 = vpop.f32.mrf.mxu0
        %v936 = vadd.f32 0.0, %v935
        %v937 = vpop.f32.mrf.mxu0
        %938 = vdwg.mxu0
        %940 = vrot.lane.b32.xlu0 %v902, 96
        %v941 = vpop.permute.xlu0 %940
        %v943 = vmul.f32 %v904, %v941
        %v944 = vpack.c.bf16 %v943, %v943
        %v946 = vsel %vm886, %v944, 0
        %948 = vmatpush.bf16.msra.mxu0 0
        %949 = vmatpush.bf16.msra.mxu0 0
        %950 = vmatpush.bf16.msra.mxu0 0
        %951 = vmatpush.bf16.msra.mxu0 0
        %952 = vmatpush.bf16.msra.mxu0 0
        %953 = vmatpush.bf16.msra.mxu0 0
        %954 = vmatpush.bf16.msra.mxu0 %v920
        %955 = vmatpush.bf16.msra.mxu0 %v919
        %956 = vmatmul.bf16.gmra.mxu0 %v946
        %v957 = vpop.f32.mrf.mxu0
        %v958 = vadd.f32 0.0, %v957
        %v959 = vpop.f32.mrf.mxu0
        %960 = vdwg.mxu0
        %v961 = vmax.f32 %v936, %v958
        %v962 = vsub.f32 %v936, %v961
        %v963 = vmul.f32 %v962, 1.442695
        %v964 = vpow.pop %v963
        %965 = vrot.lane.b32.xlu0 %v900, 64
        %v966 = vpop.permute.xlu0 %965
        %v968 = vmul.f32 %v964, %v966
        %v969 = vsub.f32 %v958, %v961
        %v970 = vmul.f32 %v969, 1.442695
        %v971 = vpow.pop %v970
        %972 = vrot.lane.b32.xlu0 %v902, 64
        %v973 = vpop.permute.xlu0 %972
        %v975 = vmul.f32 %v971, %v973
        %v976 = vadd.f32 %v968, %v975
        %v977 = vadd.f32 %v964, %v971
        %v978 = vrcp.pop %v977
        %v979 = vmul.f32 %v976, %v978
        %980 = vst.msk [vmem:[#allocation3] sm:$0xff] %vm886, %v979
        %v981 = vmul.f32 %v902, 0.35355338
        %v982 = vmul.f32 %v981, %v907
        %v983 = vpack.c.bf16 %v982, %v982
        %v985 = vsel %vm886, %v983, 0
        %987 = vmatpush.bf16.msra.mxu0 0
        %988 = vmatpush.bf16.msra.mxu0 0
        %989 = vmatpush.bf16.msra.mxu0 0
        %990 = vmatpush.bf16.msra.mxu0 0
        %991 = vmatpush.bf16.msra.mxu0 0
        %992 = vmatpush.bf16.msra.mxu0 0
        %993 = vmatpush.bf16.msra.mxu0 %v920
        %994 = vmatpush.bf16.msra.mxu0 %v919
        %995 = vmatmul.bf16.gmra.mxu0 %v985
        %v996 = vpop.f32.mrf.mxu0
        %v997 = vadd.f32 0.0, %v996
        %v998 = vpop.f32.mrf.mxu0
        %999 = vdwg.mxu0
        %v1000 = vmul.f32 %v981, %v941
        %v1001 = vpack.c.bf16 %v1000, %v1000
        %v1003 = vsel %vm886, %v1001, 0
        %1005 = vmatpush.bf16.msra.mxu0 0
        %1006 = vmatpush.bf16.msra.mxu0 0
        %1007 = vmatpush.bf16.msra.mxu0 0
        %1008 = vmatpush.bf16.msra.mxu0 0
        %1009 = vmatpush.bf16.msra.mxu0 0
        %1010 = vmatpush.bf16.msra.mxu0 0
        %1011 = vmatpush.bf16.msra.mxu0 %v920
        %1012 = vmatpush.bf16.msra.mxu0 %v919
        %1013 = vmatmul.bf16.gmra.mxu0 %v1003
        %v1014 = vpop.f32.mrf.mxu0
        %v1015 = vadd.f32 0.0, %v1014
        %v1016 = vpop.f32.mrf.mxu0
        %1017 = vdwg.mxu0
        %v1018 = vmax.f32 %v997, %v1015
        %v1019 = vsub.f32 %v997, %v1018
        %v1020 = vmul.f32 %v1019, 1.442695
        %v1021 = vpow.pop %v1020
        %v1022 = vmul.f32 %v1021, %v966
        %v1023 = vsub.f32 %v1015, %v1018
        %v1024 = vmul.f32 %v1023, 1.442695
        %v1025 = vpow.pop %v1024
        %v1026 = vmul.f32 %v1025, %v973
        %v1027 = vadd.f32 %v1022, %v1026
        %v1028 = vadd.f32 %v1021, %v1025
        %v1029 = vrcp.pop %v1028
        %v1030 = vmul.f32 %v1027, %v1029
        %1031 = vst.msk [vmem:[#allocation3 + $0x8] sm:$0xff] %vm886, %v1030
        %v1032 = vld [vmem:[#allocation3] sm:$0xff]
        %v1033 = vld [vmem:[#allocation3 + $0x8] sm:$0xff]
        %v1034 = vld [vmem:[%s782] sm:$0xf]
        %v1035 = vld [vmem:[%s782 + $0x4] sm:$0xf]
        %v1036 = vld [vmem:[%s782 + $0x8] sm:$0xf]
        %v1037 = vld [vmem:[%s782 + $0xc] sm:$0xf]
        %v1038 = vpack.c.bf16 %v1033, %v1032
        %v1039 = vld [vmem:[%s785] sm:$0x1]
        %v1041 = vperm.slane %v1039, 0
        %v1047 = vunpack.c.l.b16 %v1034
        %v1048 = vunpack.c.l.b16 %v1035
        %v1049 = vunpack.c.l.b16 %v1036
        %v1050 = vunpack.c.l.b16 %v1037
        %v1051 = vpack.c.b16 %v1048, %v1047
        %v1052 = vpack.c.b16 %v1050, %v1049
        %v1056 = vsel %vm886, %v1038, 0
        %1058 = vmatpush.bf16.msra.mxu0 0
        %1059 = vmatpush.bf16.msra.mxu0 0
        %1060 = vmatpush.bf16.msra.mxu0 0
        %1061 = vmatpush.bf16.msra.mxu0 0
        %1062 = vmatpush.bf16.msra.mxu0 0
        %1063 = vmatpush.bf16.msra.mxu0 0
        %1064 = vmatpush.bf16.msra.mxu0 %v1052
        %1065 = vmatpush.bf16.msra.mxu0 %v1051
        %1066 = vmatmul.bf16.gmra.mxu0 %v1056
        %v1067 = vpop.f32.mrf.mxu0
        %v1068 = vadd.f32 %v1041, %v1067
        %v1069 = vpop.f32.mrf.mxu0
        %v1070 = vadd.f32 %v1041, %v1069
        %1071 = vdwg.mxu0
        %v1072 = vadd.f32 %v859, %v1068
        %v1073 = vadd.f32 %v860, %v1070
        %v1074 = vld [vmem:[%s788] sm:$0x1]
        %v1075 = vld [vmem:[%s791] sm:$0x1]
        %v1076 = vsel %vm886, %v1072, 0.0
        %1077 = vadd.xlane.f32.xlu0 %v1076
        %v1078 = vpop.xlane.xlu0 %1077
        %v1079 = vsel %vm886, %v1073, 0.0
        %1080 = vadd.xlane.f32.xlu0 %v1079
        %v1081 = vpop.xlane.xlu0 %1080
        %v1082 = vrcp.pop 32.0
        %v1083 = vmul.f32 32.0, %v1082
        %v1084 = vsub.f32 1.0, %v1083
        %v1085 = vmul.f32 %v1082, %v1084
        %v1086 = vadd.f32 %v1082, %v1085
        %vm1087 = vweird.f32 %v1082
        %v1088 = vsel %vm1087, %v1082, %v1086
        %v1089 = vmul.f32 %v1078, %v1088
        %v1090 = vmul.f32 %v1081, %v1088
        %v1091 = vsub.f32 %v1072, %v1089
        %v1092 = vsub.f32 %v1073, %v1090
        %v1093 = vmul.f32 %v1091, %v1091
        %v1094 = vmul.f32 %v1092, %v1092
        %v1095 = vsel %vm886, %v1093, 0.0
        %1096 = vadd.xlane.f32.xlu0 %v1095
        %v1097 = vpop.xlane.xlu0 %1096
        %v1098 = vsel %vm886, %v1094, 0.0
        %1099 = vadd.xlane.f32.xlu0 %v1098
        %v1100 = vpop.xlane.xlu0 %1099
        %v1101 = vmul.f32 %v1097, %v1088
        %v1102 = vmul.f32 %v1100, %v1088
        %v1103 = vadd.f32 %v1101, 1e-05
        %v1104 = vadd.f32 %v1102, 1e-05
        %v1105 = vrsqrt.pop %v1103
        %v1106 = vmul.f32 %v1105, %v1103
        %v1107 = vmul.f32 %v1106, %v1105
        %v1108 = vmul.f32 0.5, %v1107
        %v1109 = vsub.f32 1.5, %v1108
        %v1110 = vmul.f32 %v1105, %v1109
        %vm1111 = vweird.f32 %v1103
        %vm1112 = vweird.f32 %v1105
        %vm1113 = vmor %vm1111, %vm1112
        %v1114 = vsel %vm1113, %v1105, %v1110
        %v1115 = vrsqrt.pop %v1104
        %v1116 = vmul.f32 %v1115, %v1104
        %v1117 = vmul.f32 %v1116, %v1115
        %v1118 = vmul.f32 0.5, %v1117
        %v1119 = vsub.f32 1.5, %v1118
        %v1120 = vmul.f32 %v1115, %v1119
        %vm1121 = vweird.f32 %v1104
        %vm1122 = vweird.f32 %v1115
        %vm1123 = vmor %vm1121, %vm1122
        %v1124 = vsel %vm1123, %v1115, %v1120
        %v1125 = vmul.f32 %v1091, %v1114
        %v1126 = vmul.f32 %v1092, %v1124
        %v1128 = vperm.slane %v1074, 0
        %v1130 = vmul.f32 %v1125, %v1128
        %v1131 = vmul.f32 %v1126, %v1128
        %v1133 = vperm.slane %v1075, 0
        %v1135 = vadd.f32 %v1130, %v1133
        %v1136 = vadd.f32 %v1131, %v1133
        %v1137 = vld [vmem:[%s802] sm:$0xff]
        %v1138 = vld [vmem:[%s802 + $0x8] sm:$0xff]
        %v1139 = vld [vmem:[%s802 + $0x10] sm:$0xff]
        %v1140 = vld [vmem:[%s802 + $0x18] sm:$0xff]
        %v1141 = vld [vmem:[%s802 + $0x20] sm:$0xff]
        %v1142 = vld [vmem:[%s802 + $0x28] sm:$0xff]
        %v1143 = vld [vmem:[%s802 + $0x30] sm:$0xff]
        %v1144 = vld [vmem:[%s802 + $0x38] sm:$0xff]
        %v1145 = vld [vmem:[%s802 + $0x40] sm:$0xff]
        %v1146 = vld [vmem:[%s802 + $0x48] sm:$0xff]
        %v1147 = vld [vmem:[%s802 + $0x50] sm:$0xff]
        %v1148 = vld [vmem:[%s802 + $0x58] sm:$0xff]
        %v1149 = vld [vmem:[%s802 + $0x60] sm:$0xff]
        %v1150 = vld [vmem:[%s802 + $0x68] sm:$0xff]
        %v1151 = vld [vmem:[%s802 + $0x70] sm:$0xff]
        %v1152 = vld [vmem:[%s802 + $0x78] sm:$0xff]
        %v1153 = vld [vmem:[%s802 + $0x80] sm:$0xff]
        %v1154 = vld [vmem:[%s802 + $0x88] sm:$0xff]
        %v1155 = vld [vmem:[%s802 + $0x90] sm:$0xff]
        %v1156 = vld [vmem:[%s802 + $0x98] sm:$0xff]
        %v1157 = vld [vmem:[%s802 + $0xa0] sm:$0xff]
        %v1158 = vld [vmem:[%s802 + $0xa8] sm:$0xff]
        %v1159 = vld [vmem:[%s802 + $0xb0] sm:$0xff]
        %v1160 = vld [vmem:[%s802 + $0xb8] sm:$0xff]
        %v1161 = vld [vmem:[%s802 + $0xc0] sm:$0xff]
        %v1162 = vld [vmem:[%s802 + $0xc8] sm:$0xff]
        %v1163 = vld [vmem:[%s802 + $0xd0] sm:$0xff]
        %v1164 = vld [vmem:[%s802 + $0xd8] sm:$0xff]
        %v1165 = vld [vmem:[%s802 + $0xe0] sm:$0xff]
        %v1166 = vld [vmem:[%s802 + $0xe8] sm:$0xff]
        %v1167 = vld [vmem:[%s802 + $0xf0] sm:$0xff]
        %v1168 = vld [vmem:[%s802 + $0xf8] sm:$0xff]
        %v1169 = vpack.c.bf16 %v1136, %v1135
        %v1170 = vld [vmem:[%s806] sm:$0xff]
        %v1171 = vld [vmem:[%s806 + $0x8] sm:$0xff]
        %v1174 = vperm.slane %v1170, 0
        %v1175 = vperm.slane %v1170, 1
        %v1176 = vperm.slane %v1170, 2
        %v1177 = vperm.slane %v1170, 3
        %v1178 = vperm.slane %v1170, 4
        %v1179 = vperm.slane %v1170, 5
        %v1180 = vperm.slane %v1170, 6
        %v1181 = vperm.slane %v1170, 7
        %v1182 = vperm.slane %v1171, 0
        %v1183 = vperm.slane %v1171, 1
        %v1184 = vperm.slane %v1171, 2
        %v1185 = vperm.slane %v1171, 3
        %v1186 = vperm.slane %v1171, 4
        %v1187 = vperm.slane %v1171, 5
        %v1188 = vperm.slane %v1171, 6
        %v1189 = vperm.slane %v1171, 7
        %v1238 = vunpack.c.l.b16 %v1137
        %v1239 = vunpack.c.h.b16 %v1137
        %v1240 = vunpack.c.l.b16 %v1138
        %v1241 = vunpack.c.h.b16 %v1138
        %v1242 = vunpack.c.l.b16 %v1139
        %v1243 = vunpack.c.h.b16 %v1139
        %v1244 = vunpack.c.l.b16 %v1140
        %v1245 = vunpack.c.h.b16 %v1140
        %v1246 = vunpack.c.l.b16 %v1141
        %v1247 = vunpack.c.h.b16 %v1141
        %v1248 = vunpack.c.l.b16 %v1142
        %v1249 = vunpack.c.h.b16 %v1142
        %v1250 = vunpack.c.l.b16 %v1143
        %v1251 = vunpack.c.h.b16 %v1143
        %v1252 = vunpack.c.l.b16 %v1144
        %v1253 = vunpack.c.h.b16 %v1144
        %v1254 = vunpack.c.l.b16 %v1145
        %v1255 = vunpack.c.h.b16 %v1145
        %v1256 = vunpack.c.l.b16 %v1146
        %v1257 = vunpack.c.h.b16 %v1146
        %v1258 = vunpack.c.l.b16 %v1147
        %v1259 = vunpack.c.h.b16 %v1147
        %v1260 = vunpack.c.l.b16 %v1148
        %v1261 = vunpack.c.h.b16 %v1148
        %v1262 = vunpack.c.l.b16 %v1149
        %v1263 = vunpack.c.h.b16 %v1149
        %v1264 = vunpack.c.l.b16 %v1150
        %v1265 = vunpack.c.h.b16 %v1150
        %v1266 = vunpack.c.l.b16 %v1151
        %v1267 = vunpack.c.h.b16 %v1151
        %v1268 = vunpack.c.l.b16 %v1152
        %v1269 = vunpack.c.h.b16 %v1152
        %v1270 = vunpack.c.l.b16 %v1153
        %v1271 = vunpack.c.h.b16 %v1153
        %v1272 = vunpack.c.l.b16 %v1154
        %v1273 = vunpack.c.h.b16 %v1154
        %v1274 = vunpack.c.l.b16 %v1155
        %v1275 = vunpack.c.h.b16 %v1155
        %v1276 = vunpack.c.l.b16 %v1156
        %v1277 = vunpack.c.h.b16 %v1156
        %v1278 = vunpack.c.l.b16 %v1157
        %v1279 = vunpack.c.h.b16 %v1157
        %v1280 = vunpack.c.l.b16 %v1158
        %v1281 = vunpack.c.h.b16 %v1158
        %v1282 = vunpack.c.l.b16 %v1159
        %v1283 = vunpack.c.h.b16 %v1159
        %v1284 = vunpack.c.l.b16 %v1160
        %v1285 = vunpack.c.h.b16 %v1160
        %v1286 = vunpack.c.l.b16 %v1161
        %v1287 = vunpack.c.h.b16 %v1161
        %v1288 = vunpack.c.l.b16 %v1162
        %v1289 = vunpack.c.h.b16 %v1162
        %v1290 = vunpack.c.l.b16 %v1163
        %v1291 = vunpack.c.h.b16 %v1163
        %v1292 = vunpack.c.l.b16 %v1164
        %v1293 = vunpack.c.h.b16 %v1164
        %v1294 = vunpack.c.l.b16 %v1165
        %v1295 = vunpack.c.h.b16 %v1165
        %v1296 = vunpack.c.l.b16 %v1166
        %v1297 = vunpack.c.h.b16 %v1166
        %v1298 = vunpack.c.l.b16 %v1167
        %v1299 = vunpack.c.h.b16 %v1167
        %v1300 = vunpack.c.l.b16 %v1168
        %v1301 = vunpack.c.h.b16 %v1168
        %v1302 = vpack.c.b16 %v1254, %v1238
        %v1303 = vpack.c.b16 %v1255, %v1239
        %v1304 = vpack.c.b16 %v1256, %v1240
        %v1305 = vpack.c.b16 %v1257, %v1241
        %v1306 = vpack.c.b16 %v1258, %v1242
        %v1307 = vpack.c.b16 %v1259, %v1243
        %v1308 = vpack.c.b16 %v1260, %v1244
        %v1309 = vpack.c.b16 %v1261, %v1245
        %v1310 = vpack.c.b16 %v1262, %v1246
        %v1311 = vpack.c.b16 %v1263, %v1247
        %v1312 = vpack.c.b16 %v1264, %v1248
        %v1313 = vpack.c.b16 %v1265, %v1249
        %v1314 = vpack.c.b16 %v1266, %v1250
        %v1315 = vpack.c.b16 %v1267, %v1251
        %v1316 = vpack.c.b16 %v1268, %v1252
        %v1317 = vpack.c.b16 %v1269, %v1253
        %v1318 = vpack.c.b16 %v1286, %v1270
        %v1319 = vpack.c.b16 %v1287, %v1271
        %v1320 = vpack.c.b16 %v1288, %v1272
        %v1321 = vpack.c.b16 %v1289, %v1273
        %v1322 = vpack.c.b16 %v1290, %v1274
        %v1323 = vpack.c.b16 %v1291, %v1275
        %v1324 = vpack.c.b16 %v1292, %v1276
        %v1325 = vpack.c.b16 %v1293, %v1277
        %v1326 = vpack.c.b16 %v1294, %v1278
        %v1327 = vpack.c.b16 %v1295, %v1279
        %v1328 = vpack.c.b16 %v1296, %v1280
        %v1329 = vpack.c.b16 %v1297, %v1281
        %v1330 = vpack.c.b16 %v1298, %v1282
        %v1331 = vpack.c.b16 %v1299, %v1283
        %v1332 = vpack.c.b16 %v1300, %v1284
        %v1333 = vpack.c.b16 %v1301, %v1285
        %v1367 = vsel %vm886, %v1169, 0
        %1369 = vmatpush.bf16.msra.mxu0 0
        %1370 = vmatpush.bf16.msra.mxu0 0
        %1371 = vmatpush.bf16.msra.mxu0 0
        %1372 = vmatpush.bf16.msra.mxu0 0
        %1373 = vmatpush.bf16.msra.mxu0 0
        %1374 = vmatpush.bf16.msra.mxu0 0
        %1375 = vmatpush.bf16.msra.mxu0 %v1318
        %1376 = vmatpush.bf16.msra.mxu0 %v1302
        %1377 = vmatmul.bf16.gmra.mxu0 %v1367
        %v1378 = vpop.f32.mrf.mxu0
        %v1379 = vadd.f32 %v1174, %v1378
        %v1380 = vpop.f32.mrf.mxu0
        %v1381 = vadd.f32 %v1174, %v1380
        %1382 = vdwg.mxu0
        %1383 = vmatpush.bf16.msra.mxu0 0
        %1384 = vmatpush.bf16.msra.mxu0 0
        %1385 = vmatpush.bf16.msra.mxu0 0
        %1386 = vmatpush.bf16.msra.mxu0 0
        %1387 = vmatpush.bf16.msra.mxu0 0
        %1388 = vmatpush.bf16.msra.mxu0 0
        %1389 = vmatpush.bf16.msra.mxu0 %v1319
        %1390 = vmatpush.bf16.msra.mxu0 %v1303
        %1391 = vmatmul.bf16.gmra.mxu0 %v1367
        %v1392 = vpop.f32.mrf.mxu0
        %v1393 = vadd.f32 %v1175, %v1392
        %v1394 = vpop.f32.mrf.mxu0
        %v1395 = vadd.f32 %v1175, %v1394
        %1396 = vdwg.mxu0
        %1397 = vmatpush.bf16.msra.mxu0 0
        %1398 = vmatpush.bf16.msra.mxu0 0
        %1399 = vmatpush.bf16.msra.mxu0 0
        %1400 = vmatpush.bf16.msra.mxu0 0
        %1401 = vmatpush.bf16.msra.mxu0 0
        %1402 = vmatpush.bf16.msra.mxu0 0
        %1403 = vmatpush.bf16.msra.mxu0 %v1320
        %1404 = vmatpush.bf16.msra.mxu0 %v1304
        %1405 = vmatmul.bf16.gmra.mxu0 %v1367
        %v1406 = vpop.f32.mrf.mxu0
        %v1407 = vadd.f32 %v1176, %v1406
        %v1408 = vpop.f32.mrf.mxu0
        %v1409 = vadd.f32 %v1176, %v1408
        %1410 = vdwg.mxu0
        %1411 = vmatpush.bf16.msra.mxu0 0
        %1412 = vmatpush.bf16.msra.mxu0 0
        %1413 = vmatpush.bf16.msra.mxu0 0
        %1414 = vmatpush.bf16.msra.mxu0 0
        %1415 = vmatpush.bf16.msra.mxu0 0
        %1416 = vmatpush.bf16.msra.mxu0 0
        %1417 = vmatpush.bf16.msra.mxu0 %v1321
        %1418 = vmatpush.bf16.msra.mxu0 %v1305
        %1419 = vmatmul.bf16.gmra.mxu0 %v1367
        %v1420 = vpop.f32.mrf.mxu0
        %v1421 = vadd.f32 %v1177, %v1420
        %v1422 = vpop.f32.mrf.mxu0
        %v1423 = vadd.f32 %v1177, %v1422
        %1424 = vdwg.mxu0
        %1425 = vmatpush.bf16.msra.mxu0 0
        %1426 = vmatpush.bf16.msra.mxu0 0
        %1427 = vmatpush.bf16.msra.mxu0 0
        %1428 = vmatpush.bf16.msra.mxu0 0
        %1429 = vmatpush.bf16.msra.mxu0 0
        %1430 = vmatpush.bf16.msra.mxu0 0
        %1431 = vmatpush.bf16.msra.mxu0 %v1322
        %1432 = vmatpush.bf16.msra.mxu0 %v1306
        %1433 = vmatmul.bf16.gmra.mxu0 %v1367
        %v1434 = vpop.f32.mrf.mxu0
        %v1435 = vadd.f32 %v1178, %v1434
        %v1436 = vpop.f32.mrf.mxu0
        %v1437 = vadd.f32 %v1178, %v1436
        %1438 = vdwg.mxu0
        %1439 = vmatpush.bf16.msra.mxu0 0
        %1440 = vmatpush.bf16.msra.mxu0 0
        %1441 = vmatpush.bf16.msra.mxu0 0
        %1442 = vmatpush.bf16.msra.mxu0 0
        %1443 = vmatpush.bf16.msra.mxu0 0
        %1444 = vmatpush.bf16.msra.mxu0 0
        %1445 = vmatpush.bf16.msra.mxu0 %v1323
        %1446 = vmatpush.bf16.msra.mxu0 %v1307
        %1447 = vmatmul.bf16.gmra.mxu0 %v1367
        %v1448 = vpop.f32.mrf.mxu0
        %v1449 = vadd.f32 %v1179, %v1448
        %v1450 = vpop.f32.mrf.mxu0
        %v1451 = vadd.f32 %v1179, %v1450
        %1452 = vdwg.mxu0
        %1453 = vmatpush.bf16.msra.mxu0 0
        %1454 = vmatpush.bf16.msra.mxu0 0
        %1455 = vmatpush.bf16.msra.mxu0 0
        %1456 = vmatpush.bf16.msra.mxu0 0
        %1457 = vmatpush.bf16.msra.mxu0 0
        %1458 = vmatpush.bf16.msra.mxu0 0
        %1459 = vmatpush.bf16.msra.mxu0 %v1324
        %1460 = vmatpush.bf16.msra.mxu0 %v1308
        %1461 = vmatmul.bf16.gmra.mxu0 %v1367
        %v1462 = vpop.f32.mrf.mxu0
        %v1463 = vadd.f32 %v1180, %v1462
        %v1464 = vpop.f32.mrf.mxu0
        %v1465 = vadd.f32 %v1180, %v1464
        %1466 = vdwg.mxu0
        %1467 = vmatpush.bf16.msra.mxu0 0
        %1468 = vmatpush.bf16.msra.mxu0 0
        %1469 = vmatpush.bf16.msra.mxu0 0
        %1470 = vmatpush.bf16.msra.mxu0 0
        %1471 = vmatpush.bf16.msra.mxu0 0
        %1472 = vmatpush.bf16.msra.mxu0 0
        %1473 = vmatpush.bf16.msra.mxu0 %v1325
        %1474 = vmatpush.bf16.msra.mxu0 %v1309
        %1475 = vmatmul.bf16.gmra.mxu0 %v1367
        %v1476 = vpop.f32.mrf.mxu0
        %v1477 = vadd.f32 %v1181, %v1476
        %v1478 = vpop.f32.mrf.mxu0
        %v1479 = vadd.f32 %v1181, %v1478
        %1480 = vdwg.mxu0
        %1481 = vmatpush.bf16.msra.mxu0 0
        %1482 = vmatpush.bf16.msra.mxu0 0
        %1483 = vmatpush.bf16.msra.mxu0 0
        %1484 = vmatpush.bf16.msra.mxu0 0
        %1485 = vmatpush.bf16.msra.mxu0 0
        %1486 = vmatpush.bf16.msra.mxu0 0
        %1487 = vmatpush.bf16.msra.mxu0 %v1326
        %1488 = vmatpush.bf16.msra.mxu0 %v1310
        %1489 = vmatmul.bf16.gmra.mxu0 %v1367
        %v1490 = vpop.f32.mrf.mxu0
        %v1491 = vadd.f32 %v1182, %v1490
        %v1492 = vpop.f32.mrf.mxu0
        %v1493 = vadd.f32 %v1182, %v1492
        %1494 = vdwg.mxu0
        %1495 = vmatpush.bf16.msra.mxu0 0
        %1496 = vmatpush.bf16.msra.mxu0 0
        %1497 = vmatpush.bf16.msra.mxu0 0
        %1498 = vmatpush.bf16.msra.mxu0 0
        %1499 = vmatpush.bf16.msra.mxu0 0
        %1500 = vmatpush.bf16.msra.mxu0 0
        %1501 = vmatpush.bf16.msra.mxu0 %v1327
        %1502 = vmatpush.bf16.msra.mxu0 %v1311
        %1503 = vmatmul.bf16.gmra.mxu0 %v1367
        %v1504 = vpop.f32.mrf.mxu0
        %v1505 = vadd.f32 %v1183, %v1504
        %v1506 = vpop.f32.mrf.mxu0
        %v1507 = vadd.f32 %v1183, %v1506
        %1508 = vdwg.mxu0
        %1509 = vmatpush.bf16.msra.mxu0 0
        %1510 = vmatpush.bf16.msra.mxu0 0
        %1511 = vmatpush.bf16.msra.mxu0 0
        %1512 = vmatpush.bf16.msra.mxu0 0
        %1513 = vmatpush.bf16.msra.mxu0 0
        %1514 = vmatpush.bf16.msra.mxu0 0
        %1515 = vmatpush.bf16.msra.mxu0 %v1328
        %1516 = vmatpush.bf16.msra.mxu0 %v1312
        %1517 = vmatmul.bf16.gmra.mxu0 %v1367
        %v1518 = vpop.f32.mrf.mxu0
        %v1519 = vadd.f32 %v1184, %v1518
        %v1520 = vpop.f32.mrf.mxu0
        %v1521 = vadd.f32 %v1184, %v1520
        %1522 = vdwg.mxu0
        %1523 = vmatpush.bf16.msra.mxu0 0
        %1524 = vmatpush.bf16.msra.mxu0 0
        %1525 = vmatpush.bf16.msra.mxu0 0
        %1526 = vmatpush.bf16.msra.mxu0 0
        %1527 = vmatpush.bf16.msra.mxu0 0
        %1528 = vmatpush.bf16.msra.mxu0 0
        %1529 = vmatpush.bf16.msra.mxu0 %v1329
        %1530 = vmatpush.bf16.msra.mxu0 %v1313
        %1531 = vmatmul.bf16.gmra.mxu0 %v1367
        %v1532 = vpop.f32.mrf.mxu0
        %v1533 = vadd.f32 %v1185, %v1532
        %v1534 = vpop.f32.mrf.mxu0
        %v1535 = vadd.f32 %v1185, %v1534
        %1536 = vdwg.mxu0
        %1537 = vmatpush.bf16.msra.mxu0 0
        %1538 = vmatpush.bf16.msra.mxu0 0
        %1539 = vmatpush.bf16.msra.mxu0 0
        %1540 = vmatpush.bf16.msra.mxu0 0
        %1541 = vmatpush.bf16.msra.mxu0 0
        %1542 = vmatpush.bf16.msra.mxu0 0
        %1543 = vmatpush.bf16.msra.mxu0 %v1330
        %1544 = vmatpush.bf16.msra.mxu0 %v1314
        %1545 = vmatmul.bf16.gmra.mxu0 %v1367
        %v1546 = vpop.f32.mrf.mxu0
        %v1547 = vadd.f32 %v1186, %v1546
        %v1548 = vpop.f32.mrf.mxu0
        %v1549 = vadd.f32 %v1186, %v1548
        %1550 = vdwg.mxu0
        %1551 = vmatpush.bf16.msra.mxu0 0
        %1552 = vmatpush.bf16.msra.mxu0 0
        %1553 = vmatpush.bf16.msra.mxu0 0
        %1554 = vmatpush.bf16.msra.mxu0 0
        %1555 = vmatpush.bf16.msra.mxu0 0
        %1556 = vmatpush.bf16.msra.mxu0 0
        %1557 = vmatpush.bf16.msra.mxu0 %v1331
        %1558 = vmatpush.bf16.msra.mxu0 %v1315
        %1559 = vmatmul.bf16.gmra.mxu0 %v1367
        %v1560 = vpop.f32.mrf.mxu0
        %v1561 = vadd.f32 %v1187, %v1560
        %v1562 = vpop.f32.mrf.mxu0
        %v1563 = vadd.f32 %v1187, %v1562
        %1564 = vdwg.mxu0
        %1565 = vmatpush.bf16.msra.mxu0 0
        %1566 = vmatpush.bf16.msra.mxu0 0
        %1567 = vmatpush.bf16.msra.mxu0 0
        %1568 = vmatpush.bf16.msra.mxu0 0
        %1569 = vmatpush.bf16.msra.mxu0 0
        %1570 = vmatpush.bf16.msra.mxu0 0
        %1571 = vmatpush.bf16.msra.mxu0 %v1332
        %1572 = vmatpush.bf16.msra.mxu0 %v1316
        %1573 = vmatmul.bf16.gmra.mxu0 %v1367
        %v1574 = vpop.f32.mrf.mxu0
        %v1575 = vadd.f32 %v1188, %v1574
        %v1576 = vpop.f32.mrf.mxu0
        %v1577 = vadd.f32 %v1188, %v1576
        %1578 = vdwg.mxu0
        %1579 = vmatpush.bf16.msra.mxu0 0
        %1580 = vmatpush.bf16.msra.mxu0 0
        %1581 = vmatpush.bf16.msra.mxu0 0
        %1582 = vmatpush.bf16.msra.mxu0 0
        %1583 = vmatpush.bf16.msra.mxu0 0
        %1584 = vmatpush.bf16.msra.mxu0 0
        %1585 = vmatpush.bf16.msra.mxu0 %v1333
        %1586 = vmatpush.bf16.msra.mxu0 %v1317
        %1587 = vmatmul.bf16.gmra.mxu0 %v1367
        %v1588 = vpop.f32.mrf.mxu0
        %v1589 = vadd.f32 %v1189, %v1588
        %v1590 = vpop.f32.mrf.mxu0
        %v1591 = vadd.f32 %v1189, %v1590
        %1592 = vdwg.mxu0
        %v1593 = vmax.f32 %v1379, 0.0
        %v1594 = vmax.f32 %v1393, 0.0
        %v1595 = vmax.f32 %v1407, 0.0
        %v1596 = vmax.f32 %v1421, 0.0
        %v1597 = vmax.f32 %v1435, 0.0
        %v1598 = vmax.f32 %v1449, 0.0
        %v1599 = vmax.f32 %v1463, 0.0
        %v1600 = vmax.f32 %v1477, 0.0
        %v1601 = vmax.f32 %v1491, 0.0
        %v1602 = vmax.f32 %v1505, 0.0
        %v1603 = vmax.f32 %v1519, 0.0
        %v1604 = vmax.f32 %v1533, 0.0
        %v1605 = vmax.f32 %v1547, 0.0
        %v1606 = vmax.f32 %v1561, 0.0
        %v1607 = vmax.f32 %v1575, 0.0
        %v1608 = vmax.f32 %v1589, 0.0
        %v1609 = vmax.f32 %v1381, 0.0
        %v1610 = vmax.f32 %v1395, 0.0
        %v1611 = vmax.f32 %v1409, 0.0
        %v1612 = vmax.f32 %v1423, 0.0
        %v1613 = vmax.f32 %v1437, 0.0
        %v1614 = vmax.f32 %v1451, 0.0
        %v1615 = vmax.f32 %v1465, 0.0
        %v1616 = vmax.f32 %v1479, 0.0
        %v1617 = vmax.f32 %v1493, 0.0
        %v1618 = vmax.f32 %v1507, 0.0
        %v1619 = vmax.f32 %v1521, 0.0
        %v1620 = vmax.f32 %v1535, 0.0
        %v1621 = vmax.f32 %v1549, 0.0
        %v1622 = vmax.f32 %v1563, 0.0
        %v1623 = vmax.f32 %v1577, 0.0
        %v1624 = vmax.f32 %v1591, 0.0
        %v1625 = vld [vmem:[%s811] sm:$0xf]
        %v1626 = vld [vmem:[%s811 + $0x4] sm:$0xf]
        %v1627 = vld [vmem:[%s811 + $0x8] sm:$0xf]
        %v1628 = vld [vmem:[%s811 + $0xc] sm:$0xf]
        %v1629 = vld [vmem:[%s811 + $0x10] sm:$0xf]
        %v1630 = vld [vmem:[%s811 + $0x14] sm:$0xf]
        %v1631 = vld [vmem:[%s811 + $0x18] sm:$0xf]
        %v1632 = vld [vmem:[%s811 + $0x1c] sm:$0xf]
        %v1633 = vld [vmem:[%s811 + $0x20] sm:$0xf]
        %v1634 = vld [vmem:[%s811 + $0x24] sm:$0xf]
        %v1635 = vld [vmem:[%s811 + $0x28] sm:$0xf]
        %v1636 = vld [vmem:[%s811 + $0x2c] sm:$0xf]
        %v1637 = vld [vmem:[%s811 + $0x30] sm:$0xf]
        %v1638 = vld [vmem:[%s811 + $0x34] sm:$0xf]
        %v1639 = vld [vmem:[%s811 + $0x38] sm:$0xf]
        %v1640 = vld [vmem:[%s811 + $0x3c] sm:$0xf]
        %v1641 = vld [vmem:[%s811 + $0x40] sm:$0xf]
        %v1642 = vld [vmem:[%s811 + $0x44] sm:$0xf]
        %v1643 = vld [vmem:[%s811 + $0x48] sm:$0xf]
        %v1644 = vld [vmem:[%s811 + $0x4c] sm:$0xf]
        %v1645 = vld [vmem:[%s811 + $0x50] sm:$0xf]
        %v1646 = vld [vmem:[%s811 + $0x54] sm:$0xf]
        %v1647 = vld [vmem:[%s811 + $0x58] sm:$0xf]
        %v1648 = vld [vmem:[%s811 + $0x5c] sm:$0xf]
        %v1649 = vld [vmem:[%s811 + $0x60] sm:$0xf]
        %v1650 = vld [vmem:[%s811 + $0x64] sm:$0xf]
        %v1651 = vld [vmem:[%s811 + $0x68] sm:$0xf]
        %v1652 = vld [vmem:[%s811 + $0x6c] sm:$0xf]
        %v1653 = vld [vmem:[%s811 + $0x70] sm:$0xf]
        %v1654 = vld [vmem:[%s811 + $0x74] sm:$0xf]
        %v1655 = vld [vmem:[%s811 + $0x78] sm:$0xf]
        %v1656 = vld [vmem:[%s811 + $0x7c] sm:$0xf]
        %v1657 = vld [vmem:[%s811 + $0x80] sm:$0xf]
        %v1658 = vld [vmem:[%s811 + $0x84] sm:$0xf]
        %v1659 = vld [vmem:[%s811 + $0x88] sm:$0xf]
        %v1660 = vld [vmem:[%s811 + $0x8c] sm:$0xf]
        %v1661 = vld [vmem:[%s811 + $0x90] sm:$0xf]
        %v1662 = vld [vmem:[%s811 + $0x94] sm:$0xf]
        %v1663 = vld [vmem:[%s811 + $0x98] sm:$0xf]
        %v1664 = vld [vmem:[%s811 + $0x9c] sm:$0xf]
        %v1665 = vld [vmem:[%s811 + $0xa0] sm:$0xf]
        %v1666 = vld [vmem:[%s811 + $0xa4] sm:$0xf]
        %v1667 = vld [vmem:[%s811 + $0xa8] sm:$0xf]
        %v1668 = vld [vmem:[%s811 + $0xac] sm:$0xf]
        %v1669 = vld [vmem:[%s811 + $0xb0] sm:$0xf]
        %v1670 = vld [vmem:[%s811 + $0xb4] sm:$0xf]
        %v1671 = vld [vmem:[%s811 + $0xb8] sm:$0xf]
        %v1672 = vld [vmem:[%s811 + $0xbc] sm:$0xf]
        %v1673 = vld [vmem:[%s811 + $0xc0] sm:$0xf]
        %v1674 = vld [vmem:[%s811 + $0xc4] sm:$0xf]
        %v1675 = vld [vmem:[%s811 + $0xc8] sm:$0xf]
        %v1676 = vld [vmem:[%s811 + $0xcc] sm:$0xf]
        %v1677 = vld [vmem:[%s811 + $0xd0] sm:$0xf]
        %v1678 = vld [vmem:[%s811 + $0xd4] sm:$0xf]
        %v1679 = vld [vmem:[%s811 + $0xd8] sm:$0xf]
        %v1680 = vld [vmem:[%s811 + $0xdc] sm:$0xf]
        %v1681 = vld [vmem:[%s811 + $0xe0] sm:$0xf]
        %v1682 = vld [vmem:[%s811 + $0xe4] sm:$0xf]
        %v1683 = vld [vmem:[%s811 + $0xe8] sm:$0xf]
        %v1684 = vld [vmem:[%s811 + $0xec] sm:$0xf]
        %v1685 = vld [vmem:[%s811 + $0xf0] sm:$0xf]
        %v1686 = vld [vmem:[%s811 + $0xf4] sm:$0xf]
        %v1687 = vld [vmem:[%s811 + $0xf8] sm:$0xf]
        %v1688 = vld [vmem:[%s811 + $0xfc] sm:$0xf]
        %v1689 = vld [vmem:[%s811 + $0x100] sm:$0xf]
        %v1690 = vld [vmem:[%s811 + $0x104] sm:$0xf]
        %v1691 = vld [vmem:[%s811 + $0x108] sm:$0xf]
        %v1692 = vld [vmem:[%s811 + $0x10c] sm:$0xf]
        %v1693 = vld [vmem:[%s811 + $0x110] sm:$0xf]
        %v1694 = vld [vmem:[%s811 + $0x114] sm:$0xf]
        %v1695 = vld [vmem:[%s811 + $0x118] sm:$0xf]
        %v1696 = vld [vmem:[%s811 + $0x11c] sm:$0xf]
        %v1697 = vld [vmem:[%s811 + $0x120] sm:$0xf]
        %v1698 = vld [vmem:[%s811 + $0x124] sm:$0xf]
        %v1699 = vld [vmem:[%s811 + $0x128] sm:$0xf]
        %v1700 = vld [vmem:[%s811 + $0x12c] sm:$0xf]
        %v1701 = vld [vmem:[%s811 + $0x130] sm:$0xf]
        %v1702 = vld [vmem:[%s811 + $0x134] sm:$0xf]
        %v1703 = vld [vmem:[%s811 + $0x138] sm:$0xf]
        %v1704 = vld [vmem:[%s811 + $0x13c] sm:$0xf]
        %v1705 = vld [vmem:[%s811 + $0x140] sm:$0xf]
        %v1706 = vld [vmem:[%s811 + $0x144] sm:$0xf]
        %v1707 = vld [vmem:[%s811 + $0x148] sm:$0xf]
        %v1708 = vld [vmem:[%s811 + $0x14c] sm:$0xf]
        %v1709 = vld [vmem:[%s811 + $0x150] sm:$0xf]
        %v1710 = vld [vmem:[%s811 + $0x154] sm:$0xf]
        %v1711 = vld [vmem:[%s811 + $0x158] sm:$0xf]
        %v1712 = vld [vmem:[%s811 + $0x15c] sm:$0xf]
        %v1713 = vld [vmem:[%s811 + $0x160] sm:$0xf]
        %v1714 = vld [vmem:[%s811 + $0x164] sm:$0xf]
        %v1715 = vld [vmem:[%s811 + $0x168] sm:$0xf]
        %v1716 = vld [vmem:[%s811 + $0x16c] sm:$0xf]
        %v1717 = vld [vmem:[%s811 + $0x170] sm:$0xf]
        %v1718 = vld [vmem:[%s811 + $0x174] sm:$0xf]
        %v1719 = vld [vmem:[%s811 + $0x178] sm:$0xf]
        %v1720 = vld [vmem:[%s811 + $0x17c] sm:$0xf]
        %v1721 = vld [vmem:[%s811 + $0x180] sm:$0xf]
        %v1722 = vld [vmem:[%s811 + $0x184] sm:$0xf]
        %v1723 = vld [vmem:[%s811 + $0x188] sm:$0xf]
        %v1724 = vld [vmem:[%s811 + $0x18c] sm:$0xf]
        %v1725 = vld [vmem:[%s811 + $0x190] sm:$0xf]
        %v1726 = vld [vmem:[%s811 + $0x194] sm:$0xf]
        %v1727 = vld [vmem:[%s811 + $0x198] sm:$0xf]
        %v1728 = vld [vmem:[%s811 + $0x19c] sm:$0xf]
        %v1729 = vld [vmem:[%s811 + $0x1a0] sm:$0xf]
        %v1730 = vld [vmem:[%s811 + $0x1a4] sm:$0xf]
        %v1731 = vld [vmem:[%s811 + $0x1a8] sm:$0xf]
        %v1732 = vld [vmem:[%s811 + $0x1ac] sm:$0xf]
        %v1733 = vld [vmem:[%s811 + $0x1b0] sm:$0xf]
        %v1734 = vld [vmem:[%s811 + $0x1b4] sm:$0xf]
        %v1735 = vld [vmem:[%s811 + $0x1b8] sm:$0xf]
        %v1736 = vld [vmem:[%s811 + $0x1bc] sm:$0xf]
        %v1737 = vld [vmem:[%s811 + $0x1c0] sm:$0xf]
        %v1738 = vld [vmem:[%s811 + $0x1c4] sm:$0xf]
        %v1739 = vld [vmem:[%s811 + $0x1c8] sm:$0xf]
        %v1740 = vld [vmem:[%s811 + $0x1cc] sm:$0xf]
        %v1741 = vld [vmem:[%s811 + $0x1d0] sm:$0xf]
        %v1742 = vld [vmem:[%s811 + $0x1d4] sm:$0xf]
        %v1743 = vld [vmem:[%s811 + $0x1d8] sm:$0xf]
        %v1744 = vld [vmem:[%s811 + $0x1dc] sm:$0xf]
        %v1745 = vld [vmem:[%s811 + $0x1e0] sm:$0xf]
        %v1746 = vld [vmem:[%s811 + $0x1e4] sm:$0xf]
        %v1747 = vld [vmem:[%s811 + $0x1e8] sm:$0xf]
        %v1748 = vld [vmem:[%s811 + $0x1ec] sm:$0xf]
        %v1749 = vld [vmem:[%s811 + $0x1f0] sm:$0xf]
        %v1750 = vld [vmem:[%s811 + $0x1f4] sm:$0xf]
        %v1751 = vld [vmem:[%s811 + $0x1f8] sm:$0xf]
        %v1752 = vld [vmem:[%s811 + $0x1fc] sm:$0xf]
        %v1753 = vld [vmem:[%s811 + $0x200] sm:$0xf]
        %v1754 = vld [vmem:[%s811 + $0x204] sm:$0xf]
        %v1755 = vld [vmem:[%s811 + $0x208] sm:$0xf]
        %v1756 = vld [vmem:[%s811 + $0x20c] sm:$0xf]
        %v1757 = vld [vmem:[%s811 + $0x210] sm:$0xf]
        %v1758 = vld [vmem:[%s811 + $0x214] sm:$0xf]
        %v1759 = vld [vmem:[%s811 + $0x218] sm:$0xf]
        %v1760 = vld [vmem:[%s811 + $0x21c] sm:$0xf]
        %v1761 = vld [vmem:[%s811 + $0x220] sm:$0xf]
        %v1762 = vld [vmem:[%s811 + $0x224] sm:$0xf]
        %v1763 = vld [vmem:[%s811 + $0x228] sm:$0xf]
        %v1764 = vld [vmem:[%s811 + $0x22c] sm:$0xf]
        %v1765 = vld [vmem:[%s811 + $0x230] sm:$0xf]
        %v1766 = vld [vmem:[%s811 + $0x234] sm:$0xf]
        %v1767 = vld [vmem:[%s811 + $0x238] sm:$0xf]
        %v1768 = vld [vmem:[%s811 + $0x23c] sm:$0xf]
        %v1769 = vld [vmem:[%s811 + $0x240] sm:$0xf]
        %v1770 = vld [vmem:[%s811 + $0x244] sm:$0xf]
        %v1771 = vld [vmem:[%s811 + $0x248] sm:$0xf]
        %v1772 = vld [vmem:[%s811 + $0x24c] sm:$0xf]
        %v1773 = vld [vmem:[%s811 + $0x250] sm:$0xf]
        %v1774 = vld [vmem:[%s811 + $0x254] sm:$0xf]
        %v1775 = vld [vmem:[%s811 + $0x258] sm:$0xf]
        %v1776 = vld [vmem:[%s811 + $0x25c] sm:$0xf]
        %v1777 = vld [vmem:[%s811 + $0x260] sm:$0xf]
        %v1778 = vld [vmem:[%s811 + $0x264] sm:$0xf]
        %v1779 = vld [vmem:[%s811 + $0x268] sm:$0xf]
        %v1780 = vld [vmem:[%s811 + $0x26c] sm:$0xf]
        %v1781 = vld [vmem:[%s811 + $0x270] sm:$0xf]
        %v1782 = vld [vmem:[%s811 + $0x274] sm:$0xf]
        %v1783 = vld [vmem:[%s811 + $0x278] sm:$0xf]
        %v1784 = vld [vmem:[%s811 + $0x27c] sm:$0xf]
        %v1785 = vld [vmem:[%s811 + $0x280] sm:$0xf]
        %v1786 = vld [vmem:[%s811 + $0x284] sm:$0xf]
        %v1787 = vld [vmem:[%s811 + $0x288] sm:$0xf]
        %v1788 = vld [vmem:[%s811 + $0x28c] sm:$0xf]
        %v1789 = vld [vmem:[%s811 + $0x290] sm:$0xf]
        %v1790 = vld [vmem:[%s811 + $0x294] sm:$0xf]
        %v1791 = vld [vmem:[%s811 + $0x298] sm:$0xf]
        %v1792 = vld [vmem:[%s811 + $0x29c] sm:$0xf]
        %v1793 = vld [vmem:[%s811 + $0x2a0] sm:$0xf]
        %v1794 = vld [vmem:[%s811 + $0x2a4] sm:$0xf]
        %v1795 = vld [vmem:[%s811 + $0x2a8] sm:$0xf]
        %v1796 = vld [vmem:[%s811 + $0x2ac] sm:$0xf]
        %v1797 = vld [vmem:[%s811 + $0x2b0] sm:$0xf]
        %v1798 = vld [vmem:[%s811 + $0x2b4] sm:$0xf]
        %v1799 = vld [vmem:[%s811 + $0x2b8] sm:$0xf]
        %v1800 = vld [vmem:[%s811 + $0x2bc] sm:$0xf]
        %v1801 = vld [vmem:[%s811 + $0x2c0] sm:$0xf]
        %v1802 = vld [vmem:[%s811 + $0x2c4] sm:$0xf]
        %v1803 = vld [vmem:[%s811 + $0x2c8] sm:$0xf]
        %v1804 = vld [vmem:[%s811 + $0x2cc] sm:$0xf]
        %v1805 = vld [vmem:[%s811 + $0x2d0] sm:$0xf]
        %v1806 = vld [vmem:[%s811 + $0x2d4] sm:$0xf]
        %v1807 = vld [vmem:[%s811 + $0x2d8] sm:$0xf]
        %v1808 = vld [vmem:[%s811 + $0x2dc] sm:$0xf]
        %v1809 = vld [vmem:[%s811 + $0x2e0] sm:$0xf]
        %v1810 = vld [vmem:[%s811 + $0x2e4] sm:$0xf]
        %v1811 = vld [vmem:[%s811 + $0x2e8] sm:$0xf]
        %v1812 = vld [vmem:[%s811 + $0x2ec] sm:$0xf]
        %v1813 = vld [vmem:[%s811 + $0x2f0] sm:$0xf]
        %v1814 = vld [vmem:[%s811 + $0x2f4] sm:$0xf]
        %v1815 = vld [vmem:[%s811 + $0x2f8] sm:$0xf]
        %v1816 = vld [vmem:[%s811 + $0x2fc] sm:$0xf]
        %v1817 = vld [vmem:[%s811 + $0x300] sm:$0xf]
        %v1818 = vld [vmem:[%s811 + $0x304] sm:$0xf]
        %v1819 = vld [vmem:[%s811 + $0x308] sm:$0xf]
        %v1820 = vld [vmem:[%s811 + $0x30c] sm:$0xf]
        %v1821 = vld [vmem:[%s811 + $0x310] sm:$0xf]
        %v1822 = vld [vmem:[%s811 + $0x314] sm:$0xf]
        %v1823 = vld [vmem:[%s811 + $0x318] sm:$0xf]
        %v1824 = vld [vmem:[%s811 + $0x31c] sm:$0xf]
        %v1825 = vld [vmem:[%s811 + $0x320] sm:$0xf]
        %v1826 = vld [vmem:[%s811 + $0x324] sm:$0xf]
        %v1827 = vld [vmem:[%s811 + $0x328] sm:$0xf]
        %v1828 = vld [vmem:[%s811 + $0x32c] sm:$0xf]
        %v1829 = vld [vmem:[%s811 + $0x330] sm:$0xf]
        %v1830 = vld [vmem:[%s811 + $0x334] sm:$0xf]
        %v1831 = vld [vmem:[%s811 + $0x338] sm:$0xf]
        %v1832 = vld [vmem:[%s811 + $0x33c] sm:$0xf]
        %v1833 = vld [vmem:[%s811 + $0x340] sm:$0xf]
        %v1834 = vld [vmem:[%s811 + $0x344] sm:$0xf]
        %v1835 = vld [vmem:[%s811 + $0x348] sm:$0xf]
        %v1836 = vld [vmem:[%s811 + $0x34c] sm:$0xf]
        %v1837 = vld [vmem:[%s811 + $0x350] sm:$0xf]
        %v1838 = vld [vmem:[%s811 + $0x354] sm:$0xf]
        %v1839 = vld [vmem:[%s811 + $0x358] sm:$0xf]
        %v1840 = vld [vmem:[%s811 + $0x35c] sm:$0xf]
        %v1841 = vld [vmem:[%s811 + $0x360] sm:$0xf]
        %v1842 = vld [vmem:[%s811 + $0x364] sm:$0xf]
        %v1843 = vld [vmem:[%s811 + $0x368] sm:$0xf]
        %v1844 = vld [vmem:[%s811 + $0x36c] sm:$0xf]
        %v1845 = vld [vmem:[%s811 + $0x370] sm:$0xf]
        %v1846 = vld [vmem:[%s811 + $0x374] sm:$0xf]
        %v1847 = vld [vmem:[%s811 + $0x378] sm:$0xf]
        %v1848 = vld [vmem:[%s811 + $0x37c] sm:$0xf]
        %v1849 = vld [vmem:[%s811 + $0x380] sm:$0xf]
        %v1850 = vld [vmem:[%s811 + $0x384] sm:$0xf]
        %v1851 = vld [vmem:[%s811 + $0x388] sm:$0xf]
        %v1852 = vld [vmem:[%s811 + $0x38c] sm:$0xf]
        %v1853 = vld [vmem:[%s811 + $0x390] sm:$0xf]
        %v1854 = vld [vmem:[%s811 + $0x394] sm:$0xf]
        %v1855 = vld [vmem:[%s811 + $0x398] sm:$0xf]
        %v1856 = vld [vmem:[%s811 + $0x39c] sm:$0xf]
        %v1857 = vld [vmem:[%s811 + $0x3a0] sm:$0xf]
        %v1858 = vld [vmem:[%s811 + $0x3a4] sm:$0xf]
        %v1859 = vld [vmem:[%s811 + $0x3a8] sm:$0xf]
        %v1860 = vld [vmem:[%s811 + $0x3ac] sm:$0xf]
        %v1861 = vld [vmem:[%s811 + $0x3b0] sm:$0xf]
        %v1862 = vld [vmem:[%s811 + $0x3b4] sm:$0xf]
        %v1863 = vld [vmem:[%s811 + $0x3b8] sm:$0xf]
        %v1864 = vld [vmem:[%s811 + $0x3bc] sm:$0xf]
        %v1865 = vld [vmem:[%s811 + $0x3c0] sm:$0xf]
        %v1866 = vld [vmem:[%s811 + $0x3c4] sm:$0xf]
        %v1867 = vld [vmem:[%s811 + $0x3c8] sm:$0xf]
        %v1868 = vld [vmem:[%s811 + $0x3cc] sm:$0xf]
        %v1869 = vld [vmem:[%s811 + $0x3d0] sm:$0xf]
        %v1870 = vld [vmem:[%s811 + $0x3d4] sm:$0xf]
        %v1871 = vld [vmem:[%s811 + $0x3d8] sm:$0xf]
        %v1872 = vld [vmem:[%s811 + $0x3dc] sm:$0xf]
        %v1873 = vld [vmem:[%s811 + $0x3e0] sm:$0xf]
        %v1874 = vld [vmem:[%s811 + $0x3e4] sm:$0xf]
        %v1875 = vld [vmem:[%s811 + $0x3e8] sm:$0xf]
        %v1876 = vld [vmem:[%s811 + $0x3ec] sm:$0xf]
        %v1877 = vld [vmem:[%s811 + $0x3f0] sm:$0xf]
        %v1878 = vld [vmem:[%s811 + $0x3f4] sm:$0xf]
        %v1879 = vld [vmem:[%s811 + $0x3f8] sm:$0xf]
        %v1880 = vld [vmem:[%s811 + $0x3fc] sm:$0xf]
        %v1881 = vpack.c.bf16 %v1609, %v1593
        %v1882 = vpack.c.bf16 %v1610, %v1594
        %v1883 = vpack.c.bf16 %v1611, %v1595
        %v1884 = vpack.c.bf16 %v1612, %v1596
        %v1885 = vpack.c.bf16 %v1613, %v1597
        %v1886 = vpack.c.bf16 %v1614, %v1598
        %v1887 = vpack.c.bf16 %v1615, %v1599
        %v1888 = vpack.c.bf16 %v1616, %v1600
        %v1889 = vpack.c.bf16 %v1617, %v1601
        %v1890 = vpack.c.bf16 %v1618, %v1602
        %v1891 = vpack.c.bf16 %v1619, %v1603
        %v1892 = vpack.c.bf16 %v1620, %v1604
        %v1893 = vpack.c.bf16 %v1621, %v1605
        %v1894 = vpack.c.bf16 %v1622, %v1606
        %v1895 = vpack.c.bf16 %v1623, %v1607
        %v1896 = vpack.c.bf16 %v1624, %v1608
        %v1897 = vld [vmem:[%s814] sm:$0x1]
        %v1899 = vperm.slane %v1897, 0
        %v2157 = vunpack.c.l.b16 %v1625
        %v2158 = vunpack.c.l.b16 %v1626
        %v2159 = vunpack.c.l.b16 %v1627
        %v2160 = vunpack.c.l.b16 %v1628
        %v2161 = vunpack.c.l.b16 %v1629
        %v2162 = vunpack.c.l.b16 %v1630
        %v2163 = vunpack.c.l.b16 %v1631
        %v2164 = vunpack.c.l.b16 %v1632
        %v2165 = vunpack.c.l.b16 %v1633
        %v2166 = vunpack.c.l.b16 %v1634
        %v2167 = vunpack.c.l.b16 %v1635
        %v2168 = vunpack.c.l.b16 %v1636
        %v2169 = vunpack.c.l.b16 %v1637
        %v2170 = vunpack.c.l.b16 %v1638
        %v2171 = vunpack.c.l.b16 %v1639
        %v2172 = vunpack.c.l.b16 %v1640
        %v2173 = vunpack.c.l.b16 %v1641
        %v2174 = vunpack.c.l.b16 %v1642
        %v2175 = vunpack.c.l.b16 %v1643
        %v2176 = vunpack.c.l.b16 %v1644
        %v2177 = vunpack.c.l.b16 %v1645
        %v2178 = vunpack.c.l.b16 %v1646
        %v2179 = vunpack.c.l.b16 %v1647
        %v2180 = vunpack.c.l.b16 %v1648
        %v2181 = vunpack.c.l.b16 %v1649
        %v2182 = vunpack.c.l.b16 %v1650
        %v2183 = vunpack.c.l.b16 %v1651
        %v2184 = vunpack.c.l.b16 %v1652
        %v2185 = vunpack.c.l.b16 %v1653
        %v2186 = vunpack.c.l.b16 %v1654
        %v2187 = vunpack.c.l.b16 %v1655
        %v2188 = vunpack.c.l.b16 %v1656
        %v2189 = vunpack.c.l.b16 %v1657
        %v2190 = vunpack.c.l.b16 %v1658
        %v2191 = vunpack.c.l.b16 %v1659
        %v2192 = vunpack.c.l.b16 %v1660
        %v2193 = vunpack.c.l.b16 %v1661
        %v2194 = vunpack.c.l.b16 %v1662
        %v2195 = vunpack.c.l.b16 %v1663
        %v2196 = vunpack.c.l.b16 %v1664
        %v2197 = vunpack.c.l.b16 %v1665
        %v2198 = vunpack.c.l.b16 %v1666
        %v2199 = vunpack.c.l.b16 %v1667
        %v2200 = vunpack.c.l.b16 %v1668
        %v2201 = vunpack.c.l.b16 %v1669
        %v2202 = vunpack.c.l.b16 %v1670
        %v2203 = vunpack.c.l.b16 %v1671
        %v2204 = vunpack.c.l.b16 %v1672
        %v2205 = vunpack.c.l.b16 %v1673
        %v2206 = vunpack.c.l.b16 %v1674
        %v2207 = vunpack.c.l.b16 %v1675
        %v2208 = vunpack.c.l.b16 %v1676
        %v2209 = vunpack.c.l.b16 %v1677
        %v2210 = vunpack.c.l.b16 %v1678
        %v2211 = vunpack.c.l.b16 %v1679
        %v2212 = vunpack.c.l.b16 %v1680
        %v2213 = vunpack.c.l.b16 %v1681
        %v2214 = vunpack.c.l.b16 %v1682
        %v2215 = vunpack.c.l.b16 %v1683
        %v2216 = vunpack.c.l.b16 %v1684
        %v2217 = vunpack.c.l.b16 %v1685
        %v2218 = vunpack.c.l.b16 %v1686
        %v2219 = vunpack.c.l.b16 %v1687
        %v2220 = vunpack.c.l.b16 %v1688
        %v2221 = vunpack.c.l.b16 %v1689
        %v2222 = vunpack.c.l.b16 %v1690
        %v2223 = vunpack.c.l.b16 %v1691
        %v2224 = vunpack.c.l.b16 %v1692
        %v2225 = vunpack.c.l.b16 %v1693
        %v2226 = vunpack.c.l.b16 %v1694
        %v2227 = vunpack.c.l.b16 %v1695
        %v2228 = vunpack.c.l.b16 %v1696
        %v2229 = vunpack.c.l.b16 %v1697
        %v2230 = vunpack.c.l.b16 %v1698
        %v2231 = vunpack.c.l.b16 %v1699
        %v2232 = vunpack.c.l.b16 %v1700
        %v2233 = vunpack.c.l.b16 %v1701
        %v2234 = vunpack.c.l.b16 %v1702
        %v2235 = vunpack.c.l.b16 %v1703
        %v2236 = vunpack.c.l.b16 %v1704
        %v2237 = vunpack.c.l.b16 %v1705
        %v2238 = vunpack.c.l.b16 %v1706
        %v2239 = vunpack.c.l.b16 %v1707
        %v2240 = vunpack.c.l.b16 %v1708
        %v2241 = vunpack.c.l.b16 %v1709
        %v2242 = vunpack.c.l.b16 %v1710
        %v2243 = vunpack.c.l.b16 %v1711
        %v2244 = vunpack.c.l.b16 %v1712
        %v2245 = vunpack.c.l.b16 %v1713
        %v2246 = vunpack.c.l.b16 %v1714
        %v2247 = vunpack.c.l.b16 %v1715
        %v2248 = vunpack.c.l.b16 %v1716
        %v2249 = vunpack.c.l.b16 %v1717
        %v2250 = vunpack.c.l.b16 %v1718
        %v2251 = vunpack.c.l.b16 %v1719
        %v2252 = vunpack.c.l.b16 %v1720
        %v2253 = vunpack.c.l.b16 %v1721
        %v2254 = vunpack.c.l.b16 %v1722
        %v2255 = vunpack.c.l.b16 %v1723
        %v2256 = vunpack.c.l.b16 %v1724
        %v2257 = vunpack.c.l.b16 %v1725
        %v2258 = vunpack.c.l.b16 %v1726
        %v2259 = vunpack.c.l.b16 %v1727
        %v2260 = vunpack.c.l.b16 %v1728
        %v2261 = vunpack.c.l.b16 %v1729
        %v2262 = vunpack.c.l.b16 %v1730
        %v2263 = vunpack.c.l.b16 %v1731
        %v2264 = vunpack.c.l.b16 %v1732
        %v2265 = vunpack.c.l.b16 %v1733
        %v2266 = vunpack.c.l.b16 %v1734
        %v2267 = vunpack.c.l.b16 %v1735
        %v2268 = vunpack.c.l.b16 %v1736
        %v2269 = vunpack.c.l.b16 %v1737
        %v2270 = vunpack.c.l.b16 %v1738
        %v2271 = vunpack.c.l.b16 %v1739
        %v2272 = vunpack.c.l.b16 %v1740
        %v2273 = vunpack.c.l.b16 %v1741
        %v2274 = vunpack.c.l.b16 %v1742
        %v2275 = vunpack.c.l.b16 %v1743
        %v2276 = vunpack.c.l.b16 %v1744
        %v2277 = vunpack.c.l.b16 %v1745
        %v2278 = vunpack.c.l.b16 %v1746
        %v2279 = vunpack.c.l.b16 %v1747
        %v2280 = vunpack.c.l.b16 %v1748
        %v2281 = vunpack.c.l.b16 %v1749
        %v2282 = vunpack.c.l.b16 %v1750
        %v2283 = vunpack.c.l.b16 %v1751
        %v2284 = vunpack.c.l.b16 %v1752
        %v2285 = vunpack.c.l.b16 %v1753
        %v2286 = vunpack.c.l.b16 %v1754
        %v2287 = vunpack.c.l.b16 %v1755
        %v2288 = vunpack.c.l.b16 %v1756
        %v2289 = vunpack.c.l.b16 %v1757
        %v2290 = vunpack.c.l.b16 %v1758
        %v2291 = vunpack.c.l.b16 %v1759
        %v2292 = vunpack.c.l.b16 %v1760
        %v2293 = vunpack.c.l.b16 %v1761
        %v2294 = vunpack.c.l.b16 %v1762
        %v2295 = vunpack.c.l.b16 %v1763
        %v2296 = vunpack.c.l.b16 %v1764
        %v2297 = vunpack.c.l.b16 %v1765
        %v2298 = vunpack.c.l.b16 %v1766
        %v2299 = vunpack.c.l.b16 %v1767
        %v2300 = vunpack.c.l.b16 %v1768
        %v2301 = vunpack.c.l.b16 %v1769
        %v2302 = vunpack.c.l.b16 %v1770
        %v2303 = vunpack.c.l.b16 %v1771
        %v2304 = vunpack.c.l.b16 %v1772
        %v2305 = vunpack.c.l.b16 %v1773
        %v2306 = vunpack.c.l.b16 %v1774
        %v2307 = vunpack.c.l.b16 %v1775
        %v2308 = vunpack.c.l.b16 %v1776
        %v2309 = vunpack.c.l.b16 %v1777
        %v2310 = vunpack.c.l.b16 %v1778
        %v2311 = vunpack.c.l.b16 %v1779
        %v2312 = vunpack.c.l.b16 %v1780
        %v2313 = vunpack.c.l.b16 %v1781
        %v2314 = vunpack.c.l.b16 %v1782
        %v2315 = vunpack.c.l.b16 %v1783
        %v2316 = vunpack.c.l.b16 %v1784
        %v2317 = vunpack.c.l.b16 %v1785
        %v2318 = vunpack.c.l.b16 %v1786
        %v2319 = vunpack.c.l.b16 %v1787
        %v2320 = vunpack.c.l.b16 %v1788
        %v2321 = vunpack.c.l.b16 %v1789
        %v2322 = vunpack.c.l.b16 %v1790
        %v2323 = vunpack.c.l.b16 %v1791
        %v2324 = vunpack.c.l.b16 %v1792
        %v2325 = vunpack.c.l.b16 %v1793
        %v2326 = vunpack.c.l.b16 %v1794
        %v2327 = vunpack.c.l.b16 %v1795
        %v2328 = vunpack.c.l.b16 %v1796
        %v2329 = vunpack.c.l.b16 %v1797
        %v2330 = vunpack.c.l.b16 %v1798
        %v2331 = vunpack.c.l.b16 %v1799
        %v2332 = vunpack.c.l.b16 %v1800
        %v2333 = vunpack.c.l.b16 %v1801
        %v2334 = vunpack.c.l.b16 %v1802
        %v2335 = vunpack.c.l.b16 %v1803
        %v2336 = vunpack.c.l.b16 %v1804
        %v2337 = vunpack.c.l.b16 %v1805
        %v2338 = vunpack.c.l.b16 %v1806
        %v2339 = vunpack.c.l.b16 %v1807
        %v2340 = vunpack.c.l.b16 %v1808
        %v2341 = vunpack.c.l.b16 %v1809
        %v2342 = vunpack.c.l.b16 %v1810
        %v2343 = vunpack.c.l.b16 %v1811
        %v2344 = vunpack.c.l.b16 %v1812
        %v2345 = vunpack.c.l.b16 %v1813
        %v2346 = vunpack.c.l.b16 %v1814
        %v2347 = vunpack.c.l.b16 %v1815
        %v2348 = vunpack.c.l.b16 %v1816
        %v2349 = vunpack.c.l.b16 %v1817
        %v2350 = vunpack.c.l.b16 %v1818
        %v2351 = vunpack.c.l.b16 %v1819
        %v2352 = vunpack.c.l.b16 %v1820
        %v2353 = vunpack.c.l.b16 %v1821
        %v2354 = vunpack.c.l.b16 %v1822
        %v2355 = vunpack.c.l.b16 %v1823
        %v2356 = vunpack.c.l.b16 %v1824
        %v2357 = vunpack.c.l.b16 %v1825
        %v2358 = vunpack.c.l.b16 %v1826
        %v2359 = vunpack.c.l.b16 %v1827
        %v2360 = vunpack.c.l.b16 %v1828
        %v2361 = vunpack.c.l.b16 %v1829
        %v2362 = vunpack.c.l.b16 %v1830
        %v2363 = vunpack.c.l.b16 %v1831
        %v2364 = vunpack.c.l.b16 %v1832
        %v2365 = vunpack.c.l.b16 %v1833
        %v2366 = vunpack.c.l.b16 %v1834
        %v2367 = vunpack.c.l.b16 %v1835
        %v2368 = vunpack.c.l.b16 %v1836
        %v2369 = vunpack.c.l.b16 %v1837
        %v2370 = vunpack.c.l.b16 %v1838
        %v2371 = vunpack.c.l.b16 %v1839
        %v2372 = vunpack.c.l.b16 %v1840
        %v2373 = vunpack.c.l.b16 %v1841
        %v2374 = vunpack.c.l.b16 %v1842
        %v2375 = vunpack.c.l.b16 %v1843
        %v2376 = vunpack.c.l.b16 %v1844
        %v2377 = vunpack.c.l.b16 %v1845
        %v2378 = vunpack.c.l.b16 %v1846
        %v2379 = vunpack.c.l.b16 %v1847
        %v2380 = vunpack.c.l.b16 %v1848
        %v2381 = vunpack.c.l.b16 %v1849
        %v2382 = vunpack.c.l.b16 %v1850
        %v2383 = vunpack.c.l.b16 %v1851
        %v2384 = vunpack.c.l.b16 %v1852
        %v2385 = vunpack.c.l.b16 %v1853
        %v2386 = vunpack.c.l.b16 %v1854
        %v2387 = vunpack.c.l.b16 %v1855
        %v2388 = vunpack.c.l.b16 %v1856
        %v2389 = vunpack.c.l.b16 %v1857
        %v2390 = vunpack.c.l.b16 %v1858
        %v2391 = vunpack.c.l.b16 %v1859
        %v2392 = vunpack.c.l.b16 %v1860
        %v2393 = vunpack.c.l.b16 %v1861
        %v2394 = vunpack.c.l.b16 %v1862
        %v2395 = vunpack.c.l.b16 %v1863
        %v2396 = vunpack.c.l.b16 %v1864
        %v2397 = vunpack.c.l.b16 %v1865
        %v2398 = vunpack.c.l.b16 %v1866
        %v2399 = vunpack.c.l.b16 %v1867
        %v2400 = vunpack.c.l.b16 %v1868
        %v2401 = vunpack.c.l.b16 %v1869
        %v2402 = vunpack.c.l.b16 %v1870
        %v2403 = vunpack.c.l.b16 %v1871
        %v2404 = vunpack.c.l.b16 %v1872
        %v2405 = vunpack.c.l.b16 %v1873
        %v2406 = vunpack.c.l.b16 %v1874
        %v2407 = vunpack.c.l.b16 %v1875
        %v2408 = vunpack.c.l.b16 %v1876
        %v2409 = vunpack.c.l.b16 %v1877
        %v2410 = vunpack.c.l.b16 %v1878
        %v2411 = vunpack.c.l.b16 %v1879
        %v2412 = vunpack.c.l.b16 %v1880
        %v2413 = vpack.c.b16 %v2158, %v2157
        %v2414 = vpack.c.b16 %v2160, %v2159
        %v2415 = vpack.c.b16 %v2162, %v2161
        %v2416 = vpack.c.b16 %v2164, %v2163
        %v2417 = vpack.c.b16 %v2166, %v2165
        %v2418 = vpack.c.b16 %v2168, %v2167
        %v2419 = vpack.c.b16 %v2170, %v2169
        %v2420 = vpack.c.b16 %v2172, %v2171
        %v2421 = vpack.c.b16 %v2174, %v2173
        %v2422 = vpack.c.b16 %v2176, %v2175
        %v2423 = vpack.c.b16 %v2178, %v2177
        %v2424 = vpack.c.b16 %v2180, %v2179
        %v2425 = vpack.c.b16 %v2182, %v2181
        %v2426 = vpack.c.b16 %v2184, %v2183
        %v2427 = vpack.c.b16 %v2186, %v2185
        %v2428 = vpack.c.b16 %v2188, %v2187
        %v2429 = vpack.c.b16 %v2190, %v2189
        %v2430 = vpack.c.b16 %v2192, %v2191
        %v2431 = vpack.c.b16 %v2194, %v2193
        %v2432 = vpack.c.b16 %v2196, %v2195
        %v2433 = vpack.c.b16 %v2198, %v2197
        %v2434 = vpack.c.b16 %v2200, %v2199
        %v2435 = vpack.c.b16 %v2202, %v2201
        %v2436 = vpack.c.b16 %v2204, %v2203
        %v2437 = vpack.c.b16 %v2206, %v2205
        %v2438 = vpack.c.b16 %v2208, %v2207
        %v2439 = vpack.c.b16 %v2210, %v2209
        %v2440 = vpack.c.b16 %v2212, %v2211
        %v2441 = vpack.c.b16 %v2214, %v2213
        %v2442 = vpack.c.b16 %v2216, %v2215
        %v2443 = vpack.c.b16 %v2218, %v2217
        %v2444 = vpack.c.b16 %v2220, %v2219
        %v2445 = vpack.c.b16 %v2222, %v2221
        %v2446 = vpack.c.b16 %v2224, %v2223
        %v2447 = vpack.c.b16 %v2226, %v2225
        %v2448 = vpack.c.b16 %v2228, %v2227
        %v2449 = vpack.c.b16 %v2230, %v2229
        %v2450 = vpack.c.b16 %v2232, %v2231
        %v2451 = vpack.c.b16 %v2234, %v2233
        %v2452 = vpack.c.b16 %v2236, %v2235
        %v2453 = vpack.c.b16 %v2238, %v2237
        %v2454 = vpack.c.b16 %v2240, %v2239
        %v2455 = vpack.c.b16 %v2242, %v2241
        %v2456 = vpack.c.b16 %v2244, %v2243
        %v2457 = vpack.c.b16 %v2246, %v2245
        %v2458 = vpack.c.b16 %v2248, %v2247
        %v2459 = vpack.c.b16 %v2250, %v2249
        %v2460 = vpack.c.b16 %v2252, %v2251
        %v2461 = vpack.c.b16 %v2254, %v2253
        %v2462 = vpack.c.b16 %v2256, %v2255
        %v2463 = vpack.c.b16 %v2258, %v2257
        %v2464 = vpack.c.b16 %v2260, %v2259
        %v2465 = vpack.c.b16 %v2262, %v2261
        %v2466 = vpack.c.b16 %v2264, %v2263
        %v2467 = vpack.c.b16 %v2266, %v2265
        %v2468 = vpack.c.b16 %v2268, %v2267
        %v2469 = vpack.c.b16 %v2270, %v2269
        %v2470 = vpack.c.b16 %v2272, %v2271
        %v2471 = vpack.c.b16 %v2274, %v2273
        %v2472 = vpack.c.b16 %v2276, %v2275
        %v2473 = vpack.c.b16 %v2278, %v2277
        %v2474 = vpack.c.b16 %v2280, %v2279
        %v2475 = vpack.c.b16 %v2282, %v2281
        %v2476 = vpack.c.b16 %v2284, %v2283
        %v2477 = vpack.c.b16 %v2286, %v2285
        %v2478 = vpack.c.b16 %v2288, %v2287
        %v2479 = vpack.c.b16 %v2290, %v2289
        %v2480 = vpack.c.b16 %v2292, %v2291
        %v2481 = vpack.c.b16 %v2294, %v2293
        %v2482 = vpack.c.b16 %v2296, %v2295
        %v2483 = vpack.c.b16 %v2298, %v2297
        %v2484 = vpack.c.b16 %v2300, %v2299
        %v2485 = vpack.c.b16 %v2302, %v2301
        %v2486 = vpack.c.b16 %v2304, %v2303
        %v2487 = vpack.c.b16 %v2306, %v2305
        %v2488 = vpack.c.b16 %v2308, %v2307
        %v2489 = vpack.c.b16 %v2310, %v2309
        %v2490 = vpack.c.b16 %v2312, %v2311
        %v2491 = vpack.c.b16 %v2314, %v2313
        %v2492 = vpack.c.b16 %v2316, %v2315
        %v2493 = vpack.c.b16 %v2318, %v2317
        %v2494 = vpack.c.b16 %v2320, %v2319
        %v2495 = vpack.c.b16 %v2322, %v2321
        %v2496 = vpack.c.b16 %v2324, %v2323
        %v2497 = vpack.c.b16 %v2326, %v2325
        %v2498 = vpack.c.b16 %v2328, %v2327
        %v2499 = vpack.c.b16 %v2330, %v2329
        %v2500 = vpack.c.b16 %v2332, %v2331
        %v2501 = vpack.c.b16 %v2334, %v2333
        %v2502 = vpack.c.b16 %v2336, %v2335
        %v2503 = vpack.c.b16 %v2338, %v2337
        %v2504 = vpack.c.b16 %v2340, %v2339
        %v2505 = vpack.c.b16 %v2342, %v2341
        %v2506 = vpack.c.b16 %v2344, %v2343
        %v2507 = vpack.c.b16 %v2346, %v2345
        %v2508 = vpack.c.b16 %v2348, %v2347
        %v2509 = vpack.c.b16 %v2350, %v2349
        %v2510 = vpack.c.b16 %v2352, %v2351
        %v2511 = vpack.c.b16 %v2354, %v2353
        %v2512 = vpack.c.b16 %v2356, %v2355
        %v2513 = vpack.c.b16 %v2358, %v2357
        %v2514 = vpack.c.b16 %v2360, %v2359
        %v2515 = vpack.c.b16 %v2362, %v2361
        %v2516 = vpack.c.b16 %v2364, %v2363
        %v2517 = vpack.c.b16 %v2366, %v2365
        %v2518 = vpack.c.b16 %v2368, %v2367
        %v2519 = vpack.c.b16 %v2370, %v2369
        %v2520 = vpack.c.b16 %v2372, %v2371
        %v2521 = vpack.c.b16 %v2374, %v2373
        %v2522 = vpack.c.b16 %v2376, %v2375
        %v2523 = vpack.c.b16 %v2378, %v2377
        %v2524 = vpack.c.b16 %v2380, %v2379
        %v2525 = vpack.c.b16 %v2382, %v2381
        %v2526 = vpack.c.b16 %v2384, %v2383
        %v2527 = vpack.c.b16 %v2386, %v2385
        %v2528 = vpack.c.b16 %v2388, %v2387
        %v2529 = vpack.c.b16 %v2390, %v2389
        %v2530 = vpack.c.b16 %v2392, %v2391
        %v2531 = vpack.c.b16 %v2394, %v2393
        %v2532 = vpack.c.b16 %v2396, %v2395
        %v2533 = vpack.c.b16 %v2398, %v2397
        %v2534 = vpack.c.b16 %v2400, %v2399
        %v2535 = vpack.c.b16 %v2402, %v2401
        %v2536 = vpack.c.b16 %v2404, %v2403
        %v2537 = vpack.c.b16 %v2406, %v2405
        %v2538 = vpack.c.b16 %v2408, %v2407
        %v2539 = vpack.c.b16 %v2410, %v2409
        %v2540 = vpack.c.b16 %v2412, %v2411
        %2669 = vmatpush.bf16.msra.mxu0 %v2420
        %2670 = vmatpush.bf16.msra.mxu0 %v2419
        %2671 = vmatpush.bf16.msra.mxu0 %v2418
        %2672 = vmatpush.bf16.msra.mxu0 %v2417
        %2673 = vmatpush.bf16.msra.mxu0 %v2416
        %2674 = vmatpush.bf16.msra.mxu0 %v2415
        %2675 = vmatpush.bf16.msra.mxu0 %v2414
        %2676 = vmatpush.bf16.msra.mxu0 %v2413
        %2677 = vmatmul.bf16.gmra.mxu0 %v1881
        %v2678 = vpop.f32.mrf.mxu0
        %v2679 = vadd.f32 %v1899, %v2678
        %v2680 = vpop.f32.mrf.mxu0
        %v2681 = vadd.f32 %v1899, %v2680
        %2682 = vdwg.mxu0
        %2683 = vmatpush.bf16.msra.mxu0 %v2428
        %2684 = vmatpush.bf16.msra.mxu0 %v2427
        %2685 = vmatpush.bf16.msra.mxu0 %v2426
        %2686 = vmatpush.bf16.msra.mxu0 %v2425
        %2687 = vmatpush.bf16.msra.mxu0 %v2424
        %2688 = vmatpush.bf16.msra.mxu0 %v2423
        %2689 = vmatpush.bf16.msra.mxu0 %v2422
        %2690 = vmatpush.bf16.msra.mxu0 %v2421
        %2691 = vmatmul.bf16.gmra.mxu0 %v1882
        %v2692 = vpop.f32.mrf.mxu0
        %v2693 = vadd.f32 %v2679, %v2692
        %v2694 = vpop.f32.mrf.mxu0
        %v2695 = vadd.f32 %v2681, %v2694
        %2696 = vdwg.mxu0
        %2697 = vmatpush.bf16.msra.mxu0 %v2436
        %2698 = vmatpush.bf16.msra.mxu0 %v2435
        %2699 = vmatpush.bf16.msra.mxu0 %v2434
        %2700 = vmatpush.bf16.msra.mxu0 %v2433
        %2701 = vmatpush.bf16.msra.mxu0 %v2432
        %2702 = vmatpush.bf16.msra.mxu0 %v2431
        %2703 = vmatpush.bf16.msra.mxu0 %v2430
        %2704 = vmatpush.bf16.msra.mxu0 %v2429
        %2705 = vmatmul.bf16.gmra.mxu0 %v1883
        %v2706 = vpop.f32.mrf.mxu0
        %v2707 = vadd.f32 %v2693, %v2706
        %v2708 = vpop.f32.mrf.mxu0
        %v2709 = vadd.f32 %v2695, %v2708
        %2710 = vdwg.mxu0
        %2711 = vmatpush.bf16.msra.mxu0 %v2444
        %2712 = vmatpush.bf16.msra.mxu0 %v2443
        %2713 = vmatpush.bf16.msra.mxu0 %v2442
        %2714 = vmatpush.bf16.msra.mxu0 %v2441
        %2715 = vmatpush.bf16.msra.mxu0 %v2440
        %2716 = vmatpush.bf16.msra.mxu0 %v2439
        %2717 = vmatpush.bf16.msra.mxu0 %v2438
        %2718 = vmatpush.bf16.msra.mxu0 %v2437
        %2719 = vmatmul.bf16.gmra.mxu0 %v1884
        %v2720 = vpop.f32.mrf.mxu0
        %v2721 = vadd.f32 %v2707, %v2720
        %v2722 = vpop.f32.mrf.mxu0
        %v2723 = vadd.f32 %v2709, %v2722
        %2724 = vdwg.mxu0
        %2725 = vmatpush.bf16.msra.mxu0 %v2452
        %2726 = vmatpush.bf16.msra.mxu0 %v2451
        %2727 = vmatpush.bf16.msra.mxu0 %v2450
        %2728 = vmatpush.bf16.msra.mxu0 %v2449
        %2729 = vmatpush.bf16.msra.mxu0 %v2448
        %2730 = vmatpush.bf16.msra.mxu0 %v2447
        %2731 = vmatpush.bf16.msra.mxu0 %v2446
        %2732 = vmatpush.bf16.msra.mxu0 %v2445
        %2733 = vmatmul.bf16.gmra.mxu0 %v1885
        %v2734 = vpop.f32.mrf.mxu0
        %v2735 = vadd.f32 %v2721, %v2734
        %v2736 = vpop.f32.mrf.mxu0
        %v2737 = vadd.f32 %v2723, %v2736
        %2738 = vdwg.mxu0
        %2739 = vmatpush.bf16.msra.mxu0 %v2460
        %2740 = vmatpush.bf16.msra.mxu0 %v2459
        %2741 = vmatpush.bf16.msra.mxu0 %v2458
        %2742 = vmatpush.bf16.msra.mxu0 %v2457
        %2743 = vmatpush.bf16.msra.mxu0 %v2456
        %2744 = vmatpush.bf16.msra.mxu0 %v2455
        %2745 = vmatpush.bf16.msra.mxu0 %v2454
        %2746 = vmatpush.bf16.msra.mxu0 %v2453
        %2747 = vmatmul.bf16.gmra.mxu0 %v1886
        %v2748 = vpop.f32.mrf.mxu0
        %v2749 = vadd.f32 %v2735, %v2748
        %v2750 = vpop.f32.mrf.mxu0
        %v2751 = vadd.f32 %v2737, %v2750
        %2752 = vdwg.mxu0
        %2753 = vmatpush.bf16.msra.mxu0 %v2468
        %2754 = vmatpush.bf16.msra.mxu0 %v2467
        %2755 = vmatpush.bf16.msra.mxu0 %v2466
        %2756 = vmatpush.bf16.msra.mxu0 %v2465
        %2757 = vmatpush.bf16.msra.mxu0 %v2464
        %2758 = vmatpush.bf16.msra.mxu0 %v2463
        %2759 = vmatpush.bf16.msra.mxu0 %v2462
        %2760 = vmatpush.bf16.msra.mxu0 %v2461
        %2761 = vmatmul.bf16.gmra.mxu0 %v1887
        %v2762 = vpop.f32.mrf.mxu0
        %v2763 = vadd.f32 %v2749, %v2762
        %v2764 = vpop.f32.mrf.mxu0
        %v2765 = vadd.f32 %v2751, %v2764
        %2766 = vdwg.mxu0
        %2767 = vmatpush.bf16.msra.mxu0 %v2476
        %2768 = vmatpush.bf16.msra.mxu0 %v2475
        %2769 = vmatpush.bf16.msra.mxu0 %v2474
        %2770 = vmatpush.bf16.msra.mxu0 %v2473
        %2771 = vmatpush.bf16.msra.mxu0 %v2472
        %2772 = vmatpush.bf16.msra.mxu0 %v2471
        %2773 = vmatpush.bf16.msra.mxu0 %v2470
        %2774 = vmatpush.bf16.msra.mxu0 %v2469
        %2775 = vmatmul.bf16.gmra.mxu0 %v1888
        %v2776 = vpop.f32.mrf.mxu0
        %v2777 = vadd.f32 %v2763, %v2776
        %v2778 = vpop.f32.mrf.mxu0
        %v2779 = vadd.f32 %v2765, %v2778
        %2780 = vdwg.mxu0
        %2781 = vmatpush.bf16.msra.mxu0 %v2484
        %2782 = vmatpush.bf16.msra.mxu0 %v2483
        %2783 = vmatpush.bf16.msra.mxu0 %v2482
        %2784 = vmatpush.bf16.msra.mxu0 %v2481
        %2785 = vmatpush.bf16.msra.mxu0 %v2480
        %2786 = vmatpush.bf16.msra.mxu0 %v2479
        %2787 = vmatpush.bf16.msra.mxu0 %v2478
        %2788 = vmatpush.bf16.msra.mxu0 %v2477
        %2789 = vmatmul.bf16.gmra.mxu0 %v1889
        %v2790 = vpop.f32.mrf.mxu0
        %v2791 = vadd.f32 %v2777, %v2790
        %v2792 = vpop.f32.mrf.mxu0
        %v2793 = vadd.f32 %v2779, %v2792
        %2794 = vdwg.mxu0
        %2795 = vmatpush.bf16.msra.mxu0 %v2492
        %2796 = vmatpush.bf16.msra.mxu0 %v2491
        %2797 = vmatpush.bf16.msra.mxu0 %v2490
        %2798 = vmatpush.bf16.msra.mxu0 %v2489
        %2799 = vmatpush.bf16.msra.mxu0 %v2488
        %2800 = vmatpush.bf16.msra.mxu0 %v2487
        %2801 = vmatpush.bf16.msra.mxu0 %v2486
        %2802 = vmatpush.bf16.msra.mxu0 %v2485
        %2803 = vmatmul.bf16.gmra.mxu0 %v1890
        %v2804 = vpop.f32.mrf.mxu0
        %v2805 = vadd.f32 %v2791, %v2804
        %v2806 = vpop.f32.mrf.mxu0
        %v2807 = vadd.f32 %v2793, %v2806
        %2808 = vdwg.mxu0
        %2809 = vmatpush.bf16.msra.mxu0 %v2500
        %2810 = vmatpush.bf16.msra.mxu0 %v2499
        %2811 = vmatpush.bf16.msra.mxu0 %v2498
        %2812 = vmatpush.bf16.msra.mxu0 %v2497
        %2813 = vmatpush.bf16.msra.mxu0 %v2496
        %2814 = vmatpush.bf16.msra.mxu0 %v2495
        %2815 = vmatpush.bf16.msra.mxu0 %v2494
        %2816 = vmatpush.bf16.msra.mxu0 %v2493
        %2817 = vmatmul.bf16.gmra.mxu0 %v1891
        %v2818 = vpop.f32.mrf.mxu0
        %v2819 = vadd.f32 %v2805, %v2818
        %v2820 = vpop.f32.mrf.mxu0
        %v2821 = vadd.f32 %v2807, %v2820
        %2822 = vdwg.mxu0
        %2823 = vmatpush.bf16.msra.mxu0 %v2508
        %2824 = vmatpush.bf16.msra.mxu0 %v2507
        %2825 = vmatpush.bf16.msra.mxu0 %v2506
        %2826 = vmatpush.bf16.msra.mxu0 %v2505
        %2827 = vmatpush.bf16.msra.mxu0 %v2504
        %2828 = vmatpush.bf16.msra.mxu0 %v2503
        %2829 = vmatpush.bf16.msra.mxu0 %v2502
        %2830 = vmatpush.bf16.msra.mxu0 %v2501
        %2831 = vmatmul.bf16.gmra.mxu0 %v1892
        %v2832 = vpop.f32.mrf.mxu0
        %v2833 = vadd.f32 %v2819, %v2832
        %v2834 = vpop.f32.mrf.mxu0
        %v2835 = vadd.f32 %v2821, %v2834
        %2836 = vdwg.mxu0
        %2837 = vmatpush.bf16.msra.mxu0 %v2516
        %2838 = vmatpush.bf16.msra.mxu0 %v2515
        %2839 = vmatpush.bf16.msra.mxu0 %v2514
        %2840 = vmatpush.bf16.msra.mxu0 %v2513
        %2841 = vmatpush.bf16.msra.mxu0 %v2512
        %2842 = vmatpush.bf16.msra.mxu0 %v2511
        %2843 = vmatpush.bf16.msra.mxu0 %v2510
        %2844 = vmatpush.bf16.msra.mxu0 %v2509
        %2845 = vmatmul.bf16.gmra.mxu0 %v1893
        %v2846 = vpop.f32.mrf.mxu0
        %v2847 = vadd.f32 %v2833, %v2846
        %v2848 = vpop.f32.mrf.mxu0
        %v2849 = vadd.f32 %v2835, %v2848
        %2850 = vdwg.mxu0
        %2851 = vmatpush.bf16.msra.mxu0 %v2524
        %2852 = vmatpush.bf16.msra.mxu0 %v2523
        %2853 = vmatpush.bf16.msra.mxu0 %v2522
        %2854 = vmatpush.bf16.msra.mxu0 %v2521
        %2855 = vmatpush.bf16.msra.mxu0 %v2520
        %2856 = vmatpush.bf16.msra.mxu0 %v2519
        %2857 = vmatpush.bf16.msra.mxu0 %v2518
        %2858 = vmatpush.bf16.msra.mxu0 %v2517
        %2859 = vmatmul.bf16.gmra.mxu0 %v1894
        %v2860 = vpop.f32.mrf.mxu0
        %v2861 = vadd.f32 %v2847, %v2860
        %v2862 = vpop.f32.mrf.mxu0
        %v2863 = vadd.f32 %v2849, %v2862
        %2864 = vdwg.mxu0
        %2865 = vmatpush.bf16.msra.mxu0 %v2532
        %2866 = vmatpush.bf16.msra.mxu0 %v2531
        %2867 = vmatpush.bf16.msra.mxu0 %v2530
        %2868 = vmatpush.bf16.msra.mxu0 %v2529
        %2869 = vmatpush.bf16.msra.mxu0 %v2528
        %2870 = vmatpush.bf16.msra.mxu0 %v2527
        %2871 = vmatpush.bf16.msra.mxu0 %v2526
        %2872 = vmatpush.bf16.msra.mxu0 %v2525
        %2873 = vmatmul.bf16.gmra.mxu0 %v1895
        %v2874 = vpop.f32.mrf.mxu0
        %v2875 = vadd.f32 %v2861, %v2874
        %v2876 = vpop.f32.mrf.mxu0
        %v2877 = vadd.f32 %v2863, %v2876
        %2878 = vdwg.mxu0
        %2879 = vmatpush.bf16.msra.mxu0 %v2540
        %2880 = vmatpush.bf16.msra.mxu0 %v2539
        %2881 = vmatpush.bf16.msra.mxu0 %v2538
        %2882 = vmatpush.bf16.msra.mxu0 %v2537
        %2883 = vmatpush.bf16.msra.mxu0 %v2536
        %2884 = vmatpush.bf16.msra.mxu0 %v2535
        %2885 = vmatpush.bf16.msra.mxu0 %v2534
        %2886 = vmatpush.bf16.msra.mxu0 %v2533
        %2887 = vmatmul.bf16.gmra.mxu0 %v1896
        %v2888 = vpop.f32.mrf.mxu0
        %v2889 = vadd.f32 %v2875, %v2888
        %v2890 = vpop.f32.mrf.mxu0
        %v2891 = vadd.f32 %v2877, %v2890
        %2892 = vdwg.mxu0
        %v2893 = vadd.f32 %v1135, %v2889
        %v2894 = vadd.f32 %v1136, %v2891
        %v2895 = vld [vmem:[%s794] sm:$0x1]
        %v2896 = vld [vmem:[%s797] sm:$0x1]
        %v2897 = vsel %vm886, %v2893, 0.0
        %2898 = vadd.xlane.f32.xlu0 %v2897
        %v2899 = vpop.xlane.xlu0 %2898
        %v2900 = vsel %vm886, %v2894, 0.0
        %2901 = vadd.xlane.f32.xlu0 %v2900
        %v2902 = vpop.xlane.xlu0 %2901
        %v2903 = vmul.f32 %v2899, %v1088
        %v2904 = vmul.f32 %v2902, %v1088
        %v2905 = vsub.f32 %v2893, %v2903
        %v2906 = vsub.f32 %v2894, %v2904
        %v2907 = vmul.f32 %v2905, %v2905
        %v2908 = vmul.f32 %v2906, %v2906
        %v2909 = vsel %vm886, %v2907, 0.0
        %2910 = vadd.xlane.f32.xlu0 %v2909
        %v2911 = vpop.xlane.xlu0 %2910
        %v2912 = vsel %vm886, %v2908, 0.0
        %2913 = vadd.xlane.f32.xlu0 %v2912
        %v2914 = vpop.xlane.xlu0 %2913
        %v2915 = vmul.f32 %v2911, %v1088
        %v2916 = vmul.f32 %v2914, %v1088
        %v2917 = vadd.f32 %v2915, 1e-05
        %v2918 = vadd.f32 %v2916, 1e-05
        %v2919 = vrsqrt.pop %v2917
        %v2920 = vmul.f32 %v2919, %v2917
        %v2921 = vmul.f32 %v2920, %v2919
        %v2922 = vmul.f32 0.5, %v2921
        %v2923 = vsub.f32 1.5, %v2922
        %v2924 = vmul.f32 %v2919, %v2923
        %vm2925 = vweird.f32 %v2917
        %vm2926 = vweird.f32 %v2919
        %vm2927 = vmor %vm2925, %vm2926
        %v2928 = vsel %vm2927, %v2919, %v2924
        %v2929 = vrsqrt.pop %v2918
        %v2930 = vmul.f32 %v2929, %v2918
        %v2931 = vmul.f32 %v2930, %v2929
        %v2932 = vmul.f32 0.5, %v2931
        %v2933 = vsub.f32 1.5, %v2932
        %v2934 = vmul.f32 %v2929, %v2933
        %vm2935 = vweird.f32 %v2918
        %vm2936 = vweird.f32 %v2929
        %vm2937 = vmor %vm2935, %vm2936
        %v2938 = vsel %vm2937, %v2929, %v2934
        %v2939 = vmul.f32 %v2905, %v2928
        %v2940 = vmul.f32 %v2906, %v2938
        %v2942 = vperm.slane %v2895, 0
        %v2944 = vmul.f32 %v2939, %v2942
        %v2945 = vmul.f32 %v2940, %v2942
        %v2947 = vperm.slane %v2896, 0
        %v2949 = vadd.f32 %v2944, %v2947
        %v2950 = vadd.f32 %v2945, %v2947
        %2951 = vst.msk [vmem:[#allocation2] sm:$0xff] %vm886, %v2949
        %2952 = vst.msk [vmem:[#allocation2 + $0x8] sm:$0xff] %vm886, %v2950
        %p2953 = scmp.eq.s32.totalorder %s36, 1
        // Predicated region
        $region101: #{tpu_custom_call.1} parent=95 // pred_check
          %p2954 = pneg %p2953
        $region102: #{tpu_custom_call.1} parent=95 // pred_check_branch
          %2956 = sbr.rel (%p2954) target = $region104
        $region103: #{tpu_custom_call.1} parent=95 // pred_region
          %v2957 = vld [vmem:[%s17] sm:$0xf]
          %v2958 = vld [vmem:[%s17 + $0x4] sm:$0xf]
          %v2959 = vld [vmem:[%s17 + $0x8] sm:$0xf]
          %v2960 = vld [vmem:[%s17 + $0xc] sm:$0xf]
          %v2961 = vpack.c.bf16 %v2950, %v2949
          %v2962 = vld [vmem:[%s18] sm:$0x1]
          %v2964 = vperm.slane %v2962, 0
          %v2970 = vunpack.c.l.b16 %v2957
          %v2971 = vunpack.c.l.b16 %v2958
          %v2972 = vunpack.c.l.b16 %v2959
          %v2973 = vunpack.c.l.b16 %v2960
          %v2974 = vpack.c.b16 %v2971, %v2970
          %v2975 = vpack.c.b16 %v2973, %v2972
          %v2979 = vsel %vm886, %v2961, 0
          %2981 = vmatpush.bf16.msra.mxu0 0
          %2982 = vmatpush.bf16.msra.mxu0 0
          %2983 = vmatpush.bf16.msra.mxu0 0
          %2984 = vmatpush.bf16.msra.mxu0 0
          %2985 = vmatpush.bf16.msra.mxu0 0
          %2986 = vmatpush.bf16.msra.mxu0 0
          %2987 = vmatpush.bf16.msra.mxu0 %v2975
          %2988 = vmatpush.bf16.msra.mxu0 %v2974
          %2989 = vmatmul.bf16.gmra.mxu0 %v2979
          %v2990 = vpop.f32.mrf.mxu0
          %v2991 = vadd.f32 %v2964, %v2990
          %v2992 = vpop.f32.mrf.mxu0
          %v2993 = vadd.f32 %v2964, %v2992
          %2994 = vdwg.mxu0
          %2995 = vst [vmem:[#allocation4] sm:$0xff] %v2991
          %2996 = vst [vmem:[#allocation4 + $0x8] sm:$0xff] %v2993
        $region104: #{tpu_custom_call.1} parent=95 // pred_fallthru
          _
        // Predicated region
        $region105: #{tpu_custom_call.1} parent=95 // pred_check
          %p2997 = pneg %p530
        $region106: #{tpu_custom_call.1} parent=95 // pred_check_branch
          %2999 = sbr.rel (%p2997) target = $region108
        $region107: #{tpu_custom_call.1} parent=95 // pred_region
          %3001 = vsyncadd [#allocation5], 0
          %s3002 = smul.addr %s35, 8
          %s3003 = scalar_lea.hbm %s19, %s3002
          %s3004 = sshll.u32 [#allocation4], 4
          %s3005 = int_to_ptr.vmem [resolvable:$true] %s3004
          %s3006 = sshll.u32 %s3003, 4
          %s3007 = int_to_ptr.hbm [resolvable:$true] %s3006
          %3012 = dma.vmem_to_hbm [thread:$0]  %s3005, 256, %s3007, [#allocation5], 128, 128, 8
        $region108: #{tpu_custom_call.1} parent=95 // pred_fallthru
          _
        // Predicated region
        $region109: #{tpu_custom_call.1} parent=95 // pred_check
          %p3013 = pneg %p530
        $region110: #{tpu_custom_call.1} parent=95 // pred_check_branch
          %3015 = sbr.rel (%p3013) target = $region112
        $region111: #{tpu_custom_call.1} parent=95 // pred_region
          %3017 = dma.done [#allocation5], 256
        $region112: #{tpu_custom_call.1} parent=95 // pred_fallthru
          _
      $region96: #{tpu_custom_call.1} parent=5 // pred_fallthru
        _
      %p3018 = scmp.le.s32.totalorder 2, %s26
      // Predicated region
      $region113: #{tpu_custom_call.1} parent=5 // pred_check
        %p3019 = pneg %p3018
      $region114: #{tpu_custom_call.1} parent=5 // pred_check_branch
        %3021 = sbr.rel (%p3019) target = $region116
      $region115: #{tpu_custom_call.1} parent=5 // pred_region
        %s3022 = ssub.s32 %s26, 2
      $region116: #{tpu_custom_call.1} parent=5 // pred_fallthru
        _
    $region6: #{tpu_custom_call.1} parent=1 // loop_footer
      %s30 = sadd.s32 1, %s26
    $region7: #{tpu_custom_call.1} parent=1 // loop_footer_branch
      %25 = sbr.rel target = $region3
    $region8: #{tpu_custom_call.1} parent=1 // loop_exit
      _
    %3023 = vsyncpa [#allocation5], 1
    %s3024 = scalar_lea.sflag [#allocation5], 1
    %3025 = vsyncpa %s3024, 1

// kernel: tpu_custom_call.1
$region0: #{tpu_custom_call.1}
  #allocation0 [shape = 'u32[]', space=smem, size = 0x4, offset = 0x4, fixed_abs, tag = 'smem constant byte address 0x4 - core index']
  #allocation1 [shape = 'u32[72,128]{1,0:T(1,128)}', space=vmem, size = 0x9000, scoped, tag = 'internal scratch']
  #allocation2 [shape = 'f32[16,32]{1,0:T(8,128)}', space=vmem, size = 0x2000, scoped, tag = 'scratch operand']
  #allocation3 [shape = 'f32[16,32]{1,0:T(8,128)}', space=vmem, size = 0x2000, scoped, tag = 'scratch operand']
  %s0 = inlined_call_operand.vmem [shape: f32[2,8,16], index: 0, kind: input, shape index: {}]
  %s1 = inlined_call_operand.vmem [shape: f32[8,32], index: 1, kind: input, shape index: {}]
  %s2 = inlined_call_operand.vmem [shape: bf16[32,32], index: 2, kind: input, shape index: {}]
  %s3 = inlined_call_operand.vmem [shape: bf16[16,32], index: 3, kind: input, shape index: {}]
  %s4 = inlined_call_operand.vmem [shape: f32[1,32], index: 4, kind: input, shape index: {}]
  %s5 = inlined_call_operand.vmem [shape: bf16[2,32,96], index: 5, kind: input, shape index: {}]
  %s6 = inlined_call_operand.vmem [shape: f32[2,1,96], index: 6, kind: input, shape index: {}]
  %s7 = inlined_call_operand.vmem [shape: bf16[2,32,32], index: 7, kind: input, shape index: {}]
  %s8 = inlined_call_operand.vmem [shape: f32[2,1,32], index: 8, kind: input, shape index: {}]
  %s9 = inlined_call_operand.vmem [shape: f32[2,1,32], index: 9, kind: input, shape index: {}]
  %s10 = inlined_call_operand.vmem [shape: f32[2,1,32], index: 10, kind: input, shape index: {}]
  %s11 = inlined_call_operand.vmem [shape: f32[2,1,32], index: 11, kind: input, shape index: {}]
  %s12 = inlined_call_operand.vmem [shape: f32[2,1,32], index: 12, kind: input, shape index: {}]
  %s13 = inlined_call_operand.vmem [shape: bf16[2,32,2048], index: 13, kind: input, shape index: {}]
  %s14 = inlined_call_operand.vmem [shape: f32[2,1,2048], index: 14, kind: input, shape index: {}]
  %s15 = inlined_call_operand.vmem [shape: bf16[2,2048,32], index: 15, kind: input, shape index: {}]
  %s16 = inlined_call_operand.vmem [shape: f32[2,1,32], index: 16, kind: input, shape index: {}]
  %s17 = inlined_call_operand.vmem [shape: bf16[32,128], index: 17, kind: input, shape index: {}]
  %s18 = inlined_call_operand.vmem [shape: f32[1,128], index: 18, kind: input, shape index: {}]
  %s19 = inlined_call_operand.hbm [shape: f32[2,8,128], index: 19, kind: output, shape index: {}]
  %s20 = sld [smem:[#allocation0]]
  $region117: #{tpu_custom_call.1} parent=0
    _
  %s22 = ssub.s32 1, %s20
  %s23 = scalar_select 0, %s22, %s20
  $region1: #{tpu_custom_call.1} parent=0
    #allocation4 [shape = 'u8[8192]{0}', space=vmem, size = 0x2000, scoped, tag = 'output window, operand 0, single buffered']
    #allocation5 [shape = 's32[2]{0}', space=sflag, size = 0x8, scoped, tag = 'scoped memory for tpu_custom_call.1']
    %24 = vsyncpa [#allocation5], 0
    loop: start=0, step=1, limit=4
    $region2: #{tpu_custom_call.1} parent=1 // loop_pre_header
      _
    $region3: #{tpu_custom_call.1} parent=1 // loop_header
      %s26 = sphi 0, %s30
      %p27 = scmp.ge.s32.totalorder %s26, 4
      %s33 = sphi 0, %s45
      %s34 = sphi 0, %s41
      %s35 = sphi 0, %s33
      %s36 = sphi 0, %s34
      %s37 = sphi 0, %s35
      %s38 = sphi 0, %s36
      %s48 = sphi 0, %s50
      %s51 = sphi 0, %s48
      %s52 = sphi 0, %s51
      %s68 = sphi 0, %s52
      %s74 = sphi 0, %s76
      %s77 = sphi 0, %s74
      %s78 = sphi 0, %s77
      %s94 = sphi 0, %s78
      %s98 = sphi 0, %s98
      %s100 = sphi 0, %s98
      %s101 = sphi 0, %s100
      %s115 = sphi 0, %s101
      %s119 = sphi 0, %s119
      %s121 = sphi 0, %s119
      %s122 = sphi 0, %s121
      %s136 = sphi 0, %s122
      %s140 = sphi 0, %s140
      %s142 = sphi 0, %s140
      %s143 = sphi 0, %s142
      %s157 = sphi 0, %s143
      %s163 = sphi 0, %s165
      %s166 = sphi 0, %s163
      %s167 = sphi 0, %s166
      %s183 = sphi 0, %s167
      %s189 = sphi 0, %s191
      %s192 = sphi 0, %s189
      %s193 = sphi 0, %s192
      %s209 = sphi 0, %s193
      %s215 = sphi 0, %s217
      %s218 = sphi 0, %s215
      %s219 = sphi 0, %s218
      %s235 = sphi 0, %s219
      %s241 = sphi 0, %s243
      %s244 = sphi 0, %s241
      %s245 = sphi 0, %s244
      %s261 = sphi 0, %s245
      %s267 = sphi 0, %s269
      %s270 = sphi 0, %s267
      %s271 = sphi 0, %s270
      %s287 = sphi 0, %s271
      %s293 = sphi 0, %s295
      %s296 = sphi 0, %s293
      %s297 = sphi 0, %s296
      %s313 = sphi 0, %s297
      %s319 = sphi 0, %s321
      %s322 = sphi 0, %s319
      %s323 = sphi 0, %s322
      %s339 = sphi 0, %s323
      %s345 = sphi 0, %s347
      %s348 = sphi 0, %s345
      %s349 = sphi 0, %s348
      %s365 = sphi 0, %s349
      %s371 = sphi 0, %s373
      %s374 = sphi 0, %s371
      %s375 = sphi 0, %s374
      %s391 = sphi 0, %s375
      %s397 = sphi 0, %s399
      %s400 = sphi 0, %s397
      %s401 = sphi 0, %s400
      %s417 = sphi 0, %s401
      %s423 = sphi 0, %s425
      %s426 = sphi 0, %s423
      %s427 = sphi 0, %s426
      %s443 = sphi 0, %s427
      %s449 = sphi 0, %s451
      %s452 = sphi 0, %s449
      %s453 = sphi 0, %s452
      %s469 = sphi 0, %s453
      %s473 = sphi 0, %s473
      %s475 = sphi 0, %s473
      %s476 = sphi 0, %s475
      %s490 = sphi 0, %s476
      %s494 = sphi 0, %s494
      %s496 = sphi 0, %s494
      %s497 = sphi 0, %s496
      %s511 = sphi 0, %s497
      %s517 = sphi 0, %s519
      %s520 = sphi 0, %s517
      %s521 = sphi 0, %s520
      %s537 = sphi 0, %s521
    $region4: #{tpu_custom_call.1} parent=1 // loop_header_branch
      %29 = sbr.rel (%p27) target = $region8
    $region5: #{tpu_custom_call.1} parent=1 // loop_body
      %s31 = ssub.s32 %s26, 1
      %s32 = ssub.s32 %s26, 2
      %s39 = sadd.s32 1, %s34
      %p40 = scmp.ge.s32.totalorder %s39, 2
      %s41 = scalar_select %p40, 0, %s39
      %s42 = sadd.s32 1, %s33
      %s43 = scalar_select %p40, %s42, %s33
      %p44 = scmp.ge.s32.totalorder %s43, 1
      %s45 = scalar_select %p44, 0, %s43
      %s46 = ssub.s32 %s33, %s45
      %p47 = scmp.eq.s32.totalorder %s46, 0
      %s49 = sadd.s32 %s48, 1
      %s50 = scalar_select %p47, %s48, %s49
      %p53 = pneg %p47
      %p54 = scmp.eq.s32.totalorder %s26, 1
      %p55 = por %p53, %p54
      %p56 = scmp.ne.s32.totalorder %s48, %s51
      %p57 = scmp.eq.s32.totalorder %s26, 0
      %p58 = por %p56, %p57
      %p59 = scmp.ne.s32.totalorder %s48, %s51
      %p60 = scmp.eq.s32.totalorder %s31, 1
      %p61 = por %p59, %p60
      %p62 = scmp.ne.s32.totalorder %s51, %s52
      %p63 = scmp.eq.s32.totalorder %s31, 0
      %p64 = por %p62, %p63
      %p65 = scmp.ne.s32.totalorder %s51, %s52
      %p66 = scmp.eq.s32.totalorder %s32, 1
      %p67 = por %p65, %p66
      %p69 = scmp.ne.s32.totalorder %s52, %s68
      %p70 = scmp.eq.s32.totalorder %s32, 0
      %p71 = por %p69, %p70
      %s72 = ssub.s32 %s33, %s45
      %p73 = scmp.eq.s32.totalorder %s72, 0
      %s75 = sadd.s32 %s74, 1
      %s76 = scalar_select %p73, %s74, %s75
      %p79 = pneg %p73
      %p80 = scmp.eq.s32.totalorder %s26, 1
      %p81 = por %p79, %p80
      %p82 = scmp.ne.s32.totalorder %s74, %s77
      %p83 = scmp.eq.s32.totalorder %s26, 0
      %p84 = por %p82, %p83
      %p85 = scmp.ne.s32.totalorder %s74, %s77
      %p86 = scmp.eq.s32.totalorder %s31, 1
      %p87 = por %p85, %p86
      %p88 = scmp.ne.s32.totalorder %s77, %s78
      %p89 = scmp.eq.s32.totalorder %s31, 0
      %p90 = por %p88, %p89
      %p91 = scmp.ne.s32.totalorder %s77, %s78
      %p92 = scmp.eq.s32.totalorder %s32, 1
      %p93 = por %p91, %p92
      %p95 = scmp.ne.s32.totalorder %s78, %s94
      %p96 = scmp.eq.s32.totalorder %s32, 0
      %p97 = por %p95, %p96
      %s99 = sadd.s32 %s98, 1
      %p102 = scmp.eq.s32.totalorder %s26, 1
      %p103 = scmp.ne.s32.totalorder %s98, %s100
      %p104 = scmp.eq.s32.totalorder %s26, 0
      %p105 = por %p103, %p104
      %p106 = scmp.ne.s32.totalorder %s98, %s100
      %p107 = scmp.eq.s32.totalorder %s31, 1
      %p108 = por %p106, %p107
      %p109 = scmp.ne.s32.totalorder %s100, %s101
      %p110 = scmp.eq.s32.totalorder %s31, 0
      %p111 = por %p109, %p110
      %p112 = scmp.ne.s32.totalorder %s100, %s101
      %p113 = scmp.eq.s32.totalorder %s32, 1
      %p114 = por %p112, %p113
      %p116 = scmp.ne.s32.totalorder %s101, %s115
      %p117 = scmp.eq.s32.totalorder %s32, 0
      %p118 = por %p116, %p117
      %s120 = sadd.s32 %s119, 1
      %p123 = scmp.eq.s32.totalorder %s26, 1
      %p124 = scmp.ne.s32.totalorder %s119, %s121
      %p125 = scmp.eq.s32.totalorder %s26, 0
      %p126 = por %p124, %p125
      %p127 = scmp.ne.s32.totalorder %s119, %s121
      %p128 = scmp.eq.s32.totalorder %s31, 1
      %p129 = por %p127, %p128
      %p130 = scmp.ne.s32.totalorder %s121, %s122
      %p131 = scmp.eq.s32.totalorder %s31, 0
      %p132 = por %p130, %p131
      %p133 = scmp.ne.s32.totalorder %s121, %s122
      %p134 = scmp.eq.s32.totalorder %s32, 1
      %p135 = por %p133, %p134
      %p137 = scmp.ne.s32.totalorder %s122, %s136
      %p138 = scmp.eq.s32.totalorder %s32, 0
      %p139 = por %p137, %p138
      %s141 = sadd.s32 %s140, 1
      %p144 = scmp.eq.s32.totalorder %s26, 1
      %p145 = scmp.ne.s32.totalorder %s140, %s142
      %p146 = scmp.eq.s32.totalorder %s26, 0
      %p147 = por %p145, %p146
      %p148 = scmp.ne.s32.totalorder %s140, %s142
      %p149 = scmp.eq.s32.totalorder %s31, 1
      %p150 = por %p148, %p149
      %p151 = scmp.ne.s32.totalorder %s142, %s143
      %p152 = scmp.eq.s32.totalorder %s31, 0
      %p153 = por %p151, %p152
      %p154 = scmp.ne.s32.totalorder %s142, %s143
      %p155 = scmp.eq.s32.totalorder %s32, 1
      %p156 = por %p154, %p155
      %p158 = scmp.ne.s32.totalorder %s143, %s157
      %p159 = scmp.eq.s32.totalorder %s32, 0
      %p160 = por %p158, %p159
      %s161 = ssub.s32 %s34, %s41
      %p162 = scmp.eq.s32.totalorder %s161, 0
      %s164 = sadd.s32 %s163, 1
      %s165 = scalar_select %p162, %s163, %s164
      %p168 = pneg %p162
      %p169 = scmp.eq.s32.totalorder %s26, 1
      %p170 = por %p168, %p169
      %p171 = scmp.ne.s32.totalorder %s163, %s166
      %p172 = scmp.eq.s32.totalorder %s26, 0
      %p173 = por %p171, %p172
      %p174 = scmp.ne.s32.totalorder %s163, %s166
      %p175 = scmp.eq.s32.totalorder %s31, 1
      %p176 = por %p174, %p175
      %p177 = scmp.ne.s32.totalorder %s166, %s167
      %p178 = scmp.eq.s32.totalorder %s31, 0
      %p179 = por %p177, %p178
      %p180 = scmp.ne.s32.totalorder %s166, %s167
      %p181 = scmp.eq.s32.totalorder %s32, 1
      %p182 = por %p180, %p181
      %p184 = scmp.ne.s32.totalorder %s167, %s183
      %p185 = scmp.eq.s32.totalorder %s32, 0
      %p186 = por %p184, %p185
      %s187 = ssub.s32 %s34, %s41
      %p188 = scmp.eq.s32.totalorder %s187, 0
      %s190 = sadd.s32 %s189, 1
      %s191 = scalar_select %p188, %s189, %s190
      %p194 = pneg %p188
      %p195 = scmp.eq.s32.totalorder %s26, 1
      %p196 = por %p194, %p195
      %p197 = scmp.ne.s32.totalorder %s189, %s192
      %p198 = scmp.eq.s32.totalorder %s26, 0
      %p199 = por %p197, %p198
      %p200 = scmp.ne.s32.totalorder %s189, %s192
      %p201 = scmp.eq.s32.totalorder %s31, 1
      %p202 = por %p200, %p201
      %p203 = scmp.ne.s32.totalorder %s192, %s193
      %p204 = scmp.eq.s32.totalorder %s31, 0
      %p205 = por %p203, %p204
      %p206 = scmp.ne.s32.totalorder %s192, %s193
      %p207 = scmp.eq.s32.totalorder %s32, 1
      %p208 = por %p206, %p207
      %p210 = scmp.ne.s32.totalorder %s193, %s209
      %p211 = scmp.eq.s32.totalorder %s32, 0
      %p212 = por %p210, %p211
      %s213 = ssub.s32 %s34, %s41
      %p214 = scmp.eq.s32.totalorder %s213, 0
      %s216 = sadd.s32 %s215, 1
      %s217 = scalar_select %p214, %s215, %s216
      %p220 = pneg %p214
      %p221 = scmp.eq.s32.totalorder %s26, 1
      %p222 = por %p220, %p221
      %p223 = scmp.ne.s32.totalorder %s215, %s218
      %p224 = scmp.eq.s32.totalorder %s26, 0
      %p225 = por %p223, %p224
      %p226 = scmp.ne.s32.totalorder %s215, %s218
      %p227 = scmp.eq.s32.totalorder %s31, 1
      %p228 = por %p226, %p227
      %p229 = scmp.ne.s32.totalorder %s218, %s219
      %p230 = scmp.eq.s32.totalorder %s31, 0
      %p231 = por %p229, %p230
      %p232 = scmp.ne.s32.totalorder %s218, %s219
      %p233 = scmp.eq.s32.totalorder %s32, 1
      %p234 = por %p232, %p233
      %p236 = scmp.ne.s32.totalorder %s219, %s235
      %p237 = scmp.eq.s32.totalorder %s32, 0
      %p238 = por %p236, %p237
      %s239 = ssub.s32 %s34, %s41
      %p240 = scmp.eq.s32.totalorder %s239, 0
      %s242 = sadd.s32 %s241, 1
      %s243 = scalar_select %p240, %s241, %s242
      %p246 = pneg %p240
      %p247 = scmp.eq.s32.totalorder %s26, 1
      %p248 = por %p246, %p247
      %p249 = scmp.ne.s32.totalorder %s241, %s244
      %p250 = scmp.eq.s32.totalorder %s26, 0
      %p251 = por %p249, %p250
      %p252 = scmp.ne.s32.totalorder %s241, %s244
      %p253 = scmp.eq.s32.totalorder %s31, 1
      %p254 = por %p252, %p253
      %p255 = scmp.ne.s32.totalorder %s244, %s245
      %p256 = scmp.eq.s32.totalorder %s31, 0
      %p257 = por %p255, %p256
      %p258 = scmp.ne.s32.totalorder %s244, %s245
      %p259 = scmp.eq.s32.totalorder %s32, 1
      %p260 = por %p258, %p259
      %p262 = scmp.ne.s32.totalorder %s245, %s261
      %p263 = scmp.eq.s32.totalorder %s32, 0
      %p264 = por %p262, %p263
      %s265 = ssub.s32 %s34, %s41
      %p266 = scmp.eq.s32.totalorder %s265, 0
      %s268 = sadd.s32 %s267, 1
      %s269 = scalar_select %p266, %s267, %s268
      %p272 = pneg %p266
      %p273 = scmp.eq.s32.totalorder %s26, 1
      %p274 = por %p272, %p273
      %p275 = scmp.ne.s32.totalorder %s267, %s270
      %p276 = scmp.eq.s32.totalorder %s26, 0
      %p277 = por %p275, %p276
      %p278 = scmp.ne.s32.totalorder %s267, %s270
      %p279 = scmp.eq.s32.totalorder %s31, 1
      %p280 = por %p278, %p279
      %p281 = scmp.ne.s32.totalorder %s270, %s271
      %p282 = scmp.eq.s32.totalorder %s31, 0
      %p283 = por %p281, %p282
      %p284 = scmp.ne.s32.totalorder %s270, %s271
      %p285 = scmp.eq.s32.totalorder %s32, 1
      %p286 = por %p284, %p285
      %p288 = scmp.ne.s32.totalorder %s271, %s287
      %p289 = scmp.eq.s32.totalorder %s32, 0
      %p290 = por %p288, %p289
      %s291 = ssub.s32 %s34, %s41
      %p292 = scmp.eq.s32.totalorder %s291, 0
      %s294 = sadd.s32 %s293, 1
      %s295 = scalar_select %p292, %s293, %s294
      %p298 = pneg %p292
      %p299 = scmp.eq.s32.totalorder %s26, 1
      %p300 = por %p298, %p299
      %p301 = scmp.ne.s32.totalorder %s293, %s296
      %p302 = scmp.eq.s32.totalorder %s26, 0
      %p303 = por %p301, %p302
      %p304 = scmp.ne.s32.totalorder %s293, %s296
      %p305 = scmp.eq.s32.totalorder %s31, 1
      %p306 = por %p304, %p305
      %p307 = scmp.ne.s32.totalorder %s296, %s297
      %p308 = scmp.eq.s32.totalorder %s31, 0
      %p309 = por %p307, %p308
      %p310 = scmp.ne.s32.totalorder %s296, %s297
      %p311 = scmp.eq.s32.totalorder %s32, 1
      %p312 = por %p310, %p311
      %p314 = scmp.ne.s32.totalorder %s297, %s313
      %p315 = scmp.eq.s32.totalorder %s32, 0
      %p316 = por %p314, %p315
      %s317 = ssub.s32 %s34, %s41
      %p318 = scmp.eq.s32.totalorder %s317, 0
      %s320 = sadd.s32 %s319, 1
      %s321 = scalar_select %p318, %s319, %s320
      %p324 = pneg %p318
      %p325 = scmp.eq.s32.totalorder %s26, 1
      %p326 = por %p324, %p325
      %p327 = scmp.ne.s32.totalorder %s319, %s322
      %p328 = scmp.eq.s32.totalorder %s26, 0
      %p329 = por %p327, %p328
      %p330 = scmp.ne.s32.totalorder %s319, %s322
      %p331 = scmp.eq.s32.totalorder %s31, 1
      %p332 = por %p330, %p331
      %p333 = scmp.ne.s32.totalorder %s322, %s323
      %p334 = scmp.eq.s32.totalorder %s31, 0
      %p335 = por %p333, %p334
      %p336 = scmp.ne.s32.totalorder %s322, %s323
      %p337 = scmp.eq.s32.totalorder %s32, 1
      %p338 = por %p336, %p337
      %p340 = scmp.ne.s32.totalorder %s323, %s339
      %p341 = scmp.eq.s32.totalorder %s32, 0
      %p342 = por %p340, %p341
      %s343 = ssub.s32 %s34, %s41
      %p344 = scmp.eq.s32.totalorder %s343, 0
      %s346 = sadd.s32 %s345, 1
      %s347 = scalar_select %p344, %s345, %s346
      %p350 = pneg %p344
      %p351 = scmp.eq.s32.totalorder %s26, 1
      %p352 = por %p350, %p351
      %p353 = scmp.ne.s32.totalorder %s345, %s348
      %p354 = scmp.eq.s32.totalorder %s26, 0
      %p355 = por %p353, %p354
      %p356 = scmp.ne.s32.totalorder %s345, %s348
      %p357 = scmp.eq.s32.totalorder %s31, 1
      %p358 = por %p356, %p357
      %p359 = scmp.ne.s32.totalorder %s348, %s349
      %p360 = scmp.eq.s32.totalorder %s31, 0
      %p361 = por %p359, %p360
      %p362 = scmp.ne.s32.totalorder %s348, %s349
      %p363 = scmp.eq.s32.totalorder %s32, 1
      %p364 = por %p362, %p363
      %p366 = scmp.ne.s32.totalorder %s349, %s365
      %p367 = scmp.eq.s32.totalorder %s32, 0
      %p368 = por %p366, %p367
      %s369 = ssub.s32 %s34, %s41
      %p370 = scmp.eq.s32.totalorder %s369, 0
      %s372 = sadd.s32 %s371, 1
      %s373 = scalar_select %p370, %s371, %s372
      %p376 = pneg %p370
      %p377 = scmp.eq.s32.totalorder %s26, 1
      %p378 = por %p376, %p377
      %p379 = scmp.ne.s32.totalorder %s371, %s374
      %p380 = scmp.eq.s32.totalorder %s26, 0
      %p381 = por %p379, %p380
      %p382 = scmp.ne.s32.totalorder %s371, %s374
      %p383 = scmp.eq.s32.totalorder %s31, 1
      %p384 = por %p382, %p383
      %p385 = scmp.ne.s32.totalorder %s374, %s375
      %p386 = scmp.eq.s32.totalorder %s31, 0
      %p387 = por %p385, %p386
      %p388 = scmp.ne.s32.totalorder %s374, %s375
      %p389 = scmp.eq.s32.totalorder %s32, 1
      %p390 = por %p388, %p389
      %p392 = scmp.ne.s32.totalorder %s375, %s391
      %p393 = scmp.eq.s32.totalorder %s32, 0
      %p394 = por %p392, %p393
      %s395 = ssub.s32 %s34, %s41
      %p396 = scmp.eq.s32.totalorder %s395, 0
      %s398 = sadd.s32 %s397, 1
      %s399 = scalar_select %p396, %s397, %s398
      %p402 = pneg %p396
      %p403 = scmp.eq.s32.totalorder %s26, 1
      %p404 = por %p402, %p403
      %p405 = scmp.ne.s32.totalorder %s397, %s400
      %p406 = scmp.eq.s32.totalorder %s26, 0
      %p407 = por %p405, %p406
      %p408 = scmp.ne.s32.totalorder %s397, %s400
      %p409 = scmp.eq.s32.totalorder %s31, 1
      %p410 = por %p408, %p409
      %p411 = scmp.ne.s32.totalorder %s400, %s401
      %p412 = scmp.eq.s32.totalorder %s31, 0
      %p413 = por %p411, %p412
      %p414 = scmp.ne.s32.totalorder %s400, %s401
      %p415 = scmp.eq.s32.totalorder %s32, 1
      %p416 = por %p414, %p415
      %p418 = scmp.ne.s32.totalorder %s401, %s417
      %p419 = scmp.eq.s32.totalorder %s32, 0
      %p420 = por %p418, %p419
      %s421 = ssub.s32 %s34, %s41
      %p422 = scmp.eq.s32.totalorder %s421, 0
      %s424 = sadd.s32 %s423, 1
      %s425 = scalar_select %p422, %s423, %s424
      %p428 = pneg %p422
      %p429 = scmp.eq.s32.totalorder %s26, 1
      %p430 = por %p428, %p429
      %p431 = scmp.ne.s32.totalorder %s423, %s426
      %p432 = scmp.eq.s32.totalorder %s26, 0
      %p433 = por %p431, %p432
      %p434 = scmp.ne.s32.totalorder %s423, %s426
      %p435 = scmp.eq.s32.totalorder %s31, 1
      %p436 = por %p434, %p435
      %p437 = scmp.ne.s32.totalorder %s426, %s427
      %p438 = scmp.eq.s32.totalorder %s31, 0
      %p439 = por %p437, %p438
      %p440 = scmp.ne.s32.totalorder %s426, %s427
      %p441 = scmp.eq.s32.totalorder %s32, 1
      %p442 = por %p440, %p441
      %p444 = scmp.ne.s32.totalorder %s427, %s443
      %p445 = scmp.eq.s32.totalorder %s32, 0
      %p446 = por %p444, %p445
      %s447 = ssub.s32 %s34, %s41
      %p448 = scmp.eq.s32.totalorder %s447, 0
      %s450 = sadd.s32 %s449, 1
      %s451 = scalar_select %p448, %s449, %s450
      %p454 = pneg %p448
      %p455 = scmp.eq.s32.totalorder %s26, 1
      %p456 = por %p454, %p455
      %p457 = scmp.ne.s32.totalorder %s449, %s452
      %p458 = scmp.eq.s32.totalorder %s26, 0
      %p459 = por %p457, %p458
      %p460 = scmp.ne.s32.totalorder %s449, %s452
      %p461 = scmp.eq.s32.totalorder %s31, 1
      %p462 = por %p460, %p461
      %p463 = scmp.ne.s32.totalorder %s452, %s453
      %p464 = scmp.eq.s32.totalorder %s31, 0
      %p465 = por %p463, %p464
      %p466 = scmp.ne.s32.totalorder %s452, %s453
      %p467 = scmp.eq.s32.totalorder %s32, 1
      %p468 = por %p466, %p467
      %p470 = scmp.ne.s32.totalorder %s453, %s469
      %p471 = scmp.eq.s32.totalorder %s32, 0
      %p472 = por %p470, %p471
      %s474 = sadd.s32 %s473, 1
      %p477 = scmp.eq.s32.totalorder %s26, 1
      %p478 = scmp.ne.s32.totalorder %s473, %s475
      %p479 = scmp.eq.s32.totalorder %s26, 0
      %p480 = por %p478, %p479
      %p481 = scmp.ne.s32.totalorder %s473, %s475
      %p482 = scmp.eq.s32.totalorder %s31, 1
      %p483 = por %p481, %p482
      %p484 = scmp.ne.s32.totalorder %s475, %s476
      %p485 = scmp.eq.s32.totalorder %s31, 0
      %p486 = por %p484, %p485
      %p487 = scmp.ne.s32.totalorder %s475, %s476
      %p488 = scmp.eq.s32.totalorder %s32, 1
      %p489 = por %p487, %p488
      %p491 = scmp.ne.s32.totalorder %s476, %s490
      %p492 = scmp.eq.s32.totalorder %s32, 0
      %p493 = por %p491, %p492
      %s495 = sadd.s32 %s494, 1
      %p498 = scmp.eq.s32.totalorder %s26, 1
      %p499 = scmp.ne.s32.totalorder %s494, %s496
      %p500 = scmp.eq.s32.totalorder %s26, 0
      %p501 = por %p499, %p500
      %p502 = scmp.ne.s32.totalorder %s494, %s496
      %p503 = scmp.eq.s32.totalorder %s31, 1
      %p504 = por %p502, %p503
      %p505 = scmp.ne.s32.totalorder %s496, %s497
      %p506 = scmp.eq.s32.totalorder %s31, 0
      %p507 = por %p505, %p506
      %p508 = scmp.ne.s32.totalorder %s496, %s497
      %p509 = scmp.eq.s32.totalorder %s32, 1
      %p510 = por %p508, %p509
      %p512 = scmp.ne.s32.totalorder %s497, %s511
      %p513 = scmp.eq.s32.totalorder %s32, 0
      %p514 = por %p512, %p513
      %s515 = ssub.s32 %s33, %s45
      %p516 = scmp.eq.s32.totalorder %s515, 0
      %s518 = sadd.s32 %s517, 1
      %s519 = scalar_select %p516, %s517, %s518
      %p522 = pneg %p516
      %p523 = scmp.eq.s32.totalorder %s26, 1
      %p524 = por %p522, %p523
      %p525 = scmp.ne.s32.totalorder %s517, %s520
      %p526 = scmp.eq.s32.totalorder %s26, 0
      %p527 = por %p525, %p526
      %p528 = scmp.ne.s32.totalorder %s517, %s520
      %p529 = scmp.eq.s32.totalorder %s31, 1
      %p530 = por %p528, %p529
      %p531 = scmp.ne.s32.totalorder %s520, %s521
      %p532 = scmp.eq.s32.totalorder %s31, 0
      %p533 = por %p531, %p532
      %p534 = scmp.ne.s32.totalorder %s520, %s521
      %p535 = scmp.eq.s32.totalorder %s32, 1
      %p536 = por %p534, %p535
      %p538 = scmp.ne.s32.totalorder %s521, %s537
      %p539 = scmp.eq.s32.totalorder %s32, 0
      %p540 = por %p538, %p539
      %p541 = scmp.le.s32.totalorder 1, %s26
      %p542 = scmp.lt.s32.totalorder %s26, 3
      %p543 = pnand %p541, %p542
      %p544 = pneg %p543
      // Predicated region
      $region9: #{tpu_custom_call.1} parent=5 // pred_check
        _
      $region10: #{tpu_custom_call.1} parent=5 // pred_check_branch
        %546 = sbr.rel (%p543) target = $region12
      $region11: #{tpu_custom_call.1} parent=5 // pred_region
        %s547 = ssub.s32 %s26, 1
        // Predicated region
        $region13: #{tpu_custom_call.1} parent=11 // pred_check
          %p548 = pneg %p64
        $region14: #{tpu_custom_call.1} parent=11 // pred_check_branch
          %550 = sbr.rel (%p548) target = $region16
        $region15: #{tpu_custom_call.1} parent=11 // pred_region
          %p551 = scmp.lt.s32.totalorder %s35, 0
          %s552 = scalar_select %p551, %s35, 0
          %s553 = smul.addr %s552, 8
          %s554 = scalar_lea.vmem %s0, %s553
        $region16: #{tpu_custom_call.1} parent=11 // pred_fallthru
          _
        // Predicated region
        $region17: #{tpu_custom_call.1} parent=11 // pred_check
          %p555 = pneg %p90
        $region18: #{tpu_custom_call.1} parent=11 // pred_check_branch
          %557 = sbr.rel (%p555) target = $region20
        $region19: #{tpu_custom_call.1} parent=11 // pred_region
          %p558 = scmp.lt.s32.totalorder %s35, 0
          %s559 = scalar_select %p558, %s35, 0
          %s560 = smul.addr %s559, 8
          %s561 = scalar_lea.vmem %s1, %s560
        $region20: #{tpu_custom_call.1} parent=11 // pred_fallthru
          _
        // Predicated region
        $region21: #{tpu_custom_call.1} parent=11 // pred_check
          %p562 = pneg %p111
        $region22: #{tpu_custom_call.1} parent=11 // pred_check_branch
          %564 = sbr.rel (%p562) target = $region24
        $region23: #{tpu_custom_call.1} parent=11 // pred_region
          _
        $region24: #{tpu_custom_call.1} parent=11 // pred_fallthru
          _
        // Predicated region
        $region25: #{tpu_custom_call.1} parent=11 // pred_check
          %p565 = pneg %p132
        $region26: #{tpu_custom_call.1} parent=11 // pred_check_branch
          %567 = sbr.rel (%p565) target = $region28
        $region27: #{tpu_custom_call.1} parent=11 // pred_region
          _
        $region28: #{tpu_custom_call.1} parent=11 // pred_fallthru
          _
        // Predicated region
        $region29: #{tpu_custom_call.1} parent=11 // pred_check
          %p568 = pneg %p153
        $region30: #{tpu_custom_call.1} parent=11 // pred_check_branch
          %570 = sbr.rel (%p568) target = $region32
        $region31: #{tpu_custom_call.1} parent=11 // pred_region
          _
        $region32: #{tpu_custom_call.1} parent=11 // pred_fallthru
          _
        // Predicated region
        $region33: #{tpu_custom_call.1} parent=11 // pred_check
          %p571 = pneg %p486
        $region34: #{tpu_custom_call.1} parent=11 // pred_check_branch
          %573 = sbr.rel (%p571) target = $region36
        $region35: #{tpu_custom_call.1} parent=11 // pred_region
          _
        $region36: #{tpu_custom_call.1} parent=11 // pred_fallthru
          _
        // Predicated region
        $region37: #{tpu_custom_call.1} parent=11 // pred_check
          %p574 = pneg %p507
        $region38: #{tpu_custom_call.1} parent=11 // pred_check_branch
          %576 = sbr.rel (%p574) target = $region40
        $region39: #{tpu_custom_call.1} parent=11 // pred_region
          _
        $region40: #{tpu_custom_call.1} parent=11 // pred_fallthru
          _
      $region12: #{tpu_custom_call.1} parent=5 // pred_fallthru
        _
      %p577 = scmp.lt.s32.totalorder %s26, 2
      // Predicated region
      $region41: #{tpu_custom_call.1} parent=5 // pred_check
        %p578 = pneg %p577
      $region42: #{tpu_custom_call.1} parent=5 // pred_check_branch
        %580 = sbr.rel (%p578) target = $region44
      $region43: #{tpu_custom_call.1} parent=5 // pred_region
        // Predicated region
        $region45: #{tpu_custom_call.1} parent=43 // pred_check
          %p581 = pneg %p173
        $region46: #{tpu_custom_call.1} parent=43 // pred_check_branch
          %583 = sbr.rel (%p581) target = $region48
        $region47: #{tpu_custom_call.1} parent=43 // pred_region
          %p584 = scmp.lt.s32.totalorder %s34, 1
          %s585 = scalar_select %p584, %s34, 1
          %s586 = smul.addr %s585, 4
          %s587 = smul.addr %s586, 4
          %s588 = scalar_lea.vmem %s5, %s587
        $region48: #{tpu_custom_call.1} parent=43 // pred_fallthru
          _
        // Predicated region
        $region49: #{tpu_custom_call.1} parent=43 // pred_check
          %p589 = pneg %p199
        $region50: #{tpu_custom_call.1} parent=43 // pred_check_branch
          %591 = sbr.rel (%p589) target = $region52
        $region51: #{tpu_custom_call.1} parent=43 // pred_region
          %p592 = scmp.lt.s32.totalorder %s34, 1
          %s593 = scalar_select %p592, %s34, 1
          %s594 = scalar_lea.vmem %s6, %s593
        $region52: #{tpu_custom_call.1} parent=43 // pred_fallthru
          _
        // Predicated region
        $region53: #{tpu_custom_call.1} parent=43 // pred_check
          %p595 = pneg %p225
        $region54: #{tpu_custom_call.1} parent=43 // pred_check_branch
          %597 = sbr.rel (%p595) target = $region56
        $region55: #{tpu_custom_call.1} parent=43 // pred_region
          %p598 = scmp.lt.s32.totalorder %s34, 1
          %s599 = scalar_select %p598, %s34, 1
          %s600 = smul.addr %s599, 4
          %s601 = smul.addr %s600, 4
          %s602 = scalar_lea.vmem %s7, %s601
        $region56: #{tpu_custom_call.1} parent=43 // pred_fallthru
          _
        // Predicated region
        $region57: #{tpu_custom_call.1} parent=43 // pred_check
          %p603 = pneg %p251
        $region58: #{tpu_custom_call.1} parent=43 // pred_check_branch
          %605 = sbr.rel (%p603) target = $region60
        $region59: #{tpu_custom_call.1} parent=43 // pred_region
          %p606 = scmp.lt.s32.totalorder %s34, 1
          %s607 = scalar_select %p606, %s34, 1
          %s608 = scalar_lea.vmem %s8, %s607
        $region60: #{tpu_custom_call.1} parent=43 // pred_fallthru
          _
        // Predicated region
        $region61: #{tpu_custom_call.1} parent=43 // pred_check
          %p609 = pneg %p277
        $region62: #{tpu_custom_call.1} parent=43 // pred_check_branch
          %611 = sbr.rel (%p609) target = $region64
        $region63: #{tpu_custom_call.1} parent=43 // pred_region
          %p612 = scmp.lt.s32.totalorder %s34, 1
          %s613 = scalar_select %p612, %s34, 1
          %s614 = scalar_lea.vmem %s9, %s613
        $region64: #{tpu_custom_call.1} parent=43 // pred_fallthru
          _
        // Predicated region
        $region65: #{tpu_custom_call.1} parent=43 // pred_check
          %p615 = pneg %p303
        $region66: #{tpu_custom_call.1} parent=43 // pred_check_branch
          %617 = sbr.rel (%p615) target = $region68
        $region67: #{tpu_custom_call.1} parent=43 // pred_region
          %p618 = scmp.lt.s32.totalorder %s34, 1
          %s619 = scalar_select %p618, %s34, 1
          %s620 = scalar_lea.vmem %s10, %s619
        $region68: #{tpu_custom_call.1} parent=43 // pred_fallthru
          _
        // Predicated region
        $region69: #{tpu_custom_call.1} parent=43 // pred_check
          %p621 = pneg %p329
        $region70: #{tpu_custom_call.1} parent=43 // pred_check_branch
          %623 = sbr.rel (%p621) target = $region72
        $region71: #{tpu_custom_call.1} parent=43 // pred_region
          %p624 = scmp.lt.s32.totalorder %s34, 1
          %s625 = scalar_select %p624, %s34, 1
          %s626 = scalar_lea.vmem %s11, %s625
        $region72: #{tpu_custom_call.1} parent=43 // pred_fallthru
          _
        // Predicated region
        $region73: #{tpu_custom_call.1} parent=43 // pred_check
          %p627 = pneg %p355
        $region74: #{tpu_custom_call.1} parent=43 // pred_check_branch
          %629 = sbr.rel (%p627) target = $region76
        $region75: #{tpu_custom_call.1} parent=43 // pred_region
          %p630 = scmp.lt.s32.totalorder %s34, 1
          %s631 = scalar_select %p630, %s34, 1
          %s632 = scalar_lea.vmem %s12, %s631
        $region76: #{tpu_custom_call.1} parent=43 // pred_fallthru
          _
        // Predicated region
        $region77: #{tpu_custom_call.1} parent=43 // pred_check
          %p633 = pneg %p381
        $region78: #{tpu_custom_call.1} parent=43 // pred_check_branch
          %635 = sbr.rel (%p633) target = $region80
        $region79: #{tpu_custom_call.1} parent=43 // pred_region
          %p636 = scmp.lt.s32.totalorder %s34, 1
          %s637 = scalar_select %p636, %s34, 1
          %s638 = smul.addr %s637, 64
          %s639 = smul.addr %s638, 4
          %s640 = scalar_lea.vmem %s13, %s639
        $region80: #{tpu_custom_call.1} parent=43 // pred_fallthru
          _
        // Predicated region
        $region81: #{tpu_custom_call.1} parent=43 // pred_check
          %p641 = pneg %p407
        $region82: #{tpu_custom_call.1} parent=43 // pred_check_branch
          %643 = sbr.rel (%p641) target = $region84
        $region83: #{tpu_custom_call.1} parent=43 // pred_region
          %p644 = scmp.lt.s32.totalorder %s34, 1
          %s645 = scalar_select %p644, %s34, 1
          %s646 = smul.addr %s645, 16
          %s647 = scalar_lea.vmem %s14, %s646
        $region84: #{tpu_custom_call.1} parent=43 // pred_fallthru
          _
        // Predicated region
        $region85: #{tpu_custom_call.1} parent=43 // pred_check
          %p648 = pneg %p433
        $region86: #{tpu_custom_call.1} parent=43 // pred_check_branch
          %650 = sbr.rel (%p648) target = $region88
        $region87: #{tpu_custom_call.1} parent=43 // pred_region
          %p651 = scmp.lt.s32.totalorder %s34, 1
          %s652 = scalar_select %p651, %s34, 1
          %s653 = smul.addr %s652, 256
          %s654 = smul.addr %s653, 4
          %s655 = scalar_lea.vmem %s15, %s654
        $region88: #{tpu_custom_call.1} parent=43 // pred_fallthru
          _
        // Predicated region
        $region89: #{tpu_custom_call.1} parent=43 // pred_check
          %p656 = pneg %p459
        $region90: #{tpu_custom_call.1} parent=43 // pred_check_branch
          %658 = sbr.rel (%p656) target = $region92
        $region91: #{tpu_custom_call.1} parent=43 // pred_region
          %p659 = scmp.lt.s32.totalorder %s34, 1
          %s660 = scalar_select %p659, %s34, 1
          %s661 = scalar_lea.vmem %s16, %s660
        $region92: #{tpu_custom_call.1} parent=43 // pred_fallthru
          _
      $region44: #{tpu_custom_call.1} parent=5 // pred_fallthru
        _
      %p662 = scmp.le.s32.totalorder 1, %s26
      %p663 = scmp.lt.s32.totalorder %s26, 3
      %p664 = pnand %p662, %p663
      %p665 = pneg %p664
      // Predicated region
      $region93: #{tpu_custom_call.1} parent=5 // pred_check
        _
      $region94: #{tpu_custom_call.1} parent=5 // pred_check_branch
        %667 = sbr.rel (%p664) target = $region96
      $region95: #{tpu_custom_call.1} parent=5 // pred_region
        %s668 = ssub.s32 %s26, 1
        %p669 = scmp.lt.s32.totalorder %s35, 0
        %s670 = scalar_select %p669, %s35, 0
        %s671 = smul.addr %s670, 8
        %s672 = scalar_lea.vmem %s0, %s671
        %p673 = pneg %p64
        %p674 = pneg %p61
        %p675 = scmp.lt.s32.totalorder %s35, 0
        %s676 = scalar_select %p675, %s35, 0
        %s677 = smul.addr %s676, 8
        %s678 = scalar_lea.vmem %s1, %s677
        %p679 = pneg %p90
        %p680 = pneg %p87
        %p681 = pneg %p111
        %p682 = pneg %p108
        %p683 = pneg %p132
        %p684 = pneg %p129
        %p685 = pneg %p153
        %p686 = pneg %p150
        %p687 = scmp.lt.s32.totalorder %s36, 1
        %s688 = scalar_select %p687, %s36, 1
        %s689 = smul.addr %s688, 4
        %s690 = smul.addr %s689, 4
        %s691 = scalar_lea.vmem %s5, %s690
        %p692 = pneg %p179
        %p693 = pneg %p176
        %p694 = scmp.lt.s32.totalorder %s36, 1
        %s695 = scalar_select %p694, %s36, 1
        %s696 = scalar_lea.vmem %s6, %s695
        %p697 = pneg %p205
        %p698 = pneg %p202
        %p699 = scmp.lt.s32.totalorder %s36, 1
        %s700 = scalar_select %p699, %s36, 1
        %s701 = smul.addr %s700, 4
        %s702 = smul.addr %s701, 4
        %s703 = scalar_lea.vmem %s7, %s702
        %p704 = pneg %p231
        %p705 = pneg %p228
        %p706 = scmp.lt.s32.totalorder %s36, 1
        %s707 = scalar_select %p706, %s36, 1
        %s708 = scalar_lea.vmem %s8, %s707
        %p709 = pneg %p257
        %p710 = pneg %p254
        %p711 = scmp.lt.s32.totalorder %s36, 1
        %s712 = scalar_select %p711, %s36, 1
        %s713 = scalar_lea.vmem %s9, %s712
        %p714 = pneg %p283
        %p715 = pneg %p280
        %p716 = scmp.lt.s32.totalorder %s36, 1
        %s717 = scalar_select %p716, %s36, 1
        %s718 = scalar_lea.vmem %s10, %s717
        %p719 = pneg %p309
        %p720 = pneg %p306
        %p721 = scmp.lt.s32.totalorder %s36, 1
        %s722 = scalar_select %p721, %s36, 1
        %s723 = scalar_lea.vmem %s11, %s722
        %p724 = pneg %p335
        %p725 = pneg %p332
        %p726 = scmp.lt.s32.totalorder %s36, 1
        %s727 = scalar_select %p726, %s36, 1
        %s728 = scalar_lea.vmem %s12, %s727
        %p729 = pneg %p361
        %p730 = pneg %p358
        %p731 = scmp.lt.s32.totalorder %s36, 1
        %s732 = scalar_select %p731, %s36, 1
        %s733 = smul.addr %s732, 64
        %s734 = smul.addr %s733, 4
        %s735 = scalar_lea.vmem %s13, %s734
        %p736 = pneg %p387
        %p737 = pneg %p384
        %p738 = scmp.lt.s32.totalorder %s36, 1
        %s739 = scalar_select %p738, %s36, 1
        %s740 = smul.addr %s739, 16
        %s741 = scalar_lea.vmem %s14, %s740
        %p742 = pneg %p413
        %p743 = pneg %p410
        %p744 = scmp.lt.s32.totalorder %s36, 1
        %s745 = scalar_select %p744, %s36, 1
        %s746 = smul.addr %s745, 256
        %s747 = smul.addr %s746, 4
        %s748 = scalar_lea.vmem %s15, %s747
        %p749 = pneg %p439
        %p750 = pneg %p436
        %p751 = scmp.lt.s32.totalorder %s36, 1
        %s752 = scalar_select %p751, %s36, 1
        %s753 = scalar_lea.vmem %s16, %s752
        %p754 = pneg %p465
        %p755 = pneg %p462
        %p756 = pneg %p486
        %p757 = pneg %p483
        %p758 = pneg %p507
        %p759 = pneg %p504
        %p760 = pneg %p533
        %p761 = pneg %p530
        %p762 = scmp.lt.s32.totalorder %s35, 0
        %s763 = scalar_select %p762, %s35, 0
        %s764 = smul.addr %s763, 8
        %s765 = scalar_lea.vmem %s0, %s764
        %p766 = scmp.lt.s32.totalorder %s35, 0
        %s767 = scalar_select %p766, %s35, 0
        %s768 = smul.addr %s767, 8
        %s769 = scalar_lea.vmem %s1, %s768
        %p770 = scmp.lt.s32.totalorder %s36, 1
        %s771 = scalar_select %p770, %s36, 1
        %s772 = smul.addr %s771, 4
        %s773 = smul.addr %s772, 4
        %s774 = scalar_lea.vmem %s5, %s773
        %p775 = scmp.lt.s32.totalorder %s36, 1
        %s776 = scalar_select %p775, %s36, 1
        %s777 = scalar_lea.vmem %s6, %s776
        %p778 = scmp.lt.s32.totalorder %s36, 1
        %s779 = scalar_select %p778, %s36, 1
        %s780 = smul.addr %s779, 4
        %s781 = smul.addr %s780, 4
        %s782 = scalar_lea.vmem %s7, %s781
        %p783 = scmp.lt.s32.totalorder %s36, 1
        %s784 = scalar_select %p783, %s36, 1
        %s785 = scalar_lea.vmem %s8, %s784
        %p786 = scmp.lt.s32.totalorder %s36, 1
        %s787 = scalar_select %p786, %s36, 1
        %s788 = scalar_lea.vmem %s9, %s787
        %p789 = scmp.lt.s32.totalorder %s36, 1
        %s790 = scalar_select %p789, %s36, 1
        %s791 = scalar_lea.vmem %s10, %s790
        %p792 = scmp.lt.s32.totalorder %s36, 1
        %s793 = scalar_select %p792, %s36, 1
        %s794 = scalar_lea.vmem %s11, %s793
        %p795 = scmp.lt.s32.totalorder %s36, 1
        %s796 = scalar_select %p795, %s36, 1
        %s797 = scalar_lea.vmem %s12, %s796
        %p798 = scmp.lt.s32.totalorder %s36, 1
        %s799 = scalar_select %p798, %s36, 1
        %s800 = smul.addr %s799, 64
        %s801 = smul.addr %s800, 4
        %s802 = scalar_lea.vmem %s13, %s801
        %p803 = scmp.lt.s32.totalorder %s36, 1
        %s804 = scalar_select %p803, %s36, 1
        %s805 = smul.addr %s804, 16
        %s806 = scalar_lea.vmem %s14, %s805
        %p807 = scmp.lt.s32.totalorder %s36, 1
        %s808 = scalar_select %p807, %s36, 1
        %s809 = smul.addr %s808, 256
        %s810 = smul.addr %s809, 4
        %s811 = scalar_lea.vmem %s15, %s810
        %p812 = scmp.lt.s32.totalorder %s36, 1
        %s813 = scalar_select %p812, %s36, 1
        %s814 = scalar_lea.vmem %s16, %s813
        %p816 = scmp.eq.s32.totalorder %s36, 0
        // Predicated region
        $region97: #{tpu_custom_call.1} parent=95 // pred_check
          %p817 = pneg %p816
        $region98: #{tpu_custom_call.1} parent=95 // pred_check_branch
          %819 = sbr.rel (%p817) target = $region100
        $region99: #{tpu_custom_call.1} parent=95 // pred_region
          %v820 = vld [vmem:[%s765] sm:$0xff]
          %v821 = vld [vmem:[%s765 + $0x8] sm:$0xff]
          %v822 = vld [vmem:[%s3] sm:$0xf]
          %v823 = vld [vmem:[%s3 + $0x4] sm:$0xf]
          %v824 = vpack.c.bf16 %v821, %v820
          %v825 = vld [vmem:[%s4] sm:$0x1]
          %v827 = vperm.slane %v825, 0
          %v831 = vunpack.c.l.b16 %v822
          %v832 = vunpack.c.l.b16 %v823
          %v833 = vpack.c.b16 %v832, %v831
          %vm835 = vcmask 130048
          %v837 = vsel %vm835, %v824, 0
          %839 = vmatpush.bf16.msra.mxu0 0
          %840 = vmatpush.bf16.msra.mxu0 0
          %841 = vmatpush.bf16.msra.mxu0 0
          %842 = vmatpush.bf16.msra.mxu0 0
          %843 = vmatpush.bf16.msra.mxu0 0
          %844 = vmatpush.bf16.msra.mxu0 0
          %845 = vmatpush.bf16.msra.mxu0 0
          %846 = vmatpush.bf16.msra.mxu0 %v833
          %847 = vmatmul.bf16.gmra.mxu0 %v837
          %v848 = vpop.f32.mrf.mxu0
          %v849 = vadd.f32 %v827, %v848
          %v850 = vpop.f32.mrf.mxu0
          %v851 = vadd.f32 %v827, %v850
          %852 = vdwg.mxu0
          %v853 = vld [vmem:[%s769] sm:$0xff]
          %v854 = vadd.f32 %v849, %v853
          %v855 = vadd.f32 %v851, %v853
          %vm856 = vcmask 261120
          %857 = vst.msk [vmem:[#allocation2] sm:$0xff] %vm856, %v854
          %858 = vst.msk [vmem:[#allocation2 + $0x8] sm:$0xff] %vm856, %v855
        $region100: #{tpu_custom_call.1} parent=95 // pred_fallthru
          _
        %v859 = vld [vmem:[#allocation2] sm:$0xff]
        %v860 = vld [vmem:[#allocation2 + $0x8] sm:$0xff]
        %v861 = vld [vmem:[%s2] sm:$0xf]
        %v862 = vld [vmem:[%s2 + $0x4] sm:$0xf]
        %v863 = vld [vmem:[%s2 + $0x8] sm:$0xf]
        %v864 = vld [vmem:[%s2 + $0xc] sm:$0xf]
        %v865 = vld [vmem:[%s774] sm:$0xf]
        %v866 = vld [vmem:[%s774 + $0x4] sm:$0xf]
        %v867 = vld [vmem:[%s774 + $0x8] sm:$0xf]
        %v868 = vld [vmem:[%s774 + $0xc] sm:$0xf]
        %v869 = vpack.c.bf16 %v860, %v859
        %v870 = vld [vmem:[%s777] sm:$0x1]
        %v872 = vperm.slane %v870, 0
        %v878 = vunpack.c.l.b16 %v865
        %v879 = vunpack.c.l.b16 %v866
        %v880 = vunpack.c.l.b16 %v867
        %v881 = vunpack.c.l.b16 %v868
        %v882 = vpack.c.b16 %v879, %v878
        %v883 = vpack.c.b16 %v881, %v880
        %vm886 = vcmask 261120
        %v888 = vsel %vm886, %v869, 0
        %890 = vmatpush.bf16.msra.mxu0 0
        %891 = vmatpush.bf16.msra.mxu0 0
        %892 = vmatpush.bf16.msra.mxu0 0
        %893 = vmatpush.bf16.msra.mxu0 0
        %894 = vmatpush.bf16.msra.mxu0 0
        %895 = vmatpush.bf16.msra.mxu0 0
        %896 = vmatpush.bf16.msra.mxu0 %v883
        %897 = vmatpush.bf16.msra.mxu0 %v882
        %898 = vmatmul.bf16.gmra.mxu0 %v888
        %v899 = vpop.f32.mrf.mxu0
        %v900 = vadd.f32 %v872, %v899
        %v901 = vpop.f32.mrf.mxu0
        %v902 = vadd.f32 %v872, %v901
        %903 = vdwg.mxu0
        %v904 = vmul.f32 %v900, 0.35355338
        %906 = vrot.lane.b32.xlu0 %v900, 96
        %v907 = vpop.permute.xlu0 %906
        %v909 = vmul.f32 %v904, %v907
        %v910 = vpack.c.bf16 %v909, %v909
        %v915 = vunpack.c.l.b16 %v861
        %v916 = vunpack.c.l.b16 %v862
        %v917 = vunpack.c.l.b16 %v863
        %v918 = vunpack.c.l.b16 %v864
        %v919 = vpack.c.b16 %v916, %v915
        %v920 = vpack.c.b16 %v918, %v917
        %v924 = vsel %vm886, %v910, 0
        %926 = vmatpush.bf16.msra.mxu0 0
        %927 = vmatpush.bf16.msra.mxu0 0
        %928 = vmatpush.bf16.msra.mxu0 0
        %929 = vmatpush.bf16.msra.mxu0 0
        %930 = vmatpush.bf16.msra.mxu0 0
        %931 = vmatpush.bf16.msra.mxu0 0
        %932 = vmatpush.bf16.msra.mxu0 %v920
        %933 = vmatpush.bf16.msra.mxu0 %v919
        %934 = vmatmul.bf16.gmra.mxu0 %v924
        %v935 = vpop.f32.mrf.mxu0
        %v936 = vadd.f32 0.0, %v935
        %v937 = vpop.f32.mrf.mxu0
        %938 = vdwg.mxu0
        %940 = vrot.lane.b32.xlu0 %v902, 96
        %v941 = vpop.permute.xlu0 %940
        %v943 = vmul.f32 %v904, %v941
        %v944 = vpack.c.bf16 %v943, %v943
        %v946 = vsel %vm886, %v944, 0
        %948 = vmatpush.bf16.msra.mxu0 0
        %949 = vmatpush.bf16.msra.mxu0 0
        %950 = vmatpush.bf16.msra.mxu0 0
        %951 = vmatpush.bf16.msra.mxu0 0
        %952 = vmatpush.bf16.msra.mxu0 0
        %953 = vmatpush.bf16.msra.mxu0 0
        %954 = vmatpush.bf16.msra.mxu0 %v920
        %955 = vmatpush.bf16.msra.mxu0 %v919
        %956 = vmatmul.bf16.gmra.mxu0 %v946
        %v957 = vpop.f32.mrf.mxu0
        %v958 = vadd.f32 0.0, %v957
        %v959 = vpop.f32.mrf.mxu0
        %960 = vdwg.mxu0
        %v961 = vmax.f32 %v936, %v958
        %v962 = vsub.f32 %v936, %v961
        %v963 = vmul.f32 %v962, 1.442695
        %v964 = vpow.pop %v963
        %965 = vrot.lane.b32.xlu0 %v900, 64
        %v966 = vpop.permute.xlu0 %965
        %v968 = vmul.f32 %v964, %v966
        %v969 = vsub.f32 %v958, %v961
        %v970 = vmul.f32 %v969, 1.442695
        %v971 = vpow.pop %v970
        %972 = vrot.lane.b32.xlu0 %v902, 64
        %v973 = vpop.permute.xlu0 %972
        %v975 = vmul.f32 %v971, %v973
        %v976 = vadd.f32 %v968, %v975
        %v977 = vadd.f32 %v964, %v971
        %v978 = vrcp.pop %v977
        %v979 = vmul.f32 %v976, %v978
        %980 = vst.msk [vmem:[#allocation3] sm:$0xff] %vm886, %v979
        %v981 = vmul.f32 %v902, 0.35355338
        %v982 = vmul.f32 %v981, %v907
        %v983 = vpack.c.bf16 %v982, %v982
        %v985 = vsel %vm886, %v983, 0
        %987 = vmatpush.bf16.msra.mxu0 0
        %988 = vmatpush.bf16.msra.mxu0 0
        %989 = vmatpush.bf16.msra.mxu0 0
        %990 = vmatpush.bf16.msra.mxu0 0
        %991 = vmatpush.bf16.msra.mxu0 0
        %992 = vmatpush.bf16.msra.mxu0 0
        %993 = vmatpush.bf16.msra.mxu0 %v920
        %994 = vmatpush.bf16.msra.mxu0 %v919
        %995 = vmatmul.bf16.gmra.mxu0 %v985
        %v996 = vpop.f32.mrf.mxu0
        %v997 = vadd.f32 0.0, %v996
        %v998 = vpop.f32.mrf.mxu0
        %999 = vdwg.mxu0
        %v1000 = vmul.f32 %v981, %v941
        %v1001 = vpack.c.bf16 %v1000, %v1000
        %v1003 = vsel %vm886, %v1001, 0
        %1005 = vmatpush.bf16.msra.mxu0 0
        %1006 = vmatpush.bf16.msra.mxu0 0
        %1007 = vmatpush.bf16.msra.mxu0 0
        %1008 = vmatpush.bf16.msra.mxu0 0
        %1009 = vmatpush.bf16.msra.mxu0 0
        %1010 = vmatpush.bf16.msra.mxu0 0
        %1011 = vmatpush.bf16.msra.mxu0 %v920
        %1012 = vmatpush.bf16.msra.mxu0 %v919
        %1013 = vmatmul.bf16.gmra.mxu0 %v1003
        %v1014 = vpop.f32.mrf.mxu0
        %v1015 = vadd.f32 0.0, %v1014
        %v1016 = vpop.f32.mrf.mxu0
        %1017 = vdwg.mxu0
        %v1018 = vmax.f32 %v997, %v1015
        %v1019 = vsub.f32 %v997, %v1018
        %v1020 = vmul.f32 %v1019, 1.442695
        %v1021 = vpow.pop %v1020
        %v1022 = vmul.f32 %v1021, %v966
        %v1023 = vsub.f32 %v1015, %v1018
        %v1024 = vmul.f32 %v1023, 1.442695
        %v1025 = vpow.pop %v1024
        %v1026 = vmul.f32 %v1025, %v973
        %v1027 = vadd.f32 %v1022, %v1026
        %v1028 = vadd.f32 %v1021, %v1025
        %v1029 = vrcp.pop %v1028
        %v1030 = vmul.f32 %v1027, %v1029
        %1031 = vst.msk [vmem:[#allocation3 + $0x8] sm:$0xff] %vm886, %v1030
        %v1032 = vld [vmem:[#allocation3] sm:$0xff]
        %v1033 = vld [vmem:[#allocation3 + $0x8] sm:$0xff]
        %v1034 = vld [vmem:[%s782] sm:$0xf]
        %v1035 = vld [vmem:[%s782 + $0x4] sm:$0xf]
        %v1036 = vld [vmem:[%s782 + $0x8] sm:$0xf]
        %v1037 = vld [vmem:[%s782 + $0xc] sm:$0xf]
        %v1038 = vpack.c.bf16 %v1033, %v1032
        %v1039 = vld [vmem:[%s785] sm:$0x1]
        %v1041 = vperm.slane %v1039, 0
        %v1047 = vunpack.c.l.b16 %v1034
        %v1048 = vunpack.c.l.b16 %v1035
        %v1049 = vunpack.c.l.b16 %v1036
        %v1050 = vunpack.c.l.b16 %v1037
        %v1051 = vpack.c.b16 %v1048, %v1047
        %v1052 = vpack.c.b16 %v1050, %v1049
        %v1056 = vsel %vm886, %v1038, 0
        %1058 = vmatpush.bf16.msra.mxu0 0
        %1059 = vmatpush.bf16.msra.mxu0 0
        %1060 = vmatpush.bf16.msra.mxu0 0
        %1061 = vmatpush.bf16.msra.mxu0 0
        %1062 = vmatpush.bf16.msra.mxu0 0
        %1063 = vmatpush.bf16.msra.mxu0 0
        %1064 = vmatpush.bf16.msra.mxu0 %v1052
        %1065 = vmatpush.bf16.msra.mxu0 %v1051
        %1066 = vmatmul.bf16.gmra.mxu0 %v1056
        %v1067 = vpop.f32.mrf.mxu0
        %v1068 = vadd.f32 %v1041, %v1067
        %v1069 = vpop.f32.mrf.mxu0
        %v1070 = vadd.f32 %v1041, %v1069
        %1071 = vdwg.mxu0
        %v1072 = vadd.f32 %v859, %v1068
        %v1073 = vadd.f32 %v860, %v1070
        %v1074 = vld [vmem:[%s788] sm:$0x1]
        %v1075 = vld [vmem:[%s791] sm:$0x1]
        %v1076 = vsel %vm886, %v1072, 0.0
        %1077 = vadd.xlane.f32.xlu0 %v1076
        %v1078 = vpop.xlane.xlu0 %1077
        %v1079 = vsel %vm886, %v1073, 0.0
        %1080 = vadd.xlane.f32.xlu0 %v1079
        %v1081 = vpop.xlane.xlu0 %1080
        %v1082 = vrcp.pop 32.0
        %v1083 = vmul.f32 32.0, %v1082
        %v1084 = vsub.f32 1.0, %v1083
        %v1085 = vmul.f32 %v1082, %v1084
        %v1086 = vadd.f32 %v1082, %v1085
        %vm1087 = vweird.f32 %v1082
        %v1088 = vsel %vm1087, %v1082, %v1086
        %v1089 = vmul.f32 %v1078, %v1088
        %v1090 = vmul.f32 %v1081, %v1088
        %v1091 = vsub.f32 %v1072, %v1089
        %v1092 = vsub.f32 %v1073, %v1090
        %v1093 = vmul.f32 %v1091, %v1091
        %v1094 = vmul.f32 %v1092, %v1092
        %v1095 = vsel %vm886, %v1093, 0.0
        %1096 = vadd.xlane.f32.xlu0 %v1095
        %v1097 = vpop.xlane.xlu0 %1096
        %v1098 = vsel %vm886, %v1094, 0.0
        %1099 = vadd.xlane.f32.xlu0 %v1098
        %v1100 = vpop.xlane.xlu0 %1099
        %v1101 = vmul.f32 %v1097, %v1088
        %v1102 = vmul.f32 %v1100, %v1088
        %v1103 = vadd.f32 %v1101, 1e-05
        %v1104 = vadd.f32 %v1102, 1e-05
        %v1105 = vrsqrt.pop %v1103
        %v1106 = vmul.f32 %v1105, %v1103
        %v1107 = vmul.f32 %v1106, %v1105
        %v1108 = vmul.f32 0.5, %v1107
        %v1109 = vsub.f32 1.5, %v1108
        %v1110 = vmul.f32 %v1105, %v1109
        %vm1111 = vweird.f32 %v1103
        %vm1112 = vweird.f32 %v1105
        %vm1113 = vmor %vm1111, %vm1112
        %v1114 = vsel %vm1113, %v1105, %v1110
        %v1115 = vrsqrt.pop %v1104
        %v1116 = vmul.f32 %v1115, %v1104
        %v1117 = vmul.f32 %v1116, %v1115
        %v1118 = vmul.f32 0.5, %v1117
        %v1119 = vsub.f32 1.5, %v1118
        %v1120 = vmul.f32 %v1115, %v1119
        %vm1121 = vweird.f32 %v1104
        %vm1122 = vweird.f32 %v1115
        %vm1123 = vmor %vm1121, %vm1122
        %v1124 = vsel %vm1123, %v1115, %v1120
        %v1125 = vmul.f32 %v1091, %v1114
        %v1126 = vmul.f32 %v1092, %v1124
        %v1128 = vperm.slane %v1074, 0
        %v1130 = vmul.f32 %v1125, %v1128
        %v1131 = vmul.f32 %v1126, %v1128
        %v1133 = vperm.slane %v1075, 0
        %v1135 = vadd.f32 %v1130, %v1133
        %v1136 = vadd.f32 %v1131, %v1133
        %v1137 = vld [vmem:[%s802] sm:$0xff]
        %v1138 = vld [vmem:[%s802 + $0x8] sm:$0xff]
        %v1139 = vld [vmem:[%s802 + $0x10] sm:$0xff]
        %v1140 = vld [vmem:[%s802 + $0x18] sm:$0xff]
        %v1141 = vld [vmem:[%s802 + $0x20] sm:$0xff]
        %v1142 = vld [vmem:[%s802 + $0x28] sm:$0xff]
        %v1143 = vld [vmem:[%s802 + $0x30] sm:$0xff]
        %v1144 = vld [vmem:[%s802 + $0x38] sm:$0xff]
        %v1145 = vld [vmem:[%s802 + $0x40] sm:$0xff]
        %v1146 = vld [vmem:[%s802 + $0x48] sm:$0xff]
        %v1147 = vld [vmem:[%s802 + $0x50] sm:$0xff]
        %v1148 = vld [vmem:[%s802 + $0x58] sm:$0xff]
        %v1149 = vld [vmem:[%s802 + $0x60] sm:$0xff]
        %v1150 = vld [vmem:[%s802 + $0x68] sm:$0xff]
        %v1151 = vld [vmem:[%s802 + $0x70] sm:$0xff]
        %v1152 = vld [vmem:[%s802 + $0x78] sm:$0xff]
        %v1153 = vld [vmem:[%s802 + $0x80] sm:$0xff]
        %v1154 = vld [vmem:[%s802 + $0x88] sm:$0xff]
        %v1155 = vld [vmem:[%s802 + $0x90] sm:$0xff]
        %v1156 = vld [vmem:[%s802 + $0x98] sm:$0xff]
        %v1157 = vld [vmem:[%s802 + $0xa0] sm:$0xff]
        %v1158 = vld [vmem:[%s802 + $0xa8] sm:$0xff]
        %v1159 = vld [vmem:[%s802 + $0xb0] sm:$0xff]
        %v1160 = vld [vmem:[%s802 + $0xb8] sm:$0xff]
        %v1161 = vld [vmem:[%s802 + $0xc0] sm:$0xff]
        %v1162 = vld [vmem:[%s802 + $0xc8] sm:$0xff]
        %v1163 = vld [vmem:[%s802 + $0xd0] sm:$0xff]
        %v1164 = vld [vmem:[%s802 + $0xd8] sm:$0xff]
        %v1165 = vld [vmem:[%s802 + $0xe0] sm:$0xff]
        %v1166 = vld [vmem:[%s802 + $0xe8] sm:$0xff]
        %v1167 = vld [vmem:[%s802 + $0xf0] sm:$0xff]
        %v1168 = vld [vmem:[%s802 + $0xf8] sm:$0xff]
        %v1169 = vpack.c.bf16 %v1136, %v1135
        %v1170 = vld [vmem:[%s806] sm:$0xff]
        %v1171 = vld [vmem:[%s806 + $0x8] sm:$0xff]
        %v1174 = vperm.slane %v1170, 0
        %v1175 = vperm.slane %v1170, 1
        %v1176 = vperm.slane %v1170, 2
        %v1177 = vperm.slane %v1170, 3
        %v1178 = vperm.slane %v1170, 4
        %v1179 = vperm.slane %v1170, 5
        %v1180 = vperm.slane %v1170, 6
        %v1181 = vperm.slane %v1170, 7
        %v1182 = vperm.slane %v1171, 0
        %v1183 = vperm.slane %v1171, 1
        %v1184 = vperm.slane %v1171, 2
        %v1185 = vperm.slane %v1171, 3
        %v1186 = vperm.slane %v1171, 4
        %v1187 = vperm.slane %v1171, 5
        %v1188 = vperm.slane %v1171, 6
        %v1189 = vperm.slane %v1171, 7
        %v1238 = vunpack.c.l.b16 %v1137
        %v1239 = vunpack.c.h.b16 %v1137
        %v1240 = vunpack.c.l.b16 %v1138
        %v1241 = vunpack.c.h.b16 %v1138
        %v1242 = vunpack.c.l.b16 %v1139
        %v1243 = vunpack.c.h.b16 %v1139
        %v1244 = vunpack.c.l.b16 %v1140
        %v1245 = vunpack.c.h.b16 %v1140
        %v1246 = vunpack.c.l.b16 %v1141
        %v1247 = vunpack.c.h.b16 %v1141
        %v1248 = vunpack.c.l.b16 %v1142
        %v1249 = vunpack.c.h.b16 %v1142
        %v1250 = vunpack.c.l.b16 %v1143
        %v1251 = vunpack.c.h.b16 %v1143
        %v1252 = vunpack.c.l.b16 %v1144
        %v1253 = vunpack.c.h.b16 %v1144
        %v1254 = vunpack.c.l.b16 %v1145
        %v1255 = vunpack.c.h.b16 %v1145
        %v1256 = vunpack.c.l.b16 %v1146
        %v1257 = vunpack.c.h.b16 %v1146
        %v1258 = vunpack.c.l.b16 %v1147
        %v1259 = vunpack.c.h.b16 %v1147
        %v1260 = vunpack.c.l.b16 %v1148
        %v1261 = vunpack.c.h.b16 %v1148
        %v1262 = vunpack.c.l.b16 %v1149
        %v1263 = vunpack.c.h.b16 %v1149
        %v1264 = vunpack.c.l.b16 %v1150
        %v1265 = vunpack.c.h.b16 %v1150
        %v1266 = vunpack.c.l.b16 %v1151
        %v1267 = vunpack.c.h.b16 %v1151
        %v1268 = vunpack.c.l.b16 %v1152
        %v1269 = vunpack.c.h.b16 %v1152
        %v1270 = vunpack.c.l.b16 %v1153
        %v1271 = vunpack.c.h.b16 %v1153
        %v1272 = vunpack.c.l.b16 %v1154
        %v1273 = vunpack.c.h.b16 %v1154
        %v1274 = vunpack.c.l.b16 %v1155
        %v1275 = vunpack.c.h.b16 %v1155
        %v1276 = vunpack.c.l.b16 %v1156
        %v1277 = vunpack.c.h.b16 %v1156
        %v1278 = vunpack.c.l.b16 %v1157
        %v1279 = vunpack.c.h.b16 %v1157
        %v1280 = vunpack.c.l.b16 %v1158
        %v1281 = vunpack.c.h.b16 %v1158
        %v1282 = vunpack.c.l.b16 %v1159
        %v1283 = vunpack.c.h.b16 %v1159
        %v1284 = vunpack.c.l.b16 %v1160
        %v1285 = vunpack.c.h.b16 %v1160
        %v1286 = vunpack.c.l.b16 %v1161
        %v1287 = vunpack.c.h.b16 %v1161
        %v1288 = vunpack.c.l.b16 %v1162
        %v1289 = vunpack.c.h.b16 %v1162
        %v1290 = vunpack.c.l.b16 %v1163
        %v1291 = vunpack.c.h.b16 %v1163
        %v1292 = vunpack.c.l.b16 %v1164
        %v1293 = vunpack.c.h.b16 %v1164
        %v1294 = vunpack.c.l.b16 %v1165
        %v1295 = vunpack.c.h.b16 %v1165
        %v1296 = vunpack.c.l.b16 %v1166
        %v1297 = vunpack.c.h.b16 %v1166
        %v1298 = vunpack.c.l.b16 %v1167
        %v1299 = vunpack.c.h.b16 %v1167
        %v1300 = vunpack.c.l.b16 %v1168
        %v1301 = vunpack.c.h.b16 %v1168
        %v1302 = vpack.c.b16 %v1254, %v1238
        %v1303 = vpack.c.b16 %v1255, %v1239
        %v1304 = vpack.c.b16 %v1256, %v1240
        %v1305 = vpack.c.b16 %v1257, %v1241
        %v1306 = vpack.c.b16 %v1258, %v1242
        %v1307 = vpack.c.b16 %v1259, %v1243
        %v1308 = vpack.c.b16 %v1260, %v1244
        %v1309 = vpack.c.b16 %v1261, %v1245
        %v1310 = vpack.c.b16 %v1262, %v1246
        %v1311 = vpack.c.b16 %v1263, %v1247
        %v1312 = vpack.c.b16 %v1264, %v1248
        %v1313 = vpack.c.b16 %v1265, %v1249
        %v1314 = vpack.c.b16 %v1266, %v1250
        %v1315 = vpack.c.b16 %v1267, %v1251
        %v1316 = vpack.c.b16 %v1268, %v1252
        %v1317 = vpack.c.b16 %v1269, %v1253
        %v1318 = vpack.c.b16 %v1286, %v1270
        %v1319 = vpack.c.b16 %v1287, %v1271
        %v1320 = vpack.c.b16 %v1288, %v1272
        %v1321 = vpack.c.b16 %v1289, %v1273
        %v1322 = vpack.c.b16 %v1290, %v1274
        %v1323 = vpack.c.b16 %v1291, %v1275
        %v1324 = vpack.c.b16 %v1292, %v1276
        %v1325 = vpack.c.b16 %v1293, %v1277
        %v1326 = vpack.c.b16 %v1294, %v1278
        %v1327 = vpack.c.b16 %v1295, %v1279
        %v1328 = vpack.c.b16 %v1296, %v1280
        %v1329 = vpack.c.b16 %v1297, %v1281
        %v1330 = vpack.c.b16 %v1298, %v1282
        %v1331 = vpack.c.b16 %v1299, %v1283
        %v1332 = vpack.c.b16 %v1300, %v1284
        %v1333 = vpack.c.b16 %v1301, %v1285
        %v1367 = vsel %vm886, %v1169, 0
        %1369 = vmatpush.bf16.msra.mxu0 0
        %1370 = vmatpush.bf16.msra.mxu0 0
        %1371 = vmatpush.bf16.msra.mxu0 0
        %1372 = vmatpush.bf16.msra.mxu0 0
        %1373 = vmatpush.bf16.msra.mxu0 0
        %1374 = vmatpush.bf16.msra.mxu0 0
        %1375 = vmatpush.bf16.msra.mxu0 %v1318
        %1376 = vmatpush.bf16.msra.mxu0 %v1302
        %1377 = vmatmul.bf16.gmra.mxu0 %v1367
        %v1378 = vpop.f32.mrf.mxu0
        %v1379 = vadd.f32 %v1174, %v1378
        %v1380 = vpop.f32.mrf.mxu0
        %v1381 = vadd.f32 %v1174, %v1380
        %1382 = vdwg.mxu0
        %1383 = vmatpush.bf16.msra.mxu0 0
        %1384 = vmatpush.bf16.msra.mxu0 0
        %1385 = vmatpush.bf16.msra.mxu0 0
        %1386 = vmatpush.bf16.msra.mxu0 0
        %1387 = vmatpush.bf16.msra.mxu0 0
        %1388 = vmatpush.bf16.msra.mxu0 0
        %1389 = vmatpush.bf16.msra.mxu0 %v1319
        %1390 = vmatpush.bf16.msra.mxu0 %v1303
        %1391 = vmatmul.bf16.gmra.mxu0 %v1367
        %v1392 = vpop.f32.mrf.mxu0
        %v1393 = vadd.f32 %v1175, %v1392
        %v1394 = vpop.f32.mrf.mxu0
        %v1395 = vadd.f32 %v1175, %v1394
        %1396 = vdwg.mxu0
        %1397 = vmatpush.bf16.msra.mxu0 0
        %1398 = vmatpush.bf16.msra.mxu0 0
        %1399 = vmatpush.bf16.msra.mxu0 0
        %1400 = vmatpush.bf16.msra.mxu0 0
        %1401 = vmatpush.bf16.msra.mxu0 0
        %1402 = vmatpush.bf16.msra.mxu0 0
        %1403 = vmatpush.bf16.msra.mxu0 %v1320
        %1404 = vmatpush.bf16.msra.mxu0 %v1304
        %1405 = vmatmul.bf16.gmra.mxu0 %v1367
        %v1406 = vpop.f32.mrf.mxu0
        %v1407 = vadd.f32 %v1176, %v1406
        %v1408 = vpop.f32.mrf.mxu0
        %v1409 = vadd.f32 %v1176, %v1408
        %1410 = vdwg.mxu0
        %1411 = vmatpush.bf16.msra.mxu0 0
        %1412 = vmatpush.bf16.msra.mxu0 0
        %1413 = vmatpush.bf16.msra.mxu0 0
        %1414 = vmatpush.bf16.msra.mxu0 0
        %1415 = vmatpush.bf16.msra.mxu0 0
        %1416 = vmatpush.bf16.msra.mxu0 0
        %1417 = vmatpush.bf16.msra.mxu0 %v1321
        %1418 = vmatpush.bf16.msra.mxu0 %v1305
        %1419 = vmatmul.bf16.gmra.mxu0 %v1367
        %v1420 = vpop.f32.mrf.mxu0
        %v1421 = vadd.f32 %v1177, %v1420
        %v1422 = vpop.f32.mrf.mxu0
        %v1423 = vadd.f32 %v1177, %v1422
        %1424 = vdwg.mxu0
        %1425 = vmatpush.bf16.msra.mxu0 0
        %1426 = vmatpush.bf16.msra.mxu0 0
        %1427 = vmatpush.bf16.msra.mxu0 0
        %1428 = vmatpush.bf16.msra.mxu0 0
        %1429 = vmatpush.bf16.msra.mxu0 0
        %1430 = vmatpush.bf16.msra.mxu0 0
        %1431 = vmatpush.bf16.msra.mxu0 %v1322
        %1432 = vmatpush.bf16.msra.mxu0 %v1306
        %1433 = vmatmul.bf16.gmra.mxu0 %v1367
        %v1434 = vpop.f32.mrf.mxu0
        %v1435 = vadd.f32 %v1178, %v1434
        %v1436 = vpop.f32.mrf.mxu0
        %v1437 = vadd.f32 %v1178, %v1436
        %1438 = vdwg.mxu0
        %1439 = vmatpush.bf16.msra.mxu0 0
        %1440 = vmatpush.bf16.msra.mxu0 0
        %1441 = vmatpush.bf16.msra.mxu0 0
        %1442 = vmatpush.bf16.msra.mxu0 0
        %1443 = vmatpush.bf16.msra.mxu0 0
        %1444 = vmatpush.bf16.msra.mxu0 0
        %1445 = vmatpush.bf16.msra.mxu0 %v1323
        %1446 = vmatpush.bf16.msra.mxu0 %v1307
        %1447 = vmatmul.bf16.gmra.mxu0 %v1367
        %v1448 = vpop.f32.mrf.mxu0
        %v1449 = vadd.f32 %v1179, %v1448
        %v1450 = vpop.f32.mrf.mxu0
        %v1451 = vadd.f32 %v1179, %v1450
        %1452 = vdwg.mxu0
        %1453 = vmatpush.bf16.msra.mxu0 0
        %1454 = vmatpush.bf16.msra.mxu0 0
        %1455 = vmatpush.bf16.msra.mxu0 0
        %1456 = vmatpush.bf16.msra.mxu0 0
        %1457 = vmatpush.bf16.msra.mxu0 0
        %1458 = vmatpush.bf16.msra.mxu0 0
        %1459 = vmatpush.bf16.msra.mxu0 %v1324
        %1460 = vmatpush.bf16.msra.mxu0 %v1308
        %1461 = vmatmul.bf16.gmra.mxu0 %v1367
        %v1462 = vpop.f32.mrf.mxu0
        %v1463 = vadd.f32 %v1180, %v1462
        %v1464 = vpop.f32.mrf.mxu0
        %v1465 = vadd.f32 %v1180, %v1464
        %1466 = vdwg.mxu0
        %1467 = vmatpush.bf16.msra.mxu0 0
        %1468 = vmatpush.bf16.msra.mxu0 0
        %1469 = vmatpush.bf16.msra.mxu0 0
        %1470 = vmatpush.bf16.msra.mxu0 0
        %1471 = vmatpush.bf16.msra.mxu0 0
        %1472 = vmatpush.bf16.msra.mxu0 0
        %1473 = vmatpush.bf16.msra.mxu0 %v1325
        %1474 = vmatpush.bf16.msra.mxu0 %v1309
        %1475 = vmatmul.bf16.gmra.mxu0 %v1367
        %v1476 = vpop.f32.mrf.mxu0
        %v1477 = vadd.f32 %v1181, %v1476
        %v1478 = vpop.f32.mrf.mxu0
        %v1479 = vadd.f32 %v1181, %v1478
        %1480 = vdwg.mxu0
        %1481 = vmatpush.bf16.msra.mxu0 0
        %1482 = vmatpush.bf16.msra.mxu0 0
        %1483 = vmatpush.bf16.msra.mxu0 0
        %1484 = vmatpush.bf16.msra.mxu0 0
        %1485 = vmatpush.bf16.msra.mxu0 0
        %1486 = vmatpush.bf16.msra.mxu0 0
        %1487 = vmatpush.bf16.msra.mxu0 %v1326
        %1488 = vmatpush.bf16.msra.mxu0 %v1310
        %1489 = vmatmul.bf16.gmra.mxu0 %v1367
        %v1490 = vpop.f32.mrf.mxu0
        %v1491 = vadd.f32 %v1182, %v1490
        %v1492 = vpop.f32.mrf.mxu0
        %v1493 = vadd.f32 %v1182, %v1492
        %1494 = vdwg.mxu0
        %1495 = vmatpush.bf16.msra.mxu0 0
        %1496 = vmatpush.bf16.msra.mxu0 0
        %1497 = vmatpush.bf16.msra.mxu0 0
        %1498 = vmatpush.bf16.msra.mxu0 0
        %1499 = vmatpush.bf16.msra.mxu0 0
        %1500 = vmatpush.bf16.msra.mxu0 0
        %1501 = vmatpush.bf16.msra.mxu0 %v1327
        %1502 = vmatpush.bf16.msra.mxu0 %v1311
        %1503 = vmatmul.bf16.gmra.mxu0 %v1367
        %v1504 = vpop.f32.mrf.mxu0
        %v1505 = vadd.f32 %v1183, %v1504
        %v1506 = vpop.f32.mrf.mxu0
        %v1507 = vadd.f32 %v1183, %v1506
        %1508 = vdwg.mxu0
        %1509 = vmatpush.bf16.msra.mxu0 0
        %1510 = vmatpush.bf16.msra.mxu0 0
        %1511 = vmatpush.bf16.msra.mxu0 0
        %1512 = vmatpush.bf16.msra.mxu0 0
        %1513 = vmatpush.bf16.msra.mxu0 0
        %1514 = vmatpush.bf16.msra.mxu0 0
        %1515 = vmatpush.bf16.msra.mxu0 %v1328
        %1516 = vmatpush.bf16.msra.mxu0 %v1312
        %1517 = vmatmul.bf16.gmra.mxu0 %v1367
        %v1518 = vpop.f32.mrf.mxu0
        %v1519 = vadd.f32 %v1184, %v1518
        %v1520 = vpop.f32.mrf.mxu0
        %v1521 = vadd.f32 %v1184, %v1520
        %1522 = vdwg.mxu0
        %1523 = vmatpush.bf16.msra.mxu0 0
        %1524 = vmatpush.bf16.msra.mxu0 0
        %1525 = vmatpush.bf16.msra.mxu0 0
        %1526 = vmatpush.bf16.msra.mxu0 0
        %1527 = vmatpush.bf16.msra.mxu0 0
        %1528 = vmatpush.bf16.msra.mxu0 0
        %1529 = vmatpush.bf16.msra.mxu0 %v1329
        %1530 = vmatpush.bf16.msra.mxu0 %v1313
        %1531 = vmatmul.bf16.gmra.mxu0 %v1367
        %v1532 = vpop.f32.mrf.mxu0
        %v1533 = vadd.f32 %v1185, %v1532
        %v1534 = vpop.f32.mrf.mxu0
        %v1535 = vadd.f32 %v1185, %v1534
        %1536 = vdwg.mxu0
        %1537 = vmatpush.bf16.msra.mxu0 0
        %1538 = vmatpush.bf16.msra.mxu0 0
        %1539 = vmatpush.bf16.msra.mxu0 0
        %1540 = vmatpush.bf16.msra.mxu0 0
        %1541 = vmatpush.bf16.msra.mxu0 0
        %1542 = vmatpush.bf16.msra.mxu0 0
        %1543 = vmatpush.bf16.msra.mxu0 %v1330
        %1544 = vmatpush.bf16.msra.mxu0 %v1314
        %1545 = vmatmul.bf16.gmra.mxu0 %v1367
        %v1546 = vpop.f32.mrf.mxu0
        %v1547 = vadd.f32 %v1186, %v1546
        %v1548 = vpop.f32.mrf.mxu0
        %v1549 = vadd.f32 %v1186, %v1548
        %1550 = vdwg.mxu0
        %1551 = vmatpush.bf16.msra.mxu0 0
        %1552 = vmatpush.bf16.msra.mxu0 0
        %1553 = vmatpush.bf16.msra.mxu0 0
        %1554 = vmatpush.bf16.msra.mxu0 0
        %1555 = vmatpush.bf16.msra.mxu0 0
        %1556 = vmatpush.bf16.msra.mxu0 0
        %1557 = vmatpush.bf16.msra.mxu0 %v1331
        %1558 = vmatpush.bf16.msra.mxu0 %v1315
        %1559 = vmatmul.bf16.gmra.mxu0 %v1367
        %v1560 = vpop.f32.mrf.mxu0
        %v1561 = vadd.f32 %v1187, %v1560
        %v1562 = vpop.f32.mrf.mxu0
        %v1563 = vadd.f32 %v1187, %v1562
        %1564 = vdwg.mxu0
        %1565 = vmatpush.bf16.msra.mxu0 0
        %1566 = vmatpush.bf16.msra.mxu0 0
        %1567 = vmatpush.bf16.msra.mxu0 0
        %1568 = vmatpush.bf16.msra.mxu0 0
        %1569 = vmatpush.bf16.msra.mxu0 0
        %1570 = vmatpush.bf16.msra.mxu0 0
        %1571 = vmatpush.bf16.msra.mxu0 %v1332
        %1572 = vmatpush.bf16.msra.mxu0 %v1316
        %1573 = vmatmul.bf16.gmra.mxu0 %v1367
        %v1574 = vpop.f32.mrf.mxu0
        %v1575 = vadd.f32 %v1188, %v1574
        %v1576 = vpop.f32.mrf.mxu0
        %v1577 = vadd.f32 %v1188, %v1576
        %1578 = vdwg.mxu0
        %1579 = vmatpush.bf16.msra.mxu0 0
        %1580 = vmatpush.bf16.msra.mxu0 0
        %1581 = vmatpush.bf16.msra.mxu0 0
        %1582 = vmatpush.bf16.msra.mxu0 0
        %1583 = vmatpush.bf16.msra.mxu0 0
        %1584 = vmatpush.bf16.msra.mxu0 0
        %1585 = vmatpush.bf16.msra.mxu0 %v1333
        %1586 = vmatpush.bf16.msra.mxu0 %v1317
        %1587 = vmatmul.bf16.gmra.mxu0 %v1367
        %v1588 = vpop.f32.mrf.mxu0
        %v1589 = vadd.f32 %v1189, %v1588
        %v1590 = vpop.f32.mrf.mxu0
        %v1591 = vadd.f32 %v1189, %v1590
        %1592 = vdwg.mxu0
        %v1593 = vmax.f32 %v1379, 0.0
        %v1594 = vmax.f32 %v1393, 0.0
        %v1595 = vmax.f32 %v1407, 0.0
        %v1596 = vmax.f32 %v1421, 0.0
        %v1597 = vmax.f32 %v1435, 0.0
        %v1598 = vmax.f32 %v1449, 0.0
        %v1599 = vmax.f32 %v1463, 0.0
        %v1600 = vmax.f32 %v1477, 0.0
        %v1601 = vmax.f32 %v1491, 0.0
        %v1602 = vmax.f32 %v1505, 0.0
        %v1603 = vmax.f32 %v1519, 0.0
        %v1604 = vmax.f32 %v1533, 0.0
        %v1605 = vmax.f32 %v1547, 0.0
        %v1606 = vmax.f32 %v1561, 0.0
        %v1607 = vmax.f32 %v1575, 0.0
        %v1608 = vmax.f32 %v1589, 0.0
        %v1609 = vmax.f32 %v1381, 0.0
        %v1610 = vmax.f32 %v1395, 0.0
        %v1611 = vmax.f32 %v1409, 0.0
        %v1612 = vmax.f32 %v1423, 0.0
        %v1613 = vmax.f32 %v1437, 0.0
        %v1614 = vmax.f32 %v1451, 0.0
        %v1615 = vmax.f32 %v1465, 0.0
        %v1616 = vmax.f32 %v1479, 0.0
        %v1617 = vmax.f32 %v1493, 0.0
        %v1618 = vmax.f32 %v1507, 0.0
        %v1619 = vmax.f32 %v1521, 0.0
        %v1620 = vmax.f32 %v1535, 0.0
        %v1621 = vmax.f32 %v1549, 0.0
        %v1622 = vmax.f32 %v1563, 0.0
        %v1623 = vmax.f32 %v1577, 0.0
        %v1624 = vmax.f32 %v1591, 0.0
        %v1625 = vld [vmem:[%s811] sm:$0xf]
        %v1626 = vld [vmem:[%s811 + $0x4] sm:$0xf]
        %v1627 = vld [vmem:[%s811 + $0x8] sm:$0xf]
        %v1628 = vld [vmem:[%s811 + $0xc] sm:$0xf]
        %v1629 = vld [vmem:[%s811 + $0x10] sm:$0xf]
        %v1630 = vld [vmem:[%s811 + $0x14] sm:$0xf]
        %v1631 = vld [vmem:[%s811 + $0x18] sm:$0xf]
        %v1632 = vld [vmem:[%s811 + $0x1c] sm:$0xf]
        %v1633 = vld [vmem:[%s811 + $0x20] sm:$0xf]
        %v1634 = vld [vmem:[%s811 + $0x24] sm:$0xf]
        %v1635 = vld [vmem:[%s811 + $0x28] sm:$0xf]
        %v1636 = vld [vmem:[%s811 + $0x2c] sm:$0xf]
        %v1637 = vld [vmem:[%s811 + $0x30] sm:$0xf]
        %v1638 = vld [vmem:[%s811 + $0x34] sm:$0xf]
        %v1639 = vld [vmem:[%s811 + $0x38] sm:$0xf]
        %v1640 = vld [vmem:[%s811 + $0x3c] sm:$0xf]
        %v1641 = vld [vmem:[%s811 + $0x40] sm:$0xf]
        %v1642 = vld [vmem:[%s811 + $0x44] sm:$0xf]
        %v1643 = vld [vmem:[%s811 + $0x48] sm:$0xf]
        %v1644 = vld [vmem:[%s811 + $0x4c] sm:$0xf]
        %v1645 = vld [vmem:[%s811 + $0x50] sm:$0xf]
        %v1646 = vld [vmem:[%s811 + $0x54] sm:$0xf]
        %v1647 = vld [vmem:[%s811 + $0x58] sm:$0xf]
        %v1648 = vld [vmem:[%s811 + $0x5c] sm:$0xf]
        %v1649 = vld [vmem:[%s811 + $0x60] sm:$0xf]
        %v1650 = vld [vmem:[%s811 + $0x64] sm:$0xf]
        %v1651 = vld [vmem:[%s811 + $0x68] sm:$0xf]
        %v1652 = vld [vmem:[%s811 + $0x6c] sm:$0xf]
        %v1653 = vld [vmem:[%s811 + $0x70] sm:$0xf]
        %v1654 = vld [vmem:[%s811 + $0x74] sm:$0xf]
        %v1655 = vld [vmem:[%s811 + $0x78] sm:$0xf]
        %v1656 = vld [vmem:[%s811 + $0x7c] sm:$0xf]
        %v1657 = vld [vmem:[%s811 + $0x80] sm:$0xf]
        %v1658 = vld [vmem:[%s811 + $0x84] sm:$0xf]
        %v1659 = vld [vmem:[%s811 + $0x88] sm:$0xf]
        %v1660 = vld [vmem:[%s811 + $0x8c] sm:$0xf]
        %v1661 = vld [vmem:[%s811 + $0x90] sm:$0xf]
        %v1662 = vld [vmem:[%s811 + $0x94] sm:$0xf]
        %v1663 = vld [vmem:[%s811 + $0x98] sm:$0xf]
        %v1664 = vld [vmem:[%s811 + $0x9c] sm:$0xf]
        %v1665 = vld [vmem:[%s811 + $0xa0] sm:$0xf]
        %v1666 = vld [vmem:[%s811 + $0xa4] sm:$0xf]
        %v1667 = vld [vmem:[%s811 + $0xa8] sm:$0xf]
        %v1668 = vld [vmem:[%s811 + $0xac] sm:$0xf]
        %v1669 = vld [vmem:[%s811 + $0xb0] sm:$0xf]
        %v1670 = vld [vmem:[%s811 + $0xb4] sm:$0xf]
        %v1671 = vld [vmem:[%s811 + $0xb8] sm:$0xf]
        %v1672 = vld [vmem:[%s811 + $0xbc] sm:$0xf]
        %v1673 = vld [vmem:[%s811 + $0xc0] sm:$0xf]
        %v1674 = vld [vmem:[%s811 + $0xc4] sm:$0xf]
        %v1675 = vld [vmem:[%s811 + $0xc8] sm:$0xf]
        %v1676 = vld [vmem:[%s811 + $0xcc] sm:$0xf]
        %v1677 = vld [vmem:[%s811 + $0xd0] sm:$0xf]
        %v1678 = vld [vmem:[%s811 + $0xd4] sm:$0xf]
        %v1679 = vld [vmem:[%s811 + $0xd8] sm:$0xf]
        %v1680 = vld [vmem:[%s811 + $0xdc] sm:$0xf]
        %v1681 = vld [vmem:[%s811 + $0xe0] sm:$0xf]
        %v1682 = vld [vmem:[%s811 + $0xe4] sm:$0xf]
        %v1683 = vld [vmem:[%s811 + $0xe8] sm:$0xf]
        %v1684 = vld [vmem:[%s811 + $0xec] sm:$0xf]
        %v1685 = vld [vmem:[%s811 + $0xf0] sm:$0xf]
        %v1686 = vld [vmem:[%s811 + $0xf4] sm:$0xf]
        %v1687 = vld [vmem:[%s811 + $0xf8] sm:$0xf]
        %v1688 = vld [vmem:[%s811 + $0xfc] sm:$0xf]
        %v1689 = vld [vmem:[%s811 + $0x100] sm:$0xf]
        %v1690 = vld [vmem:[%s811 + $0x104] sm:$0xf]
        %v1691 = vld [vmem:[%s811 + $0x108] sm:$0xf]
        %v1692 = vld [vmem:[%s811 + $0x10c] sm:$0xf]
        %v1693 = vld [vmem:[%s811 + $0x110] sm:$0xf]
        %v1694 = vld [vmem:[%s811 + $0x114] sm:$0xf]
        %v1695 = vld [vmem:[%s811 + $0x118] sm:$0xf]
        %v1696 = vld [vmem:[%s811 + $0x11c] sm:$0xf]
        %v1697 = vld [vmem:[%s811 + $0x120] sm:$0xf]
        %v1698 = vld [vmem:[%s811 + $0x124] sm:$0xf]
        %v1699 = vld [vmem:[%s811 + $0x128] sm:$0xf]
        %v1700 = vld [vmem:[%s811 + $0x12c] sm:$0xf]
        %v1701 = vld [vmem:[%s811 + $0x130] sm:$0xf]
        %v1702 = vld [vmem:[%s811 + $0x134] sm:$0xf]
        %v1703 = vld [vmem:[%s811 + $0x138] sm:$0xf]
        %v1704 = vld [vmem:[%s811 + $0x13c] sm:$0xf]
        %v1705 = vld [vmem:[%s811 + $0x140] sm:$0xf]
        %v1706 = vld [vmem:[%s811 + $0x144] sm:$0xf]
        %v1707 = vld [vmem:[%s811 + $0x148] sm:$0xf]
        %v1708 = vld [vmem:[%s811 + $0x14c] sm:$0xf]
        %v1709 = vld [vmem:[%s811 + $0x150] sm:$0xf]
        %v1710 = vld [vmem:[%s811 + $0x154] sm:$0xf]
        %v1711 = vld [vmem:[%s811 + $0x158] sm:$0xf]
        %v1712 = vld [vmem:[%s811 + $0x15c] sm:$0xf]
        %v1713 = vld [vmem:[%s811 + $0x160] sm:$0xf]
        %v1714 = vld [vmem:[%s811 + $0x164] sm:$0xf]
        %v1715 = vld [vmem:[%s811 + $0x168] sm:$0xf]
        %v1716 = vld [vmem:[%s811 + $0x16c] sm:$0xf]
        %v1717 = vld [vmem:[%s811 + $0x170] sm:$0xf]
        %v1718 = vld [vmem:[%s811 + $0x174] sm:$0xf]
        %v1719 = vld [vmem:[%s811 + $0x178] sm:$0xf]
        %v1720 = vld [vmem:[%s811 + $0x17c] sm:$0xf]
        %v1721 = vld [vmem:[%s811 + $0x180] sm:$0xf]
        %v1722 = vld [vmem:[%s811 + $0x184] sm:$0xf]
        %v1723 = vld [vmem:[%s811 + $0x188] sm:$0xf]
        %v1724 = vld [vmem:[%s811 + $0x18c] sm:$0xf]
        %v1725 = vld [vmem:[%s811 + $0x190] sm:$0xf]
        %v1726 = vld [vmem:[%s811 + $0x194] sm:$0xf]
        %v1727 = vld [vmem:[%s811 + $0x198] sm:$0xf]
        %v1728 = vld [vmem:[%s811 + $0x19c] sm:$0xf]
        %v1729 = vld [vmem:[%s811 + $0x1a0] sm:$0xf]
        %v1730 = vld [vmem:[%s811 + $0x1a4] sm:$0xf]
        %v1731 = vld [vmem:[%s811 + $0x1a8] sm:$0xf]
        %v1732 = vld [vmem:[%s811 + $0x1ac] sm:$0xf]
        %v1733 = vld [vmem:[%s811 + $0x1b0] sm:$0xf]
        %v1734 = vld [vmem:[%s811 + $0x1b4] sm:$0xf]
        %v1735 = vld [vmem:[%s811 + $0x1b8] sm:$0xf]
        %v1736 = vld [vmem:[%s811 + $0x1bc] sm:$0xf]
        %v1737 = vld [vmem:[%s811 + $0x1c0] sm:$0xf]
        %v1738 = vld [vmem:[%s811 + $0x1c4] sm:$0xf]
        %v1739 = vld [vmem:[%s811 + $0x1c8] sm:$0xf]
        %v1740 = vld [vmem:[%s811 + $0x1cc] sm:$0xf]
        %v1741 = vld [vmem:[%s811 + $0x1d0] sm:$0xf]
        %v1742 = vld [vmem:[%s811 + $0x1d4] sm:$0xf]
        %v1743 = vld [vmem:[%s811 + $0x1d8] sm:$0xf]
        %v1744 = vld [vmem:[%s811 + $0x1dc] sm:$0xf]
        %v1745 = vld [vmem:[%s811 + $0x1e0] sm:$0xf]
        %v1746 = vld [vmem:[%s811 + $0x1e4] sm:$0xf]
        %v1747 = vld [vmem:[%s811 + $0x1e8] sm:$0xf]
        %v1748 = vld [vmem:[%s811 + $0x1ec] sm:$0xf]
        %v1749 = vld [vmem:[%s811 + $0x1f0] sm:$0xf]
        %v1750 = vld [vmem:[%s811 + $0x1f4] sm:$0xf]
        %v1751 = vld [vmem:[%s811 + $0x1f8] sm:$0xf]
        %v1752 = vld [vmem:[%s811 + $0x1fc] sm:$0xf]
        %v1753 = vld [vmem:[%s811 + $0x200] sm:$0xf]
        %v1754 = vld [vmem:[%s811 + $0x204] sm:$0xf]
        %v1755 = vld [vmem:[%s811 + $0x208] sm:$0xf]
        %v1756 = vld [vmem:[%s811 + $0x20c] sm:$0xf]
        %v1757 = vld [vmem:[%s811 + $0x210] sm:$0xf]
        %v1758 = vld [vmem:[%s811 + $0x214] sm:$0xf]
        %v1759 = vld [vmem:[%s811 + $0x218] sm:$0xf]
        %v1760 = vld [vmem:[%s811 + $0x21c] sm:$0xf]
        %v1761 = vld [vmem:[%s811 + $0x220] sm:$0xf]
        %v1762 = vld [vmem:[%s811 + $0x224] sm:$0xf]
        %v1763 = vld [vmem:[%s811 + $0x228] sm:$0xf]
        %v1764 = vld [vmem:[%s811 + $0x22c] sm:$0xf]
        %v1765 = vld [vmem:[%s811 + $0x230] sm:$0xf]
        %v1766 = vld [vmem:[%s811 + $0x234] sm:$0xf]
        %v1767 = vld [vmem:[%s811 + $0x238] sm:$0xf]
        %v1768 = vld [vmem:[%s811 + $0x23c] sm:$0xf]
        %v1769 = vld [vmem:[%s811 + $0x240] sm:$0xf]
        %v1770 = vld [vmem:[%s811 + $0x244] sm:$0xf]
        %v1771 = vld [vmem:[%s811 + $0x248] sm:$0xf]
        %v1772 = vld [vmem:[%s811 + $0x24c] sm:$0xf]
        %v1773 = vld [vmem:[%s811 + $0x250] sm:$0xf]
        %v1774 = vld [vmem:[%s811 + $0x254] sm:$0xf]
        %v1775 = vld [vmem:[%s811 + $0x258] sm:$0xf]
        %v1776 = vld [vmem:[%s811 + $0x25c] sm:$0xf]
        %v1777 = vld [vmem:[%s811 + $0x260] sm:$0xf]
        %v1778 = vld [vmem:[%s811 + $0x264] sm:$0xf]
        %v1779 = vld [vmem:[%s811 + $0x268] sm:$0xf]
        %v1780 = vld [vmem:[%s811 + $0x26c] sm:$0xf]
        %v1781 = vld [vmem:[%s811 + $0x270] sm:$0xf]
        %v1782 = vld [vmem:[%s811 + $0x274] sm:$0xf]
        %v1783 = vld [vmem:[%s811 + $0x278] sm:$0xf]
        %v1784 = vld [vmem:[%s811 + $0x27c] sm:$0xf]
        %v1785 = vld [vmem:[%s811 + $0x280] sm:$0xf]
        %v1786 = vld [vmem:[%s811 + $0x284] sm:$0xf]
        %v1787 = vld [vmem:[%s811 + $0x288] sm:$0xf]
        %v1788 = vld [vmem:[%s811 + $0x28c] sm:$0xf]
        %v1789 = vld [vmem:[%s811 + $0x290] sm:$0xf]
        %v1790 = vld [vmem:[%s811 + $0x294] sm:$0xf]
        %v1791 = vld [vmem:[%s811 + $0x298] sm:$0xf]
        %v1792 = vld [vmem:[%s811 + $0x29c] sm:$0xf]
        %v1793 = vld [vmem:[%s811 + $0x2a0] sm:$0xf]
        %v1794 = vld [vmem:[%s811 + $0x2a4] sm:$0xf]
        %v1795 = vld [vmem:[%s811 + $0x2a8] sm:$0xf]
        %v1796 = vld [vmem:[%s811 + $0x2ac] sm:$0xf]
        %v1797 = vld [vmem:[%s811 + $0x2b0] sm:$0xf]
        %v1798 = vld [vmem:[%s811 + $0x2b4] sm:$0xf]
        %v1799 = vld [vmem:[%s811 + $0x2b8] sm:$0xf]
        %v1800 = vld [vmem:[%s811 + $0x2bc] sm:$0xf]
        %v1801 = vld [vmem:[%s811 + $0x2c0] sm:$0xf]
        %v1802 = vld [vmem:[%s811 + $0x2c4] sm:$0xf]
        %v1803 = vld [vmem:[%s811 + $0x2c8] sm:$0xf]
        %v1804 = vld [vmem:[%s811 + $0x2cc] sm:$0xf]
        %v1805 = vld [vmem:[%s811 + $0x2d0] sm:$0xf]
        %v1806 = vld [vmem:[%s811 + $0x2d4] sm:$0xf]
        %v1807 = vld [vmem:[%s811 + $0x2d8] sm:$0xf]
        %v1808 = vld [vmem:[%s811 + $0x2dc] sm:$0xf]
        %v1809 = vld [vmem:[%s811 + $0x2e0] sm:$0xf]
        %v1810 = vld [vmem:[%s811 + $0x2e4] sm:$0xf]
        %v1811 = vld [vmem:[%s811 + $0x2e8] sm:$0xf]
        %v1812 = vld [vmem:[%s811 + $0x2ec] sm:$0xf]
        %v1813 = vld [vmem:[%s811 + $0x2f0] sm:$0xf]
        %v1814 = vld [vmem:[%s811 + $0x2f4] sm:$0xf]
        %v1815 = vld [vmem:[%s811 + $0x2f8] sm:$0xf]
        %v1816 = vld [vmem:[%s811 + $0x2fc] sm:$0xf]
        %v1817 = vld [vmem:[%s811 + $0x300] sm:$0xf]
        %v1818 = vld [vmem:[%s811 + $0x304] sm:$0xf]
        %v1819 = vld [vmem:[%s811 + $0x308] sm:$0xf]
        %v1820 = vld [vmem:[%s811 + $0x30c] sm:$0xf]
        %v1821 = vld [vmem:[%s811 + $0x310] sm:$0xf]
        %v1822 = vld [vmem:[%s811 + $0x314] sm:$0xf]
        %v1823 = vld [vmem:[%s811 + $0x318] sm:$0xf]
        %v1824 = vld [vmem:[%s811 + $0x31c] sm:$0xf]
        %v1825 = vld [vmem:[%s811 + $0x320] sm:$0xf]
        %v1826 = vld [vmem:[%s811 + $0x324] sm:$0xf]
        %v1827 = vld [vmem:[%s811 + $0x328] sm:$0xf]
        %v1828 = vld [vmem:[%s811 + $0x32c] sm:$0xf]
        %v1829 = vld [vmem:[%s811 + $0x330] sm:$0xf]
        %v1830 = vld [vmem:[%s811 + $0x334] sm:$0xf]
        %v1831 = vld [vmem:[%s811 + $0x338] sm:$0xf]
        %v1832 = vld [vmem:[%s811 + $0x33c] sm:$0xf]
        %v1833 = vld [vmem:[%s811 + $0x340] sm:$0xf]
        %v1834 = vld [vmem:[%s811 + $0x344] sm:$0xf]
        %v1835 = vld [vmem:[%s811 + $0x348] sm:$0xf]
        %v1836 = vld [vmem:[%s811 + $0x34c] sm:$0xf]
        %v1837 = vld [vmem:[%s811 + $0x350] sm:$0xf]
        %v1838 = vld [vmem:[%s811 + $0x354] sm:$0xf]
        %v1839 = vld [vmem:[%s811 + $0x358] sm:$0xf]
        %v1840 = vld [vmem:[%s811 + $0x35c] sm:$0xf]
        %v1841 = vld [vmem:[%s811 + $0x360] sm:$0xf]
        %v1842 = vld [vmem:[%s811 + $0x364] sm:$0xf]
        %v1843 = vld [vmem:[%s811 + $0x368] sm:$0xf]
        %v1844 = vld [vmem:[%s811 + $0x36c] sm:$0xf]
        %v1845 = vld [vmem:[%s811 + $0x370] sm:$0xf]
        %v1846 = vld [vmem:[%s811 + $0x374] sm:$0xf]
        %v1847 = vld [vmem:[%s811 + $0x378] sm:$0xf]
        %v1848 = vld [vmem:[%s811 + $0x37c] sm:$0xf]
        %v1849 = vld [vmem:[%s811 + $0x380] sm:$0xf]
        %v1850 = vld [vmem:[%s811 + $0x384] sm:$0xf]
        %v1851 = vld [vmem:[%s811 + $0x388] sm:$0xf]
        %v1852 = vld [vmem:[%s811 + $0x38c] sm:$0xf]
        %v1853 = vld [vmem:[%s811 + $0x390] sm:$0xf]
        %v1854 = vld [vmem:[%s811 + $0x394] sm:$0xf]
        %v1855 = vld [vmem:[%s811 + $0x398] sm:$0xf]
        %v1856 = vld [vmem:[%s811 + $0x39c] sm:$0xf]
        %v1857 = vld [vmem:[%s811 + $0x3a0] sm:$0xf]
        %v1858 = vld [vmem:[%s811 + $0x3a4] sm:$0xf]
        %v1859 = vld [vmem:[%s811 + $0x3a8] sm:$0xf]
        %v1860 = vld [vmem:[%s811 + $0x3ac] sm:$0xf]
        %v1861 = vld [vmem:[%s811 + $0x3b0] sm:$0xf]
        %v1862 = vld [vmem:[%s811 + $0x3b4] sm:$0xf]
        %v1863 = vld [vmem:[%s811 + $0x3b8] sm:$0xf]
        %v1864 = vld [vmem:[%s811 + $0x3bc] sm:$0xf]
        %v1865 = vld [vmem:[%s811 + $0x3c0] sm:$0xf]
        %v1866 = vld [vmem:[%s811 + $0x3c4] sm:$0xf]
        %v1867 = vld [vmem:[%s811 + $0x3c8] sm:$0xf]
        %v1868 = vld [vmem:[%s811 + $0x3cc] sm:$0xf]
        %v1869 = vld [vmem:[%s811 + $0x3d0] sm:$0xf]
        %v1870 = vld [vmem:[%s811 + $0x3d4] sm:$0xf]
        %v1871 = vld [vmem:[%s811 + $0x3d8] sm:$0xf]
        %v1872 = vld [vmem:[%s811 + $0x3dc] sm:$0xf]
        %v1873 = vld [vmem:[%s811 + $0x3e0] sm:$0xf]
        %v1874 = vld [vmem:[%s811 + $0x3e4] sm:$0xf]
        %v1875 = vld [vmem:[%s811 + $0x3e8] sm:$0xf]
        %v1876 = vld [vmem:[%s811 + $0x3ec] sm:$0xf]
        %v1877 = vld [vmem:[%s811 + $0x3f0] sm:$0xf]
        %v1878 = vld [vmem:[%s811 + $0x3f4] sm:$0xf]
        %v1879 = vld [vmem:[%s811 + $0x3f8] sm:$0xf]
        %v1880 = vld [vmem:[%s811 + $0x3fc] sm:$0xf]
        %v1881 = vpack.c.bf16 %v1609, %v1593
        %v1882 = vpack.c.bf16 %v1610, %v1594
        %v1883 = vpack.c.bf16 %v1611, %v1595
        %v1884 = vpack.c.bf16 %v1612, %v1596
        %v1885 = vpack.c.bf16 %v1613, %v1597
        %v1886 = vpack.c.bf16 %v1614, %v1598
        %v1887 = vpack.c.bf16 %v1615, %v1599
        %v1888 = vpack.c.bf16 %v1616, %v1600
        %v1889 = vpack.c.bf16 %v1617, %v1601
        %v1890 = vpack.c.bf16 %v1618, %v1602
        %v1891 = vpack.c.bf16 %v1619, %v1603
        %v1892 = vpack.c.bf16 %v1620, %v1604
        %v1893 = vpack.c.bf16 %v1621, %v1605
        %v1894 = vpack.c.bf16 %v1622, %v1606
        %v1895 = vpack.c.bf16 %v1623, %v1607
        %v1896 = vpack.c.bf16 %v1624, %v1608
        %v1897 = vld [vmem:[%s814] sm:$0x1]
        %v1899 = vperm.slane %v1897, 0
        %v2157 = vunpack.c.l.b16 %v1625
        %v2158 = vunpack.c.l.b16 %v1626
        %v2159 = vunpack.c.l.b16 %v1627
        %v2160 = vunpack.c.l.b16 %v1628
        %v2161 = vunpack.c.l.b16 %v1629
        %v2162 = vunpack.c.l.b16 %v1630
        %v2163 = vunpack.c.l.b16 %v1631
        %v2164 = vunpack.c.l.b16 %v1632
        %v2165 = vunpack.c.l.b16 %v1633
        %v2166 = vunpack.c.l.b16 %v1634
        %v2167 = vunpack.c.l.b16 %v1635
        %v2168 = vunpack.c.l.b16 %v1636
        %v2169 = vunpack.c.l.b16 %v1637
        %v2170 = vunpack.c.l.b16 %v1638
        %v2171 = vunpack.c.l.b16 %v1639
        %v2172 = vunpack.c.l.b16 %v1640
        %v2173 = vunpack.c.l.b16 %v1641
        %v2174 = vunpack.c.l.b16 %v1642
        %v2175 = vunpack.c.l.b16 %v1643
        %v2176 = vunpack.c.l.b16 %v1644
        %v2177 = vunpack.c.l.b16 %v1645
        %v2178 = vunpack.c.l.b16 %v1646
        %v2179 = vunpack.c.l.b16 %v1647
        %v2180 = vunpack.c.l.b16 %v1648
        %v2181 = vunpack.c.l.b16 %v1649
        %v2182 = vunpack.c.l.b16 %v1650
        %v2183 = vunpack.c.l.b16 %v1651
        %v2184 = vunpack.c.l.b16 %v1652
        %v2185 = vunpack.c.l.b16 %v1653
        %v2186 = vunpack.c.l.b16 %v1654
        %v2187 = vunpack.c.l.b16 %v1655
        %v2188 = vunpack.c.l.b16 %v1656
        %v2189 = vunpack.c.l.b16 %v1657
        %v2190 = vunpack.c.l.b16 %v1658
        %v2191 = vunpack.c.l.b16 %v1659
        %v2192 = vunpack.c.l.b16 %v1660
        %v2193 = vunpack.c.l.b16 %v1661
        %v2194 = vunpack.c.l.b16 %v1662
        %v2195 = vunpack.c.l.b16 %v1663
        %v2196 = vunpack.c.l.b16 %v1664
        %v2197 = vunpack.c.l.b16 %v1665
        %v2198 = vunpack.c.l.b16 %v1666
        %v2199 = vunpack.c.l.b16 %v1667
        %v2200 = vunpack.c.l.b16 %v1668
        %v2201 = vunpack.c.l.b16 %v1669
        %v2202 = vunpack.c.l.b16 %v1670
        %v2203 = vunpack.c.l.b16 %v1671
        %v2204 = vunpack.c.l.b16 %v1672
        %v2205 = vunpack.c.l.b16 %v1673
        %v2206 = vunpack.c.l.b16 %v1674
        %v2207 = vunpack.c.l.b16 %v1675
        %v2208 = vunpack.c.l.b16 %v1676
        %v2209 = vunpack.c.l.b16 %v1677
        %v2210 = vunpack.c.l.b16 %v1678
        %v2211 = vunpack.c.l.b16 %v1679
        %v2212 = vunpack.c.l.b16 %v1680
        %v2213 = vunpack.c.l.b16 %v1681
        %v2214 = vunpack.c.l.b16 %v1682
        %v2215 = vunpack.c.l.b16 %v1683
        %v2216 = vunpack.c.l.b16 %v1684
        %v2217 = vunpack.c.l.b16 %v1685
        %v2218 = vunpack.c.l.b16 %v1686
        %v2219 = vunpack.c.l.b16 %v1687
        %v2220 = vunpack.c.l.b16 %v1688
        %v2221 = vunpack.c.l.b16 %v1689
        %v2222 = vunpack.c.l.b16 %v1690
        %v2223 = vunpack.c.l.b16 %v1691
        %v2224 = vunpack.c.l.b16 %v1692
        %v2225 = vunpack.c.l.b16 %v1693
        %v2226 = vunpack.c.l.b16 %v1694
        %v2227 = vunpack.c.l.b16 %v1695
        %v2228 = vunpack.c.l.b16 %v1696
        %v2229 = vunpack.c.l.b16 %v1697
        %v2230 = vunpack.c.l.b16 %v1698
        %v2231 = vunpack.c.l.b16 %v1699
        %v2232 = vunpack.c.l.b16 %v1700
        %v2233 = vunpack.c.l.b16 %v1701
        %v2234 = vunpack.c.l.b16 %v1702
        %v2235 = vunpack.c.l.b16 %v1703
        %v2236 = vunpack.c.l.b16 %v1704
        %v2237 = vunpack.c.l.b16 %v1705
        %v2238 = vunpack.c.l.b16 %v1706
        %v2239 = vunpack.c.l.b16 %v1707
        %v2240 = vunpack.c.l.b16 %v1708
        %v2241 = vunpack.c.l.b16 %v1709
        %v2242 = vunpack.c.l.b16 %v1710
        %v2243 = vunpack.c.l.b16 %v1711
        %v2244 = vunpack.c.l.b16 %v1712
        %v2245 = vunpack.c.l.b16 %v1713
        %v2246 = vunpack.c.l.b16 %v1714
        %v2247 = vunpack.c.l.b16 %v1715
        %v2248 = vunpack.c.l.b16 %v1716
        %v2249 = vunpack.c.l.b16 %v1717
        %v2250 = vunpack.c.l.b16 %v1718
        %v2251 = vunpack.c.l.b16 %v1719
        %v2252 = vunpack.c.l.b16 %v1720
        %v2253 = vunpack.c.l.b16 %v1721
        %v2254 = vunpack.c.l.b16 %v1722
        %v2255 = vunpack.c.l.b16 %v1723
        %v2256 = vunpack.c.l.b16 %v1724
        %v2257 = vunpack.c.l.b16 %v1725
        %v2258 = vunpack.c.l.b16 %v1726
        %v2259 = vunpack.c.l.b16 %v1727
        %v2260 = vunpack.c.l.b16 %v1728
        %v2261 = vunpack.c.l.b16 %v1729
        %v2262 = vunpack.c.l.b16 %v1730
        %v2263 = vunpack.c.l.b16 %v1731
        %v2264 = vunpack.c.l.b16 %v1732
        %v2265 = vunpack.c.l.b16 %v1733
        %v2266 = vunpack.c.l.b16 %v1734
        %v2267 = vunpack.c.l.b16 %v1735
        %v2268 = vunpack.c.l.b16 %v1736
        %v2269 = vunpack.c.l.b16 %v1737
        %v2270 = vunpack.c.l.b16 %v1738
        %v2271 = vunpack.c.l.b16 %v1739
        %v2272 = vunpack.c.l.b16 %v1740
        %v2273 = vunpack.c.l.b16 %v1741
        %v2274 = vunpack.c.l.b16 %v1742
        %v2275 = vunpack.c.l.b16 %v1743
        %v2276 = vunpack.c.l.b16 %v1744
        %v2277 = vunpack.c.l.b16 %v1745
        %v2278 = vunpack.c.l.b16 %v1746
        %v2279 = vunpack.c.l.b16 %v1747
        %v2280 = vunpack.c.l.b16 %v1748
        %v2281 = vunpack.c.l.b16 %v1749
        %v2282 = vunpack.c.l.b16 %v1750
        %v2283 = vunpack.c.l.b16 %v1751
        %v2284 = vunpack.c.l.b16 %v1752
        %v2285 = vunpack.c.l.b16 %v1753
        %v2286 = vunpack.c.l.b16 %v1754
        %v2287 = vunpack.c.l.b16 %v1755
        %v2288 = vunpack.c.l.b16 %v1756
        %v2289 = vunpack.c.l.b16 %v1757
        %v2290 = vunpack.c.l.b16 %v1758
        %v2291 = vunpack.c.l.b16 %v1759
        %v2292 = vunpack.c.l.b16 %v1760
        %v2293 = vunpack.c.l.b16 %v1761
        %v2294 = vunpack.c.l.b16 %v1762
        %v2295 = vunpack.c.l.b16 %v1763
        %v2296 = vunpack.c.l.b16 %v1764
        %v2297 = vunpack.c.l.b16 %v1765
        %v2298 = vunpack.c.l.b16 %v1766
        %v2299 = vunpack.c.l.b16 %v1767
        %v2300 = vunpack.c.l.b16 %v1768
        %v2301 = vunpack.c.l.b16 %v1769
        %v2302 = vunpack.c.l.b16 %v1770
        %v2303 = vunpack.c.l.b16 %v1771
        %v2304 = vunpack.c.l.b16 %v1772
        %v2305 = vunpack.c.l.b16 %v1773
        %v2306 = vunpack.c.l.b16 %v1774
        %v2307 = vunpack.c.l.b16 %v1775
        %v2308 = vunpack.c.l.b16 %v1776
        %v2309 = vunpack.c.l.b16 %v1777
        %v2310 = vunpack.c.l.b16 %v1778
        %v2311 = vunpack.c.l.b16 %v1779
        %v2312 = vunpack.c.l.b16 %v1780
        %v2313 = vunpack.c.l.b16 %v1781
        %v2314 = vunpack.c.l.b16 %v1782
        %v2315 = vunpack.c.l.b16 %v1783
        %v2316 = vunpack.c.l.b16 %v1784
        %v2317 = vunpack.c.l.b16 %v1785
        %v2318 = vunpack.c.l.b16 %v1786
        %v2319 = vunpack.c.l.b16 %v1787
        %v2320 = vunpack.c.l.b16 %v1788
        %v2321 = vunpack.c.l.b16 %v1789
        %v2322 = vunpack.c.l.b16 %v1790
        %v2323 = vunpack.c.l.b16 %v1791
        %v2324 = vunpack.c.l.b16 %v1792
        %v2325 = vunpack.c.l.b16 %v1793
        %v2326 = vunpack.c.l.b16 %v1794
        %v2327 = vunpack.c.l.b16 %v1795
        %v2328 = vunpack.c.l.b16 %v1796
        %v2329 = vunpack.c.l.b16 %v1797
        %v2330 = vunpack.c.l.b16 %v1798
        %v2331 = vunpack.c.l.b16 %v1799
        %v2332 = vunpack.c.l.b16 %v1800
        %v2333 = vunpack.c.l.b16 %v1801
        %v2334 = vunpack.c.l.b16 %v1802
        %v2335 = vunpack.c.l.b16 %v1803
        %v2336 = vunpack.c.l.b16 %v1804
        %v2337 = vunpack.c.l.b16 %v1805
        %v2338 = vunpack.c.l.b16 %v1806
        %v2339 = vunpack.c.l.b16 %v1807
        %v2340 = vunpack.c.l.b16 %v1808
        %v2341 = vunpack.c.l.b16 %v1809
        %v2342 = vunpack.c.l.b16 %v1810
        %v2343 = vunpack.c.l.b16 %v1811
        %v2344 = vunpack.c.l.b16 %v1812
        %v2345 = vunpack.c.l.b16 %v1813
        %v2346 = vunpack.c.l.b16 %v1814
        %v2347 = vunpack.c.l.b16 %v1815
        %v2348 = vunpack.c.l.b16 %v1816
        %v2349 = vunpack.c.l.b16 %v1817
        %v2350 = vunpack.c.l.b16 %v1818
        %v2351 = vunpack.c.l.b16 %v1819
        %v2352 = vunpack.c.l.b16 %v1820
        %v2353 = vunpack.c.l.b16 %v1821
        %v2354 = vunpack.c.l.b16 %v1822
        %v2355 = vunpack.c.l.b16 %v1823
        %v2356 = vunpack.c.l.b16 %v1824
        %v2357 = vunpack.c.l.b16 %v1825
        %v2358 = vunpack.c.l.b16 %v1826
        %v2359 = vunpack.c.l.b16 %v1827
        %v2360 = vunpack.c.l.b16 %v1828
        %v2361 = vunpack.c.l.b16 %v1829
        %v2362 = vunpack.c.l.b16 %v1830
        %v2363 = vunpack.c.l.b16 %v1831
        %v2364 = vunpack.c.l.b16 %v1832
        %v2365 = vunpack.c.l.b16 %v1833
        %v2366 = vunpack.c.l.b16 %v1834
        %v2367 = vunpack.c.l.b16 %v1835
        %v2368 = vunpack.c.l.b16 %v1836
        %v2369 = vunpack.c.l.b16 %v1837
        %v2370 = vunpack.c.l.b16 %v1838
        %v2371 = vunpack.c.l.b16 %v1839
        %v2372 = vunpack.c.l.b16 %v1840
        %v2373 = vunpack.c.l.b16 %v1841
        %v2374 = vunpack.c.l.b16 %v1842
        %v2375 = vunpack.c.l.b16 %v1843
        %v2376 = vunpack.c.l.b16 %v1844
        %v2377 = vunpack.c.l.b16 %v1845
        %v2378 = vunpack.c.l.b16 %v1846
        %v2379 = vunpack.c.l.b16 %v1847
        %v2380 = vunpack.c.l.b16 %v1848
        %v2381 = vunpack.c.l.b16 %v1849
        %v2382 = vunpack.c.l.b16 %v1850
        %v2383 = vunpack.c.l.b16 %v1851
        %v2384 = vunpack.c.l.b16 %v1852
        %v2385 = vunpack.c.l.b16 %v1853
        %v2386 = vunpack.c.l.b16 %v1854
        %v2387 = vunpack.c.l.b16 %v1855
        %v2388 = vunpack.c.l.b16 %v1856
        %v2389 = vunpack.c.l.b16 %v1857
        %v2390 = vunpack.c.l.b16 %v1858
        %v2391 = vunpack.c.l.b16 %v1859
        %v2392 = vunpack.c.l.b16 %v1860
        %v2393 = vunpack.c.l.b16 %v1861
        %v2394 = vunpack.c.l.b16 %v1862
        %v2395 = vunpack.c.l.b16 %v1863
        %v2396 = vunpack.c.l.b16 %v1864
        %v2397 = vunpack.c.l.b16 %v1865
        %v2398 = vunpack.c.l.b16 %v1866
        %v2399 = vunpack.c.l.b16 %v1867
        %v2400 = vunpack.c.l.b16 %v1868
        %v2401 = vunpack.c.l.b16 %v1869
        %v2402 = vunpack.c.l.b16 %v1870
        %v2403 = vunpack.c.l.b16 %v1871
        %v2404 = vunpack.c.l.b16 %v1872
        %v2405 = vunpack.c.l.b16 %v1873
        %v2406 = vunpack.c.l.b16 %v1874
        %v2407 = vunpack.c.l.b16 %v1875
        %v2408 = vunpack.c.l.b16 %v1876
        %v2409 = vunpack.c.l.b16 %v1877
        %v2410 = vunpack.c.l.b16 %v1878
        %v2411 = vunpack.c.l.b16 %v1879
        %v2412 = vunpack.c.l.b16 %v1880
        %v2413 = vpack.c.b16 %v2158, %v2157
        %v2414 = vpack.c.b16 %v2160, %v2159
        %v2415 = vpack.c.b16 %v2162, %v2161
        %v2416 = vpack.c.b16 %v2164, %v2163
        %v2417 = vpack.c.b16 %v2166, %v2165
        %v2418 = vpack.c.b16 %v2168, %v2167
        %v2419 = vpack.c.b16 %v2170, %v2169
        %v2420 = vpack.c.b16 %v2172, %v2171
        %v2421 = vpack.c.b16 %v2174, %v2173
        %v2422 = vpack.c.b16 %v2176, %v2175
        %v2423 = vpack.c.b16 %v2178, %v2177
        %v2424 = vpack.c.b16 %v2180, %v2179
        %v2425 = vpack.c.b16 %v2182, %v2181
        %v2426 = vpack.c.b16 %v2184, %v2183
        %v2427 = vpack.c.b16 %v2186, %v2185
        %v2428 = vpack.c.b16 %v2188, %v2187
        %v2429 = vpack.c.b16 %v2190, %v2189
        %v2430 = vpack.c.b16 %v2192, %v2191
        %v2431 = vpack.c.b16 %v2194, %v2193
        %v2432 = vpack.c.b16 %v2196, %v2195
        %v2433 = vpack.c.b16 %v2198, %v2197
        %v2434 = vpack.c.b16 %v2200, %v2199
        %v2435 = vpack.c.b16 %v2202, %v2201
        %v2436 = vpack.c.b16 %v2204, %v2203
        %v2437 = vpack.c.b16 %v2206, %v2205
        %v2438 = vpack.c.b16 %v2208, %v2207
        %v2439 = vpack.c.b16 %v2210, %v2209
        %v2440 = vpack.c.b16 %v2212, %v2211
        %v2441 = vpack.c.b16 %v2214, %v2213
        %v2442 = vpack.c.b16 %v2216, %v2215
        %v2443 = vpack.c.b16 %v2218, %v2217
        %v2444 = vpack.c.b16 %v2220, %v2219
        %v2445 = vpack.c.b16 %v2222, %v2221
        %v2446 = vpack.c.b16 %v2224, %v2223
        %v2447 = vpack.c.b16 %v2226, %v2225
        %v2448 = vpack.c.b16 %v2228, %v2227
        %v2449 = vpack.c.b16 %v2230, %v2229
        %v2450 = vpack.c.b16 %v2232, %v2231
        %v2451 = vpack.c.b16 %v2234, %v2233
        %v2452 = vpack.c.b16 %v2236, %v2235
        %v2453 = vpack.c.b16 %v2238, %v2237
        %v2454 = vpack.c.b16 %v2240, %v2239
        %v2455 = vpack.c.b16 %v2242, %v2241
        %v2456 = vpack.c.b16 %v2244, %v2243
        %v2457 = vpack.c.b16 %v2246, %v2245
        %v2458 = vpack.c.b16 %v2248, %v2247
        %v2459 = vpack.c.b16 %v2250, %v2249
        %v2460 = vpack.c.b16 %v2252, %v2251
        %v2461 = vpack.c.b16 %v2254, %v2253
        %v2462 = vpack.c.b16 %v2256, %v2255
        %v2463 = vpack.c.b16 %v2258, %v2257
        %v2464 = vpack.c.b16 %v2260, %v2259
        %v2465 = vpack.c.b16 %v2262, %v2261
        %v2466 = vpack.c.b16 %v2264, %v2263
        %v2467 = vpack.c.b16 %v2266, %v2265
        %v2468 = vpack.c.b16 %v2268, %v2267
        %v2469 = vpack.c.b16 %v2270, %v2269
        %v2470 = vpack.c.b16 %v2272, %v2271
        %v2471 = vpack.c.b16 %v2274, %v2273
        %v2472 = vpack.c.b16 %v2276, %v2275
        %v2473 = vpack.c.b16 %v2278, %v2277
        %v2474 = vpack.c.b16 %v2280, %v2279
        %v2475 = vpack.c.b16 %v2282, %v2281
        %v2476 = vpack.c.b16 %v2284, %v2283
        %v2477 = vpack.c.b16 %v2286, %v2285
        %v2478 = vpack.c.b16 %v2288, %v2287
        %v2479 = vpack.c.b16 %v2290, %v2289
        %v2480 = vpack.c.b16 %v2292, %v2291
        %v2481 = vpack.c.b16 %v2294, %v2293
        %v2482 = vpack.c.b16 %v2296, %v2295
        %v2483 = vpack.c.b16 %v2298, %v2297
        %v2484 = vpack.c.b16 %v2300, %v2299
        %v2485 = vpack.c.b16 %v2302, %v2301
        %v2486 = vpack.c.b16 %v2304, %v2303
        %v2487 = vpack.c.b16 %v2306, %v2305
        %v2488 = vpack.c.b16 %v2308, %v2307
        %v2489 = vpack.c.b16 %v2310, %v2309
        %v2490 = vpack.c.b16 %v2312, %v2311
        %v2491 = vpack.c.b16 %v2314, %v2313
        %v2492 = vpack.c.b16 %v2316, %v2315
        %v2493 = vpack.c.b16 %v2318, %v2317
        %v2494 = vpack.c.b16 %v2320, %v2319
        %v2495 = vpack.c.b16 %v2322, %v2321
        %v2496 = vpack.c.b16 %v2324, %v2323
        %v2497 = vpack.c.b16 %v2326, %v2325
        %v2498 = vpack.c.b16 %v2328, %v2327
        %v2499 = vpack.c.b16 %v2330, %v2329
        %v2500 = vpack.c.b16 %v2332, %v2331
        %v2501 = vpack.c.b16 %v2334, %v2333
        %v2502 = vpack.c.b16 %v2336, %v2335
        %v2503 = vpack.c.b16 %v2338, %v2337
        %v2504 = vpack.c.b16 %v2340, %v2339
        %v2505 = vpack.c.b16 %v2342, %v2341
        %v2506 = vpack.c.b16 %v2344, %v2343
        %v2507 = vpack.c.b16 %v2346, %v2345
        %v2508 = vpack.c.b16 %v2348, %v2347
        %v2509 = vpack.c.b16 %v2350, %v2349
        %v2510 = vpack.c.b16 %v2352, %v2351
        %v2511 = vpack.c.b16 %v2354, %v2353
        %v2512 = vpack.c.b16 %v2356, %v2355
        %v2513 = vpack.c.b16 %v2358, %v2357
        %v2514 = vpack.c.b16 %v2360, %v2359
        %v2515 = vpack.c.b16 %v2362, %v2361
        %v2516 = vpack.c.b16 %v2364, %v2363
        %v2517 = vpack.c.b16 %v2366, %v2365
        %v2518 = vpack.c.b16 %v2368, %v2367
        %v2519 = vpack.c.b16 %v2370, %v2369
        %v2520 = vpack.c.b16 %v2372, %v2371
        %v2521 = vpack.c.b16 %v2374, %v2373
        %v2522 = vpack.c.b16 %v2376, %v2375
        %v2523 = vpack.c.b16 %v2378, %v2377
        %v2524 = vpack.c.b16 %v2380, %v2379
        %v2525 = vpack.c.b16 %v2382, %v2381
        %v2526 = vpack.c.b16 %v2384, %v2383
        %v2527 = vpack.c.b16 %v2386, %v2385
        %v2528 = vpack.c.b16 %v2388, %v2387
        %v2529 = vpack.c.b16 %v2390, %v2389
        %v2530 = vpack.c.b16 %v2392, %v2391
        %v2531 = vpack.c.b16 %v2394, %v2393
        %v2532 = vpack.c.b16 %v2396, %v2395
        %v2533 = vpack.c.b16 %v2398, %v2397
        %v2534 = vpack.c.b16 %v2400, %v2399
        %v2535 = vpack.c.b16 %v2402, %v2401
        %v2536 = vpack.c.b16 %v2404, %v2403
        %v2537 = vpack.c.b16 %v2406, %v2405
        %v2538 = vpack.c.b16 %v2408, %v2407
        %v2539 = vpack.c.b16 %v2410, %v2409
        %v2540 = vpack.c.b16 %v2412, %v2411
        %2669 = vmatpush.bf16.msra.mxu0 %v2420
        %2670 = vmatpush.bf16.msra.mxu0 %v2419
        %2671 = vmatpush.bf16.msra.mxu0 %v2418
        %2672 = vmatpush.bf16.msra.mxu0 %v2417
        %2673 = vmatpush.bf16.msra.mxu0 %v2416
        %2674 = vmatpush.bf16.msra.mxu0 %v2415
        %2675 = vmatpush.bf16.msra.mxu0 %v2414
        %2676 = vmatpush.bf16.msra.mxu0 %v2413
        %2677 = vmatmul.bf16.gmra.mxu0 %v1881
        %v2678 = vpop.f32.mrf.mxu0
        %v2679 = vadd.f32 %v1899, %v2678
        %v2680 = vpop.f32.mrf.mxu0
        %v2681 = vadd.f32 %v1899, %v2680
        %2682 = vdwg.mxu0
        %2683 = vmatpush.bf16.msra.mxu0 %v2428
        %2684 = vmatpush.bf16.msra.mxu0 %v2427
        %2685 = vmatpush.bf16.msra.mxu0 %v2426
        %2686 = vmatpush.bf16.msra.mxu0 %v2425
        %2687 = vmatpush.bf16.msra.mxu0 %v2424
        %2688 = vmatpush.bf16.msra.mxu0 %v2423
        %2689 = vmatpush.bf16.msra.mxu0 %v2422
        %2690 = vmatpush.bf16.msra.mxu0 %v2421
        %2691 = vmatmul.bf16.gmra.mxu0 %v1882
        %v2692 = vpop.f32.mrf.mxu0
        %v2693 = vadd.f32 %v2679, %v2692
        %v2694 = vpop.f32.mrf.mxu0
        %v2695 = vadd.f32 %v2681, %v2694
        %2696 = vdwg.mxu0
        %2697 = vmatpush.bf16.msra.mxu0 %v2436
        %2698 = vmatpush.bf16.msra.mxu0 %v2435
        %2699 = vmatpush.bf16.msra.mxu0 %v2434
        %2700 = vmatpush.bf16.msra.mxu0 %v2433
        %2701 = vmatpush.bf16.msra.mxu0 %v2432
        %2702 = vmatpush.bf16.msra.mxu0 %v2431
        %2703 = vmatpush.bf16.msra.mxu0 %v2430
        %2704 = vmatpush.bf16.msra.mxu0 %v2429
        %2705 = vmatmul.bf16.gmra.mxu0 %v1883
        %v2706 = vpop.f32.mrf.mxu0
        %v2707 = vadd.f32 %v2693, %v2706
        %v2708 = vpop.f32.mrf.mxu0
        %v2709 = vadd.f32 %v2695, %v2708
        %2710 = vdwg.mxu0
        %2711 = vmatpush.bf16.msra.mxu0 %v2444
        %2712 = vmatpush.bf16.msra.mxu0 %v2443
        %2713 = vmatpush.bf16.msra.mxu0 %v2442
        %2714 = vmatpush.bf16.msra.mxu0 %v2441
        %2715 = vmatpush.bf16.msra.mxu0 %v2440
        %2716 = vmatpush.bf16.msra.mxu0 %v2439
        %2717 = vmatpush.bf16.msra.mxu0 %v2438
        %2718 = vmatpush.bf16.msra.mxu0 %v2437
        %2719 = vmatmul.bf16.gmra.mxu0 %v1884
        %v2720 = vpop.f32.mrf.mxu0
        %v2721 = vadd.f32 %v2707, %v2720
        %v2722 = vpop.f32.mrf.mxu0
        %v2723 = vadd.f32 %v2709, %v2722
        %2724 = vdwg.mxu0
        %2725 = vmatpush.bf16.msra.mxu0 %v2452
        %2726 = vmatpush.bf16.msra.mxu0 %v2451
        %2727 = vmatpush.bf16.msra.mxu0 %v2450
        %2728 = vmatpush.bf16.msra.mxu0 %v2449
        %2729 = vmatpush.bf16.msra.mxu0 %v2448
        %2730 = vmatpush.bf16.msra.mxu0 %v2447
        %2731 = vmatpush.bf16.msra.mxu0 %v2446
        %2732 = vmatpush.bf16.msra.mxu0 %v2445
        %2733 = vmatmul.bf16.gmra.mxu0 %v1885
        %v2734 = vpop.f32.mrf.mxu0
        %v2735 = vadd.f32 %v2721, %v2734
        %v2736 = vpop.f32.mrf.mxu0
        %v2737 = vadd.f32 %v2723, %v2736
        %2738 = vdwg.mxu0
        %2739 = vmatpush.bf16.msra.mxu0 %v2460
        %2740 = vmatpush.bf16.msra.mxu0 %v2459
        %2741 = vmatpush.bf16.msra.mxu0 %v2458
        %2742 = vmatpush.bf16.msra.mxu0 %v2457
        %2743 = vmatpush.bf16.msra.mxu0 %v2456
        %2744 = vmatpush.bf16.msra.mxu0 %v2455
        %2745 = vmatpush.bf16.msra.mxu0 %v2454
        %2746 = vmatpush.bf16.msra.mxu0 %v2453
        %2747 = vmatmul.bf16.gmra.mxu0 %v1886
        %v2748 = vpop.f32.mrf.mxu0
        %v2749 = vadd.f32 %v2735, %v2748
        %v2750 = vpop.f32.mrf.mxu0
        %v2751 = vadd.f32 %v2737, %v2750
        %2752 = vdwg.mxu0
        %2753 = vmatpush.bf16.msra.mxu0 %v2468
        %2754 = vmatpush.bf16.msra.mxu0 %v2467
        %2755 = vmatpush.bf16.msra.mxu0 %v2466
        %2756 = vmatpush.bf16.msra.mxu0 %v2465
        %2757 = vmatpush.bf16.msra.mxu0 %v2464
        %2758 = vmatpush.bf16.msra.mxu0 %v2463
        %2759 = vmatpush.bf16.msra.mxu0 %v2462
        %2760 = vmatpush.bf16.msra.mxu0 %v2461
        %2761 = vmatmul.bf16.gmra.mxu0 %v1887
        %v2762 = vpop.f32.mrf.mxu0
        %v2763 = vadd.f32 %v2749, %v2762
        %v2764 = vpop.f32.mrf.mxu0
        %v2765 = vadd.f32 %v2751, %v2764
        %2766 = vdwg.mxu0
        %2767 = vmatpush.bf16.msra.mxu0 %v2476
        %2768 = vmatpush.bf16.msra.mxu0 %v2475
        %2769 = vmatpush.bf16.msra.mxu0 %v2474
        %2770 = vmatpush.bf16.msra.mxu0 %v2473
        %2771 = vmatpush.bf16.msra.mxu0 %v2472
        %2772 = vmatpush.bf16.msra.mxu0 %v2471
        %2773 = vmatpush.bf16.msra.mxu0 %v2470
        %2774 = vmatpush.bf16.msra.mxu0 %v2469
        %2775 = vmatmul.bf16.gmra.mxu0 %v1888
        %v2776 = vpop.f32.mrf.mxu0
        %v2777 = vadd.f32 %v2763, %v2776
        %v2778 = vpop.f32.mrf.mxu0
        %v2779 = vadd.f32 %v2765, %v2778
        %2780 = vdwg.mxu0
        %2781 = vmatpush.bf16.msra.mxu0 %v2484
        %2782 = vmatpush.bf16.msra.mxu0 %v2483
        %2783 = vmatpush.bf16.msra.mxu0 %v2482
        %2784 = vmatpush.bf16.msra.mxu0 %v2481
        %2785 = vmatpush.bf16.msra.mxu0 %v2480
        %2786 = vmatpush.bf16.msra.mxu0 %v2479
        %2787 = vmatpush.bf16.msra.mxu0 %v2478
        %2788 = vmatpush.bf16.msra.mxu0 %v2477
        %2789 = vmatmul.bf16.gmra.mxu0 %v1889
        %v2790 = vpop.f32.mrf.mxu0
        %v2791 = vadd.f32 %v2777, %v2790
        %v2792 = vpop.f32.mrf.mxu0
        %v2793 = vadd.f32 %v2779, %v2792
        %2794 = vdwg.mxu0
        %2795 = vmatpush.bf16.msra.mxu0 %v2492
        %2796 = vmatpush.bf16.msra.mxu0 %v2491
        %2797 = vmatpush.bf16.msra.mxu0 %v2490
        %2798 = vmatpush.bf16.msra.mxu0 %v2489
        %2799 = vmatpush.bf16.msra.mxu0 %v2488
        %2800 = vmatpush.bf16.msra.mxu0 %v2487
        %2801 = vmatpush.bf16.msra.mxu0 %v2486
        %2802 = vmatpush.bf16.msra.mxu0 %v2485
        %2803 = vmatmul.bf16.gmra.mxu0 %v1890
        %v2804 = vpop.f32.mrf.mxu0
        %v2805 = vadd.f32 %v2791, %v2804
        %v2806 = vpop.f32.mrf.mxu0
        %v2807 = vadd.f32 %v2793, %v2806
        %2808 = vdwg.mxu0
        %2809 = vmatpush.bf16.msra.mxu0 %v2500
        %2810 = vmatpush.bf16.msra.mxu0 %v2499
        %2811 = vmatpush.bf16.msra.mxu0 %v2498
        %2812 = vmatpush.bf16.msra.mxu0 %v2497
        %2813 = vmatpush.bf16.msra.mxu0 %v2496
        %2814 = vmatpush.bf16.msra.mxu0 %v2495
        %2815 = vmatpush.bf16.msra.mxu0 %v2494
        %2816 = vmatpush.bf16.msra.mxu0 %v2493
        %2817 = vmatmul.bf16.gmra.mxu0 %v1891
        %v2818 = vpop.f32.mrf.mxu0
        %v2819 = vadd.f32 %v2805, %v2818
        %v2820 = vpop.f32.mrf.mxu0
        %v2821 = vadd.f32 %v2807, %v2820
        %2822 = vdwg.mxu0
        %2823 = vmatpush.bf16.msra.mxu0 %v2508
        %2824 = vmatpush.bf16.msra.mxu0 %v2507
        %2825 = vmatpush.bf16.msra.mxu0 %v2506
        %2826 = vmatpush.bf16.msra.mxu0 %v2505
        %2827 = vmatpush.bf16.msra.mxu0 %v2504
        %2828 = vmatpush.bf16.msra.mxu0 %v2503
        %2829 = vmatpush.bf16.msra.mxu0 %v2502
        %2830 = vmatpush.bf16.msra.mxu0 %v2501
        %2831 = vmatmul.bf16.gmra.mxu0 %v1892
        %v2832 = vpop.f32.mrf.mxu0
        %v2833 = vadd.f32 %v2819, %v2832
        %v2834 = vpop.f32.mrf.mxu0
        %v2835 = vadd.f32 %v2821, %v2834
        %2836 = vdwg.mxu0
        %2837 = vmatpush.bf16.msra.mxu0 %v2516
        %2838 = vmatpush.bf16.msra.mxu0 %v2515
        %2839 = vmatpush.bf16.msra.mxu0 %v2514
        %2840 = vmatpush.bf16.msra.mxu0 %v2513
        %2841 = vmatpush.bf16.msra.mxu0 %v2512
        %2842 = vmatpush.bf16.msra.mxu0 %v2511
        %2843 = vmatpush.bf16.msra.mxu0 %v2510
        %2844 = vmatpush.bf16.msra.mxu0 %v2509
        %2845 = vmatmul.bf16.gmra.mxu0 %v1893
        %v2846 = vpop.f32.mrf.mxu0
        %v2847 = vadd.f32 %v2833, %v2846
        %v2848 = vpop.f32.mrf.mxu0
        %v2849 = vadd.f32 %v2835, %v2848
        %2850 = vdwg.mxu0
        %2851 = vmatpush.bf16.msra.mxu0 %v2524
        %2852 = vmatpush.bf16.msra.mxu0 %v2523
        %2853 = vmatpush.bf16.msra.mxu0 %v2522
        %2854 = vmatpush.bf16.msra.mxu0 %v2521
        %2855 = vmatpush.bf16.msra.mxu0 %v2520
        %2856 = vmatpush.bf16.msra.mxu0 %v2519
        %2857 = vmatpush.bf16.msra.mxu0 %v2518
        %2858 = vmatpush.bf16.msra.mxu0 %v2517
        %2859 = vmatmul.bf16.gmra.mxu0 %v1894
        %v2860 = vpop.f32.mrf.mxu0
        %v2861 = vadd.f32 %v2847, %v2860
        %v2862 = vpop.f32.mrf.mxu0
        %v2863 = vadd.f32 %v2849, %v2862
        %2864 = vdwg.mxu0
        %2865 = vmatpush.bf16.msra.mxu0 %v2532
        %2866 = vmatpush.bf16.msra.mxu0 %v2531
        %2867 = vmatpush.bf16.msra.mxu0 %v2530
        %2868 = vmatpush.bf16.msra.mxu0 %v2529
        %2869 = vmatpush.bf16.msra.mxu0 %v2528
        %2870 = vmatpush.bf16.msra.mxu0 %v2527
        %2871 = vmatpush.bf16.msra.mxu0 %v2526
        %2872 = vmatpush.bf16.msra.mxu0 %v2525
        %2873 = vmatmul.bf16.gmra.mxu0 %v1895
        %v2874 = vpop.f32.mrf.mxu0
        %v2875 = vadd.f32 %v2861, %v2874
        %v2876 = vpop.f32.mrf.mxu0
        %v2877 = vadd.f32 %v2863, %v2876
        %2878 = vdwg.mxu0
        %2879 = vmatpush.bf16.msra.mxu0 %v2540
        %2880 = vmatpush.bf16.msra.mxu0 %v2539
        %2881 = vmatpush.bf16.msra.mxu0 %v2538
        %2882 = vmatpush.bf16.msra.mxu0 %v2537
        %2883 = vmatpush.bf16.msra.mxu0 %v2536
        %2884 = vmatpush.bf16.msra.mxu0 %v2535
        %2885 = vmatpush.bf16.msra.mxu0 %v2534
        %2886 = vmatpush.bf16.msra.mxu0 %v2533
        %2887 = vmatmul.bf16.gmra.mxu0 %v1896
        %v2888 = vpop.f32.mrf.mxu0
        %v2889 = vadd.f32 %v2875, %v2888
        %v2890 = vpop.f32.mrf.mxu0
        %v2891 = vadd.f32 %v2877, %v2890
        %2892 = vdwg.mxu0
        %v2893 = vadd.f32 %v1135, %v2889
        %v2894 = vadd.f32 %v1136, %v2891
        %v2895 = vld [vmem:[%s794] sm:$0x1]
        %v2896 = vld [vmem:[%s797] sm:$0x1]
        %v2897 = vsel %vm886, %v2893, 0.0
        %2898 = vadd.xlane.f32.xlu0 %v2897
        %v2899 = vpop.xlane.xlu0 %2898
        %v2900 = vsel %vm886, %v2894, 0.0
        %2901 = vadd.xlane.f32.xlu0 %v2900
        %v2902 = vpop.xlane.xlu0 %2901
        %v2903 = vmul.f32 %v2899, %v1088
        %v2904 = vmul.f32 %v2902, %v1088
        %v2905 = vsub.f32 %v2893, %v2903
        %v2906 = vsub.f32 %v2894, %v2904
        %v2907 = vmul.f32 %v2905, %v2905
        %v2908 = vmul.f32 %v2906, %v2906
        %v2909 = vsel %vm886, %v2907, 0.0
        %2910 = vadd.xlane.f32.xlu0 %v2909
        %v2911 = vpop.xlane.xlu0 %2910
        %v2912 = vsel %vm886, %v2908, 0.0
        %2913 = vadd.xlane.f32.xlu0 %v2912
        %v2914 = vpop.xlane.xlu0 %2913
        %v2915 = vmul.f32 %v2911, %v1088
        %v2916 = vmul.f32 %v2914, %v1088
        %v2917 = vadd.f32 %v2915, 1e-05
        %v2918 = vadd.f32 %v2916, 1e-05
        %v2919 = vrsqrt.pop %v2917
        %v2920 = vmul.f32 %v2919, %v2917
        %v2921 = vmul.f32 %v2920, %v2919
        %v2922 = vmul.f32 0.5, %v2921
        %v2923 = vsub.f32 1.5, %v2922
        %v2924 = vmul.f32 %v2919, %v2923
        %vm2925 = vweird.f32 %v2917
        %vm2926 = vweird.f32 %v2919
        %vm2927 = vmor %vm2925, %vm2926
        %v2928 = vsel %vm2927, %v2919, %v2924
        %v2929 = vrsqrt.pop %v2918
        %v2930 = vmul.f32 %v2929, %v2918
        %v2931 = vmul.f32 %v2930, %v2929
        %v2932 = vmul.f32 0.5, %v2931
        %v2933 = vsub.f32 1.5, %v2932
        %v2934 = vmul.f32 %v2929, %v2933
        %vm2935 = vweird.f32 %v2918
        %vm2936 = vweird.f32 %v2929
        %vm2937 = vmor %vm2935, %vm2936
        %v2938 = vsel %vm2937, %v2929, %v2934
        %v2939 = vmul.f32 %v2905, %v2928
        %v2940 = vmul.f32 %v2906, %v2938
        %v2942 = vperm.slane %v2895, 0
        %v2944 = vmul.f32 %v2939, %v2942
        %v2945 = vmul.f32 %v2940, %v2942
        %v2947 = vperm.slane %v2896, 0
        %v2949 = vadd.f32 %v2944, %v2947
        %v2950 = vadd.f32 %v2945, %v2947
        %2951 = vst.msk [vmem:[#allocation2] sm:$0xff] %vm886, %v2949
        %2952 = vst.msk [vmem:[#allocation2 + $0x8] sm:$0xff] %vm886, %v2950
        %p2953 = scmp.eq.s32.totalorder %s36, 1
        // Predicated region
        $region101: #{tpu_custom_call.1} parent=95 // pred_check
          %p2954 = pneg %p2953
        $region102: #{tpu_custom_call.1} parent=95 // pred_check_branch
          %2956 = sbr.rel (%p2954) target = $region104
        $region103: #{tpu_custom_call.1} parent=95 // pred_region
          %v2957 = vld [vmem:[%s17] sm:$0xf]
          %v2958 = vld [vmem:[%s17 + $0x4] sm:$0xf]
          %v2959 = vld [vmem:[%s17 + $0x8] sm:$0xf]
          %v2960 = vld [vmem:[%s17 + $0xc] sm:$0xf]
          %v2961 = vpack.c.bf16 %v2950, %v2949
          %v2962 = vld [vmem:[%s18] sm:$0x1]
          %v2964 = vperm.slane %v2962, 0
          %v2970 = vunpack.c.l.b16 %v2957
          %v2971 = vunpack.c.l.b16 %v2958
          %v2972 = vunpack.c.l.b16 %v2959
          %v2973 = vunpack.c.l.b16 %v2960
          %v2974 = vpack.c.b16 %v2971, %v2970
          %v2975 = vpack.c.b16 %v2973, %v2972
          %v2979 = vsel %vm886, %v2961, 0
          %2981 = vmatpush.bf16.msra.mxu0 0
          %2982 = vmatpush.bf16.msra.mxu0 0
          %2983 = vmatpush.bf16.msra.mxu0 0
          %2984 = vmatpush.bf16.msra.mxu0 0
          %2985 = vmatpush.bf16.msra.mxu0 0
          %2986 = vmatpush.bf16.msra.mxu0 0
          %2987 = vmatpush.bf16.msra.mxu0 %v2975
          %2988 = vmatpush.bf16.msra.mxu0 %v2974
          %2989 = vmatmul.bf16.gmra.mxu0 %v2979
          %v2990 = vpop.f32.mrf.mxu0
          %v2991 = vadd.f32 %v2964, %v2990
          %v2992 = vpop.f32.mrf.mxu0
          %v2993 = vadd.f32 %v2964, %v2992
          %2994 = vdwg.mxu0
          %2995 = vst [vmem:[#allocation4] sm:$0xff] %v2991
          %2996 = vst [vmem:[#allocation4 + $0x8] sm:$0xff] %v2993
        $region104: #{tpu_custom_call.1} parent=95 // pred_fallthru
          _
        // Predicated region
        $region105: #{tpu_custom_call.1} parent=95 // pred_check
          %p2997 = pneg %p530
        $region106: #{tpu_custom_call.1} parent=95 // pred_check_branch
          %2999 = sbr.rel (%p2997) target = $region108
        $region107: #{tpu_custom_call.1} parent=95 // pred_region
          %3001 = vsyncadd [#allocation5], 0
          %s3002 = smul.addr %s35, 8
          %s3003 = scalar_lea.hbm %s19, %s3002
          %s3004 = sshll.u32 [#allocation4], 4
          %s3005 = int_to_ptr.vmem [resolvable:$true] %s3004
          %s3006 = sshll.u32 %s3003, 4
          %s3007 = int_to_ptr.hbm [resolvable:$true] %s3006
          %3012 = dma.vmem_to_hbm [thread:$0]  %s3005, 256, %s3007, [#allocation5], 128, 128, 8
        $region108: #{tpu_custom_call.1} parent=95 // pred_fallthru
          _
        // Predicated region
        $region109: #{tpu_custom_call.1} parent=95 // pred_check
          %p3013 = pneg %p530
        $region110: #{tpu_custom_call.1} parent=95 // pred_check_branch
          %3015 = sbr.rel (%p3013) target = $region112
        $region111: #{tpu_custom_call.1} parent=95 // pred_region
          %3017 = dma.done [#allocation5], 256
        $region112: #{tpu_custom_call.1} parent=95 // pred_fallthru
          _
      $region96: #{tpu_custom_call.1} parent=5 // pred_fallthru
        _
      %p3018 = scmp.le.s32.totalorder 2, %s26
      // Predicated region
      $region113: #{tpu_custom_call.1} parent=5 // pred_check
        %p3019 = pneg %p3018
      $region114: #{tpu_custom_call.1} parent=5 // pred_check_branch
        %3021 = sbr.rel (%p3019) target = $region116
      $region115: #{tpu_custom_call.1} parent=5 // pred_region
        %s3022 = ssub.s32 %s26, 2
      $region116: #{tpu_custom_call.1} parent=5 // pred_fallthru
        _
    $region6: #{tpu_custom_call.1} parent=1 // loop_footer
      %s30 = sadd.s32 1, %s26
    $region7: #{tpu_custom_call.1} parent=1 // loop_footer_branch
      %25 = sbr.rel target = $region3
    $region8: #{tpu_custom_call.1} parent=1 // loop_exit
      _
    %3023 = vsyncpa [#allocation5], 1
    %s3024 = scalar_lea.sflag [#allocation5], 1
    %3025 = vsyncpa %s3024, 1

</llo_original>
